<compile_context>
chip_gen: v5e
topology: v5e:2x2
jax: 0.10.0
libtpu: 0.0.40
codegen_flags: <defaults>
</compile_context>

<pallas_src>
import functools
import math

import jax
import jax.numpy as jnp
from jax.experimental import pallas as pl
from jax.experimental.pallas import tpu as pltpu


def _decoder_layer_kernel(x_ref, mem_ref, tbias_ref, sbias_ref,
                          wqkv_self_ref, bqkv_self_ref, wo_self_ref, bo_self_ref,
                          wq_cross_ref, bq_cross_ref, wkv_cross_ref, bkv_cross_ref,
                          wo_cross_ref, bo_cross_ref,
                          w1_ref, b1_ref, w2_ref, b2_ref,
                          ln_g_ref, ln_b_ref, o_ref, *, num_heads):
    Bb, T, D = x_ref.shape
    S = mem_ref.shape[1]
    H = num_heads
    dk = D // H
    M = Bb * T

    # Fold the per-block batch into the matmul M dimension (bigger MXU passes).
    x = x_ref[...].astype(jnp.float32).reshape(M, D)            # (M, D) f32
    mem_bf = mem_ref[...].astype(jnp.bfloat16).reshape(Bb * S, D)
    tbias = tbias_ref[...]                                      # (T, T) additive bias
    sbias = sbias_ref[...]                                      # (T, S)

    def layer_norm(v, idx):
        # Annotated-Transformer LayerNorm: g * (v - mu) / (std + eps) + b, with the
        # torch.std default (unbiased, N-1).  Kept in f32 (no bf16 VPU on v5e).
        g = ln_g_ref[idx]
        b = ln_b_ref[idx]
        mu = jnp.mean(v, axis=-1, keepdims=True)
        diff = v - mu
        std = jnp.sqrt(jnp.sum(diff * diff, axis=-1, keepdims=True) / (D - 1))
        return g * diff / (std + 1e-6) + b

    def split_heads(t2d, rows):
        # (Bb*rows, D) f32 -> (Bb*H, rows, dk) bf16 — one relayout per tensor,
        # done AFTER the fused full-width projection.
        t4 = t2d.astype(jnp.bfloat16).reshape(Bb, rows, H, dk)
        return jnp.swapaxes(t4, 1, 2).reshape(Bb * H, rows, dk)

    def attention(q2d, k2d, v2d, kv_rows, bias, wo_ref, bo_ref):
        qh = split_heads(q2d, T)            # (Bb*H, T, dk)
        kh = split_heads(k2d, kv_rows)      # (Bb*H, S, dk)
        vh = split_heads(v2d, kv_rows)
        # 1/sqrt(dk) is folded into W_q / b_q in the wrapper (weight transform).
        sc = jnp.einsum('btf,bsf->bts', qh, kh,
                        preferred_element_type=jnp.float32)     # (Bb*H, T, S)
        sc = sc + bias[None]
        sc = sc - jnp.max(sc, axis=-1, keepdims=True)
        p = jnp.exp(sc)
        # Row max is exp(0)=1 after the shift => sum >= 1; approx reciprocal is safe.
        p = p * pl.reciprocal(jnp.sum(p, axis=-1, keepdims=True), approx=True)
        ctx = jnp.einsum('bts,bsf->btf', p.astype(jnp.bfloat16), vh,
                         preferred_element_type=jnp.float32)    # (Bb*H, T, dk)
        # Merge heads -> (M, D), then ONE full-width output projection.
        ctx = jnp.swapaxes(ctx.reshape(Bb, H, T, dk), 1, 2).reshape(M, D)
        return jnp.dot(ctx.astype(jnp.bfloat16), wo_ref[...],
                       preferred_element_type=jnp.float32) + bo_ref[...]

    # TODO(synk): dropout inside ResidualConnection is omitted (identity at eval time).

    # Residual 0: pre-norm masked self-attention (fused QKV projection, N = 3D).
    n0 = layer_norm(x, 0).astype(jnp.bfloat16)
    qkv = jnp.dot(n0, wqkv_self_ref[...],
                  preferred_element_type=jnp.float32) + bqkv_self_ref[...]   # (M, 3D)
    x = x + attention(qkv[:, :D], qkv[:, D:2 * D], qkv[:, 2 * D:], T,
                      tbias, wo_self_ref, bo_self_ref)

    # Residual 1: pre-norm cross-attention (Q of x; fused KV projection of memory, N = 2D).
    n1 = layer_norm(x, 1).astype(jnp.bfloat16)
    qc = jnp.dot(n1, wq_cross_ref[...],
                 preferred_element_type=jnp.float32) + bq_cross_ref[...]     # (M, D)
    kvc = jnp.dot(mem_bf, wkv_cross_ref[...],
                  preferred_element_type=jnp.float32) + bkv_cross_ref[...]   # (Bb*S, 2D)
    x = x + attention(qc, kvc[:, :D], kvc[:, D:], S,
                      sbias, wo_cross_ref, bo_cross_ref)

    # Residual 2: pre-norm position-wise FFN (Linear -> ReLU -> Linear).
    n2 = layer_norm(x, 2).astype(jnp.bfloat16)
    hid = jnp.dot(n2, w1_ref[...], preferred_element_type=jnp.float32) + b1_ref[...]
    hid = jnp.maximum(hid, 0.0).astype(jnp.bfloat16)
    x = x + jnp.dot(hid, w2_ref[...], preferred_element_type=jnp.float32) + b2_ref[...]

    o_ref[...] = x.reshape(Bb, T, D).astype(o_ref.dtype)


def prepare_params(params, num_heads):
    """One-time packing of weights into kernel-friendly layouts (off the per-call path)."""
    D = params["w_self"].shape[1]
    Dff = params["w1"].shape[1]
    dk = D // num_heads
    scale = 1.0 / math.sqrt(dk)
    wdt = jnp.bfloat16   # MXU-native weight dtype (halves weight DMA / VMEM)

    w_self, b_self = params["w_self"], params["b_self"]
    w_cross, b_cross = params["w_cross"], params["b_cross"]

    return {
        # self-attention: fused [Wq*scale | Wk | Wv] (D, 3D); lane-dense bias (1, 3D)
        "wqkv_self": jnp.concatenate([w_self[0] * scale, w_self[1], w_self[2]],
                                     axis=1).astype(wdt),
        "bqkv_self": jnp.concatenate(
            [b_self[0].reshape(-1) * scale, b_self[1].reshape(-1), b_self[2].reshape(-1)]
        ).reshape(1, 3 * D).astype(jnp.float32),
        "wo_self": w_self[3].astype(wdt),
        "bo_self": b_self[3].reshape(1, D).astype(jnp.float32),
        # cross-attention: Q projection of x; fused [Wk | Wv] projection of memory
        "wq_cross": (w_cross[0] * scale).astype(wdt),
        "bq_cross": (b_cross[0].reshape(-1) * scale).reshape(1, D).astype(jnp.float32),
        "wkv_cross": jnp.concatenate([w_cross[1], w_cross[2]], axis=1).astype(wdt),
        "bkv_cross": jnp.concatenate(
            [b_cross[1].reshape(-1), b_cross[2].reshape(-1)]
        ).reshape(1, 2 * D).astype(jnp.float32),
        "wo_cross": w_cross[3].astype(wdt),
        "bo_cross": b_cross[3].reshape(1, D).astype(jnp.float32),
        # FFN
        "w1": params["w1"].astype(wdt),
        "b1": params["b1"].reshape(1, Dff).astype(jnp.float32),
        "w2": params["w2"].astype(wdt),
        "b2": params["b2"].reshape(1, D).astype(jnp.float32),
        # LayerNorms
        "ln_g": params["ln_g"].astype(jnp.float32),
        "ln_b": params["ln_b"].astype(jnp.float32),
    }


def _batch_grid_blocks(batch):
    # Split the batch across TensorCores only where there are 2 of them (v7x);
    # v5e/v6e are single-TC, so folding the batch into one block avoids a serial
    # grid loop and doubles the matmul M dimension.
    try:
        kind = jax.devices()[0].device_kind.lower()
        cores = 2 if ("v7" in kind or "7x" in kind) else 1
    except Exception:
        cores = 1
    return cores if (cores > 1 and batch % cores == 0) else 1


def decoder_layer(x, memory, tgt_mask, src_mask, prepared, num_heads):
    B, T, D = x.shape
    S = memory.shape[1]
    Dff = prepared["w1"].shape[1]
    H = num_heads

    # Additive mask bias, computed once per call in the wrapper (outside the kernel).
    neg = jnp.float32(-1e9)
    tbias = jnp.where(tgt_mask > 0, 0.0, neg).astype(jnp.float32)   # (T, T)
    sbias = jnp.where(src_mask > 0, 0.0, neg).astype(jnp.float32)   # (T, S)

    nb = _batch_grid_blocks(B)
    Bb = B // nb

    operands = (x, memory, tbias, sbias,
                prepared["wqkv_self"], prepared["bqkv_self"],
                prepared["wo_self"], prepared["bo_self"],
                prepared["wq_cross"], prepared["bq_cross"],
                prepared["wkv_cross"], prepared["bkv_cross"],
                prepared["wo_cross"], prepared["bo_cross"],
                prepared["w1"], prepared["b1"], prepared["w2"], prepared["b2"],
                prepared["ln_g"], prepared["ln_b"])

    def const_spec(shape):
        n = len(shape)
        return pl.BlockSpec(shape, lambda b, n=n: (0,) * n)

    in_specs = [
        pl.BlockSpec((Bb, T, D), lambda b: (b, 0, 0)),   # x
        pl.BlockSpec((Bb, S, D), lambda b: (b, 0, 0)),   # memory
        const_spec((T, T)),                              # tgt additive bias
        const_spec((T, S)),                              # src additive bias
        const_spec((D, 3 * D)),                          # self-attn fused Wqkv
        const_spec((1, 3 * D)),                          # self-attn fused bqkv
        const_spec((D, D)),                              # self-attn Wo
        const_spec((1, D)),                              # self-attn bo
        const_spec((D, D)),                              # cross-attn Wq
        const_spec((1, D)),                              # cross-attn bq
        const_spec((D, 2 * D)),                          # cross-attn fused Wkv
        const_spec((1, 2 * D)),                          # cross-attn fused bkv
        const_spec((D, D)),                              # cross-attn Wo
        const_spec((1, D)),                              # cross-attn bo
        const_spec((D, Dff)),                            # ffn W1
        const_spec((1, Dff)),                            # ffn b1
        const_spec((Dff, D)),                            # ffn W2
        const_spec((1, D)),                              # ffn b2
        const_spec((3, D)),                              # layernorm gains
        const_spec((3, D)),                              # layernorm biases
    ]
    out_specs = pl.BlockSpec((Bb, T, D), lambda b: (b, 0, 0))  # lane-dense (D % 128 == 0)

    # Advisory cost estimate for the XLA scheduler.
    flops = 2 * B * (T * D * 3 * D + 2 * T * T * D + T * D * D            # self-attn
                     + T * D * D + S * D * 2 * D + 2 * T * S * D + T * D * D  # cross-attn
                     + 2 * T * D * Dff)                                   # ffn
    transcendentals = B * H * (T * T + T * S)
    bytes_accessed = sum(int(a.size) * a.dtype.itemsize for a in operands) + int(x.size) * 4
    cost = pl.CostEstimate(flops=int(flops), transcendentals=int(transcendentals),
                           bytes_accessed=int(bytes_accessed))

    kernel = functools.partial(_decoder_layer_kernel, num_heads=H)

    return pl.pallas_call(
        kernel,
        out_shape=jax.ShapeDtypeStruct((B, T, D), jnp.float32),
        grid_spec=pltpu.PrefetchScalarGridSpec(
            num_scalar_prefetch=0,
            grid=(nb,),
            in_specs=in_specs,
            out_specs=out_specs,
        ),
        compiler_params=pltpu.CompilerParams(
            dimension_semantics=("parallel",),            # batch across TCs on v7x
            vmem_limit_bytes=16 * 1024 * 1024,            # working set < 2 MiB; headroom
        ),
        cost_estimate=cost,
    )(*operands)


def reference_decoder_layer(x, memory, tgt_mask, src_mask, params, num_heads):
    """Pure-JAX f32 reference with the original (per-head, unfused) math."""
    D = x.shape[-1]
    dk = D // num_heads
    scale = 1.0 / math.sqrt(dk)

    def layer_norm(v, g, b):
        mu = jnp.mean(v, axis=-1, keepdims=True)
        diff = v - mu
        std = jnp.sqrt(jnp.sum(diff * diff, axis=-1, keepdims=True) / (D - 1))
        return g * diff / (std + 1e-6) + b

    def mha(q_in, kv_in, w, b, mask):
        q = q_in @ w[0] + b[0]
        k = kv_in @ w[1] + b[1]
        v = kv_in @ w[2] + b[2]
        outs = []
        for h in range(num_heads):
            qs, ks, vs = (t[:, h * dk:(h + 1) * dk] for t in (q, k, v))
            sc = qs @ ks.T * scale
            sc = jnp.where(mask > 0, sc, -1e9)
            p = jax.nn.softmax(sc, axis=-1)
            outs.append(p @ vs)
        return jnp.concatenate(outs, axis=-1) @ w[3] + b[3]

    def one(xi, mi):
        n0 = layer_norm(xi, params["ln_g"][0], params["ln_b"][0])
        xi = xi + mha(n0, n0, params["w_self"], params["b_self"], tgt_mask)
        n1 = layer_norm(xi, params["ln_g"][1], params["ln_b"][1])
        xi = xi + mha(n1, mi, params["w_cross"], params["b_cross"], src_mask)
        n2 = layer_norm(xi, params["ln_g"][2], params["ln_b"][2])
        hid = jnp.maximum(n2 @ params["w1"] + params["b1"][0], 0.0)
        return xi + hid @ params["w2"] + params["b2"][0]

    return jax.vmap(one)(x, memory)


if __name__ == "__main__":
    B, T, S, D, H, Dff = 2, 16, 32, 128, 4, 512

    key = jax.random.PRNGKey(0)
    keys = jax.random.split(key, 10)

    x = jax.random.normal(keys[0], (B, T, D), dtype=jnp.float32)
    memory = jax.random.normal(keys[1], (B, S, D), dtype=jnp.float32)
    # Causal target mask, all-ones source mask (1.0 = attend, 0.0 = masked).
    tgt_mask = jnp.tril(jnp.ones((T, T), dtype=jnp.float32))
    src_mask = jnp.ones((T, S), dtype=jnp.float32)

    init = 0.05
    params = {
        "w_self":  init * jax.random.normal(keys[2], (4, D, D), dtype=jnp.float32),
        "b_self":  init * jax.random.normal(keys[3], (4, D), dtype=jnp.float32),
        "w_cross": init * jax.random.normal(keys[4], (4, D, D), dtype=jnp.float32),
        "b_cross": init * jax.random.normal(keys[5], (4, D), dtype=jnp.float32),
        "w1":      init * jax.random.normal(keys[6], (D, Dff), dtype=jnp.float32),
        "b1":      init * jax.random.normal(keys[7], (1, Dff), dtype=jnp.float32),
        "w2":      init * jax.random.normal(keys[8], (Dff, D), dtype=jnp.float32),
        "b2":      init * jax.random.normal(keys[9], (1, D), dtype=jnp.float32),
        "ln_g":    jnp.ones((3, D), dtype=jnp.float32),
        "ln_b":    jnp.zeros((3, D), dtype=jnp.float32),
    }

    # One-time weight packing (not on the per-call path).
    prepared = jax.block_until_ready(prepare_params(params, num_heads=H))

    out = decoder_layer(x, memory, tgt_mask, src_mask, prepared, num_heads=H)
    out = jax.block_until_ready(out)

    ref = reference_decoder_layer(x, memory, tgt_mask, src_mask, params, num_heads=H)
    assert out.shape == (B, T, D)
    # bf16 MXU operands (f32 accumulation) vs. a pure-f32 reference -> looser tolerance.
    assert jnp.allclose(out, ref, atol=5e-2, rtol=5e-2), "mismatch vs JAX reference"

    print("KERNEL_OK")
</pallas_src>

<mosaic_0001>
module attributes {stable_mosaic.version = 11 : i64} {
  func.func @_decoder_layer_kernel(%arg0: i32, %arg1: memref<2x16x128xf32, #tpu.memory_space<vmem>>, %arg2: memref<2x32x128xf32, #tpu.memory_space<vmem>>, %arg3: memref<16x16xf32, #tpu.memory_space<vmem>>, %arg4: memref<16x32xf32, #tpu.memory_space<vmem>>, %arg5: memref<128x384xbf16, #tpu.memory_space<vmem>>, %arg6: memref<1x384xf32, #tpu.memory_space<vmem>>, %arg7: memref<128x128xbf16, #tpu.memory_space<vmem>>, %arg8: memref<1x128xf32, #tpu.memory_space<vmem>>, %arg9: memref<128x128xbf16, #tpu.memory_space<vmem>>, %arg10: memref<1x128xf32, #tpu.memory_space<vmem>>, %arg11: memref<128x256xbf16, #tpu.memory_space<vmem>>, %arg12: memref<1x256xf32, #tpu.memory_space<vmem>>, %arg13: memref<128x128xbf16, #tpu.memory_space<vmem>>, %arg14: memref<1x128xf32, #tpu.memory_space<vmem>>, %arg15: memref<128x512xbf16, #tpu.memory_space<vmem>>, %arg16: memref<1x512xf32, #tpu.memory_space<vmem>>, %arg17: memref<512x128xbf16, #tpu.memory_space<vmem>>, %arg18: memref<1x128xf32, #tpu.memory_space<vmem>>, %arg19: memref<3x128xf32, #tpu.memory_space<vmem>>, %arg20: memref<3x128xf32, #tpu.memory_space<vmem>>, %arg21: memref<2x16x128xf32, #tpu.memory_space<vmem>>) attributes {dimension_semantics = [#tpu.dimension_semantics<parallel>], iteration_bounds = array<i64: 1>, scalar_prefetch = 0 : i64, scratch_operands = 0 : i64, tpu.core_type = #tpu.core_type<tc>, window_params = [{transform_indices = @transform_0, window_bounds = array<i64: 2, 16, 128>}, {transform_indices = @transform_1, window_bounds = array<i64: 2, 32, 128>}, {pipeline_mode = #tpu.pipeline_mode<synchronous>, transform_indices = @transform_2, window_bounds = array<i64: 16, 16>}, {pipeline_mode = #tpu.pipeline_mode<synchronous>, transform_indices = @transform_3, window_bounds = array<i64: 16, 32>}, {pipeline_mode = #tpu.pipeline_mode<synchronous>, transform_indices = @transform_4, window_bounds = array<i64: 128, 384>}, {pipeline_mode = #tpu.pipeline_mode<synchronous>, transform_indices = @transform_5, window_bounds = array<i64: 1, 384>}, {pipeline_mode = #tpu.pipeline_mode<synchronous>, transform_indices = @transform_6, window_bounds = array<i64: 128, 128>}, {pipeline_mode = #tpu.pipeline_mode<synchronous>, transform_indices = @transform_7, window_bounds = array<i64: 1, 128>}, {pipeline_mode = #tpu.pipeline_mode<synchronous>, transform_indices = @transform_8, window_bounds = array<i64: 128, 128>}, {pipeline_mode = #tpu.pipeline_mode<synchronous>, transform_indices = @transform_9, window_bounds = array<i64: 1, 128>}, {pipeline_mode = #tpu.pipeline_mode<synchronous>, transform_indices = @transform_10, window_bounds = array<i64: 128, 256>}, {pipeline_mode = #tpu.pipeline_mode<synchronous>, transform_indices = @transform_11, window_bounds = array<i64: 1, 256>}, {pipeline_mode = #tpu.pipeline_mode<synchronous>, transform_indices = @transform_12, window_bounds = array<i64: 128, 128>}, {pipeline_mode = #tpu.pipeline_mode<synchronous>, transform_indices = @transform_13, window_bounds = array<i64: 1, 128>}, {pipeline_mode = #tpu.pipeline_mode<synchronous>, transform_indices = @transform_14, window_bounds = array<i64: 128, 512>}, {pipeline_mode = #tpu.pipeline_mode<synchronous>, transform_indices = @transform_15, window_bounds = array<i64: 1, 512>}, {pipeline_mode = #tpu.pipeline_mode<synchronous>, transform_indices = @transform_16, window_bounds = array<i64: 512, 128>}, {pipeline_mode = #tpu.pipeline_mode<synchronous>, transform_indices = @transform_17, window_bounds = array<i64: 1, 128>}, {pipeline_mode = #tpu.pipeline_mode<synchronous>, transform_indices = @transform_18, window_bounds = array<i64: 3, 128>}, {pipeline_mode = #tpu.pipeline_mode<synchronous>, transform_indices = @transform_19, window_bounds = array<i64: 3, 128>}, {transform_indices = @transform_20, window_bounds = array<i64: 2, 16, 128>}]} {
    %c0 = arith.constant 0 : index
    %c0_0 = arith.constant 0 : index
    %c0_1 = arith.constant 0 : index
    %0 = vector.load %arg1[%c0, %c0_0, %c0_1] : memref<2x16x128xf32, #tpu.memory_space<vmem>>, vector<2x16x128xf32>
    %1 = vector.shape_cast %0 : vector<2x16x128xf32> to vector<32x128xf32>
    %c0_2 = arith.constant 0 : index
    %c0_3 = arith.constant 0 : index
    %c0_4 = arith.constant 0 : index
    %2 = vector.load %arg2[%c0_2, %c0_3, %c0_4] : memref<2x32x128xf32, #tpu.memory_space<vmem>>, vector<2x32x128xf32>
    %3 = arith.truncf %2 : vector<2x32x128xf32> to vector<2x32x128xbf16>
    %4 = vector.shape_cast %3 : vector<2x32x128xbf16> to vector<64x128xbf16>
    %c0_5 = arith.constant 0 : index
    %c0_6 = arith.constant 0 : index
    %5 = vector.load %arg3[%c0_5, %c0_6] : memref<16x16xf32, #tpu.memory_space<vmem>>, vector<16x16xf32>
    %c0_7 = arith.constant 0 : index
    %c0_8 = arith.constant 0 : index
    %6 = vector.load %arg4[%c0_7, %c0_8] : memref<16x32xf32, #tpu.memory_space<vmem>>, vector<16x32xf32>
    %c0_9 = arith.constant 0 : index
    %c0_10 = arith.constant 0 : index
    %7 = vector.load %arg19[%c0_9, %c0_10] : memref<3x128xf32, #tpu.memory_space<vmem>>, vector<1x128xf32>
    %8 = vector.shape_cast %7 : vector<1x128xf32> to vector<128xf32>
    %c0_11 = arith.constant 0 : index
    %c0_12 = arith.constant 0 : index
    %9 = vector.load %arg20[%c0_11, %c0_12] : memref<3x128xf32, #tpu.memory_space<vmem>>, vector<1x128xf32>
    %10 = vector.shape_cast %9 : vector<1x128xf32> to vector<128xf32>
    %cst = arith.constant dense<0.000000e+00> : vector<32xf32>
    %11 = vector.multi_reduction <add>, %1, %cst [1] : vector<32x128xf32> to vector<32xf32>
    %12 = vector.shape_cast %11 : vector<32xf32> to vector<32x1xf32>
    %cst_13 = arith.constant 1.280000e+02 : f32
    %13 = vector.broadcast %cst_13 : f32 to vector<32x1xf32>
    %14 = arith.divf %12, %13 : vector<32x1xf32>
    %15 = vector.broadcast %14 : vector<32x1xf32> to vector<32x128xf32>
    %16 = arith.subf %1, %15 : vector<32x128xf32>
    %17 = arith.mulf %16, %16 : vector<32x128xf32>
    %cst_14 = arith.constant dense<0.000000e+00> : vector<32xf32>
    %18 = vector.multi_reduction <add>, %17, %cst_14 [1] : vector<32x128xf32> to vector<32xf32>
    %19 = vector.shape_cast %18 : vector<32xf32> to vector<32x1xf32>
    %cst_15 = arith.constant 1.270000e+02 : f32
    %20 = vector.broadcast %cst_15 : f32 to vector<32x1xf32>
    %21 = arith.divf %19, %20 : vector<32x1xf32>
    %22 = math.sqrt %21 : vector<32x1xf32>
    %23 = vector.shape_cast %8 : vector<128xf32> to vector<1x128xf32>
    %24 = vector.broadcast %23 : vector<1x128xf32> to vector<32x128xf32>
    %25 = arith.mulf %24, %16 : vector<32x128xf32>
    %cst_16 = arith.constant 9.99999997E-7 : f32
    %26 = vector.broadcast %cst_16 : f32 to vector<32x1xf32>
    %27 = arith.addf %22, %26 : vector<32x1xf32>
    %28 = vector.broadcast %27 : vector<32x1xf32> to vector<32x128xf32>
    %29 = arith.divf %25, %28 : vector<32x128xf32>
    %30 = vector.shape_cast %10 : vector<128xf32> to vector<1x128xf32>
    %31 = vector.broadcast %30 : vector<1x128xf32> to vector<32x128xf32>
    %32 = arith.addf %29, %31 : vector<32x128xf32>
    %33 = arith.truncf %32 : vector<32x128xf32> to vector<32x128xbf16>
    %c0_17 = arith.constant 0 : index
    %c0_18 = arith.constant 0 : index
    %34 = vector.load %arg5[%c0_17, %c0_18] : memref<128x384xbf16, #tpu.memory_space<vmem>>, vector<128x384xbf16>
    %cst_19 = arith.constant dense<0.000000e+00> : vector<32x384xf32>
    %35 = tpu.matmul %33, %34, %cst_19 {dimension_numbers = #tpu.dot_dimension_numbers<[1], [0], [0], [1], [0, 0, 1, 1], [], []>} : vector<32x128xbf16>, vector<128x384xbf16>, vector<32x384xf32> -> vector<32x384xf32>
    %c0_20 = arith.constant 0 : index
    %c0_21 = arith.constant 0 : index
    %36 = vector.load %arg6[%c0_20, %c0_21] : memref<1x384xf32, #tpu.memory_space<vmem>>, vector<1x384xf32>
    %37 = vector.broadcast %36 : vector<1x384xf32> to vector<32x384xf32>
    %38 = arith.addf %35, %37 : vector<32x384xf32>
    %39 = vector.extract_strided_slice %38 {offsets = [0, 0], sizes = [32, 128], strides = [1, 1]} : vector<32x384xf32> to vector<32x128xf32>
    %40 = vector.extract_strided_slice %38 {offsets = [0, 128], sizes = [32, 128], strides = [1, 1]} : vector<32x384xf32> to vector<32x128xf32>
    %41 = vector.extract_strided_slice %38 {offsets = [0, 256], sizes = [32, 128], strides = [1, 1]} : vector<32x384xf32> to vector<32x128xf32>
    %42 = arith.truncf %39 : vector<32x128xf32> to vector<32x128xbf16>
    %43 = vector.shape_cast %42 : vector<32x128xbf16> to vector<2x16x4x32xbf16>
    %44 = tpu.transpose %43, [0, 2, 1, 3] : vector<2x16x4x32xbf16> -> vector<2x4x16x32xbf16>
    %45 = vector.shape_cast %44 : vector<2x4x16x32xbf16> to vector<8x16x32xbf16>
    %46 = arith.truncf %40 : vector<32x128xf32> to vector<32x128xbf16>
    %47 = vector.shape_cast %46 : vector<32x128xbf16> to vector<2x16x4x32xbf16>
    %48 = tpu.transpose %47, [0, 2, 1, 3] : vector<2x16x4x32xbf16> -> vector<2x4x16x32xbf16>
    %49 = vector.shape_cast %48 : vector<2x4x16x32xbf16> to vector<8x16x32xbf16>
    %50 = arith.truncf %41 : vector<32x128xf32> to vector<32x128xbf16>
    %51 = vector.shape_cast %50 : vector<32x128xbf16> to vector<2x16x4x32xbf16>
    %52 = tpu.transpose %51, [0, 2, 1, 3] : vector<2x16x4x32xbf16> -> vector<2x4x16x32xbf16>
    %53 = vector.shape_cast %52 : vector<2x4x16x32xbf16> to vector<8x16x32xbf16>
    "tpu.trace_start"() <{level = 10 : i32, message = "btf,bsf->bts"}> : () -> ()
    %cst_22 = arith.constant dense<0.000000e+00> : vector<8x16x16xf32>
    %54 = tpu.matmul %45, %49, %cst_22 {dimension_numbers = #tpu.dot_dimension_numbers<[2], [2], [1], [1], [0, 0, 0, 1, 1, 1], [0], [0]>} : vector<8x16x32xbf16>, vector<8x16x32xbf16>, vector<8x16x16xf32> -> vector<8x16x16xf32>
    "tpu.trace_stop"() : () -> ()
    %55 = vector.shape_cast %5 : vector<16x16xf32> to vector<1x16x16xf32>
    %56 = vector.broadcast %55 : vector<1x16x16xf32> to vector<8x16x16xf32>
    %57 = arith.addf %54, %56 : vector<8x16x16xf32>
    %cst_23 = arith.constant dense<0xFF800000> : vector<8x16xf32>
    %58 = vector.multi_reduction <maximumf>, %57, %cst_23 [2] : vector<8x16x16xf32> to vector<8x16xf32>
    %59 = vector.shape_cast %58 : vector<8x16xf32> to vector<8x16x1xf32>
    %60 = vector.broadcast %59 : vector<8x16x1xf32> to vector<8x16x16xf32>
    %61 = arith.subf %57, %60 : vector<8x16x16xf32>
    %62 = math.exp %61 : vector<8x16x16xf32>
    %cst_24 = arith.constant dense<0.000000e+00> : vector<8x16xf32>
    %63 = vector.multi_reduction <add>, %62, %cst_24 [2] : vector<8x16x16xf32> to vector<8x16xf32>
    %64 = vector.shape_cast %63 : vector<8x16xf32> to vector<8x16x1xf32>
    %65 = tpu.reciprocal %64 {approx = true} : vector<8x16x1xf32> -> vector<8x16x1xf32>
    %66 = vector.broadcast %65 : vector<8x16x1xf32> to vector<8x16x16xf32>
    %67 = arith.mulf %62, %66 : vector<8x16x16xf32>
    %68 = arith.truncf %67 : vector<8x16x16xf32> to vector<8x16x16xbf16>
    "tpu.trace_start"() <{level = 10 : i32, message = "bts,bsf->btf"}> : () -> ()
    %cst_25 = arith.constant dense<0.000000e+00> : vector<8x16x32xf32>
    %69 = tpu.matmul %68, %53, %cst_25 {dimension_numbers = #tpu.dot_dimension_numbers<[2], [1], [1], [2], [0, 0, 0, 1, 1, 2], [0], [0]>} : vector<8x16x16xbf16>, vector<8x16x32xbf16>, vector<8x16x32xf32> -> vector<8x16x32xf32>
    "tpu.trace_stop"() : () -> ()
    %70 = vector.shape_cast %69 : vector<8x16x32xf32> to vector<2x4x16x32xf32>
    %71 = tpu.transpose %70, [0, 2, 1, 3] : vector<2x4x16x32xf32> -> vector<2x16x4x32xf32>
    %72 = vector.shape_cast %71 : vector<2x16x4x32xf32> to vector<32x128xf32>
    %73 = arith.truncf %72 : vector<32x128xf32> to vector<32x128xbf16>
    %c0_26 = arith.constant 0 : index
    %c0_27 = arith.constant 0 : index
    %74 = vector.load %arg7[%c0_26, %c0_27] : memref<128x128xbf16, #tpu.memory_space<vmem>>, vector<128x128xbf16>
    %cst_28 = arith.constant dense<0.000000e+00> : vector<32x128xf32>
    %75 = tpu.matmul %73, %74, %cst_28 {dimension_numbers = #tpu.dot_dimension_numbers<[1], [0], [0], [1], [0, 0, 1, 1], [], []>} : vector<32x128xbf16>, vector<128x128xbf16>, vector<32x128xf32> -> vector<32x128xf32>
    %c0_29 = arith.constant 0 : index
    %c0_30 = arith.constant 0 : index
    %76 = vector.load %arg8[%c0_29, %c0_30] : memref<1x128xf32, #tpu.memory_space<vmem>>, vector<1x128xf32>
    %77 = vector.broadcast %76 : vector<1x128xf32> to vector<32x128xf32>
    %78 = arith.addf %75, %77 : vector<32x128xf32>
    %79 = arith.addf %1, %78 : vector<32x128xf32>
    %c1 = arith.constant 1 : index
    %c0_31 = arith.constant 0 : index
    %80 = vector.load %arg19[%c1, %c0_31] : memref<3x128xf32, #tpu.memory_space<vmem>>, vector<1x128xf32>
    %81 = vector.shape_cast %80 : vector<1x128xf32> to vector<128xf32>
    %c1_32 = arith.constant 1 : index
    %c0_33 = arith.constant 0 : index
    %82 = vector.load %arg20[%c1_32, %c0_33] : memref<3x128xf32, #tpu.memory_space<vmem>>, vector<1x128xf32>
    %83 = vector.shape_cast %82 : vector<1x128xf32> to vector<128xf32>
    %cst_34 = arith.constant dense<0.000000e+00> : vector<32xf32>
    %84 = vector.multi_reduction <add>, %79, %cst_34 [1] : vector<32x128xf32> to vector<32xf32>
    %85 = vector.shape_cast %84 : vector<32xf32> to vector<32x1xf32>
    %cst_35 = arith.constant 1.280000e+02 : f32
    %86 = vector.broadcast %cst_35 : f32 to vector<32x1xf32>
    %87 = arith.divf %85, %86 : vector<32x1xf32>
    %88 = vector.broadcast %87 : vector<32x1xf32> to vector<32x128xf32>
    %89 = arith.subf %79, %88 : vector<32x128xf32>
    %90 = arith.mulf %89, %89 : vector<32x128xf32>
    %cst_36 = arith.constant dense<0.000000e+00> : vector<32xf32>
    %91 = vector.multi_reduction <add>, %90, %cst_36 [1] : vector<32x128xf32> to vector<32xf32>
    %92 = vector.shape_cast %91 : vector<32xf32> to vector<32x1xf32>
    %cst_37 = arith.constant 1.270000e+02 : f32
    %93 = vector.broadcast %cst_37 : f32 to vector<32x1xf32>
    %94 = arith.divf %92, %93 : vector<32x1xf32>
    %95 = math.sqrt %94 : vector<32x1xf32>
    %96 = vector.shape_cast %81 : vector<128xf32> to vector<1x128xf32>
    %97 = vector.broadcast %96 : vector<1x128xf32> to vector<32x128xf32>
    %98 = arith.mulf %97, %89 : vector<32x128xf32>
    %cst_38 = arith.constant 9.99999997E-7 : f32
    %99 = vector.broadcast %cst_38 : f32 to vector<32x1xf32>
    %100 = arith.addf %95, %99 : vector<32x1xf32>
    %101 = vector.broadcast %100 : vector<32x1xf32> to vector<32x128xf32>
    %102 = arith.divf %98, %101 : vector<32x128xf32>
    %103 = vector.shape_cast %83 : vector<128xf32> to vector<1x128xf32>
    %104 = vector.broadcast %103 : vector<1x128xf32> to vector<32x128xf32>
    %105 = arith.addf %102, %104 : vector<32x128xf32>
    %106 = arith.truncf %105 : vector<32x128xf32> to vector<32x128xbf16>
    %c0_39 = arith.constant 0 : index
    %c0_40 = arith.constant 0 : index
    %107 = vector.load %arg9[%c0_39, %c0_40] : memref<128x128xbf16, #tpu.memory_space<vmem>>, vector<128x128xbf16>
    %cst_41 = arith.constant dense<0.000000e+00> : vector<32x128xf32>
    %108 = tpu.matmul %106, %107, %cst_41 {dimension_numbers = #tpu.dot_dimension_numbers<[1], [0], [0], [1], [0, 0, 1, 1], [], []>} : vector<32x128xbf16>, vector<128x128xbf16>, vector<32x128xf32> -> vector<32x128xf32>
    %c0_42 = arith.constant 0 : index
    %c0_43 = arith.constant 0 : index
    %109 = vector.load %arg10[%c0_42, %c0_43] : memref<1x128xf32, #tpu.memory_space<vmem>>, vector<1x128xf32>
    %110 = vector.broadcast %109 : vector<1x128xf32> to vector<32x128xf32>
    %111 = arith.addf %108, %110 : vector<32x128xf32>
    %c0_44 = arith.constant 0 : index
    %c0_45 = arith.constant 0 : index
    %112 = vector.load %arg11[%c0_44, %c0_45] : memref<128x256xbf16, #tpu.memory_space<vmem>>, vector<128x256xbf16>
    %cst_46 = arith.constant dense<0.000000e+00> : vector<64x256xf32>
    %113 = tpu.matmul %4, %112, %cst_46 {dimension_numbers = #tpu.dot_dimension_numbers<[1], [0], [0], [1], [0, 0, 1, 1], [], []>} : vector<64x128xbf16>, vector<128x256xbf16>, vector<64x256xf32> -> vector<64x256xf32>
    %c0_47 = arith.constant 0 : index
    %c0_48 = arith.constant 0 : index
    %114 = vector.load %arg12[%c0_47, %c0_48] : memref<1x256xf32, #tpu.memory_space<vmem>>, vector<1x256xf32>
    %115 = vector.broadcast %114 : vector<1x256xf32> to vector<64x256xf32>
    %116 = arith.addf %113, %115 : vector<64x256xf32>
    %117 = vector.extract_strided_slice %116 {offsets = [0, 0], sizes = [64, 128], strides = [1, 1]} : vector<64x256xf32> to vector<64x128xf32>
    %118 = vector.extract_strided_slice %116 {offsets = [0, 128], sizes = [64, 128], strides = [1, 1]} : vector<64x256xf32> to vector<64x128xf32>
    %119 = arith.truncf %111 : vector<32x128xf32> to vector<32x128xbf16>
    %120 = vector.shape_cast %119 : vector<32x128xbf16> to vector<2x16x4x32xbf16>
    %121 = tpu.transpose %120, [0, 2, 1, 3] : vector<2x16x4x32xbf16> -> vector<2x4x16x32xbf16>
    %122 = vector.shape_cast %121 : vector<2x4x16x32xbf16> to vector<8x16x32xbf16>
    %123 = arith.truncf %117 : vector<64x128xf32> to vector<64x128xbf16>
    %124 = vector.shape_cast %123 : vector<64x128xbf16> to vector<2x32x4x32xbf16>
    %125 = tpu.transpose %124, [0, 2, 1, 3] : vector<2x32x4x32xbf16> -> vector<2x4x32x32xbf16>
    %126 = vector.shape_cast %125 : vector<2x4x32x32xbf16> to vector<8x32x32xbf16>
    %127 = arith.truncf %118 : vector<64x128xf32> to vector<64x128xbf16>
    %128 = vector.shape_cast %127 : vector<64x128xbf16> to vector<2x32x4x32xbf16>
    %129 = tpu.transpose %128, [0, 2, 1, 3] : vector<2x32x4x32xbf16> -> vector<2x4x32x32xbf16>
    %130 = vector.shape_cast %129 : vector<2x4x32x32xbf16> to vector<8x32x32xbf16>
    "tpu.trace_start"() <{level = 10 : i32, message = "btf,bsf->bts"}> : () -> ()
    %cst_49 = arith.constant dense<0.000000e+00> : vector<8x16x32xf32>
    %131 = tpu.matmul %122, %126, %cst_49 {dimension_numbers = #tpu.dot_dimension_numbers<[2], [2], [1], [1], [0, 0, 0, 1, 1, 1], [0], [0]>} : vector<8x16x32xbf16>, vector<8x32x32xbf16>, vector<8x16x32xf32> -> vector<8x16x32xf32>
    "tpu.trace_stop"() : () -> ()
    %132 = vector.shape_cast %6 : vector<16x32xf32> to vector<1x16x32xf32>
    %133 = vector.broadcast %132 : vector<1x16x32xf32> to vector<8x16x32xf32>
    %134 = arith.addf %131, %133 : vector<8x16x32xf32>
    %cst_50 = arith.constant dense<0xFF800000> : vector<8x16xf32>
    %135 = vector.multi_reduction <maximumf>, %134, %cst_50 [2] : vector<8x16x32xf32> to vector<8x16xf32>
    %136 = vector.shape_cast %135 : vector<8x16xf32> to vector<8x16x1xf32>
    %137 = vector.broadcast %136 : vector<8x16x1xf32> to vector<8x16x32xf32>
    %138 = arith.subf %134, %137 : vector<8x16x32xf32>
    %139 = math.exp %138 : vector<8x16x32xf32>
    %cst_51 = arith.constant dense<0.000000e+00> : vector<8x16xf32>
    %140 = vector.multi_reduction <add>, %139, %cst_51 [2] : vector<8x16x32xf32> to vector<8x16xf32>
    %141 = vector.shape_cast %140 : vector<8x16xf32> to vector<8x16x1xf32>
    %142 = tpu.reciprocal %141 {approx = true} : vector<8x16x1xf32> -> vector<8x16x1xf32>
    %143 = vector.broadcast %142 : vector<8x16x1xf32> to vector<8x16x32xf32>
    %144 = arith.mulf %139, %143 : vector<8x16x32xf32>
    %145 = arith.truncf %144 : vector<8x16x32xf32> to vector<8x16x32xbf16>
    "tpu.trace_start"() <{level = 10 : i32, message = "bts,bsf->btf"}> : () -> ()
    %cst_52 = arith.constant dense<0.000000e+00> : vector<8x16x32xf32>
    %146 = tpu.matmul %145, %130, %cst_52 {dimension_numbers = #tpu.dot_dimension_numbers<[2], [1], [1], [2], [0, 0, 0, 1, 1, 2], [0], [0]>} : vector<8x16x32xbf16>, vector<8x32x32xbf16>, vector<8x16x32xf32> -> vector<8x16x32xf32>
    "tpu.trace_stop"() : () -> ()
    %147 = vector.shape_cast %146 : vector<8x16x32xf32> to vector<2x4x16x32xf32>
    %148 = tpu.transpose %147, [0, 2, 1, 3] : vector<2x4x16x32xf32> -> vector<2x16x4x32xf32>
    %149 = vector.shape_cast %148 : vector<2x16x4x32xf32> to vector<32x128xf32>
    %150 = arith.truncf %149 : vector<32x128xf32> to vector<32x128xbf16>
    %c0_53 = arith.constant 0 : index
    %c0_54 = arith.constant 0 : index
    %151 = vector.load %arg13[%c0_53, %c0_54] : memref<128x128xbf16, #tpu.memory_space<vmem>>, vector<128x128xbf16>
    %cst_55 = arith.constant dense<0.000000e+00> : vector<32x128xf32>
    %152 = tpu.matmul %150, %151, %cst_55 {dimension_numbers = #tpu.dot_dimension_numbers<[1], [0], [0], [1], [0, 0, 1, 1], [], []>} : vector<32x128xbf16>, vector<128x128xbf16>, vector<32x128xf32> -> vector<32x128xf32>
    %c0_56 = arith.constant 0 : index
    %c0_57 = arith.constant 0 : index
    %153 = vector.load %arg14[%c0_56, %c0_57] : memref<1x128xf32, #tpu.memory_space<vmem>>, vector<1x128xf32>
    %154 = vector.broadcast %153 : vector<1x128xf32> to vector<32x128xf32>
    %155 = arith.addf %152, %154 : vector<32x128xf32>
    %156 = arith.addf %79, %155 : vector<32x128xf32>
    %c2 = arith.constant 2 : index
    %c0_58 = arith.constant 0 : index
    %157 = vector.load %arg19[%c2, %c0_58] : memref<3x128xf32, #tpu.memory_space<vmem>>, vector<1x128xf32>
    %158 = vector.shape_cast %157 : vector<1x128xf32> to vector<128xf32>
    %c2_59 = arith.constant 2 : index
    %c0_60 = arith.constant 0 : index
    %159 = vector.load %arg20[%c2_59, %c0_60] : memref<3x128xf32, #tpu.memory_space<vmem>>, vector<1x128xf32>
    %160 = vector.shape_cast %159 : vector<1x128xf32> to vector<128xf32>
    %cst_61 = arith.constant dense<0.000000e+00> : vector<32xf32>
    %161 = vector.multi_reduction <add>, %156, %cst_61 [1] : vector<32x128xf32> to vector<32xf32>
    %162 = vector.shape_cast %161 : vector<32xf32> to vector<32x1xf32>
    %cst_62 = arith.constant 1.280000e+02 : f32
    %163 = vector.broadcast %cst_62 : f32 to vector<32x1xf32>
    %164 = arith.divf %162, %163 : vector<32x1xf32>
    %165 = vector.broadcast %164 : vector<32x1xf32> to vector<32x128xf32>
    %166 = arith.subf %156, %165 : vector<32x128xf32>
    %167 = arith.mulf %166, %166 : vector<32x128xf32>
    %cst_63 = arith.constant dense<0.000000e+00> : vector<32xf32>
    %168 = vector.multi_reduction <add>, %167, %cst_63 [1] : vector<32x128xf32> to vector<32xf32>
    %169 = vector.shape_cast %168 : vector<32xf32> to vector<32x1xf32>
    %cst_64 = arith.constant 1.270000e+02 : f32
    %170 = vector.broadcast %cst_64 : f32 to vector<32x1xf32>
    %171 = arith.divf %169, %170 : vector<32x1xf32>
    %172 = math.sqrt %171 : vector<32x1xf32>
    %173 = vector.shape_cast %158 : vector<128xf32> to vector<1x128xf32>
    %174 = vector.broadcast %173 : vector<1x128xf32> to vector<32x128xf32>
    %175 = arith.mulf %174, %166 : vector<32x128xf32>
    %cst_65 = arith.constant 9.99999997E-7 : f32
    %176 = vector.broadcast %cst_65 : f32 to vector<32x1xf32>
    %177 = arith.addf %172, %176 : vector<32x1xf32>
    %178 = vector.broadcast %177 : vector<32x1xf32> to vector<32x128xf32>
    %179 = arith.divf %175, %178 : vector<32x128xf32>
    %180 = vector.shape_cast %160 : vector<128xf32> to vector<1x128xf32>
    %181 = vector.broadcast %180 : vector<1x128xf32> to vector<32x128xf32>
    %182 = arith.addf %179, %181 : vector<32x128xf32>
    %183 = arith.truncf %182 : vector<32x128xf32> to vector<32x128xbf16>
    %c0_66 = arith.constant 0 : index
    %c0_67 = arith.constant 0 : index
    %184 = vector.load %arg15[%c0_66, %c0_67] : memref<128x512xbf16, #tpu.memory_space<vmem>>, vector<128x512xbf16>
    %cst_68 = arith.constant dense<0.000000e+00> : vector<32x512xf32>
    %185 = tpu.matmul %183, %184, %cst_68 {dimension_numbers = #tpu.dot_dimension_numbers<[1], [0], [0], [1], [0, 0, 1, 1], [], []>} : vector<32x128xbf16>, vector<128x512xbf16>, vector<32x512xf32> -> vector<32x512xf32>
    %c0_69 = arith.constant 0 : index
    %c0_70 = arith.constant 0 : index
    %186 = vector.load %arg16[%c0_69, %c0_70] : memref<1x512xf32, #tpu.memory_space<vmem>>, vector<1x512xf32>
    %187 = vector.broadcast %186 : vector<1x512xf32> to vector<32x512xf32>
    %188 = arith.addf %185, %187 : vector<32x512xf32>
    %cst_71 = arith.constant 0.000000e+00 : f32
    %189 = vector.broadcast %cst_71 : f32 to vector<32x512xf32>
    %190 = arith.maximumf %188, %189 : vector<32x512xf32>
    %191 = arith.truncf %190 : vector<32x512xf32> to vector<32x512xbf16>
    %c0_72 = arith.constant 0 : index
    %c0_73 = arith.constant 0 : index
    %192 = vector.load %arg17[%c0_72, %c0_73] : memref<512x128xbf16, #tpu.memory_space<vmem>>, vector<512x128xbf16>
    %cst_74 = arith.constant dense<0.000000e+00> : vector<32x128xf32>
    %193 = tpu.matmul %191, %192, %cst_74 {dimension_numbers = #tpu.dot_dimension_numbers<[1], [0], [0], [1], [0, 0, 1, 1], [], []>} : vector<32x512xbf16>, vector<512x128xbf16>, vector<32x128xf32> -> vector<32x128xf32>
    %194 = arith.addf %156, %193 : vector<32x128xf32>
    %c0_75 = arith.constant 0 : index
    %c0_76 = arith.constant 0 : index
    %195 = vector.load %arg18[%c0_75, %c0_76] : memref<1x128xf32, #tpu.memory_space<vmem>>, vector<1x128xf32>
    %196 = vector.broadcast %195 : vector<1x128xf32> to vector<32x128xf32>
    %197 = arith.addf %194, %196 : vector<32x128xf32>
    %198 = vector.shape_cast %197 : vector<32x128xf32> to vector<2x16x128xf32>
    %c0_77 = arith.constant 0 : index
    %c0_78 = arith.constant 0 : index
    %c0_79 = arith.constant 0 : index
    %199 = vector.load %arg21[%c0_77, %c0_78, %c0_79] : memref<2x16x128xf32, #tpu.memory_space<vmem>>, vector<2x16x128xf32>
    tpu.vector_store %arg21[%c0_77, %c0_78, %c0_79], %198 {strides = array<i32>} : memref<2x16x128xf32, #tpu.memory_space<vmem>>, vector<2x16x128xf32>,
    return
  }
  func.func @transform_0(%arg0: i32) -> (i32, i32, i32) {
    %c0_i32 = arith.constant 0 : i32
    %c0_i32_0 = arith.constant 0 : i32
    %c0_i32_1 = arith.constant 0 : i32
    return %arg0, %c0_i32, %c0_i32_0 : i32, i32, i32
  }
  func.func @transform_1(%arg0: i32) -> (i32, i32, i32) {
    %c0_i32 = arith.constant 0 : i32
    %c0_i32_0 = arith.constant 0 : i32
    %c0_i32_1 = arith.constant 0 : i32
    return %arg0, %c0_i32, %c0_i32_0 : i32, i32, i32
  }
  func.func @transform_2(%arg0: i32) -> (i32, i32) {
    %c0_i32 = arith.constant 0 : i32
    %c0_i32_0 = arith.constant 0 : i32
    %c0_i32_1 = arith.constant 0 : i32
    return %c0_i32, %c0_i32_0 : i32, i32
  }
  func.func @transform_3(%arg0: i32) -> (i32, i32) {
    %c0_i32 = arith.constant 0 : i32
    %c0_i32_0 = arith.constant 0 : i32
    %c0_i32_1 = arith.constant 0 : i32
    return %c0_i32, %c0_i32_0 : i32, i32
  }
  func.func @transform_4(%arg0: i32) -> (i32, i32) {
    %c0_i32 = arith.constant 0 : i32
    %c0_i32_0 = arith.constant 0 : i32
    %c0_i32_1 = arith.constant 0 : i32
    return %c0_i32, %c0_i32_0 : i32, i32
  }
  func.func @transform_5(%arg0: i32) -> (i32, i32) {
    %c0_i32 = arith.constant 0 : i32
    %c0_i32_0 = arith.constant 0 : i32
    %c0_i32_1 = arith.constant 0 : i32
    return %c0_i32, %c0_i32_0 : i32, i32
  }
  func.func @transform_6(%arg0: i32) -> (i32, i32) {
    %c0_i32 = arith.constant 0 : i32
    %c0_i32_0 = arith.constant 0 : i32
    %c0_i32_1 = arith.constant 0 : i32
    return %c0_i32, %c0_i32_0 : i32, i32
  }
  func.func @transform_7(%arg0: i32) -> (i32, i32) {
    %c0_i32 = arith.constant 0 : i32
    %c0_i32_0 = arith.constant 0 : i32
    %c0_i32_1 = arith.constant 0 : i32
    return %c0_i32, %c0_i32_0 : i32, i32
  }
  func.func @transform_8(%arg0: i32) -> (i32, i32) {
    %c0_i32 = arith.constant 0 : i32
    %c0_i32_0 = arith.constant 0 : i32
    %c0_i32_1 = arith.constant 0 : i32
    return %c0_i32, %c0_i32_0 : i32, i32
  }
  func.func @transform_9(%arg0: i32) -> (i32, i32) {
    %c0_i32 = arith.constant 0 : i32
    %c0_i32_0 = arith.constant 0 : i32
    %c0_i32_1 = arith.constant 0 : i32
    return %c0_i32, %c0_i32_0 : i32, i32
  }
  func.func @transform_10(%arg0: i32) -> (i32, i32) {
    %c0_i32 = arith.constant 0 : i32
    %c0_i32_0 = arith.constant 0 : i32
    %c0_i32_1 = arith.constant 0 : i32
    return %c0_i32, %c0_i32_0 : i32, i32
  }
  func.func @transform_11(%arg0: i32) -> (i32, i32) {
    %c0_i32 = arith.constant 0 : i32
    %c0_i32_0 = arith.constant 0 : i32
    %c0_i32_1 = arith.constant 0 : i32
    return %c0_i32, %c0_i32_0 : i32, i32
  }
  func.func @transform_12(%arg0: i32) -> (i32, i32) {
    %c0_i32 = arith.constant 0 : i32
    %c0_i32_0 = arith.constant 0 : i32
    %c0_i32_1 = arith.constant 0 : i32
    return %c0_i32, %c0_i32_0 : i32, i32
  }
  func.func @transform_13(%arg0: i32) -> (i32, i32) {
    %c0_i32 = arith.constant 0 : i32
    %c0_i32_0 = arith.constant 0 : i32
    %c0_i32_1 = arith.constant 0 : i32
    return %c0_i32, %c0_i32_0 : i32, i32
  }
  func.func @transform_14(%arg0: i32) -> (i32, i32) {
    %c0_i32 = arith.constant 0 : i32
    %c0_i32_0 = arith.constant 0 : i32
    %c0_i32_1 = arith.constant 0 : i32
    return %c0_i32, %c0_i32_0 : i32, i32
  }
  func.func @transform_15(%arg0: i32) -> (i32, i32) {
    %c0_i32 = arith.constant 0 : i32
    %c0_i32_0 = arith.constant 0 : i32
    %c0_i32_1 = arith.constant 0 : i32
    return %c0_i32, %c0_i32_0 : i32, i32
  }
  func.func @transform_16(%arg0: i32) -> (i32, i32) {
    %c0_i32 = arith.constant 0 : i32
    %c0_i32_0 = arith.constant 0 : i32
    %c0_i32_1 = arith.constant 0 : i32
    return %c0_i32, %c0_i32_0 : i32, i32
  }
  func.func @transform_17(%arg0: i32) -> (i32, i32) {
    %c0_i32 = arith.constant 0 : i32
    %c0_i32_0 = arith.constant 0 : i32
    %c0_i32_1 = arith.constant 0 : i32
    return %c0_i32, %c0_i32_0 : i32, i32
  }
  func.func @transform_18(%arg0: i32) -> (i32, i32) {
    %c0_i32 = arith.constant 0 : i32
    %c0_i32_0 = arith.constant 0 : i32
    %c0_i32_1 = arith.constant 0 : i32
    return %c0_i32, %c0_i32_0 : i32, i32
  }
  func.func @transform_19(%arg0: i32) -> (i32, i32) {
    %c0_i32 = arith.constant 0 : i32
    %c0_i32_0 = arith.constant 0 : i32
    %c0_i32_1 = arith.constant 0 : i32
    return %c0_i32, %c0_i32_0 : i32, i32
  }
  func.func @transform_20(%arg0: i32) -> (i32, i32, i32) {
    %c0_i32 = arith.constant 0 : i32
    %c0_i32_0 = arith.constant 0 : i32
    %c0_i32_1 = arith.constant 0 : i32
    return %arg0, %c0_i32, %c0_i32_0 : i32, i32, i32
  }
}

</mosaic_0001>

<llo_original>
// kernel: tpu_custom_call.1
$region0: #{tpu_custom_call.1}
  #allocation0 [shape = 'u32[]', space=smem, size = 0x4, offset = 0x4, fixed_abs, tag = 'smem constant byte address 0x4 - core index']
  #allocation1 [shape = 'u32[72,128]{1,0:T(1,128)}', space=vmem, size = 0x9000, scoped, tag = 'internal scratch']
  %s0 = inlined_call_operand.hbm [shape: f32[2,16,128], index: 0, kind: input, shape index: {}]
  %s1 = inlined_call_operand.hbm [shape: f32[2,32,128], index: 1, kind: input, shape index: {}]
  %s2 = inlined_call_operand.hbm [shape: f32[16,16], index: 2, kind: input, shape index: {}]
  %s3 = inlined_call_operand.hbm [shape: f32[16,32], index: 3, kind: input, shape index: {}]
  %s4 = inlined_call_operand.hbm [shape: bf16[128,384], index: 4, kind: input, shape index: {}]
  %s5 = inlined_call_operand.hbm [shape: f32[1,384], index: 5, kind: input, shape index: {}]
  %s6 = inlined_call_operand.hbm [shape: bf16[128,128], index: 6, kind: input, shape index: {}]
  %s7 = inlined_call_operand.hbm [shape: f32[1,128], index: 7, kind: input, shape index: {}]
  %s8 = inlined_call_operand.hbm [shape: bf16[128,128], index: 8, kind: input, shape index: {}]
  %s9 = inlined_call_operand.hbm [shape: f32[1,128], index: 9, kind: input, shape index: {}]
  %s10 = inlined_call_operand.hbm [shape: bf16[128,256], index: 10, kind: input, shape index: {}]
  %s11 = inlined_call_operand.hbm [shape: f32[1,256], index: 11, kind: input, shape index: {}]
  %s12 = inlined_call_operand.hbm [shape: bf16[128,128], index: 12, kind: input, shape index: {}]
  %s13 = inlined_call_operand.hbm [shape: f32[1,128], index: 13, kind: input, shape index: {}]
  %s14 = inlined_call_operand.hbm [shape: bf16[128,512], index: 14, kind: input, shape index: {}]
  %s15 = inlined_call_operand.vmem [shape: f32[1,512], index: 15, kind: input, shape index: {}]
  %s16 = inlined_call_operand.hbm [shape: bf16[512,128], index: 16, kind: input, shape index: {}]
  %s17 = inlined_call_operand.vmem [shape: f32[1,128], index: 17, kind: input, shape index: {}]
  %s18 = inlined_call_operand.vmem [shape: f32[3,128], index: 18, kind: input, shape index: {}]
  %s19 = inlined_call_operand.vmem [shape: f32[3,128], index: 19, kind: input, shape index: {}]
  %s20 = inlined_call_operand.hbm [shape: f32[2,16,128], index: 20, kind: output, shape index: {}]
  %s21 = sld [smem:[#allocation0]]
  $region154: #{tpu_custom_call.1} parent=0
    _
  %s23 = ssub.s32 1, %s21
  %s24 = scalar_select 0, %s23, %s21
  $region1: #{tpu_custom_call.1} parent=0
    #allocation2 [shape = 'u8[16384]{0}', space=vmem, size = 0x4000, scoped, tag = 'input window, operand 0, single buffered']
    #allocation3 [shape = 's32[1]{0}', space=sflag, size = 0x4, scoped, tag = 'scoped memory for tpu_custom_call.1']
    #allocation4 [shape = 's32[1]{0}', space=sflag, size = 0x4, scoped, tag = 'scoped memory for tpu_custom_call.1']
    #allocation5 [shape = 'u8[32768]{0}', space=vmem, size = 0x8000, scoped, tag = 'input window, operand 1, single buffered']
    #allocation6 [shape = 's32[1]{0}', space=sflag, size = 0x4, scoped, tag = 'scoped memory for tpu_custom_call.1']
    #allocation7 [shape = 'u8[8192]{0}', space=vmem, size = 0x2000, scoped, tag = 'input window, operand 2, single buffered']
    #allocation8 [shape = 'u8[8192]{0}', space=vmem, size = 0x2000, scoped, tag = 'input window, operand 3, single buffered']
    #allocation9 [shape = 's32[1]{0}', space=sflag, size = 0x4, scoped, tag = 'scoped memory for tpu_custom_call.1']
    #allocation10 [shape = 'u8[98304]{0}', space=vmem, size = 0x18000, scoped, tag = 'input window, operand 4, single buffered']
    #allocation11 [shape = 'u8[1536]{0}', space=vmem, size = 0x800, scoped, tag = 'input window, operand 5, single buffered']
    #allocation12 [shape = 's32[1]{0}', space=sflag, size = 0x4, scoped, tag = 'scoped memory for tpu_custom_call.1']
    #allocation13 [shape = 'u8[32768]{0}', space=vmem, size = 0x8000, scoped, tag = 'input window, operand 6, single buffered']
    #allocation14 [shape = 'u8[512]{0}', space=vmem, size = 0x400, scoped, tag = 'input window, operand 7, single buffered']
    #allocation15 [shape = 's32[1]{0}', space=sflag, size = 0x4, scoped, tag = 'scoped memory for tpu_custom_call.1']
    #allocation16 [shape = 'u8[32768]{0}', space=vmem, size = 0x8000, scoped, tag = 'input window, operand 8, single buffered']
    #allocation17 [shape = 'u8[512]{0}', space=vmem, size = 0x400, scoped, tag = 'input window, operand 9, single buffered']
    #allocation18 [shape = 's32[1]{0}', space=sflag, size = 0x4, scoped, tag = 'scoped memory for tpu_custom_call.1']
    #allocation19 [shape = 'u8[65536]{0}', space=vmem, size = 0x10000, scoped, tag = 'input window, operand 10, single buffered']
    #allocation20 [shape = 'u8[1024]{0}', space=vmem, size = 0x400, scoped, tag = 'input window, operand 11, single buffered']
    #allocation21 [shape = 's32[1]{0}', space=sflag, size = 0x4, scoped, tag = 'scoped memory for tpu_custom_call.1']
    #allocation22 [shape = 'u8[32768]{0}', space=vmem, size = 0x8000, scoped, tag = 'input window, operand 12, single buffered']
    #allocation23 [shape = 'u8[512]{0}', space=vmem, size = 0x400, scoped, tag = 'input window, operand 13, single buffered']
    #allocation24 [shape = 's32[1]{0}', space=sflag, size = 0x4, scoped, tag = 'scoped memory for tpu_custom_call.1']
    #allocation25 [shape = 'u8[131072]{0}', space=vmem, size = 0x20000, scoped, tag = 'input window, operand 14, single buffered']
    #allocation26 [shape = 'u8[131072]{0}', space=vmem, size = 0x20000, scoped, tag = 'input window, operand 16, single buffered']
    #allocation27 [shape = 's32[1]{0}', space=sflag, size = 0x4, scoped, tag = 'scoped memory for tpu_custom_call.1']
    #allocation28 [shape = 'u8[16384]{0}', space=vmem, size = 0x4000, scoped, tag = 'output window, operand 0, single buffered']
    %25 = vsyncpa [#allocation3], 0
    %26 = vsyncpa [#allocation6], 0
    %27 = vsyncpa [#allocation9], 0
    %28 = vsyncpa [#allocation12], 0
    %29 = vsyncpa [#allocation15], 0
    %30 = vsyncpa [#allocation18], 0
    %31 = vsyncpa [#allocation21], 0
    %32 = vsyncpa [#allocation24], 0
    %33 = vsyncpa [#allocation27], 0
    %34 = vsyncpa [#allocation4], 0
    // Predicated region
    $region2: #{tpu_custom_call.1} parent=1 // pred_check
      _
    $region3: #{tpu_custom_call.1} parent=1 // pred_check_branch
      %36 = sbr.rel (0) target = $region5
    $region4: #{tpu_custom_call.1} parent=1 // pred_region
      %38 = vsyncadd [#allocation3], 0
      %s39 = sshll.u32 %s0, 4
      %s40 = int_to_ptr.hbm [resolvable:$true] %s39
      %s41 = sshll.u32 [#allocation2], 4
      %s42 = int_to_ptr.vmem [resolvable:$true] %s41
      %47 = dma.hbm_to_vmem [thread:$0]  %s40, 512, %s42, [#allocation3], 128, 128, 8
    $region5: #{tpu_custom_call.1} parent=1 // pred_fallthru
      _
    // Predicated region
    $region6: #{tpu_custom_call.1} parent=1 // pred_check
      _
    $region7: #{tpu_custom_call.1} parent=1 // pred_check_branch
      %49 = sbr.rel (0) target = $region9
    $region8: #{tpu_custom_call.1} parent=1 // pred_region
      %51 = vsyncadd [#allocation6], 0
      %s52 = sshll.u32 %s1, 4
      %s53 = int_to_ptr.hbm [resolvable:$true] %s52
      %s54 = sshll.u32 [#allocation5], 4
      %s55 = int_to_ptr.vmem [resolvable:$true] %s54
      %60 = dma.hbm_to_vmem [thread:$0]  %s53, 1024, %s55, [#allocation6], 128, 128, 8
    $region9: #{tpu_custom_call.1} parent=1 // pred_fallthru
      _
    // Predicated region
    $region10: #{tpu_custom_call.1} parent=1 // pred_check
      _
    $region11: #{tpu_custom_call.1} parent=1 // pred_check_branch
      %62 = sbr.rel (0) target = $region13
    $region12: #{tpu_custom_call.1} parent=1 // pred_region
      %64 = vsyncadd [#allocation6], 0
      %s65 = sshll.u32 %s2, 4
      %s66 = int_to_ptr.hbm [resolvable:$true] %s65
      %s67 = sshll.u32 [#allocation7], 4
      %s68 = int_to_ptr.vmem [resolvable:$true] %s67
      %73 = dma.hbm_to_vmem [thread:$0]  %s66, 256, %s68, [#allocation6], 128, 128, 8
    $region13: #{tpu_custom_call.1} parent=1 // pred_fallthru
      _
    // Predicated region
    $region14: #{tpu_custom_call.1} parent=1 // pred_check
      _
    $region15: #{tpu_custom_call.1} parent=1 // pred_check_branch
      %75 = sbr.rel (0) target = $region17
    $region16: #{tpu_custom_call.1} parent=1 // pred_region
      %77 = vsyncadd [#allocation9], 0
      %s78 = sshll.u32 %s3, 4
      %s79 = int_to_ptr.hbm [resolvable:$true] %s78
      %s80 = sshll.u32 [#allocation8], 4
      %s81 = int_to_ptr.vmem [resolvable:$true] %s80
      %86 = dma.hbm_to_vmem [thread:$0]  %s79, 256, %s81, [#allocation9], 128, 128, 8
    $region17: #{tpu_custom_call.1} parent=1 // pred_fallthru
      _
    // Predicated region
    $region18: #{tpu_custom_call.1} parent=1 // pred_check
      _
    $region19: #{tpu_custom_call.1} parent=1 // pred_check_branch
      %88 = sbr.rel (0) target = $region21
    $region20: #{tpu_custom_call.1} parent=1 // pred_region
      %90 = vsyncadd [#allocation9], 0
      %s91 = sshll.u32 %s4, 4
      %s92 = int_to_ptr.hbm [resolvable:$true] %s91
      %s93 = sshll.u32 [#allocation10], 4
      %s94 = int_to_ptr.vmem [resolvable:$true] %s93
      %99 = dma.hbm_to_vmem [thread:$0]  %s92, 3072, %s94, [#allocation9], 192, 192, 12
    $region21: #{tpu_custom_call.1} parent=1 // pred_fallthru
      _
    // Predicated region
    $region22: #{tpu_custom_call.1} parent=1 // pred_check
      _
    $region23: #{tpu_custom_call.1} parent=1 // pred_check_branch
      %101 = sbr.rel (0) target = $region25
    $region24: #{tpu_custom_call.1} parent=1 // pred_region
      %103 = vsyncadd [#allocation12], 0
      %s105 = sshll.u32 %s5, 4
      %s106 = int_to_ptr.hbm [resolvable:$true] %s105
      %s107 = sshll.u32 [#allocation11], 4
      %s108 = int_to_ptr.vmem [resolvable:$true] %s107
      %110 = dma.hbm_to_vmem [thread:$0]  %s106, 48, %s108, [#allocation12]
    $region25: #{tpu_custom_call.1} parent=1 // pred_fallthru
      _
    // Predicated region
    $region26: #{tpu_custom_call.1} parent=1 // pred_check
      _
    $region27: #{tpu_custom_call.1} parent=1 // pred_check_branch
      %112 = sbr.rel (0) target = $region29
    $region28: #{tpu_custom_call.1} parent=1 // pred_region
      %114 = vsyncadd [#allocation12], 0
      %s115 = sshll.u32 %s6, 4
      %s116 = int_to_ptr.hbm [resolvable:$true] %s115
      %s117 = sshll.u32 [#allocation13], 4
      %s118 = int_to_ptr.vmem [resolvable:$true] %s117
      %123 = dma.hbm_to_vmem [thread:$0]  %s116, 1024, %s118, [#allocation12], 64, 64, 4
    $region29: #{tpu_custom_call.1} parent=1 // pred_fallthru
      _
    // Predicated region
    $region30: #{tpu_custom_call.1} parent=1 // pred_check
      _
    $region31: #{tpu_custom_call.1} parent=1 // pred_check_branch
      %125 = sbr.rel (0) target = $region33
    $region32: #{tpu_custom_call.1} parent=1 // pred_region
      %127 = vsyncadd [#allocation15], 0
      %s129 = sshll.u32 %s7, 4
      %s130 = int_to_ptr.hbm [resolvable:$true] %s129
      %s131 = sshll.u32 [#allocation14], 4
      %s132 = int_to_ptr.vmem [resolvable:$true] %s131
      %134 = dma.hbm_to_vmem [thread:$0]  %s130, 16, %s132, [#allocation15]
    $region33: #{tpu_custom_call.1} parent=1 // pred_fallthru
      _
    // Predicated region
    $region34: #{tpu_custom_call.1} parent=1 // pred_check
      _
    $region35: #{tpu_custom_call.1} parent=1 // pred_check_branch
      %136 = sbr.rel (0) target = $region37
    $region36: #{tpu_custom_call.1} parent=1 // pred_region
      %138 = vsyncadd [#allocation15], 0
      %s139 = sshll.u32 %s8, 4
      %s140 = int_to_ptr.hbm [resolvable:$true] %s139
      %s141 = sshll.u32 [#allocation16], 4
      %s142 = int_to_ptr.vmem [resolvable:$true] %s141
      %147 = dma.hbm_to_vmem [thread:$0]  %s140, 1024, %s142, [#allocation15], 64, 64, 4
    $region37: #{tpu_custom_call.1} parent=1 // pred_fallthru
      _
    // Predicated region
    $region38: #{tpu_custom_call.1} parent=1 // pred_check
      _
    $region39: #{tpu_custom_call.1} parent=1 // pred_check_branch
      %149 = sbr.rel (0) target = $region41
    $region40: #{tpu_custom_call.1} parent=1 // pred_region
      %151 = vsyncadd [#allocation18], 0
      %s153 = sshll.u32 %s9, 4
      %s154 = int_to_ptr.hbm [resolvable:$true] %s153
      %s155 = sshll.u32 [#allocation17], 4
      %s156 = int_to_ptr.vmem [resolvable:$true] %s155
      %158 = dma.hbm_to_vmem [thread:$0]  %s154, 16, %s156, [#allocation18]
    $region41: #{tpu_custom_call.1} parent=1 // pred_fallthru
      _
    // Predicated region
    $region42: #{tpu_custom_call.1} parent=1 // pred_check
      _
    $region43: #{tpu_custom_call.1} parent=1 // pred_check_branch
      %160 = sbr.rel (0) target = $region45
    $region44: #{tpu_custom_call.1} parent=1 // pred_region
      %162 = vsyncadd [#allocation18], 0
      %s163 = sshll.u32 %s10, 4
      %s164 = int_to_ptr.hbm [resolvable:$true] %s163
      %s165 = sshll.u32 [#allocation19], 4
      %s166 = int_to_ptr.vmem [resolvable:$true] %s165
      %171 = dma.hbm_to_vmem [thread:$0]  %s164, 2048, %s166, [#allocation18], 128, 128, 8
    $region45: #{tpu_custom_call.1} parent=1 // pred_fallthru
      _
    // Predicated region
    $region46: #{tpu_custom_call.1} parent=1 // pred_check
      _
    $region47: #{tpu_custom_call.1} parent=1 // pred_check_branch
      %173 = sbr.rel (0) target = $region49
    $region48: #{tpu_custom_call.1} parent=1 // pred_region
      %175 = vsyncadd [#allocation21], 0
      %s177 = sshll.u32 %s11, 4
      %s178 = int_to_ptr.hbm [resolvable:$true] %s177
      %s179 = sshll.u32 [#allocation20], 4
      %s180 = int_to_ptr.vmem [resolvable:$true] %s179
      %182 = dma.hbm_to_vmem [thread:$0]  %s178, 32, %s180, [#allocation21]
    $region49: #{tpu_custom_call.1} parent=1 // pred_fallthru
      _
    // Predicated region
    $region50: #{tpu_custom_call.1} parent=1 // pred_check
      _
    $region51: #{tpu_custom_call.1} parent=1 // pred_check_branch
      %184 = sbr.rel (0) target = $region53
    $region52: #{tpu_custom_call.1} parent=1 // pred_region
      %186 = vsyncadd [#allocation21], 0
      %s187 = sshll.u32 %s12, 4
      %s188 = int_to_ptr.hbm [resolvable:$true] %s187
      %s189 = sshll.u32 [#allocation22], 4
      %s190 = int_to_ptr.vmem [resolvable:$true] %s189
      %195 = dma.hbm_to_vmem [thread:$0]  %s188, 1024, %s190, [#allocation21], 64, 64, 4
    $region53: #{tpu_custom_call.1} parent=1 // pred_fallthru
      _
    // Predicated region
    $region54: #{tpu_custom_call.1} parent=1 // pred_check
      _
    $region55: #{tpu_custom_call.1} parent=1 // pred_check_branch
      %197 = sbr.rel (0) target = $region57
    $region56: #{tpu_custom_call.1} parent=1 // pred_region
      %199 = vsyncadd [#allocation24], 0
      %s201 = sshll.u32 %s13, 4
      %s202 = int_to_ptr.hbm [resolvable:$true] %s201
      %s203 = sshll.u32 [#allocation23], 4
      %s204 = int_to_ptr.vmem [resolvable:$true] %s203
      %206 = dma.hbm_to_vmem [thread:$0]  %s202, 16, %s204, [#allocation24]
    $region57: #{tpu_custom_call.1} parent=1 // pred_fallthru
      _
    // Predicated region
    $region58: #{tpu_custom_call.1} parent=1 // pred_check
      _
    $region59: #{tpu_custom_call.1} parent=1 // pred_check_branch
      %208 = sbr.rel (0) target = $region61
    $region60: #{tpu_custom_call.1} parent=1 // pred_region
      %210 = vsyncadd [#allocation24], 0
      %s211 = sshll.u32 %s14, 4
      %s212 = int_to_ptr.hbm [resolvable:$true] %s211
      %s213 = sshll.u32 [#allocation25], 4
      %s214 = int_to_ptr.vmem [resolvable:$true] %s213
      %219 = dma.hbm_to_vmem [thread:$0]  %s212, 4096, %s214, [#allocation24], 256, 256, 16
    $region61: #{tpu_custom_call.1} parent=1 // pred_fallthru
      _
    // Predicated region
    $region62: #{tpu_custom_call.1} parent=1 // pred_check
      _
    $region63: #{tpu_custom_call.1} parent=1 // pred_check_branch
      %221 = sbr.rel (0) target = $region65
    $region64: #{tpu_custom_call.1} parent=1 // pred_region
      _
    $region65: #{tpu_custom_call.1} parent=1 // pred_fallthru
      _
    // Predicated region
    $region66: #{tpu_custom_call.1} parent=1 // pred_check
      _
    $region67: #{tpu_custom_call.1} parent=1 // pred_check_branch
      %223 = sbr.rel (0) target = $region69
    $region68: #{tpu_custom_call.1} parent=1 // pred_region
      %225 = vsyncadd [#allocation27], 0
      %s226 = sshll.u32 %s16, 4
      %s227 = int_to_ptr.hbm [resolvable:$true] %s226
      %s228 = sshll.u32 [#allocation26], 4
      %s229 = int_to_ptr.vmem [resolvable:$true] %s228
      %234 = dma.hbm_to_vmem [thread:$0]  %s227, 4096, %s229, [#allocation27], 64, 64, 4
    $region69: #{tpu_custom_call.1} parent=1 // pred_fallthru
      _
    // Predicated region
    $region70: #{tpu_custom_call.1} parent=1 // pred_check
      _
    $region71: #{tpu_custom_call.1} parent=1 // pred_check_branch
      %236 = sbr.rel (0) target = $region73
    $region72: #{tpu_custom_call.1} parent=1 // pred_region
      _
    $region73: #{tpu_custom_call.1} parent=1 // pred_fallthru
      _
    // Predicated region
    $region74: #{tpu_custom_call.1} parent=1 // pred_check
      _
    $region75: #{tpu_custom_call.1} parent=1 // pred_check_branch
      %238 = sbr.rel (0) target = $region77
    $region76: #{tpu_custom_call.1} parent=1 // pred_region
      _
    $region77: #{tpu_custom_call.1} parent=1 // pred_fallthru
      _
    // Predicated region
    $region78: #{tpu_custom_call.1} parent=1 // pred_check
      _
    $region79: #{tpu_custom_call.1} parent=1 // pred_check_branch
      %240 = sbr.rel (0) target = $region81
    $region80: #{tpu_custom_call.1} parent=1 // pred_region
      _
    $region81: #{tpu_custom_call.1} parent=1 // pred_fallthru
      _
    // Predicated region
    $region82: #{tpu_custom_call.1} parent=1 // pred_check
      _
    $region83: #{tpu_custom_call.1} parent=1 // pred_check_branch
      %242 = sbr.rel (0) target = $region85
    $region84: #{tpu_custom_call.1} parent=1 // pred_region
      %244 = dma.done [#allocation3], 512
    $region85: #{tpu_custom_call.1} parent=1 // pred_fallthru
      _
    // Predicated region
    $region86: #{tpu_custom_call.1} parent=1 // pred_check
      _
    $region87: #{tpu_custom_call.1} parent=1 // pred_check_branch
      %246 = sbr.rel (0) target = $region89
    $region88: #{tpu_custom_call.1} parent=1 // pred_region
      %248 = dma.done [#allocation6], 1024
    $region89: #{tpu_custom_call.1} parent=1 // pred_fallthru
      _
    // Predicated region
    $region90: #{tpu_custom_call.1} parent=1 // pred_check
      _
    $region91: #{tpu_custom_call.1} parent=1 // pred_check_branch
      %250 = sbr.rel (0) target = $region93
    $region92: #{tpu_custom_call.1} parent=1 // pred_region
      %252 = dma.done [#allocation6], 256
    $region93: #{tpu_custom_call.1} parent=1 // pred_fallthru
      _
    // Predicated region
    $region94: #{tpu_custom_call.1} parent=1 // pred_check
      _
    $region95: #{tpu_custom_call.1} parent=1 // pred_check_branch
      %254 = sbr.rel (0) target = $region97
    $region96: #{tpu_custom_call.1} parent=1 // pred_region
      %256 = dma.done [#allocation9], 256
    $region97: #{tpu_custom_call.1} parent=1 // pred_fallthru
      _
    // Predicated region
    $region98: #{tpu_custom_call.1} parent=1 // pred_check
      _
    $region99: #{tpu_custom_call.1} parent=1 // pred_check_branch
      %258 = sbr.rel (0) target = $region101
    $region100: #{tpu_custom_call.1} parent=1 // pred_region
      %260 = dma.done [#allocation9], 3072
    $region101: #{tpu_custom_call.1} parent=1 // pred_fallthru
      _
    // Predicated region
    $region102: #{tpu_custom_call.1} parent=1 // pred_check
      _
    $region103: #{tpu_custom_call.1} parent=1 // pred_check_branch
      %262 = sbr.rel (0) target = $region105
    $region104: #{tpu_custom_call.1} parent=1 // pred_region
      %264 = dma.done [#allocation12], 48
    $region105: #{tpu_custom_call.1} parent=1 // pred_fallthru
      _
    // Predicated region
    $region106: #{tpu_custom_call.1} parent=1 // pred_check
      _
    $region107: #{tpu_custom_call.1} parent=1 // pred_check_branch
      %266 = sbr.rel (0) target = $region109
    $region108: #{tpu_custom_call.1} parent=1 // pred_region
      %268 = dma.done [#allocation12], 1024
    $region109: #{tpu_custom_call.1} parent=1 // pred_fallthru
      _
    // Predicated region
    $region110: #{tpu_custom_call.1} parent=1 // pred_check
      _
    $region111: #{tpu_custom_call.1} parent=1 // pred_check_branch
      %270 = sbr.rel (0) target = $region113
    $region112: #{tpu_custom_call.1} parent=1 // pred_region
      %272 = dma.done [#allocation15], 16
    $region113: #{tpu_custom_call.1} parent=1 // pred_fallthru
      _
    // Predicated region
    $region114: #{tpu_custom_call.1} parent=1 // pred_check
      _
    $region115: #{tpu_custom_call.1} parent=1 // pred_check_branch
      %274 = sbr.rel (0) target = $region117
    $region116: #{tpu_custom_call.1} parent=1 // pred_region
      %276 = dma.done [#allocation15], 1024
    $region117: #{tpu_custom_call.1} parent=1 // pred_fallthru
      _
    // Predicated region
    $region118: #{tpu_custom_call.1} parent=1 // pred_check
      _
    $region119: #{tpu_custom_call.1} parent=1 // pred_check_branch
      %278 = sbr.rel (0) target = $region121
    $region120: #{tpu_custom_call.1} parent=1 // pred_region
      %280 = dma.done [#allocation18], 16
    $region121: #{tpu_custom_call.1} parent=1 // pred_fallthru
      _
    // Predicated region
    $region122: #{tpu_custom_call.1} parent=1 // pred_check
      _
    $region123: #{tpu_custom_call.1} parent=1 // pred_check_branch
      %282 = sbr.rel (0) target = $region125
    $region124: #{tpu_custom_call.1} parent=1 // pred_region
      %284 = dma.done [#allocation18], 2048
    $region125: #{tpu_custom_call.1} parent=1 // pred_fallthru
      _
    // Predicated region
    $region126: #{tpu_custom_call.1} parent=1 // pred_check
      _
    $region127: #{tpu_custom_call.1} parent=1 // pred_check_branch
      %286 = sbr.rel (0) target = $region129
    $region128: #{tpu_custom_call.1} parent=1 // pred_region
      %288 = dma.done [#allocation21], 32
    $region129: #{tpu_custom_call.1} parent=1 // pred_fallthru
      _
    // Predicated region
    $region130: #{tpu_custom_call.1} parent=1 // pred_check
      _
    $region131: #{tpu_custom_call.1} parent=1 // pred_check_branch
      %290 = sbr.rel (0) target = $region133
    $region132: #{tpu_custom_call.1} parent=1 // pred_region
      %292 = dma.done [#allocation21], 1024
    $region133: #{tpu_custom_call.1} parent=1 // pred_fallthru
      _
    // Predicated region
    $region134: #{tpu_custom_call.1} parent=1 // pred_check
      _
    $region135: #{tpu_custom_call.1} parent=1 // pred_check_branch
      %294 = sbr.rel (0) target = $region137
    $region136: #{tpu_custom_call.1} parent=1 // pred_region
      %296 = dma.done [#allocation24], 16
    $region137: #{tpu_custom_call.1} parent=1 // pred_fallthru
      _
    // Predicated region
    $region138: #{tpu_custom_call.1} parent=1 // pred_check
      _
    $region139: #{tpu_custom_call.1} parent=1 // pred_check_branch
      %298 = sbr.rel (0) target = $region141
    $region140: #{tpu_custom_call.1} parent=1 // pred_region
      %300 = dma.done [#allocation24], 4096
    $region141: #{tpu_custom_call.1} parent=1 // pred_fallthru
      _
    // Predicated region
    $region142: #{tpu_custom_call.1} parent=1 // pred_check
      _
    $region143: #{tpu_custom_call.1} parent=1 // pred_check_branch
      %302 = sbr.rel (0) target = $region145
    $region144: #{tpu_custom_call.1} parent=1 // pred_region
      %304 = dma.done [#allocation27], 4096
    $region145: #{tpu_custom_call.1} parent=1 // pred_fallthru
      _
    %v306 = vld [vmem:[#allocation2] sm:$0xff]
    %v307 = vld [vmem:[#allocation2 + $0x8] sm:$0xff]
    %v308 = vld [vmem:[#allocation2 + $0x10] sm:$0xff]
    %v309 = vld [vmem:[#allocation2 + $0x18] sm:$0xff]
    %v310 = vld [vmem:[#allocation5] sm:$0xff]
    %v311 = vld [vmem:[#allocation5 + $0x8] sm:$0xff]
    %v312 = vld [vmem:[#allocation5 + $0x10] sm:$0xff]
    %v313 = vld [vmem:[#allocation5 + $0x18] sm:$0xff]
    %v314 = vld [vmem:[#allocation5 + $0x20] sm:$0xff]
    %v315 = vld [vmem:[#allocation5 + $0x28] sm:$0xff]
    %v316 = vld [vmem:[#allocation5 + $0x30] sm:$0xff]
    %v317 = vld [vmem:[#allocation5 + $0x38] sm:$0xff]
    %v318 = vpack.c.bf16 %v310, %v310
    %v319 = vpack.c.bf16 %v311, %v311
    %v320 = vpack.c.bf16 %v312, %v312
    %v321 = vpack.c.bf16 %v313, %v313
    %v322 = vpack.c.bf16 %v314, %v314
    %v323 = vpack.c.bf16 %v315, %v315
    %v324 = vpack.c.bf16 %v316, %v316
    %v325 = vpack.c.bf16 %v317, %v317
    %v326 = vld [vmem:[#allocation7] sm:$0xff]
    %v327 = vld [vmem:[#allocation7 + $0x8] sm:$0xff]
    %v328 = vld [vmem:[#allocation8] sm:$0xff]
    %v329 = vld [vmem:[#allocation8 + $0x8] sm:$0xff]
    %v330 = vld [vmem:[%s18] sm:$0x1]
    %v331 = vld [vmem:[%s19] sm:$0x1]
    %332 = vadd.xlane.f32.xlu0 %v306
    %v333 = vpop.xlane.xlu0 %332
    %334 = vadd.xlane.f32.xlu0 %v307
    %v335 = vpop.xlane.xlu0 %334
    %336 = vadd.xlane.f32.xlu0 %v308
    %v337 = vpop.xlane.xlu0 %336
    %338 = vadd.xlane.f32.xlu0 %v309
    %v339 = vpop.xlane.xlu0 %338
    %v340 = vrcp.pop 128.0
    %v341 = vmul.f32 128.0, %v340
    %v342 = vsub.f32 1.0, %v341
    %v343 = vmul.f32 %v340, %v342
    %v344 = vadd.f32 %v340, %v343
    %vm345 = vweird.f32 %v340
    %v346 = vsel %vm345, %v340, %v344
    %v347 = vmul.f32 %v333, %v346
    %v348 = vmul.f32 %v335, %v346
    %v349 = vmul.f32 %v337, %v346
    %v350 = vmul.f32 %v339, %v346
    %v351 = vsub.f32 %v306, %v347
    %v352 = vsub.f32 %v307, %v348
    %v353 = vsub.f32 %v308, %v349
    %v354 = vsub.f32 %v309, %v350
    %v355 = vmul.f32 %v351, %v351
    %v356 = vmul.f32 %v352, %v352
    %v357 = vmul.f32 %v353, %v353
    %v358 = vmul.f32 %v354, %v354
    %359 = vadd.xlane.f32.xlu0 %v355
    %v360 = vpop.xlane.xlu0 %359
    %361 = vadd.xlane.f32.xlu0 %v356
    %v362 = vpop.xlane.xlu0 %361
    %363 = vadd.xlane.f32.xlu0 %v357
    %v364 = vpop.xlane.xlu0 %363
    %365 = vadd.xlane.f32.xlu0 %v358
    %v366 = vpop.xlane.xlu0 %365
    %v367 = vrcp.pop 127.0
    %v368 = vmul.f32 127.0, %v367
    %v369 = vsub.f32 1.0, %v368
    %v370 = vmul.f32 %v367, %v369
    %v371 = vadd.f32 %v367, %v370
    %vm372 = vweird.f32 %v367
    %v373 = vsel %vm372, %v367, %v371
    %v374 = vmul.f32 %v360, %v373
    %v375 = vmul.f32 %v362, %v373
    %v376 = vmul.f32 %v364, %v373
    %v377 = vmul.f32 %v366, %v373
    %v378 = vrsqrt.pop %v374
    %v379 = vmul.f32 %v378, %v374
    %v380 = vmul.f32 %v379, %v378
    %v381 = vmul.f32 0.5, %v380
    %v382 = vsub.f32 1.5, %v381
    %v383 = vmul.f32 %v378, %v382
    %v384 = vmul.f32 %v374, %v383
    %vm385 = vcmp.eq.f32.partialorder %v374, inf
    %v386 = vsel %vm385, %v374, %v384
    %vm387 = vcmp.eq.f32.partialorder %v374, 0.0
    %v388 = vand.u32 %v374, 2147483648
    %v389 = vsel %vm387, %v388, %v386
    %v390 = vrsqrt.pop %v375
    %v391 = vmul.f32 %v390, %v375
    %v392 = vmul.f32 %v391, %v390
    %v393 = vmul.f32 0.5, %v392
    %v394 = vsub.f32 1.5, %v393
    %v395 = vmul.f32 %v390, %v394
    %v396 = vmul.f32 %v375, %v395
    %vm397 = vcmp.eq.f32.partialorder %v375, inf
    %v398 = vsel %vm397, %v375, %v396
    %vm399 = vcmp.eq.f32.partialorder %v375, 0.0
    %v400 = vand.u32 %v375, 2147483648
    %v401 = vsel %vm399, %v400, %v398
    %v402 = vrsqrt.pop %v376
    %v403 = vmul.f32 %v402, %v376
    %v404 = vmul.f32 %v403, %v402
    %v405 = vmul.f32 0.5, %v404
    %v406 = vsub.f32 1.5, %v405
    %v407 = vmul.f32 %v402, %v406
    %v408 = vmul.f32 %v376, %v407
    %vm409 = vcmp.eq.f32.partialorder %v376, inf
    %v410 = vsel %vm409, %v376, %v408
    %vm411 = vcmp.eq.f32.partialorder %v376, 0.0
    %v412 = vand.u32 %v376, 2147483648
    %v413 = vsel %vm411, %v412, %v410
    %v414 = vrsqrt.pop %v377
    %v415 = vmul.f32 %v414, %v377
    %v416 = vmul.f32 %v415, %v414
    %v417 = vmul.f32 0.5, %v416
    %v418 = vsub.f32 1.5, %v417
    %v419 = vmul.f32 %v414, %v418
    %v420 = vmul.f32 %v377, %v419
    %vm421 = vcmp.eq.f32.partialorder %v377, inf
    %v422 = vsel %vm421, %v377, %v420
    %vm423 = vcmp.eq.f32.partialorder %v377, 0.0
    %v424 = vand.u32 %v377, 2147483648
    %v425 = vsel %vm423, %v424, %v422
    %v426 = vperm.slane %v330, 0
    %v427 = vmul.f32 %v426, %v351
    %v428 = vmul.f32 %v426, %v352
    %v429 = vmul.f32 %v426, %v353
    %v430 = vmul.f32 %v426, %v354
    %v431 = vadd.f32 %v389, 1e-06
    %v432 = vadd.f32 %v401, 1e-06
    %v433 = vadd.f32 %v413, 1e-06
    %v434 = vadd.f32 %v425, 1e-06
    %v435 = vrcp.pop %v431
    %v436 = vmul.f32 %v431, %v435
    %v437 = vsub.f32 1.0, %v436
    %v438 = vmul.f32 %v435, %v437
    %v439 = vadd.f32 %v435, %v438
    %vm440 = vweird.f32 %v431
    %vm441 = vweird.f32 %v435
    %vm442 = vmor %vm440, %vm441
    %v443 = vsel %vm442, %v435, %v439
    %v444 = vand.u32 2147483647, %v431
    %vm445 = vcmp.eq.f32.partialorder %v444, 8.507059e+37
    %v446 = vand.u32 %v431, 2147483648
    %v447 = vor.u32 1.1754944e-38, %v446
    %v448 = vsel %vm445, %v447, %v443
    %v449 = vmul.f32 %v427, %v448
    %v450 = vrcp.pop %v432
    %v451 = vmul.f32 %v432, %v450
    %v452 = vsub.f32 1.0, %v451
    %v453 = vmul.f32 %v450, %v452
    %v454 = vadd.f32 %v450, %v453
    %vm455 = vweird.f32 %v432
    %vm456 = vweird.f32 %v450
    %vm457 = vmor %vm455, %vm456
    %v458 = vsel %vm457, %v450, %v454
    %v459 = vand.u32 2147483647, %v432
    %vm460 = vcmp.eq.f32.partialorder %v459, 8.507059e+37
    %v461 = vand.u32 %v432, 2147483648
    %v462 = vor.u32 1.1754944e-38, %v461
    %v463 = vsel %vm460, %v462, %v458
    %v464 = vmul.f32 %v428, %v463
    %v465 = vrcp.pop %v433
    %v466 = vmul.f32 %v433, %v465
    %v467 = vsub.f32 1.0, %v466
    %v468 = vmul.f32 %v465, %v467
    %v469 = vadd.f32 %v465, %v468
    %vm470 = vweird.f32 %v433
    %vm471 = vweird.f32 %v465
    %vm472 = vmor %vm470, %vm471
    %v473 = vsel %vm472, %v465, %v469
    %v474 = vand.u32 2147483647, %v433
    %vm475 = vcmp.eq.f32.partialorder %v474, 8.507059e+37
    %v476 = vand.u32 %v433, 2147483648
    %v477 = vor.u32 1.1754944e-38, %v476
    %v478 = vsel %vm475, %v477, %v473
    %v479 = vmul.f32 %v429, %v478
    %v480 = vrcp.pop %v434
    %v481 = vmul.f32 %v434, %v480
    %v482 = vsub.f32 1.0, %v481
    %v483 = vmul.f32 %v480, %v482
    %v484 = vadd.f32 %v480, %v483
    %vm485 = vweird.f32 %v434
    %vm486 = vweird.f32 %v480
    %vm487 = vmor %vm485, %vm486
    %v488 = vsel %vm487, %v480, %v484
    %v489 = vand.u32 2147483647, %v434
    %vm490 = vcmp.eq.f32.partialorder %v489, 8.507059e+37
    %v491 = vand.u32 %v434, 2147483648
    %v492 = vor.u32 1.1754944e-38, %v491
    %v493 = vsel %vm490, %v492, %v488
    %v494 = vmul.f32 %v430, %v493
    %v495 = vperm.slane %v331, 0
    %v496 = vadd.f32 %v449, %v495
    %v497 = vadd.f32 %v464, %v495
    %v498 = vadd.f32 %v479, %v495
    %v499 = vadd.f32 %v494, %v495
    %v500 = vpack.c.bf16 %v497, %v496
    %v501 = vpack.c.bf16 %v499, %v498
    %v502 = vld [vmem:[#allocation10] sm:$0xff]
    %v503 = vld [vmem:[#allocation10 + $0x8] sm:$0xf]
    %v504 = vld [vmem:[#allocation10 + $0xc] sm:$0xff]
    %v505 = vld [vmem:[#allocation10 + $0x14] sm:$0xf]
    %v506 = vld [vmem:[#allocation10 + $0x18] sm:$0xff]
    %v507 = vld [vmem:[#allocation10 + $0x20] sm:$0xf]
    %v508 = vld [vmem:[#allocation10 + $0x24] sm:$0xff]
    %v509 = vld [vmem:[#allocation10 + $0x2c] sm:$0xf]
    %v510 = vld [vmem:[#allocation10 + $0x30] sm:$0xff]
    %v511 = vld [vmem:[#allocation10 + $0x38] sm:$0xf]
    %v512 = vld [vmem:[#allocation10 + $0x3c] sm:$0xff]
    %v513 = vld [vmem:[#allocation10 + $0x44] sm:$0xf]
    %v514 = vld [vmem:[#allocation10 + $0x48] sm:$0xff]
    %v515 = vld [vmem:[#allocation10 + $0x50] sm:$0xf]
    %v516 = vld [vmem:[#allocation10 + $0x54] sm:$0xff]
    %v517 = vld [vmem:[#allocation10 + $0x5c] sm:$0xf]
    %v518 = vld [vmem:[#allocation10 + $0x60] sm:$0xff]
    %v519 = vld [vmem:[#allocation10 + $0x68] sm:$0xf]
    %v520 = vld [vmem:[#allocation10 + $0x6c] sm:$0xff]
    %v521 = vld [vmem:[#allocation10 + $0x74] sm:$0xf]
    %v522 = vld [vmem:[#allocation10 + $0x78] sm:$0xff]
    %v523 = vld [vmem:[#allocation10 + $0x80] sm:$0xf]
    %v524 = vld [vmem:[#allocation10 + $0x84] sm:$0xff]
    %v525 = vld [vmem:[#allocation10 + $0x8c] sm:$0xf]
    %v526 = vld [vmem:[#allocation10 + $0x90] sm:$0xff]
    %v527 = vld [vmem:[#allocation10 + $0x98] sm:$0xf]
    %v528 = vld [vmem:[#allocation10 + $0x9c] sm:$0xff]
    %v529 = vld [vmem:[#allocation10 + $0xa4] sm:$0xf]
    %v530 = vld [vmem:[#allocation10 + $0xa8] sm:$0xff]
    %v531 = vld [vmem:[#allocation10 + $0xb0] sm:$0xf]
    %v532 = vld [vmem:[#allocation10 + $0xb4] sm:$0xff]
    %v533 = vld [vmem:[#allocation10 + $0xbc] sm:$0xf]
    %v534 = vld [vmem:[#allocation11] sm:$0x7]
    %v536 = vperm.slane %v534, 0
    %v537 = vperm.slane %v534, 1
    %v538 = vperm.slane %v534, 2
    %v574 = vunpack.c.l.b16 %v502
    %v575 = vunpack.c.h.b16 %v502
    %v576 = vunpack.c.l.b16 %v503
    %v577 = vunpack.c.l.b16 %v504
    %v578 = vunpack.c.h.b16 %v504
    %v579 = vunpack.c.l.b16 %v505
    %v580 = vunpack.c.l.b16 %v506
    %v581 = vunpack.c.h.b16 %v506
    %v582 = vunpack.c.l.b16 %v507
    %v583 = vunpack.c.l.b16 %v508
    %v584 = vunpack.c.h.b16 %v508
    %v585 = vunpack.c.l.b16 %v509
    %v586 = vunpack.c.l.b16 %v510
    %v587 = vunpack.c.h.b16 %v510
    %v588 = vunpack.c.l.b16 %v511
    %v589 = vunpack.c.l.b16 %v512
    %v590 = vunpack.c.h.b16 %v512
    %v591 = vunpack.c.l.b16 %v513
    %v592 = vunpack.c.l.b16 %v514
    %v593 = vunpack.c.h.b16 %v514
    %v594 = vunpack.c.l.b16 %v515
    %v595 = vunpack.c.l.b16 %v516
    %v596 = vunpack.c.h.b16 %v516
    %v597 = vunpack.c.l.b16 %v517
    %v598 = vunpack.c.l.b16 %v518
    %v599 = vunpack.c.h.b16 %v518
    %v600 = vunpack.c.l.b16 %v519
    %v601 = vunpack.c.l.b16 %v520
    %v602 = vunpack.c.h.b16 %v520
    %v603 = vunpack.c.l.b16 %v521
    %v604 = vunpack.c.l.b16 %v522
    %v605 = vunpack.c.h.b16 %v522
    %v606 = vunpack.c.l.b16 %v523
    %v607 = vunpack.c.l.b16 %v524
    %v608 = vunpack.c.h.b16 %v524
    %v609 = vunpack.c.l.b16 %v525
    %v610 = vunpack.c.l.b16 %v526
    %v611 = vunpack.c.h.b16 %v526
    %v612 = vunpack.c.l.b16 %v527
    %v613 = vunpack.c.l.b16 %v528
    %v614 = vunpack.c.h.b16 %v528
    %v615 = vunpack.c.l.b16 %v529
    %v616 = vunpack.c.l.b16 %v530
    %v617 = vunpack.c.h.b16 %v530
    %v618 = vunpack.c.l.b16 %v531
    %v619 = vunpack.c.l.b16 %v532
    %v620 = vunpack.c.h.b16 %v532
    %v621 = vunpack.c.l.b16 %v533
    %v622 = vpack.c.b16 %v577, %v574
    %v623 = vpack.c.b16 %v578, %v575
    %v624 = vpack.c.b16 %v579, %v576
    %v625 = vpack.c.b16 %v583, %v580
    %v626 = vpack.c.b16 %v584, %v581
    %v627 = vpack.c.b16 %v585, %v582
    %v628 = vpack.c.b16 %v589, %v586
    %v629 = vpack.c.b16 %v590, %v587
    %v630 = vpack.c.b16 %v591, %v588
    %v631 = vpack.c.b16 %v595, %v592
    %v632 = vpack.c.b16 %v596, %v593
    %v633 = vpack.c.b16 %v597, %v594
    %v634 = vpack.c.b16 %v601, %v598
    %v635 = vpack.c.b16 %v602, %v599
    %v636 = vpack.c.b16 %v603, %v600
    %v637 = vpack.c.b16 %v607, %v604
    %v638 = vpack.c.b16 %v608, %v605
    %v639 = vpack.c.b16 %v609, %v606
    %v640 = vpack.c.b16 %v613, %v610
    %v641 = vpack.c.b16 %v614, %v611
    %v642 = vpack.c.b16 %v615, %v612
    %v643 = vpack.c.b16 %v619, %v616
    %v644 = vpack.c.b16 %v620, %v617
    %v645 = vpack.c.b16 %v621, %v618
    %670 = vmatpush.bf16.msra.mxu0 %v643
    %671 = vmatpush.bf16.msra.mxu0 %v640
    %672 = vmatpush.bf16.msra.mxu0 %v637
    %673 = vmatpush.bf16.msra.mxu0 %v634
    %674 = vmatpush.bf16.msra.mxu0 %v631
    %675 = vmatpush.bf16.msra.mxu0 %v628
    %676 = vmatpush.bf16.msra.mxu0 %v625
    %677 = vmatpush.bf16.msra.mxu0 %v622
    %678 = vmatmul.bf16.gmra.mxu0 %v500
    %v679 = vpop.f32.mrf.mxu0
    %v680 = vadd.f32 %v536, %v679
    %v681 = vpop.f32.mrf.mxu0
    %v682 = vadd.f32 %v536, %v681
    %683 = vmatmul.bf16.gmra.mxu0 %v501
    %v684 = vpop.f32.mrf.mxu0
    %v685 = vadd.f32 %v536, %v684
    %v686 = vpop.f32.mrf.mxu0
    %v687 = vadd.f32 %v536, %v686
    %688 = vdwg.mxu0
    %689 = vmatpush.bf16.msra.mxu0 %v644
    %690 = vmatpush.bf16.msra.mxu0 %v641
    %691 = vmatpush.bf16.msra.mxu0 %v638
    %692 = vmatpush.bf16.msra.mxu0 %v635
    %693 = vmatpush.bf16.msra.mxu0 %v632
    %694 = vmatpush.bf16.msra.mxu0 %v629
    %695 = vmatpush.bf16.msra.mxu0 %v626
    %696 = vmatpush.bf16.msra.mxu0 %v623
    %697 = vmatmul.bf16.gmra.mxu0 %v500
    %v698 = vpop.f32.mrf.mxu0
    %v699 = vadd.f32 %v537, %v698
    %v700 = vpop.f32.mrf.mxu0
    %v701 = vadd.f32 %v537, %v700
    %702 = vmatmul.bf16.gmra.mxu0 %v501
    %v703 = vpop.f32.mrf.mxu0
    %v704 = vadd.f32 %v537, %v703
    %v705 = vpop.f32.mrf.mxu0
    %v706 = vadd.f32 %v537, %v705
    %707 = vdwg.mxu0
    %708 = vmatpush.bf16.msra.mxu0 %v645
    %709 = vmatpush.bf16.msra.mxu0 %v642
    %710 = vmatpush.bf16.msra.mxu0 %v639
    %711 = vmatpush.bf16.msra.mxu0 %v636
    %712 = vmatpush.bf16.msra.mxu0 %v633
    %713 = vmatpush.bf16.msra.mxu0 %v630
    %714 = vmatpush.bf16.msra.mxu0 %v627
    %715 = vmatpush.bf16.msra.mxu0 %v624
    %716 = vmatmul.bf16.gmra.mxu0 %v500
    %v717 = vpop.f32.mrf.mxu0
    %v718 = vadd.f32 %v538, %v717
    %v719 = vpop.f32.mrf.mxu0
    %v720 = vadd.f32 %v538, %v719
    %721 = vmatmul.bf16.gmra.mxu0 %v501
    %v722 = vpop.f32.mrf.mxu0
    %v723 = vadd.f32 %v538, %v722
    %v724 = vpop.f32.mrf.mxu0
    %v725 = vadd.f32 %v538, %v724
    %726 = vdwg.mxu0
    %v727 = vpack.c.bf16 %v680, %v680
    %v728 = vpack.c.bf16 %v682, %v682
    %v729 = vpack.c.bf16 %v685, %v685
    %v730 = vpack.c.bf16 %v687, %v687
    %735 = vrot.lane.b32.xlu0 %v727, 96
    %v736 = vpop.permute.xlu0 %735
    %737 = vrot.lane.b32.xlu0 %v728, 96
    %v738 = vpop.permute.xlu0 %737
    %739 = vrot.lane.b32.xlu0 %v729, 96
    %v740 = vpop.permute.xlu0 %739
    %741 = vrot.lane.b32.xlu0 %v730, 96
    %v742 = vpop.permute.xlu0 %741
    %743 = vrot.lane.b32.xlu0 %v727, 64
    %v744 = vpop.permute.xlu0 %743
    %745 = vrot.lane.b32.xlu0 %v728, 64
    %v746 = vpop.permute.xlu0 %745
    %747 = vrot.lane.b32.xlu0 %v729, 64
    %v748 = vpop.permute.xlu0 %747
    %749 = vrot.lane.b32.xlu0 %v730, 64
    %v750 = vpop.permute.xlu0 %749
    %751 = vrot.lane.b32.xlu0 %v727, 32
    %v752 = vpop.permute.xlu0 %751
    %753 = vrot.lane.b32.xlu0 %v728, 32
    %v754 = vpop.permute.xlu0 %753
    %755 = vrot.lane.b32.xlu0 %v729, 32
    %v756 = vpop.permute.xlu0 %755
    %757 = vrot.lane.b32.xlu0 %v730, 32
    %v758 = vpop.permute.xlu0 %757
    %v761 = vpack.i.b16 %v736, %v727
    %v762 = vshrl.u32 %v727, 16
    %v763 = vshrl.u32 %v736, 16
    %v764 = vpack.i.b16 %v763, %v762
    %v767 = vpack.i.b16 %v752, %v744
    %v768 = vshrl.u32 %v744, 16
    %v769 = vshrl.u32 %v752, 16
    %v770 = vpack.i.b16 %v769, %v768
    %v773 = vpack.i.b16 %v738, %v728
    %v774 = vshrl.u32 %v728, 16
    %v775 = vshrl.u32 %v738, 16
    %v776 = vpack.i.b16 %v775, %v774
    %v779 = vpack.i.b16 %v754, %v746
    %v780 = vshrl.u32 %v746, 16
    %v781 = vshrl.u32 %v754, 16
    %v782 = vpack.i.b16 %v781, %v780
    %v785 = vpack.i.b16 %v740, %v729
    %v786 = vshrl.u32 %v729, 16
    %v787 = vshrl.u32 %v740, 16
    %v788 = vpack.i.b16 %v787, %v786
    %v791 = vpack.i.b16 %v756, %v748
    %v792 = vshrl.u32 %v748, 16
    %v793 = vshrl.u32 %v756, 16
    %v794 = vpack.i.b16 %v793, %v792
    %v797 = vpack.i.b16 %v742, %v730
    %v798 = vshrl.u32 %v730, 16
    %v799 = vshrl.u32 %v742, 16
    %v800 = vpack.i.b16 %v799, %v798
    %v803 = vpack.i.b16 %v758, %v750
    %v804 = vshrl.u32 %v750, 16
    %v805 = vshrl.u32 %v758, 16
    %v806 = vpack.i.b16 %v805, %v804
    %v809 = vunpack.c.l.s4 1983009808
    %v810 = vunpack.c.0.s8 %v809
    %v811 = vperm.slane %v761, %v810
    %v814 = vunpack.c.l.s4 1983009808
    %v815 = vunpack.c.0.s8 %v814
    %v816 = vperm.slane %v767, %v815
    %v817 = vrot.slane %v816, 4
    %vm818 = vcmask 1047556
    %v819 = vsel %vm818, %v817, %v811
    %v820 = vrot.slane %v811, 4
    %v821 = vsel %vm818, %v816, %v820
    %v823 = vunpack.c.l.s4 1934713408
    %v824 = vunpack.c.0.s8 %v823
    %v825 = vperm.slane %v819, %v824
    %v827 = vunpack.c.l.s4 1934713408
    %v828 = vunpack.c.0.s8 %v827
    %v829 = vperm.slane %v821, %v828
    %v830 = vrot.slane %v825, 4
    %v831 = vsel %vm818, 0, %v830
    %v832 = vrot.slane %v829, 4
    %v833 = vsel %vm818, 0, %v832
    %v836 = vunpack.c.l.s4 1983009808
    %v837 = vunpack.c.0.s8 %v836
    %v838 = vperm.slane %v764, %v837
    %v841 = vunpack.c.l.s4 1983009808
    %v842 = vunpack.c.0.s8 %v841
    %v843 = vperm.slane %v770, %v842
    %v844 = vrot.slane %v843, 4
    %v845 = vsel %vm818, %v844, %v838
    %v846 = vrot.slane %v838, 4
    %v847 = vsel %vm818, %v843, %v846
    %v849 = vunpack.c.l.s4 1934713408
    %v850 = vunpack.c.0.s8 %v849
    %v851 = vperm.slane %v845, %v850
    %v853 = vunpack.c.l.s4 1934713408
    %v854 = vunpack.c.0.s8 %v853
    %v855 = vperm.slane %v847, %v854
    %v856 = vrot.slane %v851, 4
    %v857 = vsel %vm818, 0, %v856
    %v858 = vrot.slane %v855, 4
    %v859 = vsel %vm818, 0, %v858
    %v862 = vunpack.c.l.s4 1983009808
    %v863 = vunpack.c.0.s8 %v862
    %v864 = vperm.slane %v773, %v863
    %v867 = vunpack.c.l.s4 1983009808
    %v868 = vunpack.c.0.s8 %v867
    %v869 = vperm.slane %v779, %v868
    %v870 = vrot.slane %v869, 4
    %v871 = vsel %vm818, %v870, %v864
    %v872 = vrot.slane %v864, 4
    %v873 = vsel %vm818, %v869, %v872
    %v875 = vunpack.c.l.s4 1934713408
    %v876 = vunpack.c.0.s8 %v875
    %v877 = vperm.slane %v871, %v876
    %v879 = vunpack.c.l.s4 1934713408
    %v880 = vunpack.c.0.s8 %v879
    %v881 = vperm.slane %v873, %v880
    %v882 = vrot.slane %v877, 4
    %v883 = vsel %vm818, 0, %v882
    %v884 = vrot.slane %v881, 4
    %v885 = vsel %vm818, 0, %v884
    %v888 = vunpack.c.l.s4 1983009808
    %v889 = vunpack.c.0.s8 %v888
    %v890 = vperm.slane %v776, %v889
    %v893 = vunpack.c.l.s4 1983009808
    %v894 = vunpack.c.0.s8 %v893
    %v895 = vperm.slane %v782, %v894
    %v896 = vrot.slane %v895, 4
    %v897 = vsel %vm818, %v896, %v890
    %v898 = vrot.slane %v890, 4
    %v899 = vsel %vm818, %v895, %v898
    %v901 = vunpack.c.l.s4 1934713408
    %v902 = vunpack.c.0.s8 %v901
    %v903 = vperm.slane %v897, %v902
    %v905 = vunpack.c.l.s4 1934713408
    %v906 = vunpack.c.0.s8 %v905
    %v907 = vperm.slane %v899, %v906
    %v908 = vrot.slane %v903, 4
    %v909 = vsel %vm818, 0, %v908
    %v910 = vrot.slane %v907, 4
    %v911 = vsel %vm818, 0, %v910
    %v914 = vunpack.c.l.s4 1983009808
    %v915 = vunpack.c.0.s8 %v914
    %v916 = vperm.slane %v785, %v915
    %v919 = vunpack.c.l.s4 1983009808
    %v920 = vunpack.c.0.s8 %v919
    %v921 = vperm.slane %v791, %v920
    %v922 = vrot.slane %v921, 4
    %v923 = vsel %vm818, %v922, %v916
    %v924 = vrot.slane %v916, 4
    %v925 = vsel %vm818, %v921, %v924
    %v927 = vunpack.c.l.s4 1934713408
    %v928 = vunpack.c.0.s8 %v927
    %v929 = vperm.slane %v923, %v928
    %v931 = vunpack.c.l.s4 1934713408
    %v932 = vunpack.c.0.s8 %v931
    %v933 = vperm.slane %v925, %v932
    %v934 = vrot.slane %v929, 4
    %v935 = vsel %vm818, 0, %v934
    %v936 = vrot.slane %v933, 4
    %v937 = vsel %vm818, 0, %v936
    %v940 = vunpack.c.l.s4 1983009808
    %v941 = vunpack.c.0.s8 %v940
    %v942 = vperm.slane %v788, %v941
    %v945 = vunpack.c.l.s4 1983009808
    %v946 = vunpack.c.0.s8 %v945
    %v947 = vperm.slane %v794, %v946
    %v948 = vrot.slane %v947, 4
    %v949 = vsel %vm818, %v948, %v942
    %v950 = vrot.slane %v942, 4
    %v951 = vsel %vm818, %v947, %v950
    %v953 = vunpack.c.l.s4 1934713408
    %v954 = vunpack.c.0.s8 %v953
    %v955 = vperm.slane %v949, %v954
    %v957 = vunpack.c.l.s4 1934713408
    %v958 = vunpack.c.0.s8 %v957
    %v959 = vperm.slane %v951, %v958
    %v960 = vrot.slane %v955, 4
    %v961 = vsel %vm818, 0, %v960
    %v962 = vrot.slane %v959, 4
    %v963 = vsel %vm818, 0, %v962
    %v966 = vunpack.c.l.s4 1983009808
    %v967 = vunpack.c.0.s8 %v966
    %v968 = vperm.slane %v797, %v967
    %v971 = vunpack.c.l.s4 1983009808
    %v972 = vunpack.c.0.s8 %v971
    %v973 = vperm.slane %v803, %v972
    %v974 = vrot.slane %v973, 4
    %v975 = vsel %vm818, %v974, %v968
    %v976 = vrot.slane %v968, 4
    %v977 = vsel %vm818, %v973, %v976
    %v979 = vunpack.c.l.s4 1934713408
    %v980 = vunpack.c.0.s8 %v979
    %v981 = vperm.slane %v975, %v980
    %v983 = vunpack.c.l.s4 1934713408
    %v984 = vunpack.c.0.s8 %v983
    %v985 = vperm.slane %v977, %v984
    %v986 = vrot.slane %v981, 4
    %v987 = vsel %vm818, 0, %v986
    %v988 = vrot.slane %v985, 4
    %v989 = vsel %vm818, 0, %v988
    %v992 = vunpack.c.l.s4 1983009808
    %v993 = vunpack.c.0.s8 %v992
    %v994 = vperm.slane %v800, %v993
    %v997 = vunpack.c.l.s4 1983009808
    %v998 = vunpack.c.0.s8 %v997
    %v999 = vperm.slane %v806, %v998
    %v1000 = vrot.slane %v999, 4
    %v1001 = vsel %vm818, %v1000, %v994
    %v1002 = vrot.slane %v994, 4
    %v1003 = vsel %vm818, %v999, %v1002
    %v1005 = vunpack.c.l.s4 1934713408
    %v1006 = vunpack.c.0.s8 %v1005
    %v1007 = vperm.slane %v1001, %v1006
    %v1009 = vunpack.c.l.s4 1934713408
    %v1010 = vunpack.c.0.s8 %v1009
    %v1011 = vperm.slane %v1003, %v1010
    %v1012 = vrot.slane %v1007, 4
    %v1013 = vsel %vm818, 0, %v1012
    %v1014 = vrot.slane %v1011, 4
    %v1015 = vsel %vm818, 0, %v1014
    %v1016 = vsel %vm818, %v832, %v825
    %v1018 = vunpack.c.l.s4 1983009808
    %v1019 = vunpack.c.0.s8 %v1018
    %v1020 = vperm.slane %v1016, %v1019
    %v1021 = vrot.slane %v833, 4
    %v1022 = vsel %vm818, %v1021, %v831
    %v1024 = vunpack.c.l.s4 1983009808
    %v1025 = vunpack.c.0.s8 %v1024
    %v1026 = vperm.slane %v1022, %v1025
    %v1027 = vrot.slane %v1026, 4
    %v1028 = vsel %vm818, %v1027, %v1020
    %v1030 = vunpack.c.l.s4 1934713408
    %v1031 = vunpack.c.0.s8 %v1030
    %v1032 = vperm.slane %v1028, %v1031
    %v1033 = vrot.slane %v1032, 4
    %v1034 = vsel %vm818, 0, %v1033
    %v1035 = vsel %vm818, %v858, %v851
    %v1037 = vunpack.c.l.s4 1983009808
    %v1038 = vunpack.c.0.s8 %v1037
    %v1039 = vperm.slane %v1035, %v1038
    %v1040 = vrot.slane %v859, 4
    %v1041 = vsel %vm818, %v1040, %v857
    %v1043 = vunpack.c.l.s4 1983009808
    %v1044 = vunpack.c.0.s8 %v1043
    %v1045 = vperm.slane %v1041, %v1044
    %v1046 = vrot.slane %v1045, 4
    %v1047 = vsel %vm818, %v1046, %v1039
    %v1049 = vunpack.c.l.s4 1934713408
    %v1050 = vunpack.c.0.s8 %v1049
    %v1051 = vperm.slane %v1047, %v1050
    %v1052 = vrot.slane %v1051, 4
    %v1053 = vsel %vm818, 0, %v1052
    %v1054 = vsel %vm818, %v884, %v877
    %v1056 = vunpack.c.l.s4 1983009808
    %v1057 = vunpack.c.0.s8 %v1056
    %v1058 = vperm.slane %v1054, %v1057
    %v1059 = vrot.slane %v885, 4
    %v1060 = vsel %vm818, %v1059, %v883
    %v1062 = vunpack.c.l.s4 1983009808
    %v1063 = vunpack.c.0.s8 %v1062
    %v1064 = vperm.slane %v1060, %v1063
    %v1065 = vrot.slane %v1064, 4
    %v1066 = vsel %vm818, %v1065, %v1058
    %v1068 = vunpack.c.l.s4 1934713408
    %v1069 = vunpack.c.0.s8 %v1068
    %v1070 = vperm.slane %v1066, %v1069
    %v1071 = vrot.slane %v1070, 4
    %v1072 = vsel %vm818, 0, %v1071
    %v1073 = vsel %vm818, %v910, %v903
    %v1075 = vunpack.c.l.s4 1983009808
    %v1076 = vunpack.c.0.s8 %v1075
    %v1077 = vperm.slane %v1073, %v1076
    %v1078 = vrot.slane %v911, 4
    %v1079 = vsel %vm818, %v1078, %v909
    %v1081 = vunpack.c.l.s4 1983009808
    %v1082 = vunpack.c.0.s8 %v1081
    %v1083 = vperm.slane %v1079, %v1082
    %v1084 = vrot.slane %v1083, 4
    %v1085 = vsel %vm818, %v1084, %v1077
    %v1087 = vunpack.c.l.s4 1934713408
    %v1088 = vunpack.c.0.s8 %v1087
    %v1089 = vperm.slane %v1085, %v1088
    %v1090 = vrot.slane %v1089, 4
    %v1091 = vsel %vm818, 0, %v1090
    %v1092 = vsel %vm818, %v936, %v929
    %v1094 = vunpack.c.l.s4 1983009808
    %v1095 = vunpack.c.0.s8 %v1094
    %v1096 = vperm.slane %v1092, %v1095
    %v1097 = vrot.slane %v937, 4
    %v1098 = vsel %vm818, %v1097, %v935
    %v1100 = vunpack.c.l.s4 1983009808
    %v1101 = vunpack.c.0.s8 %v1100
    %v1102 = vperm.slane %v1098, %v1101
    %v1103 = vrot.slane %v1102, 4
    %v1104 = vsel %vm818, %v1103, %v1096
    %v1106 = vunpack.c.l.s4 1934713408
    %v1107 = vunpack.c.0.s8 %v1106
    %v1108 = vperm.slane %v1104, %v1107
    %v1109 = vrot.slane %v1108, 4
    %v1110 = vsel %vm818, 0, %v1109
    %v1111 = vsel %vm818, %v962, %v955
    %v1113 = vunpack.c.l.s4 1983009808
    %v1114 = vunpack.c.0.s8 %v1113
    %v1115 = vperm.slane %v1111, %v1114
    %v1116 = vrot.slane %v963, 4
    %v1117 = vsel %vm818, %v1116, %v961
    %v1119 = vunpack.c.l.s4 1983009808
    %v1120 = vunpack.c.0.s8 %v1119
    %v1121 = vperm.slane %v1117, %v1120
    %v1122 = vrot.slane %v1121, 4
    %v1123 = vsel %vm818, %v1122, %v1115
    %v1125 = vunpack.c.l.s4 1934713408
    %v1126 = vunpack.c.0.s8 %v1125
    %v1127 = vperm.slane %v1123, %v1126
    %v1128 = vrot.slane %v1127, 4
    %v1129 = vsel %vm818, 0, %v1128
    %v1130 = vsel %vm818, %v988, %v981
    %v1132 = vunpack.c.l.s4 1983009808
    %v1133 = vunpack.c.0.s8 %v1132
    %v1134 = vperm.slane %v1130, %v1133
    %v1135 = vrot.slane %v989, 4
    %v1136 = vsel %vm818, %v1135, %v987
    %v1138 = vunpack.c.l.s4 1983009808
    %v1139 = vunpack.c.0.s8 %v1138
    %v1140 = vperm.slane %v1136, %v1139
    %v1141 = vrot.slane %v1140, 4
    %v1142 = vsel %vm818, %v1141, %v1134
    %v1144 = vunpack.c.l.s4 1934713408
    %v1145 = vunpack.c.0.s8 %v1144
    %v1146 = vperm.slane %v1142, %v1145
    %v1147 = vrot.slane %v1146, 4
    %v1148 = vsel %vm818, 0, %v1147
    %v1149 = vsel %vm818, %v1014, %v1007
    %v1151 = vunpack.c.l.s4 1983009808
    %v1152 = vunpack.c.0.s8 %v1151
    %v1153 = vperm.slane %v1149, %v1152
    %v1154 = vrot.slane %v1015, 4
    %v1155 = vsel %vm818, %v1154, %v1013
    %v1157 = vunpack.c.l.s4 1983009808
    %v1158 = vunpack.c.0.s8 %v1157
    %v1159 = vperm.slane %v1155, %v1158
    %v1160 = vrot.slane %v1159, 4
    %v1161 = vsel %vm818, %v1160, %v1153
    %v1163 = vunpack.c.l.s4 1934713408
    %v1164 = vunpack.c.0.s8 %v1163
    %v1165 = vperm.slane %v1161, %v1164
    %v1166 = vrot.slane %v1165, 4
    %v1167 = vsel %vm818, 0, %v1166
    %v1170 = vpack.i.b16 %v1051, %v1032
    %v1171 = vshrl.u32 %v1032, 16
    %v1172 = vshrl.u32 %v1051, 16
    %v1173 = vpack.i.b16 %v1172, %v1171
    %v1176 = vpack.i.b16 %v1053, %v1034
    %v1177 = vshrl.u32 %v1034, 16
    %v1178 = vshrl.u32 %v1053, 16
    %v1179 = vpack.i.b16 %v1178, %v1177
    %v1182 = vpack.i.b16 %v1089, %v1070
    %v1183 = vshrl.u32 %v1070, 16
    %v1184 = vshrl.u32 %v1089, 16
    %v1185 = vpack.i.b16 %v1184, %v1183
    %v1188 = vpack.i.b16 %v1091, %v1072
    %v1189 = vshrl.u32 %v1072, 16
    %v1190 = vshrl.u32 %v1091, 16
    %v1191 = vpack.i.b16 %v1190, %v1189
    %v1194 = vpack.i.b16 %v1127, %v1108
    %v1195 = vshrl.u32 %v1108, 16
    %v1196 = vshrl.u32 %v1127, 16
    %v1197 = vpack.i.b16 %v1196, %v1195
    %v1200 = vpack.i.b16 %v1129, %v1110
    %v1201 = vshrl.u32 %v1110, 16
    %v1202 = vshrl.u32 %v1129, 16
    %v1203 = vpack.i.b16 %v1202, %v1201
    %v1206 = vpack.i.b16 %v1165, %v1146
    %v1207 = vshrl.u32 %v1146, 16
    %v1208 = vshrl.u32 %v1165, 16
    %v1209 = vpack.i.b16 %v1208, %v1207
    %v1212 = vpack.i.b16 %v1167, %v1148
    %v1213 = vshrl.u32 %v1148, 16
    %v1214 = vshrl.u32 %v1167, 16
    %v1215 = vpack.i.b16 %v1214, %v1213
    %v1216 = vpack.c.bf16 %v699, %v699
    %v1217 = vpack.c.bf16 %v701, %v701
    %v1218 = vpack.c.bf16 %v704, %v704
    %v1219 = vpack.c.bf16 %v706, %v706
    %1224 = vrot.lane.b32.xlu0 %v1216, 96
    %v1225 = vpop.permute.xlu0 %1224
    %1226 = vrot.lane.b32.xlu0 %v1217, 96
    %v1227 = vpop.permute.xlu0 %1226
    %1228 = vrot.lane.b32.xlu0 %v1218, 96
    %v1229 = vpop.permute.xlu0 %1228
    %1230 = vrot.lane.b32.xlu0 %v1219, 96
    %v1231 = vpop.permute.xlu0 %1230
    %1232 = vrot.lane.b32.xlu0 %v1216, 64
    %v1233 = vpop.permute.xlu0 %1232
    %1234 = vrot.lane.b32.xlu0 %v1217, 64
    %v1235 = vpop.permute.xlu0 %1234
    %1236 = vrot.lane.b32.xlu0 %v1218, 64
    %v1237 = vpop.permute.xlu0 %1236
    %1238 = vrot.lane.b32.xlu0 %v1219, 64
    %v1239 = vpop.permute.xlu0 %1238
    %1240 = vrot.lane.b32.xlu0 %v1216, 32
    %v1241 = vpop.permute.xlu0 %1240
    %1242 = vrot.lane.b32.xlu0 %v1217, 32
    %v1243 = vpop.permute.xlu0 %1242
    %1244 = vrot.lane.b32.xlu0 %v1218, 32
    %v1245 = vpop.permute.xlu0 %1244
    %1246 = vrot.lane.b32.xlu0 %v1219, 32
    %v1247 = vpop.permute.xlu0 %1246
    %v1250 = vpack.i.b16 %v1225, %v1216
    %v1251 = vshrl.u32 %v1216, 16
    %v1252 = vshrl.u32 %v1225, 16
    %v1253 = vpack.i.b16 %v1252, %v1251
    %v1256 = vpack.i.b16 %v1241, %v1233
    %v1257 = vshrl.u32 %v1233, 16
    %v1258 = vshrl.u32 %v1241, 16
    %v1259 = vpack.i.b16 %v1258, %v1257
    %v1262 = vpack.i.b16 %v1227, %v1217
    %v1263 = vshrl.u32 %v1217, 16
    %v1264 = vshrl.u32 %v1227, 16
    %v1265 = vpack.i.b16 %v1264, %v1263
    %v1268 = vpack.i.b16 %v1243, %v1235
    %v1269 = vshrl.u32 %v1235, 16
    %v1270 = vshrl.u32 %v1243, 16
    %v1271 = vpack.i.b16 %v1270, %v1269
    %v1274 = vpack.i.b16 %v1229, %v1218
    %v1275 = vshrl.u32 %v1218, 16
    %v1276 = vshrl.u32 %v1229, 16
    %v1277 = vpack.i.b16 %v1276, %v1275
    %v1280 = vpack.i.b16 %v1245, %v1237
    %v1281 = vshrl.u32 %v1237, 16
    %v1282 = vshrl.u32 %v1245, 16
    %v1283 = vpack.i.b16 %v1282, %v1281
    %v1286 = vpack.i.b16 %v1231, %v1219
    %v1287 = vshrl.u32 %v1219, 16
    %v1288 = vshrl.u32 %v1231, 16
    %v1289 = vpack.i.b16 %v1288, %v1287
    %v1292 = vpack.i.b16 %v1247, %v1239
    %v1293 = vshrl.u32 %v1239, 16
    %v1294 = vshrl.u32 %v1247, 16
    %v1295 = vpack.i.b16 %v1294, %v1293
    %v1298 = vunpack.c.l.s4 1983009808
    %v1299 = vunpack.c.0.s8 %v1298
    %v1300 = vperm.slane %v1250, %v1299
    %v1303 = vunpack.c.l.s4 1983009808
    %v1304 = vunpack.c.0.s8 %v1303
    %v1305 = vperm.slane %v1256, %v1304
    %v1306 = vrot.slane %v1305, 4
    %v1307 = vsel %vm818, %v1306, %v1300
    %v1308 = vrot.slane %v1300, 4
    %v1309 = vsel %vm818, %v1305, %v1308
    %v1311 = vunpack.c.l.s4 1934713408
    %v1312 = vunpack.c.0.s8 %v1311
    %v1313 = vperm.slane %v1307, %v1312
    %v1315 = vunpack.c.l.s4 1934713408
    %v1316 = vunpack.c.0.s8 %v1315
    %v1317 = vperm.slane %v1309, %v1316
    %v1318 = vrot.slane %v1313, 4
    %v1319 = vsel %vm818, 0, %v1318
    %v1320 = vrot.slane %v1317, 4
    %v1321 = vsel %vm818, 0, %v1320
    %v1324 = vunpack.c.l.s4 1983009808
    %v1325 = vunpack.c.0.s8 %v1324
    %v1326 = vperm.slane %v1253, %v1325
    %v1329 = vunpack.c.l.s4 1983009808
    %v1330 = vunpack.c.0.s8 %v1329
    %v1331 = vperm.slane %v1259, %v1330
    %v1332 = vrot.slane %v1331, 4
    %v1333 = vsel %vm818, %v1332, %v1326
    %v1334 = vrot.slane %v1326, 4
    %v1335 = vsel %vm818, %v1331, %v1334
    %v1337 = vunpack.c.l.s4 1934713408
    %v1338 = vunpack.c.0.s8 %v1337
    %v1339 = vperm.slane %v1333, %v1338
    %v1341 = vunpack.c.l.s4 1934713408
    %v1342 = vunpack.c.0.s8 %v1341
    %v1343 = vperm.slane %v1335, %v1342
    %v1344 = vrot.slane %v1339, 4
    %v1345 = vsel %vm818, 0, %v1344
    %v1346 = vrot.slane %v1343, 4
    %v1347 = vsel %vm818, 0, %v1346
    %v1350 = vunpack.c.l.s4 1983009808
    %v1351 = vunpack.c.0.s8 %v1350
    %v1352 = vperm.slane %v1262, %v1351
    %v1355 = vunpack.c.l.s4 1983009808
    %v1356 = vunpack.c.0.s8 %v1355
    %v1357 = vperm.slane %v1268, %v1356
    %v1358 = vrot.slane %v1357, 4
    %v1359 = vsel %vm818, %v1358, %v1352
    %v1360 = vrot.slane %v1352, 4
    %v1361 = vsel %vm818, %v1357, %v1360
    %v1363 = vunpack.c.l.s4 1934713408
    %v1364 = vunpack.c.0.s8 %v1363
    %v1365 = vperm.slane %v1359, %v1364
    %v1367 = vunpack.c.l.s4 1934713408
    %v1368 = vunpack.c.0.s8 %v1367
    %v1369 = vperm.slane %v1361, %v1368
    %v1370 = vrot.slane %v1365, 4
    %v1371 = vsel %vm818, 0, %v1370
    %v1372 = vrot.slane %v1369, 4
    %v1373 = vsel %vm818, 0, %v1372
    %v1376 = vunpack.c.l.s4 1983009808
    %v1377 = vunpack.c.0.s8 %v1376
    %v1378 = vperm.slane %v1265, %v1377
    %v1381 = vunpack.c.l.s4 1983009808
    %v1382 = vunpack.c.0.s8 %v1381
    %v1383 = vperm.slane %v1271, %v1382
    %v1384 = vrot.slane %v1383, 4
    %v1385 = vsel %vm818, %v1384, %v1378
    %v1386 = vrot.slane %v1378, 4
    %v1387 = vsel %vm818, %v1383, %v1386
    %v1389 = vunpack.c.l.s4 1934713408
    %v1390 = vunpack.c.0.s8 %v1389
    %v1391 = vperm.slane %v1385, %v1390
    %v1393 = vunpack.c.l.s4 1934713408
    %v1394 = vunpack.c.0.s8 %v1393
    %v1395 = vperm.slane %v1387, %v1394
    %v1396 = vrot.slane %v1391, 4
    %v1397 = vsel %vm818, 0, %v1396
    %v1398 = vrot.slane %v1395, 4
    %v1399 = vsel %vm818, 0, %v1398
    %v1402 = vunpack.c.l.s4 1983009808
    %v1403 = vunpack.c.0.s8 %v1402
    %v1404 = vperm.slane %v1274, %v1403
    %v1407 = vunpack.c.l.s4 1983009808
    %v1408 = vunpack.c.0.s8 %v1407
    %v1409 = vperm.slane %v1280, %v1408
    %v1410 = vrot.slane %v1409, 4
    %v1411 = vsel %vm818, %v1410, %v1404
    %v1412 = vrot.slane %v1404, 4
    %v1413 = vsel %vm818, %v1409, %v1412
    %v1415 = vunpack.c.l.s4 1934713408
    %v1416 = vunpack.c.0.s8 %v1415
    %v1417 = vperm.slane %v1411, %v1416
    %v1419 = vunpack.c.l.s4 1934713408
    %v1420 = vunpack.c.0.s8 %v1419
    %v1421 = vperm.slane %v1413, %v1420
    %v1422 = vrot.slane %v1417, 4
    %v1423 = vsel %vm818, 0, %v1422
    %v1424 = vrot.slane %v1421, 4
    %v1425 = vsel %vm818, 0, %v1424
    %v1428 = vunpack.c.l.s4 1983009808
    %v1429 = vunpack.c.0.s8 %v1428
    %v1430 = vperm.slane %v1277, %v1429
    %v1433 = vunpack.c.l.s4 1983009808
    %v1434 = vunpack.c.0.s8 %v1433
    %v1435 = vperm.slane %v1283, %v1434
    %v1436 = vrot.slane %v1435, 4
    %v1437 = vsel %vm818, %v1436, %v1430
    %v1438 = vrot.slane %v1430, 4
    %v1439 = vsel %vm818, %v1435, %v1438
    %v1441 = vunpack.c.l.s4 1934713408
    %v1442 = vunpack.c.0.s8 %v1441
    %v1443 = vperm.slane %v1437, %v1442
    %v1445 = vunpack.c.l.s4 1934713408
    %v1446 = vunpack.c.0.s8 %v1445
    %v1447 = vperm.slane %v1439, %v1446
    %v1448 = vrot.slane %v1443, 4
    %v1449 = vsel %vm818, 0, %v1448
    %v1450 = vrot.slane %v1447, 4
    %v1451 = vsel %vm818, 0, %v1450
    %v1454 = vunpack.c.l.s4 1983009808
    %v1455 = vunpack.c.0.s8 %v1454
    %v1456 = vperm.slane %v1286, %v1455
    %v1459 = vunpack.c.l.s4 1983009808
    %v1460 = vunpack.c.0.s8 %v1459
    %v1461 = vperm.slane %v1292, %v1460
    %v1462 = vrot.slane %v1461, 4
    %v1463 = vsel %vm818, %v1462, %v1456
    %v1464 = vrot.slane %v1456, 4
    %v1465 = vsel %vm818, %v1461, %v1464
    %v1467 = vunpack.c.l.s4 1934713408
    %v1468 = vunpack.c.0.s8 %v1467
    %v1469 = vperm.slane %v1463, %v1468
    %v1471 = vunpack.c.l.s4 1934713408
    %v1472 = vunpack.c.0.s8 %v1471
    %v1473 = vperm.slane %v1465, %v1472
    %v1474 = vrot.slane %v1469, 4
    %v1475 = vsel %vm818, 0, %v1474
    %v1476 = vrot.slane %v1473, 4
    %v1477 = vsel %vm818, 0, %v1476
    %v1480 = vunpack.c.l.s4 1983009808
    %v1481 = vunpack.c.0.s8 %v1480
    %v1482 = vperm.slane %v1289, %v1481
    %v1485 = vunpack.c.l.s4 1983009808
    %v1486 = vunpack.c.0.s8 %v1485
    %v1487 = vperm.slane %v1295, %v1486
    %v1488 = vrot.slane %v1487, 4
    %v1489 = vsel %vm818, %v1488, %v1482
    %v1490 = vrot.slane %v1482, 4
    %v1491 = vsel %vm818, %v1487, %v1490
    %v1493 = vunpack.c.l.s4 1934713408
    %v1494 = vunpack.c.0.s8 %v1493
    %v1495 = vperm.slane %v1489, %v1494
    %v1497 = vunpack.c.l.s4 1934713408
    %v1498 = vunpack.c.0.s8 %v1497
    %v1499 = vperm.slane %v1491, %v1498
    %v1500 = vrot.slane %v1495, 4
    %v1501 = vsel %vm818, 0, %v1500
    %v1502 = vrot.slane %v1499, 4
    %v1503 = vsel %vm818, 0, %v1502
    %v1504 = vsel %vm818, %v1320, %v1313
    %v1506 = vunpack.c.l.s4 1983009808
    %v1507 = vunpack.c.0.s8 %v1506
    %v1508 = vperm.slane %v1504, %v1507
    %v1509 = vrot.slane %v1321, 4
    %v1510 = vsel %vm818, %v1509, %v1319
    %v1512 = vunpack.c.l.s4 1983009808
    %v1513 = vunpack.c.0.s8 %v1512
    %v1514 = vperm.slane %v1510, %v1513
    %v1515 = vrot.slane %v1514, 4
    %v1516 = vsel %vm818, %v1515, %v1508
    %v1518 = vunpack.c.l.s4 1934713408
    %v1519 = vunpack.c.0.s8 %v1518
    %v1520 = vperm.slane %v1516, %v1519
    %v1521 = vrot.slane %v1520, 4
    %v1522 = vsel %vm818, 0, %v1521
    %v1523 = vsel %vm818, %v1346, %v1339
    %v1525 = vunpack.c.l.s4 1983009808
    %v1526 = vunpack.c.0.s8 %v1525
    %v1527 = vperm.slane %v1523, %v1526
    %v1528 = vrot.slane %v1347, 4
    %v1529 = vsel %vm818, %v1528, %v1345
    %v1531 = vunpack.c.l.s4 1983009808
    %v1532 = vunpack.c.0.s8 %v1531
    %v1533 = vperm.slane %v1529, %v1532
    %v1534 = vrot.slane %v1533, 4
    %v1535 = vsel %vm818, %v1534, %v1527
    %v1537 = vunpack.c.l.s4 1934713408
    %v1538 = vunpack.c.0.s8 %v1537
    %v1539 = vperm.slane %v1535, %v1538
    %v1540 = vrot.slane %v1539, 4
    %v1541 = vsel %vm818, 0, %v1540
    %v1542 = vsel %vm818, %v1372, %v1365
    %v1544 = vunpack.c.l.s4 1983009808
    %v1545 = vunpack.c.0.s8 %v1544
    %v1546 = vperm.slane %v1542, %v1545
    %v1547 = vrot.slane %v1373, 4
    %v1548 = vsel %vm818, %v1547, %v1371
    %v1550 = vunpack.c.l.s4 1983009808
    %v1551 = vunpack.c.0.s8 %v1550
    %v1552 = vperm.slane %v1548, %v1551
    %v1553 = vrot.slane %v1552, 4
    %v1554 = vsel %vm818, %v1553, %v1546
    %v1556 = vunpack.c.l.s4 1934713408
    %v1557 = vunpack.c.0.s8 %v1556
    %v1558 = vperm.slane %v1554, %v1557
    %v1559 = vrot.slane %v1558, 4
    %v1560 = vsel %vm818, 0, %v1559
    %v1561 = vsel %vm818, %v1398, %v1391
    %v1563 = vunpack.c.l.s4 1983009808
    %v1564 = vunpack.c.0.s8 %v1563
    %v1565 = vperm.slane %v1561, %v1564
    %v1566 = vrot.slane %v1399, 4
    %v1567 = vsel %vm818, %v1566, %v1397
    %v1569 = vunpack.c.l.s4 1983009808
    %v1570 = vunpack.c.0.s8 %v1569
    %v1571 = vperm.slane %v1567, %v1570
    %v1572 = vrot.slane %v1571, 4
    %v1573 = vsel %vm818, %v1572, %v1565
    %v1575 = vunpack.c.l.s4 1934713408
    %v1576 = vunpack.c.0.s8 %v1575
    %v1577 = vperm.slane %v1573, %v1576
    %v1578 = vrot.slane %v1577, 4
    %v1579 = vsel %vm818, 0, %v1578
    %v1580 = vsel %vm818, %v1424, %v1417
    %v1582 = vunpack.c.l.s4 1983009808
    %v1583 = vunpack.c.0.s8 %v1582
    %v1584 = vperm.slane %v1580, %v1583
    %v1585 = vrot.slane %v1425, 4
    %v1586 = vsel %vm818, %v1585, %v1423
    %v1588 = vunpack.c.l.s4 1983009808
    %v1589 = vunpack.c.0.s8 %v1588
    %v1590 = vperm.slane %v1586, %v1589
    %v1591 = vrot.slane %v1590, 4
    %v1592 = vsel %vm818, %v1591, %v1584
    %v1594 = vunpack.c.l.s4 1934713408
    %v1595 = vunpack.c.0.s8 %v1594
    %v1596 = vperm.slane %v1592, %v1595
    %v1597 = vrot.slane %v1596, 4
    %v1598 = vsel %vm818, 0, %v1597
    %v1599 = vsel %vm818, %v1450, %v1443
    %v1601 = vunpack.c.l.s4 1983009808
    %v1602 = vunpack.c.0.s8 %v1601
    %v1603 = vperm.slane %v1599, %v1602
    %v1604 = vrot.slane %v1451, 4
    %v1605 = vsel %vm818, %v1604, %v1449
    %v1607 = vunpack.c.l.s4 1983009808
    %v1608 = vunpack.c.0.s8 %v1607
    %v1609 = vperm.slane %v1605, %v1608
    %v1610 = vrot.slane %v1609, 4
    %v1611 = vsel %vm818, %v1610, %v1603
    %v1613 = vunpack.c.l.s4 1934713408
    %v1614 = vunpack.c.0.s8 %v1613
    %v1615 = vperm.slane %v1611, %v1614
    %v1616 = vrot.slane %v1615, 4
    %v1617 = vsel %vm818, 0, %v1616
    %v1618 = vsel %vm818, %v1476, %v1469
    %v1620 = vunpack.c.l.s4 1983009808
    %v1621 = vunpack.c.0.s8 %v1620
    %v1622 = vperm.slane %v1618, %v1621
    %v1623 = vrot.slane %v1477, 4
    %v1624 = vsel %vm818, %v1623, %v1475
    %v1626 = vunpack.c.l.s4 1983009808
    %v1627 = vunpack.c.0.s8 %v1626
    %v1628 = vperm.slane %v1624, %v1627
    %v1629 = vrot.slane %v1628, 4
    %v1630 = vsel %vm818, %v1629, %v1622
    %v1632 = vunpack.c.l.s4 1934713408
    %v1633 = vunpack.c.0.s8 %v1632
    %v1634 = vperm.slane %v1630, %v1633
    %v1635 = vrot.slane %v1634, 4
    %v1636 = vsel %vm818, 0, %v1635
    %v1637 = vsel %vm818, %v1502, %v1495
    %v1639 = vunpack.c.l.s4 1983009808
    %v1640 = vunpack.c.0.s8 %v1639
    %v1641 = vperm.slane %v1637, %v1640
    %v1642 = vrot.slane %v1503, 4
    %v1643 = vsel %vm818, %v1642, %v1501
    %v1645 = vunpack.c.l.s4 1983009808
    %v1646 = vunpack.c.0.s8 %v1645
    %v1647 = vperm.slane %v1643, %v1646
    %v1648 = vrot.slane %v1647, 4
    %v1649 = vsel %vm818, %v1648, %v1641
    %v1651 = vunpack.c.l.s4 1934713408
    %v1652 = vunpack.c.0.s8 %v1651
    %v1653 = vperm.slane %v1649, %v1652
    %v1654 = vrot.slane %v1653, 4
    %v1655 = vsel %vm818, 0, %v1654
    %v1658 = vpack.i.b16 %v1539, %v1520
    %v1659 = vshrl.u32 %v1520, 16
    %v1660 = vshrl.u32 %v1539, 16
    %v1661 = vpack.i.b16 %v1660, %v1659
    %v1664 = vpack.i.b16 %v1541, %v1522
    %v1665 = vshrl.u32 %v1522, 16
    %v1666 = vshrl.u32 %v1541, 16
    %v1667 = vpack.i.b16 %v1666, %v1665
    %v1670 = vpack.i.b16 %v1577, %v1558
    %v1671 = vshrl.u32 %v1558, 16
    %v1672 = vshrl.u32 %v1577, 16
    %v1673 = vpack.i.b16 %v1672, %v1671
    %v1676 = vpack.i.b16 %v1579, %v1560
    %v1677 = vshrl.u32 %v1560, 16
    %v1678 = vshrl.u32 %v1579, 16
    %v1679 = vpack.i.b16 %v1678, %v1677
    %v1682 = vpack.i.b16 %v1615, %v1596
    %v1683 = vshrl.u32 %v1596, 16
    %v1684 = vshrl.u32 %v1615, 16
    %v1685 = vpack.i.b16 %v1684, %v1683
    %v1688 = vpack.i.b16 %v1617, %v1598
    %v1689 = vshrl.u32 %v1598, 16
    %v1690 = vshrl.u32 %v1617, 16
    %v1691 = vpack.i.b16 %v1690, %v1689
    %v1694 = vpack.i.b16 %v1653, %v1634
    %v1695 = vshrl.u32 %v1634, 16
    %v1696 = vshrl.u32 %v1653, 16
    %v1697 = vpack.i.b16 %v1696, %v1695
    %v1700 = vpack.i.b16 %v1655, %v1636
    %v1701 = vshrl.u32 %v1636, 16
    %v1702 = vshrl.u32 %v1655, 16
    %v1703 = vpack.i.b16 %v1702, %v1701
    %v1704 = vpack.c.bf16 %v718, %v718
    %v1705 = vpack.c.bf16 %v720, %v720
    %v1706 = vpack.c.bf16 %v723, %v723
    %v1707 = vpack.c.bf16 %v725, %v725
    %1712 = vrot.lane.b32.xlu0 %v1704, 96
    %v1713 = vpop.permute.xlu0 %1712
    %1714 = vrot.lane.b32.xlu0 %v1705, 96
    %v1715 = vpop.permute.xlu0 %1714
    %1716 = vrot.lane.b32.xlu0 %v1706, 96
    %v1717 = vpop.permute.xlu0 %1716
    %1718 = vrot.lane.b32.xlu0 %v1707, 96
    %v1719 = vpop.permute.xlu0 %1718
    %1720 = vrot.lane.b32.xlu0 %v1704, 64
    %v1721 = vpop.permute.xlu0 %1720
    %1722 = vrot.lane.b32.xlu0 %v1705, 64
    %v1723 = vpop.permute.xlu0 %1722
    %1724 = vrot.lane.b32.xlu0 %v1706, 64
    %v1725 = vpop.permute.xlu0 %1724
    %1726 = vrot.lane.b32.xlu0 %v1707, 64
    %v1727 = vpop.permute.xlu0 %1726
    %1728 = vrot.lane.b32.xlu0 %v1704, 32
    %v1729 = vpop.permute.xlu0 %1728
    %1730 = vrot.lane.b32.xlu0 %v1705, 32
    %v1731 = vpop.permute.xlu0 %1730
    %1732 = vrot.lane.b32.xlu0 %v1706, 32
    %v1733 = vpop.permute.xlu0 %1732
    %1734 = vrot.lane.b32.xlu0 %v1707, 32
    %v1735 = vpop.permute.xlu0 %1734
    %v1738 = vpack.i.b16 %v1713, %v1704
    %v1739 = vshrl.u32 %v1704, 16
    %v1740 = vshrl.u32 %v1713, 16
    %v1741 = vpack.i.b16 %v1740, %v1739
    %v1744 = vpack.i.b16 %v1729, %v1721
    %v1745 = vshrl.u32 %v1721, 16
    %v1746 = vshrl.u32 %v1729, 16
    %v1747 = vpack.i.b16 %v1746, %v1745
    %v1750 = vpack.i.b16 %v1715, %v1705
    %v1751 = vshrl.u32 %v1705, 16
    %v1752 = vshrl.u32 %v1715, 16
    %v1753 = vpack.i.b16 %v1752, %v1751
    %v1756 = vpack.i.b16 %v1731, %v1723
    %v1757 = vshrl.u32 %v1723, 16
    %v1758 = vshrl.u32 %v1731, 16
    %v1759 = vpack.i.b16 %v1758, %v1757
    %v1762 = vpack.i.b16 %v1717, %v1706
    %v1763 = vshrl.u32 %v1706, 16
    %v1764 = vshrl.u32 %v1717, 16
    %v1765 = vpack.i.b16 %v1764, %v1763
    %v1768 = vpack.i.b16 %v1733, %v1725
    %v1769 = vshrl.u32 %v1725, 16
    %v1770 = vshrl.u32 %v1733, 16
    %v1771 = vpack.i.b16 %v1770, %v1769
    %v1774 = vpack.i.b16 %v1719, %v1707
    %v1775 = vshrl.u32 %v1707, 16
    %v1776 = vshrl.u32 %v1719, 16
    %v1777 = vpack.i.b16 %v1776, %v1775
    %v1780 = vpack.i.b16 %v1735, %v1727
    %v1781 = vshrl.u32 %v1727, 16
    %v1782 = vshrl.u32 %v1735, 16
    %v1783 = vpack.i.b16 %v1782, %v1781
    %v1786 = vunpack.c.l.s4 1983009808
    %v1787 = vunpack.c.0.s8 %v1786
    %v1788 = vperm.slane %v1738, %v1787
    %v1791 = vunpack.c.l.s4 1983009808
    %v1792 = vunpack.c.0.s8 %v1791
    %v1793 = vperm.slane %v1744, %v1792
    %v1794 = vrot.slane %v1793, 4
    %v1795 = vsel %vm818, %v1794, %v1788
    %v1796 = vrot.slane %v1788, 4
    %v1797 = vsel %vm818, %v1793, %v1796
    %v1799 = vunpack.c.l.s4 1934713408
    %v1800 = vunpack.c.0.s8 %v1799
    %v1801 = vperm.slane %v1795, %v1800
    %v1803 = vunpack.c.l.s4 1934713408
    %v1804 = vunpack.c.0.s8 %v1803
    %v1805 = vperm.slane %v1797, %v1804
    %v1806 = vrot.slane %v1801, 4
    %v1807 = vsel %vm818, 0, %v1806
    %v1808 = vrot.slane %v1805, 4
    %v1809 = vsel %vm818, 0, %v1808
    %v1812 = vunpack.c.l.s4 1983009808
    %v1813 = vunpack.c.0.s8 %v1812
    %v1814 = vperm.slane %v1741, %v1813
    %v1817 = vunpack.c.l.s4 1983009808
    %v1818 = vunpack.c.0.s8 %v1817
    %v1819 = vperm.slane %v1747, %v1818
    %v1820 = vrot.slane %v1819, 4
    %v1821 = vsel %vm818, %v1820, %v1814
    %v1822 = vrot.slane %v1814, 4
    %v1823 = vsel %vm818, %v1819, %v1822
    %v1825 = vunpack.c.l.s4 1934713408
    %v1826 = vunpack.c.0.s8 %v1825
    %v1827 = vperm.slane %v1821, %v1826
    %v1829 = vunpack.c.l.s4 1934713408
    %v1830 = vunpack.c.0.s8 %v1829
    %v1831 = vperm.slane %v1823, %v1830
    %v1832 = vrot.slane %v1827, 4
    %v1833 = vsel %vm818, 0, %v1832
    %v1834 = vrot.slane %v1831, 4
    %v1835 = vsel %vm818, 0, %v1834
    %v1838 = vunpack.c.l.s4 1983009808
    %v1839 = vunpack.c.0.s8 %v1838
    %v1840 = vperm.slane %v1750, %v1839
    %v1843 = vunpack.c.l.s4 1983009808
    %v1844 = vunpack.c.0.s8 %v1843
    %v1845 = vperm.slane %v1756, %v1844
    %v1846 = vrot.slane %v1845, 4
    %v1847 = vsel %vm818, %v1846, %v1840
    %v1848 = vrot.slane %v1840, 4
    %v1849 = vsel %vm818, %v1845, %v1848
    %v1851 = vunpack.c.l.s4 1934713408
    %v1852 = vunpack.c.0.s8 %v1851
    %v1853 = vperm.slane %v1847, %v1852
    %v1855 = vunpack.c.l.s4 1934713408
    %v1856 = vunpack.c.0.s8 %v1855
    %v1857 = vperm.slane %v1849, %v1856
    %v1858 = vrot.slane %v1853, 4
    %v1859 = vsel %vm818, 0, %v1858
    %v1860 = vrot.slane %v1857, 4
    %v1861 = vsel %vm818, 0, %v1860
    %v1864 = vunpack.c.l.s4 1983009808
    %v1865 = vunpack.c.0.s8 %v1864
    %v1866 = vperm.slane %v1753, %v1865
    %v1869 = vunpack.c.l.s4 1983009808
    %v1870 = vunpack.c.0.s8 %v1869
    %v1871 = vperm.slane %v1759, %v1870
    %v1872 = vrot.slane %v1871, 4
    %v1873 = vsel %vm818, %v1872, %v1866
    %v1874 = vrot.slane %v1866, 4
    %v1875 = vsel %vm818, %v1871, %v1874
    %v1877 = vunpack.c.l.s4 1934713408
    %v1878 = vunpack.c.0.s8 %v1877
    %v1879 = vperm.slane %v1873, %v1878
    %v1881 = vunpack.c.l.s4 1934713408
    %v1882 = vunpack.c.0.s8 %v1881
    %v1883 = vperm.slane %v1875, %v1882
    %v1884 = vrot.slane %v1879, 4
    %v1885 = vsel %vm818, 0, %v1884
    %v1886 = vrot.slane %v1883, 4
    %v1887 = vsel %vm818, 0, %v1886
    %v1890 = vunpack.c.l.s4 1983009808
    %v1891 = vunpack.c.0.s8 %v1890
    %v1892 = vperm.slane %v1762, %v1891
    %v1895 = vunpack.c.l.s4 1983009808
    %v1896 = vunpack.c.0.s8 %v1895
    %v1897 = vperm.slane %v1768, %v1896
    %v1898 = vrot.slane %v1897, 4
    %v1899 = vsel %vm818, %v1898, %v1892
    %v1900 = vrot.slane %v1892, 4
    %v1901 = vsel %vm818, %v1897, %v1900
    %v1903 = vunpack.c.l.s4 1934713408
    %v1904 = vunpack.c.0.s8 %v1903
    %v1905 = vperm.slane %v1899, %v1904
    %v1907 = vunpack.c.l.s4 1934713408
    %v1908 = vunpack.c.0.s8 %v1907
    %v1909 = vperm.slane %v1901, %v1908
    %v1910 = vrot.slane %v1905, 4
    %v1911 = vsel %vm818, 0, %v1910
    %v1912 = vrot.slane %v1909, 4
    %v1913 = vsel %vm818, 0, %v1912
    %v1916 = vunpack.c.l.s4 1983009808
    %v1917 = vunpack.c.0.s8 %v1916
    %v1918 = vperm.slane %v1765, %v1917
    %v1921 = vunpack.c.l.s4 1983009808
    %v1922 = vunpack.c.0.s8 %v1921
    %v1923 = vperm.slane %v1771, %v1922
    %v1924 = vrot.slane %v1923, 4
    %v1925 = vsel %vm818, %v1924, %v1918
    %v1926 = vrot.slane %v1918, 4
    %v1927 = vsel %vm818, %v1923, %v1926
    %v1929 = vunpack.c.l.s4 1934713408
    %v1930 = vunpack.c.0.s8 %v1929
    %v1931 = vperm.slane %v1925, %v1930
    %v1933 = vunpack.c.l.s4 1934713408
    %v1934 = vunpack.c.0.s8 %v1933
    %v1935 = vperm.slane %v1927, %v1934
    %v1936 = vrot.slane %v1931, 4
    %v1937 = vsel %vm818, 0, %v1936
    %v1938 = vrot.slane %v1935, 4
    %v1939 = vsel %vm818, 0, %v1938
    %v1942 = vunpack.c.l.s4 1983009808
    %v1943 = vunpack.c.0.s8 %v1942
    %v1944 = vperm.slane %v1774, %v1943
    %v1947 = vunpack.c.l.s4 1983009808
    %v1948 = vunpack.c.0.s8 %v1947
    %v1949 = vperm.slane %v1780, %v1948
    %v1950 = vrot.slane %v1949, 4
    %v1951 = vsel %vm818, %v1950, %v1944
    %v1952 = vrot.slane %v1944, 4
    %v1953 = vsel %vm818, %v1949, %v1952
    %v1955 = vunpack.c.l.s4 1934713408
    %v1956 = vunpack.c.0.s8 %v1955
    %v1957 = vperm.slane %v1951, %v1956
    %v1959 = vunpack.c.l.s4 1934713408
    %v1960 = vunpack.c.0.s8 %v1959
    %v1961 = vperm.slane %v1953, %v1960
    %v1962 = vrot.slane %v1957, 4
    %v1963 = vsel %vm818, 0, %v1962
    %v1964 = vrot.slane %v1961, 4
    %v1965 = vsel %vm818, 0, %v1964
    %v1968 = vunpack.c.l.s4 1983009808
    %v1969 = vunpack.c.0.s8 %v1968
    %v1970 = vperm.slane %v1777, %v1969
    %v1973 = vunpack.c.l.s4 1983009808
    %v1974 = vunpack.c.0.s8 %v1973
    %v1975 = vperm.slane %v1783, %v1974
    %v1976 = vrot.slane %v1975, 4
    %v1977 = vsel %vm818, %v1976, %v1970
    %v1978 = vrot.slane %v1970, 4
    %v1979 = vsel %vm818, %v1975, %v1978
    %v1981 = vunpack.c.l.s4 1934713408
    %v1982 = vunpack.c.0.s8 %v1981
    %v1983 = vperm.slane %v1977, %v1982
    %v1985 = vunpack.c.l.s4 1934713408
    %v1986 = vunpack.c.0.s8 %v1985
    %v1987 = vperm.slane %v1979, %v1986
    %v1988 = vrot.slane %v1983, 4
    %v1989 = vsel %vm818, 0, %v1988
    %v1990 = vrot.slane %v1987, 4
    %v1991 = vsel %vm818, 0, %v1990
    %v1992 = vsel %vm818, %v1808, %v1801
    %v1994 = vunpack.c.l.s4 1983009808
    %v1995 = vunpack.c.0.s8 %v1994
    %v1996 = vperm.slane %v1992, %v1995
    %v1997 = vrot.slane %v1809, 4
    %v1998 = vsel %vm818, %v1997, %v1807
    %v2000 = vunpack.c.l.s4 1983009808
    %v2001 = vunpack.c.0.s8 %v2000
    %v2002 = vperm.slane %v1998, %v2001
    %v2003 = vrot.slane %v2002, 4
    %v2004 = vsel %vm818, %v2003, %v1996
    %v2006 = vunpack.c.l.s4 1934713408
    %v2007 = vunpack.c.0.s8 %v2006
    %v2008 = vperm.slane %v2004, %v2007
    %v2009 = vrot.slane %v2008, 4
    %v2010 = vsel %vm818, 0, %v2009
    %v2011 = vsel %vm818, %v1834, %v1827
    %v2013 = vunpack.c.l.s4 1983009808
    %v2014 = vunpack.c.0.s8 %v2013
    %v2015 = vperm.slane %v2011, %v2014
    %v2016 = vrot.slane %v1835, 4
    %v2017 = vsel %vm818, %v2016, %v1833
    %v2019 = vunpack.c.l.s4 1983009808
    %v2020 = vunpack.c.0.s8 %v2019
    %v2021 = vperm.slane %v2017, %v2020
    %v2022 = vrot.slane %v2021, 4
    %v2023 = vsel %vm818, %v2022, %v2015
    %v2025 = vunpack.c.l.s4 1934713408
    %v2026 = vunpack.c.0.s8 %v2025
    %v2027 = vperm.slane %v2023, %v2026
    %v2028 = vrot.slane %v2027, 4
    %v2029 = vsel %vm818, 0, %v2028
    %v2030 = vsel %vm818, %v1860, %v1853
    %v2032 = vunpack.c.l.s4 1983009808
    %v2033 = vunpack.c.0.s8 %v2032
    %v2034 = vperm.slane %v2030, %v2033
    %v2035 = vrot.slane %v1861, 4
    %v2036 = vsel %vm818, %v2035, %v1859
    %v2038 = vunpack.c.l.s4 1983009808
    %v2039 = vunpack.c.0.s8 %v2038
    %v2040 = vperm.slane %v2036, %v2039
    %v2041 = vrot.slane %v2040, 4
    %v2042 = vsel %vm818, %v2041, %v2034
    %v2044 = vunpack.c.l.s4 1934713408
    %v2045 = vunpack.c.0.s8 %v2044
    %v2046 = vperm.slane %v2042, %v2045
    %v2047 = vrot.slane %v2046, 4
    %v2048 = vsel %vm818, 0, %v2047
    %v2049 = vsel %vm818, %v1886, %v1879
    %v2051 = vunpack.c.l.s4 1983009808
    %v2052 = vunpack.c.0.s8 %v2051
    %v2053 = vperm.slane %v2049, %v2052
    %v2054 = vrot.slane %v1887, 4
    %v2055 = vsel %vm818, %v2054, %v1885
    %v2057 = vunpack.c.l.s4 1983009808
    %v2058 = vunpack.c.0.s8 %v2057
    %v2059 = vperm.slane %v2055, %v2058
    %v2060 = vrot.slane %v2059, 4
    %v2061 = vsel %vm818, %v2060, %v2053
    %v2063 = vunpack.c.l.s4 1934713408
    %v2064 = vunpack.c.0.s8 %v2063
    %v2065 = vperm.slane %v2061, %v2064
    %v2066 = vrot.slane %v2065, 4
    %v2067 = vsel %vm818, 0, %v2066
    %v2068 = vsel %vm818, %v1912, %v1905
    %v2070 = vunpack.c.l.s4 1983009808
    %v2071 = vunpack.c.0.s8 %v2070
    %v2072 = vperm.slane %v2068, %v2071
    %v2073 = vrot.slane %v1913, 4
    %v2074 = vsel %vm818, %v2073, %v1911
    %v2076 = vunpack.c.l.s4 1983009808
    %v2077 = vunpack.c.0.s8 %v2076
    %v2078 = vperm.slane %v2074, %v2077
    %v2079 = vrot.slane %v2078, 4
    %v2080 = vsel %vm818, %v2079, %v2072
    %v2082 = vunpack.c.l.s4 1934713408
    %v2083 = vunpack.c.0.s8 %v2082
    %v2084 = vperm.slane %v2080, %v2083
    %v2085 = vrot.slane %v2084, 4
    %v2086 = vsel %vm818, 0, %v2085
    %v2087 = vsel %vm818, %v1938, %v1931
    %v2089 = vunpack.c.l.s4 1983009808
    %v2090 = vunpack.c.0.s8 %v2089
    %v2091 = vperm.slane %v2087, %v2090
    %v2092 = vrot.slane %v1939, 4
    %v2093 = vsel %vm818, %v2092, %v1937
    %v2095 = vunpack.c.l.s4 1983009808
    %v2096 = vunpack.c.0.s8 %v2095
    %v2097 = vperm.slane %v2093, %v2096
    %v2098 = vrot.slane %v2097, 4
    %v2099 = vsel %vm818, %v2098, %v2091
    %v2101 = vunpack.c.l.s4 1934713408
    %v2102 = vunpack.c.0.s8 %v2101
    %v2103 = vperm.slane %v2099, %v2102
    %v2104 = vrot.slane %v2103, 4
    %v2105 = vsel %vm818, 0, %v2104
    %v2106 = vsel %vm818, %v1964, %v1957
    %v2108 = vunpack.c.l.s4 1983009808
    %v2109 = vunpack.c.0.s8 %v2108
    %v2110 = vperm.slane %v2106, %v2109
    %v2111 = vrot.slane %v1965, 4
    %v2112 = vsel %vm818, %v2111, %v1963
    %v2114 = vunpack.c.l.s4 1983009808
    %v2115 = vunpack.c.0.s8 %v2114
    %v2116 = vperm.slane %v2112, %v2115
    %v2117 = vrot.slane %v2116, 4
    %v2118 = vsel %vm818, %v2117, %v2110
    %v2120 = vunpack.c.l.s4 1934713408
    %v2121 = vunpack.c.0.s8 %v2120
    %v2122 = vperm.slane %v2118, %v2121
    %v2123 = vrot.slane %v2122, 4
    %v2124 = vsel %vm818, 0, %v2123
    %v2125 = vsel %vm818, %v1990, %v1983
    %v2127 = vunpack.c.l.s4 1983009808
    %v2128 = vunpack.c.0.s8 %v2127
    %v2129 = vperm.slane %v2125, %v2128
    %v2130 = vrot.slane %v1991, 4
    %v2131 = vsel %vm818, %v2130, %v1989
    %v2133 = vunpack.c.l.s4 1983009808
    %v2134 = vunpack.c.0.s8 %v2133
    %v2135 = vperm.slane %v2131, %v2134
    %v2136 = vrot.slane %v2135, 4
    %v2137 = vsel %vm818, %v2136, %v2129
    %v2139 = vunpack.c.l.s4 1934713408
    %v2140 = vunpack.c.0.s8 %v2139
    %v2141 = vperm.slane %v2137, %v2140
    %v2142 = vrot.slane %v2141, 4
    %v2143 = vsel %vm818, 0, %v2142
    %v2146 = vpack.i.b16 %v2027, %v2008
    %v2147 = vshrl.u32 %v2008, 16
    %v2148 = vshrl.u32 %v2027, 16
    %v2149 = vpack.i.b16 %v2148, %v2147
    %v2152 = vpack.i.b16 %v2029, %v2010
    %v2153 = vshrl.u32 %v2010, 16
    %v2154 = vshrl.u32 %v2029, 16
    %v2155 = vpack.i.b16 %v2154, %v2153
    %v2158 = vpack.i.b16 %v2065, %v2046
    %v2159 = vshrl.u32 %v2046, 16
    %v2160 = vshrl.u32 %v2065, 16
    %v2161 = vpack.i.b16 %v2160, %v2159
    %v2164 = vpack.i.b16 %v2067, %v2048
    %v2165 = vshrl.u32 %v2048, 16
    %v2166 = vshrl.u32 %v2067, 16
    %v2167 = vpack.i.b16 %v2166, %v2165
    %v2170 = vpack.i.b16 %v2103, %v2084
    %v2171 = vshrl.u32 %v2084, 16
    %v2172 = vshrl.u32 %v2103, 16
    %v2173 = vpack.i.b16 %v2172, %v2171
    %v2176 = vpack.i.b16 %v2105, %v2086
    %v2177 = vshrl.u32 %v2086, 16
    %v2178 = vshrl.u32 %v2105, 16
    %v2179 = vpack.i.b16 %v2178, %v2177
    %v2182 = vpack.i.b16 %v2141, %v2122
    %v2183 = vshrl.u32 %v2122, 16
    %v2184 = vshrl.u32 %v2141, 16
    %v2185 = vpack.i.b16 %v2184, %v2183
    %v2188 = vpack.i.b16 %v2143, %v2124
    %v2189 = vshrl.u32 %v2124, 16
    %v2190 = vshrl.u32 %v2143, 16
    %v2191 = vpack.i.b16 %v2190, %v2189
    %v2192 = vunpack.c.l.b16 %v1170
    %v2193 = vunpack.c.l.b16 %v1182
    %v2194 = vpack.c.b16 %v2193, %v2192
    %v2195 = vunpack.c.l.b16 %v1658
    %v2196 = vunpack.c.l.b16 %v1670
    %v2197 = vpack.c.b16 %v2196, %v2195
    %vm2198 = vcmask 261120
    %v2200 = vsel %vm2198, %v2194, 0
    %v2203 = vsel %vm2198, %v2197, 0
    %2205 = vmatpush.bf16.xpose.msra.mxu0 0
    %2206 = vmatpush.bf16.xpose.msra.mxu0 0
    %2207 = vmatpush.bf16.xpose.msra.mxu0 0
    %2208 = vmatpush.bf16.xpose.msra.mxu0 0
    %2209 = vmatpush.bf16.xpose.msra.mxu0 0
    %2210 = vmatpush.bf16.xpose.msra.mxu0 0
    %2211 = vmatpush.bf16.xpose.msra.mxu0 0
    %2212 = vmatpush.bf16.xpose.msra.mxu0 %v2203
    %2213 = vmatmul.bf16.gmra.mxu0 %v2200
    %v2214 = vpop.f32.mrf.mxu0
    %v2215 = vadd.f32 %v326, %v2214
    %v2216 = vpop.f32.mrf.mxu0
    %v2217 = vadd.f32 %v327, %v2216
    %2218 = vdwg.mxu0
    %v2219 = vunpack.c.l.b16 %v1173
    %v2220 = vunpack.c.l.b16 %v1185
    %v2221 = vpack.c.b16 %v2220, %v2219
    %v2222 = vunpack.c.l.b16 %v1661
    %v2223 = vunpack.c.l.b16 %v1673
    %v2224 = vpack.c.b16 %v2223, %v2222
    %v2226 = vsel %vm2198, %v2221, 0
    %v2229 = vsel %vm2198, %v2224, 0
    %2231 = vmatpush.bf16.xpose.msra.mxu0 0
    %2232 = vmatpush.bf16.xpose.msra.mxu0 0
    %2233 = vmatpush.bf16.xpose.msra.mxu0 0
    %2234 = vmatpush.bf16.xpose.msra.mxu0 0
    %2235 = vmatpush.bf16.xpose.msra.mxu0 0
    %2236 = vmatpush.bf16.xpose.msra.mxu0 0
    %2237 = vmatpush.bf16.xpose.msra.mxu0 0
    %2238 = vmatpush.bf16.xpose.msra.mxu0 %v2229
    %2239 = vmatmul.bf16.gmra.mxu0 %v2226
    %v2240 = vpop.f32.mrf.mxu0
    %v2241 = vadd.f32 %v326, %v2240
    %v2242 = vpop.f32.mrf.mxu0
    %v2243 = vadd.f32 %v327, %v2242
    %2244 = vdwg.mxu0
    %v2245 = vunpack.c.l.b16 %v1176
    %v2246 = vunpack.c.l.b16 %v1188
    %v2247 = vpack.c.b16 %v2246, %v2245
    %v2248 = vunpack.c.l.b16 %v1664
    %v2249 = vunpack.c.l.b16 %v1676
    %v2250 = vpack.c.b16 %v2249, %v2248
    %v2252 = vsel %vm2198, %v2247, 0
    %v2255 = vsel %vm2198, %v2250, 0
    %2257 = vmatpush.bf16.xpose.msra.mxu0 0
    %2258 = vmatpush.bf16.xpose.msra.mxu0 0
    %2259 = vmatpush.bf16.xpose.msra.mxu0 0
    %2260 = vmatpush.bf16.xpose.msra.mxu0 0
    %2261 = vmatpush.bf16.xpose.msra.mxu0 0
    %2262 = vmatpush.bf16.xpose.msra.mxu0 0
    %2263 = vmatpush.bf16.xpose.msra.mxu0 0
    %2264 = vmatpush.bf16.xpose.msra.mxu0 %v2255
    %2265 = vmatmul.bf16.gmra.mxu0 %v2252
    %v2266 = vpop.f32.mrf.mxu0
    %v2267 = vadd.f32 %v326, %v2266
    %v2268 = vpop.f32.mrf.mxu0
    %v2269 = vadd.f32 %v327, %v2268
    %2270 = vdwg.mxu0
    %v2271 = vunpack.c.l.b16 %v1179
    %v2272 = vunpack.c.l.b16 %v1191
    %v2273 = vpack.c.b16 %v2272, %v2271
    %v2274 = vunpack.c.l.b16 %v1667
    %v2275 = vunpack.c.l.b16 %v1679
    %v2276 = vpack.c.b16 %v2275, %v2274
    %v2278 = vsel %vm2198, %v2273, 0
    %v2281 = vsel %vm2198, %v2276, 0
    %2283 = vmatpush.bf16.xpose.msra.mxu0 0
    %2284 = vmatpush.bf16.xpose.msra.mxu0 0
    %2285 = vmatpush.bf16.xpose.msra.mxu0 0
    %2286 = vmatpush.bf16.xpose.msra.mxu0 0
    %2287 = vmatpush.bf16.xpose.msra.mxu0 0
    %2288 = vmatpush.bf16.xpose.msra.mxu0 0
    %2289 = vmatpush.bf16.xpose.msra.mxu0 0
    %2290 = vmatpush.bf16.xpose.msra.mxu0 %v2281
    %2291 = vmatmul.bf16.gmra.mxu0 %v2278
    %v2292 = vpop.f32.mrf.mxu0
    %v2293 = vadd.f32 %v326, %v2292
    %v2294 = vpop.f32.mrf.mxu0
    %v2295 = vadd.f32 %v327, %v2294
    %2296 = vdwg.mxu0
    %v2297 = vunpack.c.l.b16 %v1194
    %v2298 = vunpack.c.l.b16 %v1206
    %v2299 = vpack.c.b16 %v2298, %v2297
    %v2300 = vunpack.c.l.b16 %v1682
    %v2301 = vunpack.c.l.b16 %v1694
    %v2302 = vpack.c.b16 %v2301, %v2300
    %v2304 = vsel %vm2198, %v2299, 0
    %v2307 = vsel %vm2198, %v2302, 0
    %2309 = vmatpush.bf16.xpose.msra.mxu0 0
    %2310 = vmatpush.bf16.xpose.msra.mxu0 0
    %2311 = vmatpush.bf16.xpose.msra.mxu0 0
    %2312 = vmatpush.bf16.xpose.msra.mxu0 0
    %2313 = vmatpush.bf16.xpose.msra.mxu0 0
    %2314 = vmatpush.bf16.xpose.msra.mxu0 0
    %2315 = vmatpush.bf16.xpose.msra.mxu0 0
    %2316 = vmatpush.bf16.xpose.msra.mxu0 %v2307
    %2317 = vmatmul.bf16.gmra.mxu0 %v2304
    %v2318 = vpop.f32.mrf.mxu0
    %v2319 = vadd.f32 %v326, %v2318
    %v2320 = vpop.f32.mrf.mxu0
    %v2321 = vadd.f32 %v327, %v2320
    %2322 = vdwg.mxu0
    %v2323 = vunpack.c.l.b16 %v1197
    %v2324 = vunpack.c.l.b16 %v1209
    %v2325 = vpack.c.b16 %v2324, %v2323
    %v2326 = vunpack.c.l.b16 %v1685
    %v2327 = vunpack.c.l.b16 %v1697
    %v2328 = vpack.c.b16 %v2327, %v2326
    %v2330 = vsel %vm2198, %v2325, 0
    %v2333 = vsel %vm2198, %v2328, 0
    %2335 = vmatpush.bf16.xpose.msra.mxu0 0
    %2336 = vmatpush.bf16.xpose.msra.mxu0 0
    %2337 = vmatpush.bf16.xpose.msra.mxu0 0
    %2338 = vmatpush.bf16.xpose.msra.mxu0 0
    %2339 = vmatpush.bf16.xpose.msra.mxu0 0
    %2340 = vmatpush.bf16.xpose.msra.mxu0 0
    %2341 = vmatpush.bf16.xpose.msra.mxu0 0
    %2342 = vmatpush.bf16.xpose.msra.mxu0 %v2333
    %2343 = vmatmul.bf16.gmra.mxu0 %v2330
    %v2344 = vpop.f32.mrf.mxu0
    %v2345 = vadd.f32 %v326, %v2344
    %v2346 = vpop.f32.mrf.mxu0
    %v2347 = vadd.f32 %v327, %v2346
    %2348 = vdwg.mxu0
    %v2349 = vunpack.c.l.b16 %v1200
    %v2350 = vunpack.c.l.b16 %v1212
    %v2351 = vpack.c.b16 %v2350, %v2349
    %v2352 = vunpack.c.l.b16 %v1688
    %v2353 = vunpack.c.l.b16 %v1700
    %v2354 = vpack.c.b16 %v2353, %v2352
    %v2356 = vsel %vm2198, %v2351, 0
    %v2359 = vsel %vm2198, %v2354, 0
    %2361 = vmatpush.bf16.xpose.msra.mxu0 0
    %2362 = vmatpush.bf16.xpose.msra.mxu0 0
    %2363 = vmatpush.bf16.xpose.msra.mxu0 0
    %2364 = vmatpush.bf16.xpose.msra.mxu0 0
    %2365 = vmatpush.bf16.xpose.msra.mxu0 0
    %2366 = vmatpush.bf16.xpose.msra.mxu0 0
    %2367 = vmatpush.bf16.xpose.msra.mxu0 0
    %2368 = vmatpush.bf16.xpose.msra.mxu0 %v2359
    %2369 = vmatmul.bf16.gmra.mxu0 %v2356
    %v2370 = vpop.f32.mrf.mxu0
    %v2371 = vadd.f32 %v326, %v2370
    %v2372 = vpop.f32.mrf.mxu0
    %v2373 = vadd.f32 %v327, %v2372
    %2374 = vdwg.mxu0
    %v2375 = vunpack.c.l.b16 %v1203
    %v2376 = vunpack.c.l.b16 %v1215
    %v2377 = vpack.c.b16 %v2376, %v2375
    %v2378 = vunpack.c.l.b16 %v1691
    %v2379 = vunpack.c.l.b16 %v1703
    %v2380 = vpack.c.b16 %v2379, %v2378
    %v2382 = vsel %vm2198, %v2377, 0
    %v2385 = vsel %vm2198, %v2380, 0
    %2387 = vmatpush.bf16.xpose.msra.mxu0 0
    %2388 = vmatpush.bf16.xpose.msra.mxu0 0
    %2389 = vmatpush.bf16.xpose.msra.mxu0 0
    %2390 = vmatpush.bf16.xpose.msra.mxu0 0
    %2391 = vmatpush.bf16.xpose.msra.mxu0 0
    %2392 = vmatpush.bf16.xpose.msra.mxu0 0
    %2393 = vmatpush.bf16.xpose.msra.mxu0 0
    %2394 = vmatpush.bf16.xpose.msra.mxu0 %v2385
    %2395 = vmatmul.bf16.gmra.mxu0 %v2382
    %v2396 = vpop.f32.mrf.mxu0
    %v2397 = vadd.f32 %v326, %v2396
    %v2398 = vpop.f32.mrf.mxu0
    %v2399 = vadd.f32 %v327, %v2398
    %2400 = vdwg.mxu0
    %vm2401 = vcmask 130048
    %v2402 = vsel %vm2401, %v2215, -inf
    %2403 = vmax.xlane.f32.xlu0 %v2402
    %v2404 = vpop.xlane.xlu0 %2403
    %v2405 = vsel %vm2401, %v2217, -inf
    %2406 = vmax.xlane.f32.xlu0 %v2405
    %v2407 = vpop.xlane.xlu0 %2406
    %v2408 = vsel %vm2401, %v2241, -inf
    %2409 = vmax.xlane.f32.xlu0 %v2408
    %v2410 = vpop.xlane.xlu0 %2409
    %v2411 = vsel %vm2401, %v2243, -inf
    %2412 = vmax.xlane.f32.xlu0 %v2411
    %v2413 = vpop.xlane.xlu0 %2412
    %v2414 = vsel %vm2401, %v2267, -inf
    %2415 = vmax.xlane.f32.xlu0 %v2414
    %v2416 = vpop.xlane.xlu0 %2415
    %v2417 = vsel %vm2401, %v2269, -inf
    %2418 = vmax.xlane.f32.xlu0 %v2417
    %v2419 = vpop.xlane.xlu0 %2418
    %v2420 = vsel %vm2401, %v2293, -inf
    %2421 = vmax.xlane.f32.xlu0 %v2420
    %v2422 = vpop.xlane.xlu0 %2421
    %v2423 = vsel %vm2401, %v2295, -inf
    %2424 = vmax.xlane.f32.xlu0 %v2423
    %v2425 = vpop.xlane.xlu0 %2424
    %v2426 = vsel %vm2401, %v2319, -inf
    %2427 = vmax.xlane.f32.xlu0 %v2426
    %v2428 = vpop.xlane.xlu0 %2427
    %v2429 = vsel %vm2401, %v2321, -inf
    %2430 = vmax.xlane.f32.xlu0 %v2429
    %v2431 = vpop.xlane.xlu0 %2430
    %v2432 = vsel %vm2401, %v2345, -inf
    %2433 = vmax.xlane.f32.xlu0 %v2432
    %v2434 = vpop.xlane.xlu0 %2433
    %v2435 = vsel %vm2401, %v2347, -inf
    %2436 = vmax.xlane.f32.xlu0 %v2435
    %v2437 = vpop.xlane.xlu0 %2436
    %v2438 = vsel %vm2401, %v2371, -inf
    %2439 = vmax.xlane.f32.xlu0 %v2438
    %v2440 = vpop.xlane.xlu0 %2439
    %v2441 = vsel %vm2401, %v2373, -inf
    %2442 = vmax.xlane.f32.xlu0 %v2441
    %v2443 = vpop.xlane.xlu0 %2442
    %v2444 = vsel %vm2401, %v2397, -inf
    %2445 = vmax.xlane.f32.xlu0 %v2444
    %v2446 = vpop.xlane.xlu0 %2445
    %v2447 = vsel %vm2401, %v2399, -inf
    %2448 = vmax.xlane.f32.xlu0 %v2447
    %v2449 = vpop.xlane.xlu0 %2448
    %v2450 = vsub.f32 %v2215, %v2404
    %v2451 = vsub.f32 %v2217, %v2407
    %v2452 = vsub.f32 %v2241, %v2410
    %v2453 = vsub.f32 %v2243, %v2413
    %v2454 = vsub.f32 %v2267, %v2416
    %v2455 = vsub.f32 %v2269, %v2419
    %v2456 = vsub.f32 %v2293, %v2422
    %v2457 = vsub.f32 %v2295, %v2425
    %v2458 = vsub.f32 %v2319, %v2428
    %v2459 = vsub.f32 %v2321, %v2431
    %v2460 = vsub.f32 %v2345, %v2434
    %v2461 = vsub.f32 %v2347, %v2437
    %v2462 = vsub.f32 %v2371, %v2440
    %v2463 = vsub.f32 %v2373, %v2443
    %v2464 = vsub.f32 %v2397, %v2446
    %v2465 = vsub.f32 %v2399, %v2449
    %v2466 = vmul.f32 %v2450, 1.442695
    %v2467 = vpow.pop %v2466
    %v2468 = vmul.f32 %v2451, 1.442695
    %v2469 = vpow.pop %v2468
    %v2470 = vmul.f32 %v2452, 1.442695
    %v2471 = vpow.pop %v2470
    %v2472 = vmul.f32 %v2453, 1.442695
    %v2473 = vpow.pop %v2472
    %v2474 = vmul.f32 %v2454, 1.442695
    %v2475 = vpow.pop %v2474
    %v2476 = vmul.f32 %v2455, 1.442695
    %v2477 = vpow.pop %v2476
    %v2478 = vmul.f32 %v2456, 1.442695
    %v2479 = vpow.pop %v2478
    %v2480 = vmul.f32 %v2457, 1.442695
    %v2481 = vpow.pop %v2480
    %v2482 = vmul.f32 %v2458, 1.442695
    %v2483 = vpow.pop %v2482
    %v2484 = vmul.f32 %v2459, 1.442695
    %v2485 = vpow.pop %v2484
    %v2486 = vmul.f32 %v2460, 1.442695
    %v2487 = vpow.pop %v2486
    %v2488 = vmul.f32 %v2461, 1.442695
    %v2489 = vpow.pop %v2488
    %v2490 = vmul.f32 %v2462, 1.442695
    %v2491 = vpow.pop %v2490
    %v2492 = vmul.f32 %v2463, 1.442695
    %v2493 = vpow.pop %v2492
    %v2494 = vmul.f32 %v2464, 1.442695
    %v2495 = vpow.pop %v2494
    %v2496 = vmul.f32 %v2465, 1.442695
    %v2497 = vpow.pop %v2496
    %v2498 = vsel %vm2401, %v2467, 0.0
    %2499 = vadd.xlane.f32.xlu0 %v2498
    %v2500 = vpop.xlane.xlu0 %2499
    %v2501 = vsel %vm2401, %v2469, 0.0
    %2502 = vadd.xlane.f32.xlu0 %v2501
    %v2503 = vpop.xlane.xlu0 %2502
    %v2504 = vsel %vm2401, %v2471, 0.0
    %2505 = vadd.xlane.f32.xlu0 %v2504
    %v2506 = vpop.xlane.xlu0 %2505
    %v2507 = vsel %vm2401, %v2473, 0.0
    %2508 = vadd.xlane.f32.xlu0 %v2507
    %v2509 = vpop.xlane.xlu0 %2508
    %v2510 = vsel %vm2401, %v2475, 0.0
    %2511 = vadd.xlane.f32.xlu0 %v2510
    %v2512 = vpop.xlane.xlu0 %2511
    %v2513 = vsel %vm2401, %v2477, 0.0
    %2514 = vadd.xlane.f32.xlu0 %v2513
    %v2515 = vpop.xlane.xlu0 %2514
    %v2516 = vsel %vm2401, %v2479, 0.0
    %2517 = vadd.xlane.f32.xlu0 %v2516
    %v2518 = vpop.xlane.xlu0 %2517
    %v2519 = vsel %vm2401, %v2481, 0.0
    %2520 = vadd.xlane.f32.xlu0 %v2519
    %v2521 = vpop.xlane.xlu0 %2520
    %v2522 = vsel %vm2401, %v2483, 0.0
    %2523 = vadd.xlane.f32.xlu0 %v2522
    %v2524 = vpop.xlane.xlu0 %2523
    %v2525 = vsel %vm2401, %v2485, 0.0
    %2526 = vadd.xlane.f32.xlu0 %v2525
    %v2527 = vpop.xlane.xlu0 %2526
    %v2528 = vsel %vm2401, %v2487, 0.0
    %2529 = vadd.xlane.f32.xlu0 %v2528
    %v2530 = vpop.xlane.xlu0 %2529
    %v2531 = vsel %vm2401, %v2489, 0.0
    %2532 = vadd.xlane.f32.xlu0 %v2531
    %v2533 = vpop.xlane.xlu0 %2532
    %v2534 = vsel %vm2401, %v2491, 0.0
    %2535 = vadd.xlane.f32.xlu0 %v2534
    %v2536 = vpop.xlane.xlu0 %2535
    %v2537 = vsel %vm2401, %v2493, 0.0
    %2538 = vadd.xlane.f32.xlu0 %v2537
    %v2539 = vpop.xlane.xlu0 %2538
    %v2540 = vsel %vm2401, %v2495, 0.0
    %2541 = vadd.xlane.f32.xlu0 %v2540
    %v2542 = vpop.xlane.xlu0 %2541
    %v2543 = vsel %vm2401, %v2497, 0.0
    %2544 = vadd.xlane.f32.xlu0 %v2543
    %v2545 = vpop.xlane.xlu0 %2544
    %v2546 = vrcp.pop %v2500
    %v2547 = vrcp.pop %v2503
    %v2548 = vrcp.pop %v2506
    %v2549 = vrcp.pop %v2509
    %v2550 = vrcp.pop %v2512
    %v2551 = vrcp.pop %v2515
    %v2552 = vrcp.pop %v2518
    %v2553 = vrcp.pop %v2521
    %v2554 = vrcp.pop %v2524
    %v2555 = vrcp.pop %v2527
    %v2556 = vrcp.pop %v2530
    %v2557 = vrcp.pop %v2533
    %v2558 = vrcp.pop %v2536
    %v2559 = vrcp.pop %v2539
    %v2560 = vrcp.pop %v2542
    %v2561 = vrcp.pop %v2545
    %v2562 = vmul.f32 %v2467, %v2546
    %v2563 = vmul.f32 %v2469, %v2547
    %v2564 = vmul.f32 %v2471, %v2548
    %v2565 = vmul.f32 %v2473, %v2549
    %v2566 = vmul.f32 %v2475, %v2550
    %v2567 = vmul.f32 %v2477, %v2551
    %v2568 = vmul.f32 %v2479, %v2552
    %v2569 = vmul.f32 %v2481, %v2553
    %v2570 = vmul.f32 %v2483, %v2554
    %v2571 = vmul.f32 %v2485, %v2555
    %v2572 = vmul.f32 %v2487, %v2556
    %v2573 = vmul.f32 %v2489, %v2557
    %v2574 = vmul.f32 %v2491, %v2558
    %v2575 = vmul.f32 %v2493, %v2559
    %v2576 = vmul.f32 %v2495, %v2560
    %v2577 = vmul.f32 %v2497, %v2561
    %v2578 = vpack.c.bf16 %v2562, %v2562
    %v2579 = vpack.c.bf16 %v2563, %v2563
    %v2580 = vpack.c.bf16 %v2564, %v2564
    %v2581 = vpack.c.bf16 %v2565, %v2565
    %v2582 = vpack.c.bf16 %v2566, %v2566
    %v2583 = vpack.c.bf16 %v2567, %v2567
    %v2584 = vpack.c.bf16 %v2568, %v2568
    %v2585 = vpack.c.bf16 %v2569, %v2569
    %v2586 = vpack.c.bf16 %v2570, %v2570
    %v2587 = vpack.c.bf16 %v2571, %v2571
    %v2588 = vpack.c.bf16 %v2572, %v2572
    %v2589 = vpack.c.bf16 %v2573, %v2573
    %v2590 = vpack.c.bf16 %v2574, %v2574
    %v2591 = vpack.c.bf16 %v2575, %v2575
    %v2592 = vpack.c.bf16 %v2576, %v2576
    %v2593 = vpack.c.bf16 %v2577, %v2577
    %v2596 = vunpack.c.l.b16 %v2578
    %v2597 = vunpack.c.l.b16 %v2579
    %v2598 = vpack.c.b16 %v2597, %v2596
    %v2599 = vunpack.c.l.b16 %v2146
    %v2600 = vunpack.c.l.b16 %v2158
    %v2601 = vpack.c.b16 %v2600, %v2599
    %v2604 = vsel %vm2401, %v2598, 0
    %2606 = vmatpush.bf16.msra.mxu0 0
    %2607 = vmatpush.bf16.msra.mxu0 0
    %2608 = vmatpush.bf16.msra.mxu0 0
    %2609 = vmatpush.bf16.msra.mxu0 0
    %2610 = vmatpush.bf16.msra.mxu0 0
    %2611 = vmatpush.bf16.msra.mxu0 0
    %2612 = vmatpush.bf16.msra.mxu0 0
    %2613 = vmatpush.bf16.msra.mxu0 %v2601
    %2614 = vmatmul.bf16.gmra.mxu0 %v2604
    %v2615 = vpop.f32.mrf.mxu0
    %v2616 = vadd.f32 0.0, %v2615
    %v2617 = vpop.f32.mrf.mxu0
    %v2618 = vadd.f32 0.0, %v2617
    %2619 = vdwg.mxu0
    %v2622 = vunpack.c.l.b16 %v2580
    %v2623 = vunpack.c.l.b16 %v2581
    %v2624 = vpack.c.b16 %v2623, %v2622
    %v2625 = vunpack.c.l.b16 %v2149
    %v2626 = vunpack.c.l.b16 %v2161
    %v2627 = vpack.c.b16 %v2626, %v2625
    %v2630 = vsel %vm2401, %v2624, 0
    %2632 = vmatpush.bf16.msra.mxu0 0
    %2633 = vmatpush.bf16.msra.mxu0 0
    %2634 = vmatpush.bf16.msra.mxu0 0
    %2635 = vmatpush.bf16.msra.mxu0 0
    %2636 = vmatpush.bf16.msra.mxu0 0
    %2637 = vmatpush.bf16.msra.mxu0 0
    %2638 = vmatpush.bf16.msra.mxu0 0
    %2639 = vmatpush.bf16.msra.mxu0 %v2627
    %2640 = vmatmul.bf16.gmra.mxu0 %v2630
    %v2641 = vpop.f32.mrf.mxu0
    %v2642 = vadd.f32 0.0, %v2641
    %v2643 = vpop.f32.mrf.mxu0
    %v2644 = vadd.f32 0.0, %v2643
    %2645 = vdwg.mxu0
    %v2648 = vunpack.c.l.b16 %v2582
    %v2649 = vunpack.c.l.b16 %v2583
    %v2650 = vpack.c.b16 %v2649, %v2648
    %v2651 = vunpack.c.l.b16 %v2152
    %v2652 = vunpack.c.l.b16 %v2164
    %v2653 = vpack.c.b16 %v2652, %v2651
    %v2656 = vsel %vm2401, %v2650, 0
    %2658 = vmatpush.bf16.msra.mxu0 0
    %2659 = vmatpush.bf16.msra.mxu0 0
    %2660 = vmatpush.bf16.msra.mxu0 0
    %2661 = vmatpush.bf16.msra.mxu0 0
    %2662 = vmatpush.bf16.msra.mxu0 0
    %2663 = vmatpush.bf16.msra.mxu0 0
    %2664 = vmatpush.bf16.msra.mxu0 0
    %2665 = vmatpush.bf16.msra.mxu0 %v2653
    %2666 = vmatmul.bf16.gmra.mxu0 %v2656
    %v2667 = vpop.f32.mrf.mxu0
    %v2668 = vadd.f32 0.0, %v2667
    %v2669 = vpop.f32.mrf.mxu0
    %v2670 = vadd.f32 0.0, %v2669
    %2671 = vdwg.mxu0
    %v2674 = vunpack.c.l.b16 %v2584
    %v2675 = vunpack.c.l.b16 %v2585
    %v2676 = vpack.c.b16 %v2675, %v2674
    %v2677 = vunpack.c.l.b16 %v2155
    %v2678 = vunpack.c.l.b16 %v2167
    %v2679 = vpack.c.b16 %v2678, %v2677
    %v2682 = vsel %vm2401, %v2676, 0
    %2684 = vmatpush.bf16.msra.mxu0 0
    %2685 = vmatpush.bf16.msra.mxu0 0
    %2686 = vmatpush.bf16.msra.mxu0 0
    %2687 = vmatpush.bf16.msra.mxu0 0
    %2688 = vmatpush.bf16.msra.mxu0 0
    %2689 = vmatpush.bf16.msra.mxu0 0
    %2690 = vmatpush.bf16.msra.mxu0 0
    %2691 = vmatpush.bf16.msra.mxu0 %v2679
    %2692 = vmatmul.bf16.gmra.mxu0 %v2682
    %v2693 = vpop.f32.mrf.mxu0
    %v2694 = vadd.f32 0.0, %v2693
    %v2695 = vpop.f32.mrf.mxu0
    %v2696 = vadd.f32 0.0, %v2695
    %2697 = vdwg.mxu0
    %v2700 = vunpack.c.l.b16 %v2586
    %v2701 = vunpack.c.l.b16 %v2587
    %v2702 = vpack.c.b16 %v2701, %v2700
    %v2703 = vunpack.c.l.b16 %v2170
    %v2704 = vunpack.c.l.b16 %v2182
    %v2705 = vpack.c.b16 %v2704, %v2703
    %v2708 = vsel %vm2401, %v2702, 0
    %2710 = vmatpush.bf16.msra.mxu0 0
    %2711 = vmatpush.bf16.msra.mxu0 0
    %2712 = vmatpush.bf16.msra.mxu0 0
    %2713 = vmatpush.bf16.msra.mxu0 0
    %2714 = vmatpush.bf16.msra.mxu0 0
    %2715 = vmatpush.bf16.msra.mxu0 0
    %2716 = vmatpush.bf16.msra.mxu0 0
    %2717 = vmatpush.bf16.msra.mxu0 %v2705
    %2718 = vmatmul.bf16.gmra.mxu0 %v2708
    %v2719 = vpop.f32.mrf.mxu0
    %v2720 = vadd.f32 0.0, %v2719
    %v2721 = vpop.f32.mrf.mxu0
    %v2722 = vadd.f32 0.0, %v2721
    %2723 = vdwg.mxu0
    %v2726 = vunpack.c.l.b16 %v2588
    %v2727 = vunpack.c.l.b16 %v2589
    %v2728 = vpack.c.b16 %v2727, %v2726
    %v2729 = vunpack.c.l.b16 %v2173
    %v2730 = vunpack.c.l.b16 %v2185
    %v2731 = vpack.c.b16 %v2730, %v2729
    %v2734 = vsel %vm2401, %v2728, 0
    %2736 = vmatpush.bf16.msra.mxu0 0
    %2737 = vmatpush.bf16.msra.mxu0 0
    %2738 = vmatpush.bf16.msra.mxu0 0
    %2739 = vmatpush.bf16.msra.mxu0 0
    %2740 = vmatpush.bf16.msra.mxu0 0
    %2741 = vmatpush.bf16.msra.mxu0 0
    %2742 = vmatpush.bf16.msra.mxu0 0
    %2743 = vmatpush.bf16.msra.mxu0 %v2731
    %2744 = vmatmul.bf16.gmra.mxu0 %v2734
    %v2745 = vpop.f32.mrf.mxu0
    %v2746 = vadd.f32 0.0, %v2745
    %v2747 = vpop.f32.mrf.mxu0
    %v2748 = vadd.f32 0.0, %v2747
    %2749 = vdwg.mxu0
    %v2752 = vunpack.c.l.b16 %v2590
    %v2753 = vunpack.c.l.b16 %v2591
    %v2754 = vpack.c.b16 %v2753, %v2752
    %v2755 = vunpack.c.l.b16 %v2176
    %v2756 = vunpack.c.l.b16 %v2188
    %v2757 = vpack.c.b16 %v2756, %v2755
    %v2760 = vsel %vm2401, %v2754, 0
    %2762 = vmatpush.bf16.msra.mxu0 0
    %2763 = vmatpush.bf16.msra.mxu0 0
    %2764 = vmatpush.bf16.msra.mxu0 0
    %2765 = vmatpush.bf16.msra.mxu0 0
    %2766 = vmatpush.bf16.msra.mxu0 0
    %2767 = vmatpush.bf16.msra.mxu0 0
    %2768 = vmatpush.bf16.msra.mxu0 0
    %2769 = vmatpush.bf16.msra.mxu0 %v2757
    %2770 = vmatmul.bf16.gmra.mxu0 %v2760
    %v2771 = vpop.f32.mrf.mxu0
    %v2772 = vadd.f32 0.0, %v2771
    %v2773 = vpop.f32.mrf.mxu0
    %v2774 = vadd.f32 0.0, %v2773
    %2775 = vdwg.mxu0
    %v2778 = vunpack.c.l.b16 %v2592
    %v2779 = vunpack.c.l.b16 %v2593
    %v2780 = vpack.c.b16 %v2779, %v2778
    %v2781 = vunpack.c.l.b16 %v2179
    %v2782 = vunpack.c.l.b16 %v2191
    %v2783 = vpack.c.b16 %v2782, %v2781
    %v2786 = vsel %vm2401, %v2780, 0
    %2788 = vmatpush.bf16.msra.mxu0 0
    %2789 = vmatpush.bf16.msra.mxu0 0
    %2790 = vmatpush.bf16.msra.mxu0 0
    %2791 = vmatpush.bf16.msra.mxu0 0
    %2792 = vmatpush.bf16.msra.mxu0 0
    %2793 = vmatpush.bf16.msra.mxu0 0
    %2794 = vmatpush.bf16.msra.mxu0 0
    %2795 = vmatpush.bf16.msra.mxu0 %v2783
    %2796 = vmatmul.bf16.gmra.mxu0 %v2786
    %v2797 = vpop.f32.mrf.mxu0
    %v2798 = vadd.f32 0.0, %v2797
    %v2799 = vpop.f32.mrf.mxu0
    %v2800 = vadd.f32 0.0, %v2799
    %2801 = vdwg.mxu0
    %v2802 = vrot.slane %v2668, 4
    %vm2803 = vcmask 1047556
    %v2804 = vsel %vm2803, %v2802, %v2616
    %v2805 = vrot.slane %v2616, 4
    %v2806 = vsel %vm2803, %v2668, %v2805
    %v2808 = vunpack.c.l.s4 1983009808
    %v2809 = vunpack.c.0.s8 %v2808
    %v2810 = vperm.slane %v2804, %v2809
    %v2812 = vunpack.c.l.s4 1983009808
    %v2813 = vunpack.c.0.s8 %v2812
    %v2814 = vperm.slane %v2806, %v2813
    %v2815 = vrot.slane %v2694, 4
    %v2816 = vsel %vm2803, %v2815, %v2642
    %v2817 = vrot.slane %v2642, 4
    %v2818 = vsel %vm2803, %v2694, %v2817
    %v2820 = vunpack.c.l.s4 1983009808
    %v2821 = vunpack.c.0.s8 %v2820
    %v2822 = vperm.slane %v2816, %v2821
    %v2824 = vunpack.c.l.s4 1983009808
    %v2825 = vunpack.c.0.s8 %v2824
    %v2826 = vperm.slane %v2818, %v2825
    %v2827 = vrot.slane %v2822, 4
    %v2828 = vsel %vm2803, %v2827, %v2810
    %v2829 = vrot.slane %v2810, 4
    %v2830 = vsel %vm2803, %v2822, %v2829
    %v2832 = vunpack.c.l.s4 1934713408
    %v2833 = vunpack.c.0.s8 %v2832
    %v2834 = vperm.slane %v2828, %v2833
    %v2836 = vunpack.c.l.s4 1934713408
    %v2837 = vunpack.c.0.s8 %v2836
    %v2838 = vperm.slane %v2830, %v2837
    %v2839 = vrot.slane %v2826, 4
    %v2840 = vsel %vm2803, %v2839, %v2814
    %v2841 = vrot.slane %v2814, 4
    %v2842 = vsel %vm2803, %v2826, %v2841
    %v2844 = vunpack.c.l.s4 1934713408
    %v2845 = vunpack.c.0.s8 %v2844
    %v2846 = vperm.slane %v2840, %v2845
    %v2848 = vunpack.c.l.s4 1934713408
    %v2849 = vunpack.c.0.s8 %v2848
    %v2850 = vperm.slane %v2842, %v2849
    %v2851 = vrot.slane %v2834, 4
    %v2852 = vsel %vm2803, 0.0, %v2851
    %v2853 = vrot.slane %v2838, 4
    %v2854 = vsel %vm2803, 0.0, %v2853
    %v2855 = vrot.slane %v2846, 4
    %v2856 = vsel %vm2803, 0.0, %v2855
    %v2857 = vrot.slane %v2850, 4
    %v2858 = vsel %vm2803, 0.0, %v2857
    %v2859 = vrot.slane %v2670, 4
    %v2860 = vsel %vm2803, %v2859, %v2618
    %v2861 = vrot.slane %v2618, 4
    %v2862 = vsel %vm2803, %v2670, %v2861
    %v2864 = vunpack.c.l.s4 1983009808
    %v2865 = vunpack.c.0.s8 %v2864
    %v2866 = vperm.slane %v2860, %v2865
    %v2868 = vunpack.c.l.s4 1983009808
    %v2869 = vunpack.c.0.s8 %v2868
    %v2870 = vperm.slane %v2862, %v2869
    %v2871 = vrot.slane %v2696, 4
    %v2872 = vsel %vm2803, %v2871, %v2644
    %v2873 = vrot.slane %v2644, 4
    %v2874 = vsel %vm2803, %v2696, %v2873
    %v2876 = vunpack.c.l.s4 1983009808
    %v2877 = vunpack.c.0.s8 %v2876
    %v2878 = vperm.slane %v2872, %v2877
    %v2880 = vunpack.c.l.s4 1983009808
    %v2881 = vunpack.c.0.s8 %v2880
    %v2882 = vperm.slane %v2874, %v2881
    %v2883 = vrot.slane %v2878, 4
    %v2884 = vsel %vm2803, %v2883, %v2866
    %v2885 = vrot.slane %v2866, 4
    %v2886 = vsel %vm2803, %v2878, %v2885
    %v2888 = vunpack.c.l.s4 1934713408
    %v2889 = vunpack.c.0.s8 %v2888
    %v2890 = vperm.slane %v2884, %v2889
    %v2892 = vunpack.c.l.s4 1934713408
    %v2893 = vunpack.c.0.s8 %v2892
    %v2894 = vperm.slane %v2886, %v2893
    %v2895 = vrot.slane %v2882, 4
    %v2896 = vsel %vm2803, %v2895, %v2870
    %v2897 = vrot.slane %v2870, 4
    %v2898 = vsel %vm2803, %v2882, %v2897
    %v2900 = vunpack.c.l.s4 1934713408
    %v2901 = vunpack.c.0.s8 %v2900
    %v2902 = vperm.slane %v2896, %v2901
    %v2904 = vunpack.c.l.s4 1934713408
    %v2905 = vunpack.c.0.s8 %v2904
    %v2906 = vperm.slane %v2898, %v2905
    %v2907 = vrot.slane %v2890, 4
    %v2908 = vsel %vm2803, 0.0, %v2907
    %v2909 = vrot.slane %v2894, 4
    %v2910 = vsel %vm2803, 0.0, %v2909
    %v2911 = vrot.slane %v2902, 4
    %v2912 = vsel %vm2803, 0.0, %v2911
    %v2913 = vrot.slane %v2906, 4
    %v2914 = vsel %vm2803, 0.0, %v2913
    %v2915 = vrot.slane %v2772, 4
    %v2916 = vsel %vm2803, %v2915, %v2720
    %v2917 = vrot.slane %v2720, 4
    %v2918 = vsel %vm2803, %v2772, %v2917
    %v2920 = vunpack.c.l.s4 1983009808
    %v2921 = vunpack.c.0.s8 %v2920
    %v2922 = vperm.slane %v2916, %v2921
    %v2924 = vunpack.c.l.s4 1983009808
    %v2925 = vunpack.c.0.s8 %v2924
    %v2926 = vperm.slane %v2918, %v2925
    %v2927 = vrot.slane %v2798, 4
    %v2928 = vsel %vm2803, %v2927, %v2746
    %v2929 = vrot.slane %v2746, 4
    %v2930 = vsel %vm2803, %v2798, %v2929
    %v2932 = vunpack.c.l.s4 1983009808
    %v2933 = vunpack.c.0.s8 %v2932
    %v2934 = vperm.slane %v2928, %v2933
    %v2936 = vunpack.c.l.s4 1983009808
    %v2937 = vunpack.c.0.s8 %v2936
    %v2938 = vperm.slane %v2930, %v2937
    %v2939 = vrot.slane %v2934, 4
    %v2940 = vsel %vm2803, %v2939, %v2922
    %v2941 = vrot.slane %v2922, 4
    %v2942 = vsel %vm2803, %v2934, %v2941
    %v2944 = vunpack.c.l.s4 1934713408
    %v2945 = vunpack.c.0.s8 %v2944
    %v2946 = vperm.slane %v2940, %v2945
    %v2948 = vunpack.c.l.s4 1934713408
    %v2949 = vunpack.c.0.s8 %v2948
    %v2950 = vperm.slane %v2942, %v2949
    %v2951 = vrot.slane %v2938, 4
    %v2952 = vsel %vm2803, %v2951, %v2926
    %v2953 = vrot.slane %v2926, 4
    %v2954 = vsel %vm2803, %v2938, %v2953
    %v2956 = vunpack.c.l.s4 1934713408
    %v2957 = vunpack.c.0.s8 %v2956
    %v2958 = vperm.slane %v2952, %v2957
    %v2960 = vunpack.c.l.s4 1934713408
    %v2961 = vunpack.c.0.s8 %v2960
    %v2962 = vperm.slane %v2954, %v2961
    %v2963 = vrot.slane %v2946, 4
    %v2964 = vsel %vm2803, 0.0, %v2963
    %v2965 = vrot.slane %v2950, 4
    %v2966 = vsel %vm2803, 0.0, %v2965
    %v2967 = vrot.slane %v2958, 4
    %v2968 = vsel %vm2803, 0.0, %v2967
    %v2969 = vrot.slane %v2962, 4
    %v2970 = vsel %vm2803, 0.0, %v2969
    %v2971 = vrot.slane %v2774, 4
    %v2972 = vsel %vm2803, %v2971, %v2722
    %v2973 = vrot.slane %v2722, 4
    %v2974 = vsel %vm2803, %v2774, %v2973
    %v2976 = vunpack.c.l.s4 1983009808
    %v2977 = vunpack.c.0.s8 %v2976
    %v2978 = vperm.slane %v2972, %v2977
    %v2980 = vunpack.c.l.s4 1983009808
    %v2981 = vunpack.c.0.s8 %v2980
    %v2982 = vperm.slane %v2974, %v2981
    %v2983 = vrot.slane %v2800, 4
    %v2984 = vsel %vm2803, %v2983, %v2748
    %v2985 = vrot.slane %v2748, 4
    %v2986 = vsel %vm2803, %v2800, %v2985
    %v2988 = vunpack.c.l.s4 1983009808
    %v2989 = vunpack.c.0.s8 %v2988
    %v2990 = vperm.slane %v2984, %v2989
    %v2992 = vunpack.c.l.s4 1983009808
    %v2993 = vunpack.c.0.s8 %v2992
    %v2994 = vperm.slane %v2986, %v2993
    %v2995 = vrot.slane %v2990, 4
    %v2996 = vsel %vm2803, %v2995, %v2978
    %v2997 = vrot.slane %v2978, 4
    %v2998 = vsel %vm2803, %v2990, %v2997
    %v3000 = vunpack.c.l.s4 1934713408
    %v3001 = vunpack.c.0.s8 %v3000
    %v3002 = vperm.slane %v2996, %v3001
    %v3004 = vunpack.c.l.s4 1934713408
    %v3005 = vunpack.c.0.s8 %v3004
    %v3006 = vperm.slane %v2998, %v3005
    %v3007 = vrot.slane %v2994, 4
    %v3008 = vsel %vm2803, %v3007, %v2982
    %v3009 = vrot.slane %v2982, 4
    %v3010 = vsel %vm2803, %v2994, %v3009
    %v3012 = vunpack.c.l.s4 1934713408
    %v3013 = vunpack.c.0.s8 %v3012
    %v3014 = vperm.slane %v3008, %v3013
    %v3016 = vunpack.c.l.s4 1934713408
    %v3017 = vunpack.c.0.s8 %v3016
    %v3018 = vperm.slane %v3010, %v3017
    %v3019 = vrot.slane %v3002, 4
    %v3020 = vsel %vm2803, 0.0, %v3019
    %v3021 = vrot.slane %v3006, 4
    %v3022 = vsel %vm2803, 0.0, %v3021
    %v3023 = vrot.slane %v3014, 4
    %v3024 = vsel %vm2803, 0.0, %v3023
    %v3025 = vrot.slane %v3018, 4
    %v3026 = vsel %vm2803, 0.0, %v3025
    %v3027 = vsel %vm2803, %v2853, %v2834
    %v3029 = vunpack.c.l.s4 1983009808
    %v3030 = vunpack.c.0.s8 %v3029
    %v3031 = vperm.slane %v3027, %v3030
    %v3032 = vrot.slane %v2854, 4
    %v3033 = vsel %vm2803, %v3032, %v2852
    %v3035 = vunpack.c.l.s4 1983009808
    %v3036 = vunpack.c.0.s8 %v3035
    %v3037 = vperm.slane %v3033, %v3036
    %v3038 = vsel %vm2803, %v2857, %v2846
    %v3040 = vunpack.c.l.s4 1983009808
    %v3041 = vunpack.c.0.s8 %v3040
    %v3042 = vperm.slane %v3038, %v3041
    %v3043 = vrot.slane %v2858, 4
    %v3044 = vsel %vm2803, %v3043, %v2856
    %v3046 = vunpack.c.l.s4 1983009808
    %v3047 = vunpack.c.0.s8 %v3046
    %v3048 = vperm.slane %v3044, %v3047
    %v3049 = vrot.slane %v3037, 4
    %v3050 = vsel %vm2803, %v3049, %v3031
    %v3051 = vrot.slane %v3031, 4
    %v3052 = vsel %vm2803, %v3037, %v3051
    %v3054 = vunpack.c.l.s4 1934713408
    %v3055 = vunpack.c.0.s8 %v3054
    %v3056 = vperm.slane %v3050, %v3055
    %v3058 = vunpack.c.l.s4 1934713408
    %v3059 = vunpack.c.0.s8 %v3058
    %v3060 = vperm.slane %v3052, %v3059
    %v3061 = vrot.slane %v3048, 4
    %v3062 = vsel %vm2803, %v3061, %v3042
    %v3063 = vrot.slane %v3042, 4
    %v3064 = vsel %vm2803, %v3048, %v3063
    %v3066 = vunpack.c.l.s4 1934713408
    %v3067 = vunpack.c.0.s8 %v3066
    %v3068 = vperm.slane %v3062, %v3067
    %v3070 = vunpack.c.l.s4 1934713408
    %v3071 = vunpack.c.0.s8 %v3070
    %v3072 = vperm.slane %v3064, %v3071
    %v3073 = vrot.slane %v3068, 4
    %v3074 = vsel %vm2803, %v3073, %v3056
    %v3075 = vrot.slane %v3056, 4
    %v3076 = vsel %vm2803, %v3068, %v3075
    %v3077 = vrot.slane %v3072, 4
    %v3078 = vsel %vm2803, %v3077, %v3060
    %v3079 = vrot.slane %v3060, 4
    %v3080 = vsel %vm2803, %v3072, %v3079
    %v3081 = vsel %vm2803, %v2909, %v2890
    %v3083 = vunpack.c.l.s4 1983009808
    %v3084 = vunpack.c.0.s8 %v3083
    %v3085 = vperm.slane %v3081, %v3084
    %v3086 = vrot.slane %v2910, 4
    %v3087 = vsel %vm2803, %v3086, %v2908
    %v3089 = vunpack.c.l.s4 1983009808
    %v3090 = vunpack.c.0.s8 %v3089
    %v3091 = vperm.slane %v3087, %v3090
    %v3092 = vsel %vm2803, %v2913, %v2902
    %v3094 = vunpack.c.l.s4 1983009808
    %v3095 = vunpack.c.0.s8 %v3094
    %v3096 = vperm.slane %v3092, %v3095
    %v3097 = vrot.slane %v2914, 4
    %v3098 = vsel %vm2803, %v3097, %v2912
    %v3100 = vunpack.c.l.s4 1983009808
    %v3101 = vunpack.c.0.s8 %v3100
    %v3102 = vperm.slane %v3098, %v3101
    %v3103 = vrot.slane %v3091, 4
    %v3104 = vsel %vm2803, %v3103, %v3085
    %v3105 = vrot.slane %v3085, 4
    %v3106 = vsel %vm2803, %v3091, %v3105
    %v3108 = vunpack.c.l.s4 1934713408
    %v3109 = vunpack.c.0.s8 %v3108
    %v3110 = vperm.slane %v3104, %v3109
    %v3112 = vunpack.c.l.s4 1934713408
    %v3113 = vunpack.c.0.s8 %v3112
    %v3114 = vperm.slane %v3106, %v3113
    %v3115 = vrot.slane %v3102, 4
    %v3116 = vsel %vm2803, %v3115, %v3096
    %v3117 = vrot.slane %v3096, 4
    %v3118 = vsel %vm2803, %v3102, %v3117
    %v3120 = vunpack.c.l.s4 1934713408
    %v3121 = vunpack.c.0.s8 %v3120
    %v3122 = vperm.slane %v3116, %v3121
    %v3124 = vunpack.c.l.s4 1934713408
    %v3125 = vunpack.c.0.s8 %v3124
    %v3126 = vperm.slane %v3118, %v3125
    %v3127 = vrot.slane %v3122, 4
    %v3128 = vsel %vm2803, %v3127, %v3110
    %v3129 = vrot.slane %v3110, 4
    %v3130 = vsel %vm2803, %v3122, %v3129
    %v3131 = vrot.slane %v3126, 4
    %v3132 = vsel %vm2803, %v3131, %v3114
    %v3133 = vrot.slane %v3114, 4
    %v3134 = vsel %vm2803, %v3126, %v3133
    %v3135 = vsel %vm2803, %v2965, %v2946
    %v3137 = vunpack.c.l.s4 1983009808
    %v3138 = vunpack.c.0.s8 %v3137
    %v3139 = vperm.slane %v3135, %v3138
    %v3140 = vrot.slane %v2966, 4
    %v3141 = vsel %vm2803, %v3140, %v2964
    %v3143 = vunpack.c.l.s4 1983009808
    %v3144 = vunpack.c.0.s8 %v3143
    %v3145 = vperm.slane %v3141, %v3144
    %v3146 = vsel %vm2803, %v2969, %v2958
    %v3148 = vunpack.c.l.s4 1983009808
    %v3149 = vunpack.c.0.s8 %v3148
    %v3150 = vperm.slane %v3146, %v3149
    %v3151 = vrot.slane %v2970, 4
    %v3152 = vsel %vm2803, %v3151, %v2968
    %v3154 = vunpack.c.l.s4 1983009808
    %v3155 = vunpack.c.0.s8 %v3154
    %v3156 = vperm.slane %v3152, %v3155
    %v3157 = vrot.slane %v3145, 4
    %v3158 = vsel %vm2803, %v3157, %v3139
    %v3159 = vrot.slane %v3139, 4
    %v3160 = vsel %vm2803, %v3145, %v3159
    %v3162 = vunpack.c.l.s4 1934713408
    %v3163 = vunpack.c.0.s8 %v3162
    %v3164 = vperm.slane %v3158, %v3163
    %v3166 = vunpack.c.l.s4 1934713408
    %v3167 = vunpack.c.0.s8 %v3166
    %v3168 = vperm.slane %v3160, %v3167
    %v3169 = vrot.slane %v3156, 4
    %v3170 = vsel %vm2803, %v3169, %v3150
    %v3171 = vrot.slane %v3150, 4
    %v3172 = vsel %vm2803, %v3156, %v3171
    %v3174 = vunpack.c.l.s4 1934713408
    %v3175 = vunpack.c.0.s8 %v3174
    %v3176 = vperm.slane %v3170, %v3175
    %v3178 = vunpack.c.l.s4 1934713408
    %v3179 = vunpack.c.0.s8 %v3178
    %v3180 = vperm.slane %v3172, %v3179
    %v3181 = vrot.slane %v3176, 4
    %v3182 = vsel %vm2803, %v3181, %v3164
    %v3183 = vrot.slane %v3164, 4
    %v3184 = vsel %vm2803, %v3176, %v3183
    %v3185 = vrot.slane %v3180, 4
    %v3186 = vsel %vm2803, %v3185, %v3168
    %v3187 = vrot.slane %v3168, 4
    %v3188 = vsel %vm2803, %v3180, %v3187
    %v3189 = vsel %vm2803, %v3021, %v3002
    %v3191 = vunpack.c.l.s4 1983009808
    %v3192 = vunpack.c.0.s8 %v3191
    %v3193 = vperm.slane %v3189, %v3192
    %v3194 = vrot.slane %v3022, 4
    %v3195 = vsel %vm2803, %v3194, %v3020
    %v3197 = vunpack.c.l.s4 1983009808
    %v3198 = vunpack.c.0.s8 %v3197
    %v3199 = vperm.slane %v3195, %v3198
    %v3200 = vsel %vm2803, %v3025, %v3014
    %v3202 = vunpack.c.l.s4 1983009808
    %v3203 = vunpack.c.0.s8 %v3202
    %v3204 = vperm.slane %v3200, %v3203
    %v3205 = vrot.slane %v3026, 4
    %v3206 = vsel %vm2803, %v3205, %v3024
    %v3208 = vunpack.c.l.s4 1983009808
    %v3209 = vunpack.c.0.s8 %v3208
    %v3210 = vperm.slane %v3206, %v3209
    %v3211 = vrot.slane %v3199, 4
    %v3212 = vsel %vm2803, %v3211, %v3193
    %v3213 = vrot.slane %v3193, 4
    %v3214 = vsel %vm2803, %v3199, %v3213
    %v3216 = vunpack.c.l.s4 1934713408
    %v3217 = vunpack.c.0.s8 %v3216
    %v3218 = vperm.slane %v3212, %v3217
    %v3220 = vunpack.c.l.s4 1934713408
    %v3221 = vunpack.c.0.s8 %v3220
    %v3222 = vperm.slane %v3214, %v3221
    %v3223 = vrot.slane %v3210, 4
    %v3224 = vsel %vm2803, %v3223, %v3204
    %v3225 = vrot.slane %v3204, 4
    %v3226 = vsel %vm2803, %v3210, %v3225
    %v3228 = vunpack.c.l.s4 1934713408
    %v3229 = vunpack.c.0.s8 %v3228
    %v3230 = vperm.slane %v3224, %v3229
    %v3232 = vunpack.c.l.s4 1934713408
    %v3233 = vunpack.c.0.s8 %v3232
    %v3234 = vperm.slane %v3226, %v3233
    %v3235 = vrot.slane %v3230, 4
    %v3236 = vsel %vm2803, %v3235, %v3218
    %v3237 = vrot.slane %v3218, 4
    %v3238 = vsel %vm2803, %v3230, %v3237
    %v3239 = vrot.slane %v3234, 4
    %v3240 = vsel %vm2803, %v3239, %v3222
    %v3241 = vrot.slane %v3222, 4
    %v3242 = vsel %vm2803, %v3234, %v3241
    %3247 = vrot.lane.b32.xlu0 %v3076, 32
    %v3248 = vpop.permute.xlu0 %3247
    %3249 = vrot.lane.b32.xlu0 %v3130, 32
    %v3250 = vpop.permute.xlu0 %3249
    %3251 = vrot.lane.b32.xlu0 %v3184, 32
    %v3252 = vpop.permute.xlu0 %3251
    %3253 = vrot.lane.b32.xlu0 %v3238, 32
    %v3254 = vpop.permute.xlu0 %3253
    %3263 = vrot.lane.b32.xlu0 %v3078, 64
    %v3264 = vpop.permute.xlu0 %3263
    %3265 = vrot.lane.b32.xlu0 %v3132, 64
    %v3266 = vpop.permute.xlu0 %3265
    %3267 = vrot.lane.b32.xlu0 %v3186, 64
    %v3268 = vpop.permute.xlu0 %3267
    %3269 = vrot.lane.b32.xlu0 %v3240, 64
    %v3270 = vpop.permute.xlu0 %3269
    %3279 = vrot.lane.b32.xlu0 %v3080, 96
    %v3280 = vpop.permute.xlu0 %3279
    %3281 = vrot.lane.b32.xlu0 %v3134, 96
    %v3282 = vpop.permute.xlu0 %3281
    %3283 = vrot.lane.b32.xlu0 %v3188, 96
    %v3284 = vpop.permute.xlu0 %3283
    %3285 = vrot.lane.b32.xlu0 %v3242, 96
    %v3286 = vpop.permute.xlu0 %3285
    %v3291 = vsel %vm2198, %v3074, %v3248
    %v3292 = vsel %vm2198, %v3128, %v3250
    %v3293 = vsel %vm2198, %v3182, %v3252
    %v3294 = vsel %vm2198, %v3236, %v3254
    %vm3295 = vcmask 523264
    %v3296 = vsel %vm3295, %v3291, %v3264
    %v3297 = vsel %vm3295, %v3292, %v3266
    %v3298 = vsel %vm3295, %v3293, %v3268
    %v3299 = vsel %vm3295, %v3294, %v3270
    %vm3300 = vcmask 785408
    %v3301 = vsel %vm3300, %v3296, %v3280
    %v3302 = vsel %vm3300, %v3297, %v3282
    %v3303 = vsel %vm3300, %v3298, %v3284
    %v3304 = vsel %vm3300, %v3299, %v3286
    %v3305 = vpack.c.bf16 %v3302, %v3301
    %v3306 = vpack.c.bf16 %v3304, %v3303
    %v3307 = vld [vmem:[#allocation13] sm:$0xf]
    %v3308 = vld [vmem:[#allocation13 + $0x4] sm:$0xf]
    %v3309 = vld [vmem:[#allocation13 + $0x8] sm:$0xf]
    %v3310 = vld [vmem:[#allocation13 + $0xc] sm:$0xf]
    %v3311 = vld [vmem:[#allocation13 + $0x10] sm:$0xf]
    %v3312 = vld [vmem:[#allocation13 + $0x14] sm:$0xf]
    %v3313 = vld [vmem:[#allocation13 + $0x18] sm:$0xf]
    %v3314 = vld [vmem:[#allocation13 + $0x1c] sm:$0xf]
    %v3315 = vld [vmem:[#allocation13 + $0x20] sm:$0xf]
    %v3316 = vld [vmem:[#allocation13 + $0x24] sm:$0xf]
    %v3317 = vld [vmem:[#allocation13 + $0x28] sm:$0xf]
    %v3318 = vld [vmem:[#allocation13 + $0x2c] sm:$0xf]
    %v3319 = vld [vmem:[#allocation13 + $0x30] sm:$0xf]
    %v3320 = vld [vmem:[#allocation13 + $0x34] sm:$0xf]
    %v3321 = vld [vmem:[#allocation13 + $0x38] sm:$0xf]
    %v3322 = vld [vmem:[#allocation13 + $0x3c] sm:$0xf]
    %v3323 = vld [vmem:[#allocation14] sm:$0x1]
    %v3325 = vperm.slane %v3323, 0
    %v3343 = vunpack.c.l.b16 %v3307
    %v3344 = vunpack.c.l.b16 %v3308
    %v3345 = vunpack.c.l.b16 %v3309
    %v3346 = vunpack.c.l.b16 %v3310
    %v3347 = vunpack.c.l.b16 %v3311
    %v3348 = vunpack.c.l.b16 %v3312
    %v3349 = vunpack.c.l.b16 %v3313
    %v3350 = vunpack.c.l.b16 %v3314
    %v3351 = vunpack.c.l.b16 %v3315
    %v3352 = vunpack.c.l.b16 %v3316
    %v3353 = vunpack.c.l.b16 %v3317
    %v3354 = vunpack.c.l.b16 %v3318
    %v3355 = vunpack.c.l.b16 %v3319
    %v3356 = vunpack.c.l.b16 %v3320
    %v3357 = vunpack.c.l.b16 %v3321
    %v3358 = vunpack.c.l.b16 %v3322
    %v3359 = vpack.c.b16 %v3344, %v3343
    %v3360 = vpack.c.b16 %v3346, %v3345
    %v3361 = vpack.c.b16 %v3348, %v3347
    %v3362 = vpack.c.b16 %v3350, %v3349
    %v3363 = vpack.c.b16 %v3352, %v3351
    %v3364 = vpack.c.b16 %v3354, %v3353
    %v3365 = vpack.c.b16 %v3356, %v3355
    %v3366 = vpack.c.b16 %v3358, %v3357
    %3375 = vmatpush.bf16.msra.mxu0 %v3366
    %3376 = vmatpush.bf16.msra.mxu0 %v3365
    %3377 = vmatpush.bf16.msra.mxu0 %v3364
    %3378 = vmatpush.bf16.msra.mxu0 %v3363
    %3379 = vmatpush.bf16.msra.mxu0 %v3362
    %3380 = vmatpush.bf16.msra.mxu0 %v3361
    %3381 = vmatpush.bf16.msra.mxu0 %v3360
    %3382 = vmatpush.bf16.msra.mxu0 %v3359
    %3383 = vmatmul.bf16.gmra.mxu0 %v3305
    %v3384 = vpop.f32.mrf.mxu0
    %v3385 = vadd.f32 %v3325, %v3384
    %v3386 = vpop.f32.mrf.mxu0
    %v3387 = vadd.f32 %v3325, %v3386
    %3388 = vmatmul.bf16.gmra.mxu0 %v3306
    %v3389 = vpop.f32.mrf.mxu0
    %v3390 = vadd.f32 %v3325, %v3389
    %v3391 = vpop.f32.mrf.mxu0
    %v3392 = vadd.f32 %v3325, %v3391
    %3393 = vdwg.mxu0
    %v3394 = vadd.f32 %v306, %v3385
    %v3395 = vadd.f32 %v307, %v3387
    %v3396 = vadd.f32 %v308, %v3390
    %v3397 = vadd.f32 %v309, %v3392
    %v3398 = vld [vmem:[%s18 + $0x1] sm:$0x1]
    %v3399 = vld [vmem:[%s19 + $0x1] sm:$0x1]
    %3400 = vadd.xlane.f32.xlu0 %v3394
    %v3401 = vpop.xlane.xlu0 %3400
    %3402 = vadd.xlane.f32.xlu0 %v3395
    %v3403 = vpop.xlane.xlu0 %3402
    %3404 = vadd.xlane.f32.xlu0 %v3396
    %v3405 = vpop.xlane.xlu0 %3404
    %3406 = vadd.xlane.f32.xlu0 %v3397
    %v3407 = vpop.xlane.xlu0 %3406
    %v3408 = vmul.f32 %v3401, %v346
    %v3409 = vmul.f32 %v3403, %v346
    %v3410 = vmul.f32 %v3405, %v346
    %v3411 = vmul.f32 %v3407, %v346
    %v3412 = vsub.f32 %v3394, %v3408
    %v3413 = vsub.f32 %v3395, %v3409
    %v3414 = vsub.f32 %v3396, %v3410
    %v3415 = vsub.f32 %v3397, %v3411
    %v3416 = vmul.f32 %v3412, %v3412
    %v3417 = vmul.f32 %v3413, %v3413
    %v3418 = vmul.f32 %v3414, %v3414
    %v3419 = vmul.f32 %v3415, %v3415
    %3420 = vadd.xlane.f32.xlu0 %v3416
    %v3421 = vpop.xlane.xlu0 %3420
    %3422 = vadd.xlane.f32.xlu0 %v3417
    %v3423 = vpop.xlane.xlu0 %3422
    %3424 = vadd.xlane.f32.xlu0 %v3418
    %v3425 = vpop.xlane.xlu0 %3424
    %3426 = vadd.xlane.f32.xlu0 %v3419
    %v3427 = vpop.xlane.xlu0 %3426
    %v3428 = vmul.f32 %v3421, %v373
    %v3429 = vmul.f32 %v3423, %v373
    %v3430 = vmul.f32 %v3425, %v373
    %v3431 = vmul.f32 %v3427, %v373
    %v3432 = vrsqrt.pop %v3428
    %v3433 = vmul.f32 %v3432, %v3428
    %v3434 = vmul.f32 %v3433, %v3432
    %v3435 = vmul.f32 0.5, %v3434
    %v3436 = vsub.f32 1.5, %v3435
    %v3437 = vmul.f32 %v3432, %v3436
    %v3438 = vmul.f32 %v3428, %v3437
    %vm3439 = vcmp.eq.f32.partialorder %v3428, inf
    %v3440 = vsel %vm3439, %v3428, %v3438
    %vm3441 = vcmp.eq.f32.partialorder %v3428, 0.0
    %v3442 = vand.u32 %v3428, 2147483648
    %v3443 = vsel %vm3441, %v3442, %v3440
    %v3444 = vrsqrt.pop %v3429
    %v3445 = vmul.f32 %v3444, %v3429
    %v3446 = vmul.f32 %v3445, %v3444
    %v3447 = vmul.f32 0.5, %v3446
    %v3448 = vsub.f32 1.5, %v3447
    %v3449 = vmul.f32 %v3444, %v3448
    %v3450 = vmul.f32 %v3429, %v3449
    %vm3451 = vcmp.eq.f32.partialorder %v3429, inf
    %v3452 = vsel %vm3451, %v3429, %v3450
    %vm3453 = vcmp.eq.f32.partialorder %v3429, 0.0
    %v3454 = vand.u32 %v3429, 2147483648
    %v3455 = vsel %vm3453, %v3454, %v3452
    %v3456 = vrsqrt.pop %v3430
    %v3457 = vmul.f32 %v3456, %v3430
    %v3458 = vmul.f32 %v3457, %v3456
    %v3459 = vmul.f32 0.5, %v3458
    %v3460 = vsub.f32 1.5, %v3459
    %v3461 = vmul.f32 %v3456, %v3460
    %v3462 = vmul.f32 %v3430, %v3461
    %vm3463 = vcmp.eq.f32.partialorder %v3430, inf
    %v3464 = vsel %vm3463, %v3430, %v3462
    %vm3465 = vcmp.eq.f32.partialorder %v3430, 0.0
    %v3466 = vand.u32 %v3430, 2147483648
    %v3467 = vsel %vm3465, %v3466, %v3464
    %v3468 = vrsqrt.pop %v3431
    %v3469 = vmul.f32 %v3468, %v3431
    %v3470 = vmul.f32 %v3469, %v3468
    %v3471 = vmul.f32 0.5, %v3470
    %v3472 = vsub.f32 1.5, %v3471
    %v3473 = vmul.f32 %v3468, %v3472
    %v3474 = vmul.f32 %v3431, %v3473
    %vm3475 = vcmp.eq.f32.partialorder %v3431, inf
    %v3476 = vsel %vm3475, %v3431, %v3474
    %vm3477 = vcmp.eq.f32.partialorder %v3431, 0.0
    %v3478 = vand.u32 %v3431, 2147483648
    %v3479 = vsel %vm3477, %v3478, %v3476
    %v3480 = vperm.slane %v3398, 0
    %v3481 = vmul.f32 %v3480, %v3412
    %v3482 = vmul.f32 %v3480, %v3413
    %v3483 = vmul.f32 %v3480, %v3414
    %v3484 = vmul.f32 %v3480, %v3415
    %v3485 = vadd.f32 %v3443, 1e-06
    %v3486 = vadd.f32 %v3455, 1e-06
    %v3487 = vadd.f32 %v3467, 1e-06
    %v3488 = vadd.f32 %v3479, 1e-06
    %v3489 = vrcp.pop %v3485
    %v3490 = vmul.f32 %v3485, %v3489
    %v3491 = vsub.f32 1.0, %v3490
    %v3492 = vmul.f32 %v3489, %v3491
    %v3493 = vadd.f32 %v3489, %v3492
    %vm3494 = vweird.f32 %v3485
    %vm3495 = vweird.f32 %v3489
    %vm3496 = vmor %vm3494, %vm3495
    %v3497 = vsel %vm3496, %v3489, %v3493
    %v3498 = vand.u32 2147483647, %v3485
    %vm3499 = vcmp.eq.f32.partialorder %v3498, 8.507059e+37
    %v3500 = vand.u32 %v3485, 2147483648
    %v3501 = vor.u32 1.1754944e-38, %v3500
    %v3502 = vsel %vm3499, %v3501, %v3497
    %v3503 = vmul.f32 %v3481, %v3502
    %v3504 = vrcp.pop %v3486
    %v3505 = vmul.f32 %v3486, %v3504
    %v3506 = vsub.f32 1.0, %v3505
    %v3507 = vmul.f32 %v3504, %v3506
    %v3508 = vadd.f32 %v3504, %v3507
    %vm3509 = vweird.f32 %v3486
    %vm3510 = vweird.f32 %v3504
    %vm3511 = vmor %vm3509, %vm3510
    %v3512 = vsel %vm3511, %v3504, %v3508
    %v3513 = vand.u32 2147483647, %v3486
    %vm3514 = vcmp.eq.f32.partialorder %v3513, 8.507059e+37
    %v3515 = vand.u32 %v3486, 2147483648
    %v3516 = vor.u32 1.1754944e-38, %v3515
    %v3517 = vsel %vm3514, %v3516, %v3512
    %v3518 = vmul.f32 %v3482, %v3517
    %v3519 = vrcp.pop %v3487
    %v3520 = vmul.f32 %v3487, %v3519
    %v3521 = vsub.f32 1.0, %v3520
    %v3522 = vmul.f32 %v3519, %v3521
    %v3523 = vadd.f32 %v3519, %v3522
    %vm3524 = vweird.f32 %v3487
    %vm3525 = vweird.f32 %v3519
    %vm3526 = vmor %vm3524, %vm3525
    %v3527 = vsel %vm3526, %v3519, %v3523
    %v3528 = vand.u32 2147483647, %v3487
    %vm3529 = vcmp.eq.f32.partialorder %v3528, 8.507059e+37
    %v3530 = vand.u32 %v3487, 2147483648
    %v3531 = vor.u32 1.1754944e-38, %v3530
    %v3532 = vsel %vm3529, %v3531, %v3527
    %v3533 = vmul.f32 %v3483, %v3532
    %v3534 = vrcp.pop %v3488
    %v3535 = vmul.f32 %v3488, %v3534
    %v3536 = vsub.f32 1.0, %v3535
    %v3537 = vmul.f32 %v3534, %v3536
    %v3538 = vadd.f32 %v3534, %v3537
    %vm3539 = vweird.f32 %v3488
    %vm3540 = vweird.f32 %v3534
    %vm3541 = vmor %vm3539, %vm3540
    %v3542 = vsel %vm3541, %v3534, %v3538
    %v3543 = vand.u32 2147483647, %v3488
    %vm3544 = vcmp.eq.f32.partialorder %v3543, 8.507059e+37
    %v3545 = vand.u32 %v3488, 2147483648
    %v3546 = vor.u32 1.1754944e-38, %v3545
    %v3547 = vsel %vm3544, %v3546, %v3542
    %v3548 = vmul.f32 %v3484, %v3547
    %v3549 = vperm.slane %v3399, 0
    %v3550 = vadd.f32 %v3503, %v3549
    %v3551 = vadd.f32 %v3518, %v3549
    %v3552 = vadd.f32 %v3533, %v3549
    %v3553 = vadd.f32 %v3548, %v3549
    %v3554 = vpack.c.bf16 %v3551, %v3550
    %v3555 = vpack.c.bf16 %v3553, %v3552
    %v3556 = vld [vmem:[#allocation16] sm:$0xf]
    %v3557 = vld [vmem:[#allocation16 + $0x4] sm:$0xf]
    %v3558 = vld [vmem:[#allocation16 + $0x8] sm:$0xf]
    %v3559 = vld [vmem:[#allocation16 + $0xc] sm:$0xf]
    %v3560 = vld [vmem:[#allocation16 + $0x10] sm:$0xf]
    %v3561 = vld [vmem:[#allocation16 + $0x14] sm:$0xf]
    %v3562 = vld [vmem:[#allocation16 + $0x18] sm:$0xf]
    %v3563 = vld [vmem:[#allocation16 + $0x1c] sm:$0xf]
    %v3564 = vld [vmem:[#allocation16 + $0x20] sm:$0xf]
    %v3565 = vld [vmem:[#allocation16 + $0x24] sm:$0xf]
    %v3566 = vld [vmem:[#allocation16 + $0x28] sm:$0xf]
    %v3567 = vld [vmem:[#allocation16 + $0x2c] sm:$0xf]
    %v3568 = vld [vmem:[#allocation16 + $0x30] sm:$0xf]
    %v3569 = vld [vmem:[#allocation16 + $0x34] sm:$0xf]
    %v3570 = vld [vmem:[#allocation16 + $0x38] sm:$0xf]
    %v3571 = vld [vmem:[#allocation16 + $0x3c] sm:$0xf]
    %v3572 = vld [vmem:[#allocation17] sm:$0x1]
    %v3574 = vperm.slane %v3572, 0
    %v3592 = vunpack.c.l.b16 %v3556
    %v3593 = vunpack.c.l.b16 %v3557
    %v3594 = vunpack.c.l.b16 %v3558
    %v3595 = vunpack.c.l.b16 %v3559
    %v3596 = vunpack.c.l.b16 %v3560
    %v3597 = vunpack.c.l.b16 %v3561
    %v3598 = vunpack.c.l.b16 %v3562
    %v3599 = vunpack.c.l.b16 %v3563
    %v3600 = vunpack.c.l.b16 %v3564
    %v3601 = vunpack.c.l.b16 %v3565
    %v3602 = vunpack.c.l.b16 %v3566
    %v3603 = vunpack.c.l.b16 %v3567
    %v3604 = vunpack.c.l.b16 %v3568
    %v3605 = vunpack.c.l.b16 %v3569
    %v3606 = vunpack.c.l.b16 %v3570
    %v3607 = vunpack.c.l.b16 %v3571
    %v3608 = vpack.c.b16 %v3593, %v3592
    %v3609 = vpack.c.b16 %v3595, %v3594
    %v3610 = vpack.c.b16 %v3597, %v3596
    %v3611 = vpack.c.b16 %v3599, %v3598
    %v3612 = vpack.c.b16 %v3601, %v3600
    %v3613 = vpack.c.b16 %v3603, %v3602
    %v3614 = vpack.c.b16 %v3605, %v3604
    %v3615 = vpack.c.b16 %v3607, %v3606
    %3624 = vmatpush.bf16.msra.mxu0 %v3615
    %3625 = vmatpush.bf16.msra.mxu0 %v3614
    %3626 = vmatpush.bf16.msra.mxu0 %v3613
    %3627 = vmatpush.bf16.msra.mxu0 %v3612
    %3628 = vmatpush.bf16.msra.mxu0 %v3611
    %3629 = vmatpush.bf16.msra.mxu0 %v3610
    %3630 = vmatpush.bf16.msra.mxu0 %v3609
    %3631 = vmatpush.bf16.msra.mxu0 %v3608
    %3632 = vmatmul.bf16.gmra.mxu0 %v3554
    %v3633 = vpop.f32.mrf.mxu0
    %v3634 = vadd.f32 %v3574, %v3633
    %v3635 = vpop.f32.mrf.mxu0
    %v3636 = vadd.f32 %v3574, %v3635
    %3637 = vmatmul.bf16.gmra.mxu0 %v3555
    %v3638 = vpop.f32.mrf.mxu0
    %v3639 = vadd.f32 %v3574, %v3638
    %v3640 = vpop.f32.mrf.mxu0
    %v3641 = vadd.f32 %v3574, %v3640
    %3642 = vdwg.mxu0
    %v3643 = vld [vmem:[#allocation19] sm:$0xff]
    %v3644 = vld [vmem:[#allocation19 + $0x8] sm:$0xff]
    %v3645 = vld [vmem:[#allocation19 + $0x10] sm:$0xff]
    %v3646 = vld [vmem:[#allocation19 + $0x18] sm:$0xff]
    %v3647 = vld [vmem:[#allocation19 + $0x20] sm:$0xff]
    %v3648 = vld [vmem:[#allocation19 + $0x28] sm:$0xff]
    %v3649 = vld [vmem:[#allocation19 + $0x30] sm:$0xff]
    %v3650 = vld [vmem:[#allocation19 + $0x38] sm:$0xff]
    %v3651 = vld [vmem:[#allocation19 + $0x40] sm:$0xff]
    %v3652 = vld [vmem:[#allocation19 + $0x48] sm:$0xff]
    %v3653 = vld [vmem:[#allocation19 + $0x50] sm:$0xff]
    %v3654 = vld [vmem:[#allocation19 + $0x58] sm:$0xff]
    %v3655 = vld [vmem:[#allocation19 + $0x60] sm:$0xff]
    %v3656 = vld [vmem:[#allocation19 + $0x68] sm:$0xff]
    %v3657 = vld [vmem:[#allocation19 + $0x70] sm:$0xff]
    %v3658 = vld [vmem:[#allocation19 + $0x78] sm:$0xff]
    %v3659 = vld [vmem:[#allocation20] sm:$0x3]
    %v3661 = vperm.slane %v3659, 0
    %v3662 = vperm.slane %v3659, 1
    %v3673 = vunpack.c.l.b16 %v318
    %v3674 = vunpack.c.l.b16 %v319
    %v3675 = vunpack.c.l.b16 %v320
    %v3676 = vunpack.c.l.b16 %v321
    %v3677 = vunpack.c.l.b16 %v322
    %v3678 = vunpack.c.l.b16 %v323
    %v3679 = vunpack.c.l.b16 %v324
    %v3680 = vunpack.c.l.b16 %v325
    %v3681 = vpack.c.b16 %v3674, %v3673
    %v3682 = vpack.c.b16 %v3676, %v3675
    %v3683 = vpack.c.b16 %v3678, %v3677
    %v3684 = vpack.c.b16 %v3680, %v3679
    %v3705 = vunpack.c.l.b16 %v3643
    %v3706 = vunpack.c.h.b16 %v3643
    %v3707 = vunpack.c.l.b16 %v3644
    %v3708 = vunpack.c.h.b16 %v3644
    %v3709 = vunpack.c.l.b16 %v3645
    %v3710 = vunpack.c.h.b16 %v3645
    %v3711 = vunpack.c.l.b16 %v3646
    %v3712 = vunpack.c.h.b16 %v3646
    %v3713 = vunpack.c.l.b16 %v3647
    %v3714 = vunpack.c.h.b16 %v3647
    %v3715 = vunpack.c.l.b16 %v3648
    %v3716 = vunpack.c.h.b16 %v3648
    %v3717 = vunpack.c.l.b16 %v3649
    %v3718 = vunpack.c.h.b16 %v3649
    %v3719 = vunpack.c.l.b16 %v3650
    %v3720 = vunpack.c.h.b16 %v3650
    %v3721 = vunpack.c.l.b16 %v3651
    %v3722 = vunpack.c.h.b16 %v3651
    %v3723 = vunpack.c.l.b16 %v3652
    %v3724 = vunpack.c.h.b16 %v3652
    %v3725 = vunpack.c.l.b16 %v3653
    %v3726 = vunpack.c.h.b16 %v3653
    %v3727 = vunpack.c.l.b16 %v3654
    %v3728 = vunpack.c.h.b16 %v3654
    %v3729 = vunpack.c.l.b16 %v3655
    %v3730 = vunpack.c.h.b16 %v3655
    %v3731 = vunpack.c.l.b16 %v3656
    %v3732 = vunpack.c.h.b16 %v3656
    %v3733 = vunpack.c.l.b16 %v3657
    %v3734 = vunpack.c.h.b16 %v3657
    %v3735 = vunpack.c.l.b16 %v3658
    %v3736 = vunpack.c.h.b16 %v3658
    %v3737 = vpack.c.b16 %v3707, %v3705
    %v3738 = vpack.c.b16 %v3708, %v3706
    %v3739 = vpack.c.b16 %v3711, %v3709
    %v3740 = vpack.c.b16 %v3712, %v3710
    %v3741 = vpack.c.b16 %v3715, %v3713
    %v3742 = vpack.c.b16 %v3716, %v3714
    %v3743 = vpack.c.b16 %v3719, %v3717
    %v3744 = vpack.c.b16 %v3720, %v3718
    %v3745 = vpack.c.b16 %v3723, %v3721
    %v3746 = vpack.c.b16 %v3724, %v3722
    %v3747 = vpack.c.b16 %v3727, %v3725
    %v3748 = vpack.c.b16 %v3728, %v3726
    %v3749 = vpack.c.b16 %v3731, %v3729
    %v3750 = vpack.c.b16 %v3732, %v3730
    %v3751 = vpack.c.b16 %v3735, %v3733
    %v3752 = vpack.c.b16 %v3736, %v3734
    %3769 = vmatpush.bf16.msra.mxu0 %v3751
    %3770 = vmatpush.bf16.msra.mxu0 %v3749
    %3771 = vmatpush.bf16.msra.mxu0 %v3747
    %3772 = vmatpush.bf16.msra.mxu0 %v3745
    %3773 = vmatpush.bf16.msra.mxu0 %v3743
    %3774 = vmatpush.bf16.msra.mxu0 %v3741
    %3775 = vmatpush.bf16.msra.mxu0 %v3739
    %3776 = vmatpush.bf16.msra.mxu0 %v3737
    %3777 = vmatmul.bf16.gmra.mxu0 %v3681
    %v3778 = vpop.f32.mrf.mxu0
    %v3779 = vadd.f32 %v3661, %v3778
    %v3780 = vpop.f32.mrf.mxu0
    %v3781 = vadd.f32 %v3661, %v3780
    %3782 = vmatmul.bf16.gmra.mxu0 %v3682
    %v3783 = vpop.f32.mrf.mxu0
    %v3784 = vadd.f32 %v3661, %v3783
    %v3785 = vpop.f32.mrf.mxu0
    %v3786 = vadd.f32 %v3661, %v3785
    %3787 = vmatmul.bf16.gmra.mxu0 %v3683
    %v3788 = vpop.f32.mrf.mxu0
    %v3789 = vadd.f32 %v3661, %v3788
    %v3790 = vpop.f32.mrf.mxu0
    %v3791 = vadd.f32 %v3661, %v3790
    %3792 = vmatmul.bf16.gmra.mxu0 %v3684
    %v3793 = vpop.f32.mrf.mxu0
    %v3794 = vadd.f32 %v3661, %v3793
    %v3795 = vpop.f32.mrf.mxu0
    %v3796 = vadd.f32 %v3661, %v3795
    %3797 = vdwg.mxu0
    %3798 = vmatpush.bf16.msra.mxu0 %v3752
    %3799 = vmatpush.bf16.msra.mxu0 %v3750
    %3800 = vmatpush.bf16.msra.mxu0 %v3748
    %3801 = vmatpush.bf16.msra.mxu0 %v3746
    %3802 = vmatpush.bf16.msra.mxu0 %v3744
    %3803 = vmatpush.bf16.msra.mxu0 %v3742
    %3804 = vmatpush.bf16.msra.mxu0 %v3740
    %3805 = vmatpush.bf16.msra.mxu0 %v3738
    %3806 = vmatmul.bf16.gmra.mxu0 %v3681
    %v3807 = vpop.f32.mrf.mxu0
    %v3808 = vadd.f32 %v3662, %v3807
    %v3809 = vpop.f32.mrf.mxu0
    %v3810 = vadd.f32 %v3662, %v3809
    %3811 = vmatmul.bf16.gmra.mxu0 %v3682
    %v3812 = vpop.f32.mrf.mxu0
    %v3813 = vadd.f32 %v3662, %v3812
    %v3814 = vpop.f32.mrf.mxu0
    %v3815 = vadd.f32 %v3662, %v3814
    %3816 = vmatmul.bf16.gmra.mxu0 %v3683
    %v3817 = vpop.f32.mrf.mxu0
    %v3818 = vadd.f32 %v3662, %v3817
    %v3819 = vpop.f32.mrf.mxu0
    %v3820 = vadd.f32 %v3662, %v3819
    %3821 = vmatmul.bf16.gmra.mxu0 %v3684
    %v3822 = vpop.f32.mrf.mxu0
    %v3823 = vadd.f32 %v3662, %v3822
    %v3824 = vpop.f32.mrf.mxu0
    %v3825 = vadd.f32 %v3662, %v3824
    %3826 = vdwg.mxu0
    %v3827 = vpack.c.bf16 %v3634, %v3634
    %v3828 = vpack.c.bf16 %v3636, %v3636
    %v3829 = vpack.c.bf16 %v3639, %v3639
    %v3830 = vpack.c.bf16 %v3641, %v3641
    %3835 = vrot.lane.b32.xlu0 %v3827, 96
    %v3836 = vpop.permute.xlu0 %3835
    %3837 = vrot.lane.b32.xlu0 %v3828, 96
    %v3838 = vpop.permute.xlu0 %3837
    %3839 = vrot.lane.b32.xlu0 %v3829, 96
    %v3840 = vpop.permute.xlu0 %3839
    %3841 = vrot.lane.b32.xlu0 %v3830, 96
    %v3842 = vpop.permute.xlu0 %3841
    %3843 = vrot.lane.b32.xlu0 %v3827, 64
    %v3844 = vpop.permute.xlu0 %3843
    %3845 = vrot.lane.b32.xlu0 %v3828, 64
    %v3846 = vpop.permute.xlu0 %3845
    %3847 = vrot.lane.b32.xlu0 %v3829, 64
    %v3848 = vpop.permute.xlu0 %3847
    %3849 = vrot.lane.b32.xlu0 %v3830, 64
    %v3850 = vpop.permute.xlu0 %3849
    %3851 = vrot.lane.b32.xlu0 %v3827, 32
    %v3852 = vpop.permute.xlu0 %3851
    %3853 = vrot.lane.b32.xlu0 %v3828, 32
    %v3854 = vpop.permute.xlu0 %3853
    %3855 = vrot.lane.b32.xlu0 %v3829, 32
    %v3856 = vpop.permute.xlu0 %3855
    %3857 = vrot.lane.b32.xlu0 %v3830, 32
    %v3858 = vpop.permute.xlu0 %3857
    %v3861 = vpack.i.b16 %v3836, %v3827
    %v3862 = vshrl.u32 %v3827, 16
    %v3863 = vshrl.u32 %v3836, 16
    %v3864 = vpack.i.b16 %v3863, %v3862
    %v3867 = vpack.i.b16 %v3852, %v3844
    %v3868 = vshrl.u32 %v3844, 16
    %v3869 = vshrl.u32 %v3852, 16
    %v3870 = vpack.i.b16 %v3869, %v3868
    %v3873 = vpack.i.b16 %v3838, %v3828
    %v3874 = vshrl.u32 %v3828, 16
    %v3875 = vshrl.u32 %v3838, 16
    %v3876 = vpack.i.b16 %v3875, %v3874
    %v3879 = vpack.i.b16 %v3854, %v3846
    %v3880 = vshrl.u32 %v3846, 16
    %v3881 = vshrl.u32 %v3854, 16
    %v3882 = vpack.i.b16 %v3881, %v3880
    %v3885 = vpack.i.b16 %v3840, %v3829
    %v3886 = vshrl.u32 %v3829, 16
    %v3887 = vshrl.u32 %v3840, 16
    %v3888 = vpack.i.b16 %v3887, %v3886
    %v3891 = vpack.i.b16 %v3856, %v3848
    %v3892 = vshrl.u32 %v3848, 16
    %v3893 = vshrl.u32 %v3856, 16
    %v3894 = vpack.i.b16 %v3893, %v3892
    %v3897 = vpack.i.b16 %v3842, %v3830
    %v3898 = vshrl.u32 %v3830, 16
    %v3899 = vshrl.u32 %v3842, 16
    %v3900 = vpack.i.b16 %v3899, %v3898
    %v3903 = vpack.i.b16 %v3858, %v3850
    %v3904 = vshrl.u32 %v3850, 16
    %v3905 = vshrl.u32 %v3858, 16
    %v3906 = vpack.i.b16 %v3905, %v3904
    %v3909 = vunpack.c.l.s4 1983009808
    %v3910 = vunpack.c.0.s8 %v3909
    %v3911 = vperm.slane %v3861, %v3910
    %v3914 = vunpack.c.l.s4 1983009808
    %v3915 = vunpack.c.0.s8 %v3914
    %v3916 = vperm.slane %v3867, %v3915
    %v3917 = vrot.slane %v3916, 4
    %v3918 = vsel %vm818, %v3917, %v3911
    %v3919 = vrot.slane %v3911, 4
    %v3920 = vsel %vm818, %v3916, %v3919
    %v3922 = vunpack.c.l.s4 1934713408
    %v3923 = vunpack.c.0.s8 %v3922
    %v3924 = vperm.slane %v3918, %v3923
    %v3926 = vunpack.c.l.s4 1934713408
    %v3927 = vunpack.c.0.s8 %v3926
    %v3928 = vperm.slane %v3920, %v3927
    %v3929 = vrot.slane %v3924, 4
    %v3930 = vsel %vm818, 0, %v3929
    %v3931 = vrot.slane %v3928, 4
    %v3932 = vsel %vm818, 0, %v3931
    %v3935 = vunpack.c.l.s4 1983009808
    %v3936 = vunpack.c.0.s8 %v3935
    %v3937 = vperm.slane %v3864, %v3936
    %v3940 = vunpack.c.l.s4 1983009808
    %v3941 = vunpack.c.0.s8 %v3940
    %v3942 = vperm.slane %v3870, %v3941
    %v3943 = vrot.slane %v3942, 4
    %v3944 = vsel %vm818, %v3943, %v3937
    %v3945 = vrot.slane %v3937, 4
    %v3946 = vsel %vm818, %v3942, %v3945
    %v3948 = vunpack.c.l.s4 1934713408
    %v3949 = vunpack.c.0.s8 %v3948
    %v3950 = vperm.slane %v3944, %v3949
    %v3952 = vunpack.c.l.s4 1934713408
    %v3953 = vunpack.c.0.s8 %v3952
    %v3954 = vperm.slane %v3946, %v3953
    %v3955 = vrot.slane %v3950, 4
    %v3956 = vsel %vm818, 0, %v3955
    %v3957 = vrot.slane %v3954, 4
    %v3958 = vsel %vm818, 0, %v3957
    %v3961 = vunpack.c.l.s4 1983009808
    %v3962 = vunpack.c.0.s8 %v3961
    %v3963 = vperm.slane %v3873, %v3962
    %v3966 = vunpack.c.l.s4 1983009808
    %v3967 = vunpack.c.0.s8 %v3966
    %v3968 = vperm.slane %v3879, %v3967
    %v3969 = vrot.slane %v3968, 4
    %v3970 = vsel %vm818, %v3969, %v3963
    %v3971 = vrot.slane %v3963, 4
    %v3972 = vsel %vm818, %v3968, %v3971
    %v3974 = vunpack.c.l.s4 1934713408
    %v3975 = vunpack.c.0.s8 %v3974
    %v3976 = vperm.slane %v3970, %v3975
    %v3978 = vunpack.c.l.s4 1934713408
    %v3979 = vunpack.c.0.s8 %v3978
    %v3980 = vperm.slane %v3972, %v3979
    %v3981 = vrot.slane %v3976, 4
    %v3982 = vsel %vm818, 0, %v3981
    %v3983 = vrot.slane %v3980, 4
    %v3984 = vsel %vm818, 0, %v3983
    %v3987 = vunpack.c.l.s4 1983009808
    %v3988 = vunpack.c.0.s8 %v3987
    %v3989 = vperm.slane %v3876, %v3988
    %v3992 = vunpack.c.l.s4 1983009808
    %v3993 = vunpack.c.0.s8 %v3992
    %v3994 = vperm.slane %v3882, %v3993
    %v3995 = vrot.slane %v3994, 4
    %v3996 = vsel %vm818, %v3995, %v3989
    %v3997 = vrot.slane %v3989, 4
    %v3998 = vsel %vm818, %v3994, %v3997
    %v4000 = vunpack.c.l.s4 1934713408
    %v4001 = vunpack.c.0.s8 %v4000
    %v4002 = vperm.slane %v3996, %v4001
    %v4004 = vunpack.c.l.s4 1934713408
    %v4005 = vunpack.c.0.s8 %v4004
    %v4006 = vperm.slane %v3998, %v4005
    %v4007 = vrot.slane %v4002, 4
    %v4008 = vsel %vm818, 0, %v4007
    %v4009 = vrot.slane %v4006, 4
    %v4010 = vsel %vm818, 0, %v4009
    %v4013 = vunpack.c.l.s4 1983009808
    %v4014 = vunpack.c.0.s8 %v4013
    %v4015 = vperm.slane %v3885, %v4014
    %v4018 = vunpack.c.l.s4 1983009808
    %v4019 = vunpack.c.0.s8 %v4018
    %v4020 = vperm.slane %v3891, %v4019
    %v4021 = vrot.slane %v4020, 4
    %v4022 = vsel %vm818, %v4021, %v4015
    %v4023 = vrot.slane %v4015, 4
    %v4024 = vsel %vm818, %v4020, %v4023
    %v4026 = vunpack.c.l.s4 1934713408
    %v4027 = vunpack.c.0.s8 %v4026
    %v4028 = vperm.slane %v4022, %v4027
    %v4030 = vunpack.c.l.s4 1934713408
    %v4031 = vunpack.c.0.s8 %v4030
    %v4032 = vperm.slane %v4024, %v4031
    %v4033 = vrot.slane %v4028, 4
    %v4034 = vsel %vm818, 0, %v4033
    %v4035 = vrot.slane %v4032, 4
    %v4036 = vsel %vm818, 0, %v4035
    %v4039 = vunpack.c.l.s4 1983009808
    %v4040 = vunpack.c.0.s8 %v4039
    %v4041 = vperm.slane %v3888, %v4040
    %v4044 = vunpack.c.l.s4 1983009808
    %v4045 = vunpack.c.0.s8 %v4044
    %v4046 = vperm.slane %v3894, %v4045
    %v4047 = vrot.slane %v4046, 4
    %v4048 = vsel %vm818, %v4047, %v4041
    %v4049 = vrot.slane %v4041, 4
    %v4050 = vsel %vm818, %v4046, %v4049
    %v4052 = vunpack.c.l.s4 1934713408
    %v4053 = vunpack.c.0.s8 %v4052
    %v4054 = vperm.slane %v4048, %v4053
    %v4056 = vunpack.c.l.s4 1934713408
    %v4057 = vunpack.c.0.s8 %v4056
    %v4058 = vperm.slane %v4050, %v4057
    %v4059 = vrot.slane %v4054, 4
    %v4060 = vsel %vm818, 0, %v4059
    %v4061 = vrot.slane %v4058, 4
    %v4062 = vsel %vm818, 0, %v4061
    %v4065 = vunpack.c.l.s4 1983009808
    %v4066 = vunpack.c.0.s8 %v4065
    %v4067 = vperm.slane %v3897, %v4066
    %v4070 = vunpack.c.l.s4 1983009808
    %v4071 = vunpack.c.0.s8 %v4070
    %v4072 = vperm.slane %v3903, %v4071
    %v4073 = vrot.slane %v4072, 4
    %v4074 = vsel %vm818, %v4073, %v4067
    %v4075 = vrot.slane %v4067, 4
    %v4076 = vsel %vm818, %v4072, %v4075
    %v4078 = vunpack.c.l.s4 1934713408
    %v4079 = vunpack.c.0.s8 %v4078
    %v4080 = vperm.slane %v4074, %v4079
    %v4082 = vunpack.c.l.s4 1934713408
    %v4083 = vunpack.c.0.s8 %v4082
    %v4084 = vperm.slane %v4076, %v4083
    %v4085 = vrot.slane %v4080, 4
    %v4086 = vsel %vm818, 0, %v4085
    %v4087 = vrot.slane %v4084, 4
    %v4088 = vsel %vm818, 0, %v4087
    %v4091 = vunpack.c.l.s4 1983009808
    %v4092 = vunpack.c.0.s8 %v4091
    %v4093 = vperm.slane %v3900, %v4092
    %v4096 = vunpack.c.l.s4 1983009808
    %v4097 = vunpack.c.0.s8 %v4096
    %v4098 = vperm.slane %v3906, %v4097
    %v4099 = vrot.slane %v4098, 4
    %v4100 = vsel %vm818, %v4099, %v4093
    %v4101 = vrot.slane %v4093, 4
    %v4102 = vsel %vm818, %v4098, %v4101
    %v4104 = vunpack.c.l.s4 1934713408
    %v4105 = vunpack.c.0.s8 %v4104
    %v4106 = vperm.slane %v4100, %v4105
    %v4108 = vunpack.c.l.s4 1934713408
    %v4109 = vunpack.c.0.s8 %v4108
    %v4110 = vperm.slane %v4102, %v4109
    %v4111 = vrot.slane %v4106, 4
    %v4112 = vsel %vm818, 0, %v4111
    %v4113 = vrot.slane %v4110, 4
    %v4114 = vsel %vm818, 0, %v4113
    %v4115 = vsel %vm818, %v3931, %v3924
    %v4117 = vunpack.c.l.s4 1983009808
    %v4118 = vunpack.c.0.s8 %v4117
    %v4119 = vperm.slane %v4115, %v4118
    %v4120 = vrot.slane %v3932, 4
    %v4121 = vsel %vm818, %v4120, %v3930
    %v4123 = vunpack.c.l.s4 1983009808
    %v4124 = vunpack.c.0.s8 %v4123
    %v4125 = vperm.slane %v4121, %v4124
    %v4126 = vrot.slane %v4125, 4
    %v4127 = vsel %vm818, %v4126, %v4119
    %v4129 = vunpack.c.l.s4 1934713408
    %v4130 = vunpack.c.0.s8 %v4129
    %v4131 = vperm.slane %v4127, %v4130
    %v4132 = vrot.slane %v4131, 4
    %v4133 = vsel %vm818, 0, %v4132
    %v4134 = vsel %vm818, %v3957, %v3950
    %v4136 = vunpack.c.l.s4 1983009808
    %v4137 = vunpack.c.0.s8 %v4136
    %v4138 = vperm.slane %v4134, %v4137
    %v4139 = vrot.slane %v3958, 4
    %v4140 = vsel %vm818, %v4139, %v3956
    %v4142 = vunpack.c.l.s4 1983009808
    %v4143 = vunpack.c.0.s8 %v4142
    %v4144 = vperm.slane %v4140, %v4143
    %v4145 = vrot.slane %v4144, 4
    %v4146 = vsel %vm818, %v4145, %v4138
    %v4148 = vunpack.c.l.s4 1934713408
    %v4149 = vunpack.c.0.s8 %v4148
    %v4150 = vperm.slane %v4146, %v4149
    %v4151 = vrot.slane %v4150, 4
    %v4152 = vsel %vm818, 0, %v4151
    %v4153 = vsel %vm818, %v3983, %v3976
    %v4155 = vunpack.c.l.s4 1983009808
    %v4156 = vunpack.c.0.s8 %v4155
    %v4157 = vperm.slane %v4153, %v4156
    %v4158 = vrot.slane %v3984, 4
    %v4159 = vsel %vm818, %v4158, %v3982
    %v4161 = vunpack.c.l.s4 1983009808
    %v4162 = vunpack.c.0.s8 %v4161
    %v4163 = vperm.slane %v4159, %v4162
    %v4164 = vrot.slane %v4163, 4
    %v4165 = vsel %vm818, %v4164, %v4157
    %v4167 = vunpack.c.l.s4 1934713408
    %v4168 = vunpack.c.0.s8 %v4167
    %v4169 = vperm.slane %v4165, %v4168
    %v4170 = vrot.slane %v4169, 4
    %v4171 = vsel %vm818, 0, %v4170
    %v4172 = vsel %vm818, %v4009, %v4002
    %v4174 = vunpack.c.l.s4 1983009808
    %v4175 = vunpack.c.0.s8 %v4174
    %v4176 = vperm.slane %v4172, %v4175
    %v4177 = vrot.slane %v4010, 4
    %v4178 = vsel %vm818, %v4177, %v4008
    %v4180 = vunpack.c.l.s4 1983009808
    %v4181 = vunpack.c.0.s8 %v4180
    %v4182 = vperm.slane %v4178, %v4181
    %v4183 = vrot.slane %v4182, 4
    %v4184 = vsel %vm818, %v4183, %v4176
    %v4186 = vunpack.c.l.s4 1934713408
    %v4187 = vunpack.c.0.s8 %v4186
    %v4188 = vperm.slane %v4184, %v4187
    %v4189 = vrot.slane %v4188, 4
    %v4190 = vsel %vm818, 0, %v4189
    %v4191 = vsel %vm818, %v4035, %v4028
    %v4193 = vunpack.c.l.s4 1983009808
    %v4194 = vunpack.c.0.s8 %v4193
    %v4195 = vperm.slane %v4191, %v4194
    %v4196 = vrot.slane %v4036, 4
    %v4197 = vsel %vm818, %v4196, %v4034
    %v4199 = vunpack.c.l.s4 1983009808
    %v4200 = vunpack.c.0.s8 %v4199
    %v4201 = vperm.slane %v4197, %v4200
    %v4202 = vrot.slane %v4201, 4
    %v4203 = vsel %vm818, %v4202, %v4195
    %v4205 = vunpack.c.l.s4 1934713408
    %v4206 = vunpack.c.0.s8 %v4205
    %v4207 = vperm.slane %v4203, %v4206
    %v4208 = vrot.slane %v4207, 4
    %v4209 = vsel %vm818, 0, %v4208
    %v4210 = vsel %vm818, %v4061, %v4054
    %v4212 = vunpack.c.l.s4 1983009808
    %v4213 = vunpack.c.0.s8 %v4212
    %v4214 = vperm.slane %v4210, %v4213
    %v4215 = vrot.slane %v4062, 4
    %v4216 = vsel %vm818, %v4215, %v4060
    %v4218 = vunpack.c.l.s4 1983009808
    %v4219 = vunpack.c.0.s8 %v4218
    %v4220 = vperm.slane %v4216, %v4219
    %v4221 = vrot.slane %v4220, 4
    %v4222 = vsel %vm818, %v4221, %v4214
    %v4224 = vunpack.c.l.s4 1934713408
    %v4225 = vunpack.c.0.s8 %v4224
    %v4226 = vperm.slane %v4222, %v4225
    %v4227 = vrot.slane %v4226, 4
    %v4228 = vsel %vm818, 0, %v4227
    %v4229 = vsel %vm818, %v4087, %v4080
    %v4231 = vunpack.c.l.s4 1983009808
    %v4232 = vunpack.c.0.s8 %v4231
    %v4233 = vperm.slane %v4229, %v4232
    %v4234 = vrot.slane %v4088, 4
    %v4235 = vsel %vm818, %v4234, %v4086
    %v4237 = vunpack.c.l.s4 1983009808
    %v4238 = vunpack.c.0.s8 %v4237
    %v4239 = vperm.slane %v4235, %v4238
    %v4240 = vrot.slane %v4239, 4
    %v4241 = vsel %vm818, %v4240, %v4233
    %v4243 = vunpack.c.l.s4 1934713408
    %v4244 = vunpack.c.0.s8 %v4243
    %v4245 = vperm.slane %v4241, %v4244
    %v4246 = vrot.slane %v4245, 4
    %v4247 = vsel %vm818, 0, %v4246
    %v4248 = vsel %vm818, %v4113, %v4106
    %v4250 = vunpack.c.l.s4 1983009808
    %v4251 = vunpack.c.0.s8 %v4250
    %v4252 = vperm.slane %v4248, %v4251
    %v4253 = vrot.slane %v4114, 4
    %v4254 = vsel %vm818, %v4253, %v4112
    %v4256 = vunpack.c.l.s4 1983009808
    %v4257 = vunpack.c.0.s8 %v4256
    %v4258 = vperm.slane %v4254, %v4257
    %v4259 = vrot.slane %v4258, 4
    %v4260 = vsel %vm818, %v4259, %v4252
    %v4262 = vunpack.c.l.s4 1934713408
    %v4263 = vunpack.c.0.s8 %v4262
    %v4264 = vperm.slane %v4260, %v4263
    %v4265 = vrot.slane %v4264, 4
    %v4266 = vsel %vm818, 0, %v4265
    %v4269 = vpack.i.b16 %v4150, %v4131
    %v4270 = vshrl.u32 %v4131, 16
    %v4271 = vshrl.u32 %v4150, 16
    %v4272 = vpack.i.b16 %v4271, %v4270
    %v4275 = vpack.i.b16 %v4152, %v4133
    %v4276 = vshrl.u32 %v4133, 16
    %v4277 = vshrl.u32 %v4152, 16
    %v4278 = vpack.i.b16 %v4277, %v4276
    %v4281 = vpack.i.b16 %v4188, %v4169
    %v4282 = vshrl.u32 %v4169, 16
    %v4283 = vshrl.u32 %v4188, 16
    %v4284 = vpack.i.b16 %v4283, %v4282
    %v4287 = vpack.i.b16 %v4190, %v4171
    %v4288 = vshrl.u32 %v4171, 16
    %v4289 = vshrl.u32 %v4190, 16
    %v4290 = vpack.i.b16 %v4289, %v4288
    %v4293 = vpack.i.b16 %v4226, %v4207
    %v4294 = vshrl.u32 %v4207, 16
    %v4295 = vshrl.u32 %v4226, 16
    %v4296 = vpack.i.b16 %v4295, %v4294
    %v4299 = vpack.i.b16 %v4228, %v4209
    %v4300 = vshrl.u32 %v4209, 16
    %v4301 = vshrl.u32 %v4228, 16
    %v4302 = vpack.i.b16 %v4301, %v4300
    %v4305 = vpack.i.b16 %v4264, %v4245
    %v4306 = vshrl.u32 %v4245, 16
    %v4307 = vshrl.u32 %v4264, 16
    %v4308 = vpack.i.b16 %v4307, %v4306
    %v4311 = vpack.i.b16 %v4266, %v4247
    %v4312 = vshrl.u32 %v4247, 16
    %v4313 = vshrl.u32 %v4266, 16
    %v4314 = vpack.i.b16 %v4313, %v4312
    %v4315 = vpack.c.bf16 %v3779, %v3779
    %v4316 = vpack.c.bf16 %v3781, %v3781
    %v4317 = vpack.c.bf16 %v3784, %v3784
    %v4318 = vpack.c.bf16 %v3786, %v3786
    %v4319 = vpack.c.bf16 %v3789, %v3789
    %v4320 = vpack.c.bf16 %v3791, %v3791
    %v4321 = vpack.c.bf16 %v3794, %v3794
    %v4322 = vpack.c.bf16 %v3796, %v3796
    %4331 = vrot.lane.b32.xlu0 %v4315, 96
    %v4332 = vpop.permute.xlu0 %4331
    %4333 = vrot.lane.b32.xlu0 %v4316, 96
    %v4334 = vpop.permute.xlu0 %4333
    %4335 = vrot.lane.b32.xlu0 %v4317, 96
    %v4336 = vpop.permute.xlu0 %4335
    %4337 = vrot.lane.b32.xlu0 %v4318, 96
    %v4338 = vpop.permute.xlu0 %4337
    %4339 = vrot.lane.b32.xlu0 %v4319, 96
    %v4340 = vpop.permute.xlu0 %4339
    %4341 = vrot.lane.b32.xlu0 %v4320, 96
    %v4342 = vpop.permute.xlu0 %4341
    %4343 = vrot.lane.b32.xlu0 %v4321, 96
    %v4344 = vpop.permute.xlu0 %4343
    %4345 = vrot.lane.b32.xlu0 %v4322, 96
    %v4346 = vpop.permute.xlu0 %4345
    %4347 = vrot.lane.b32.xlu0 %v4315, 64
    %v4348 = vpop.permute.xlu0 %4347
    %4349 = vrot.lane.b32.xlu0 %v4316, 64
    %v4350 = vpop.permute.xlu0 %4349
    %4351 = vrot.lane.b32.xlu0 %v4317, 64
    %v4352 = vpop.permute.xlu0 %4351
    %4353 = vrot.lane.b32.xlu0 %v4318, 64
    %v4354 = vpop.permute.xlu0 %4353
    %4355 = vrot.lane.b32.xlu0 %v4319, 64
    %v4356 = vpop.permute.xlu0 %4355
    %4357 = vrot.lane.b32.xlu0 %v4320, 64
    %v4358 = vpop.permute.xlu0 %4357
    %4359 = vrot.lane.b32.xlu0 %v4321, 64
    %v4360 = vpop.permute.xlu0 %4359
    %4361 = vrot.lane.b32.xlu0 %v4322, 64
    %v4362 = vpop.permute.xlu0 %4361
    %4363 = vrot.lane.b32.xlu0 %v4315, 32
    %v4364 = vpop.permute.xlu0 %4363
    %4365 = vrot.lane.b32.xlu0 %v4316, 32
    %v4366 = vpop.permute.xlu0 %4365
    %4367 = vrot.lane.b32.xlu0 %v4317, 32
    %v4368 = vpop.permute.xlu0 %4367
    %4369 = vrot.lane.b32.xlu0 %v4318, 32
    %v4370 = vpop.permute.xlu0 %4369
    %4371 = vrot.lane.b32.xlu0 %v4319, 32
    %v4372 = vpop.permute.xlu0 %4371
    %4373 = vrot.lane.b32.xlu0 %v4320, 32
    %v4374 = vpop.permute.xlu0 %4373
    %4375 = vrot.lane.b32.xlu0 %v4321, 32
    %v4376 = vpop.permute.xlu0 %4375
    %4377 = vrot.lane.b32.xlu0 %v4322, 32
    %v4378 = vpop.permute.xlu0 %4377
    %v4381 = vpack.i.b16 %v4332, %v4315
    %v4382 = vshrl.u32 %v4315, 16
    %v4383 = vshrl.u32 %v4332, 16
    %v4384 = vpack.i.b16 %v4383, %v4382
    %v4387 = vpack.i.b16 %v4364, %v4348
    %v4388 = vshrl.u32 %v4348, 16
    %v4389 = vshrl.u32 %v4364, 16
    %v4390 = vpack.i.b16 %v4389, %v4388
    %v4393 = vpack.i.b16 %v4334, %v4316
    %v4394 = vshrl.u32 %v4316, 16
    %v4395 = vshrl.u32 %v4334, 16
    %v4396 = vpack.i.b16 %v4395, %v4394
    %v4399 = vpack.i.b16 %v4366, %v4350
    %v4400 = vshrl.u32 %v4350, 16
    %v4401 = vshrl.u32 %v4366, 16
    %v4402 = vpack.i.b16 %v4401, %v4400
    %v4405 = vpack.i.b16 %v4336, %v4317
    %v4406 = vshrl.u32 %v4317, 16
    %v4407 = vshrl.u32 %v4336, 16
    %v4408 = vpack.i.b16 %v4407, %v4406
    %v4411 = vpack.i.b16 %v4368, %v4352
    %v4412 = vshrl.u32 %v4352, 16
    %v4413 = vshrl.u32 %v4368, 16
    %v4414 = vpack.i.b16 %v4413, %v4412
    %v4417 = vpack.i.b16 %v4338, %v4318
    %v4418 = vshrl.u32 %v4318, 16
    %v4419 = vshrl.u32 %v4338, 16
    %v4420 = vpack.i.b16 %v4419, %v4418
    %v4423 = vpack.i.b16 %v4370, %v4354
    %v4424 = vshrl.u32 %v4354, 16
    %v4425 = vshrl.u32 %v4370, 16
    %v4426 = vpack.i.b16 %v4425, %v4424
    %v4429 = vpack.i.b16 %v4340, %v4319
    %v4430 = vshrl.u32 %v4319, 16
    %v4431 = vshrl.u32 %v4340, 16
    %v4432 = vpack.i.b16 %v4431, %v4430
    %v4435 = vpack.i.b16 %v4372, %v4356
    %v4436 = vshrl.u32 %v4356, 16
    %v4437 = vshrl.u32 %v4372, 16
    %v4438 = vpack.i.b16 %v4437, %v4436
    %v4441 = vpack.i.b16 %v4342, %v4320
    %v4442 = vshrl.u32 %v4320, 16
    %v4443 = vshrl.u32 %v4342, 16
    %v4444 = vpack.i.b16 %v4443, %v4442
    %v4447 = vpack.i.b16 %v4374, %v4358
    %v4448 = vshrl.u32 %v4358, 16
    %v4449 = vshrl.u32 %v4374, 16
    %v4450 = vpack.i.b16 %v4449, %v4448
    %v4453 = vpack.i.b16 %v4344, %v4321
    %v4454 = vshrl.u32 %v4321, 16
    %v4455 = vshrl.u32 %v4344, 16
    %v4456 = vpack.i.b16 %v4455, %v4454
    %v4459 = vpack.i.b16 %v4376, %v4360
    %v4460 = vshrl.u32 %v4360, 16
    %v4461 = vshrl.u32 %v4376, 16
    %v4462 = vpack.i.b16 %v4461, %v4460
    %v4465 = vpack.i.b16 %v4346, %v4322
    %v4466 = vshrl.u32 %v4322, 16
    %v4467 = vshrl.u32 %v4346, 16
    %v4468 = vpack.i.b16 %v4467, %v4466
    %v4471 = vpack.i.b16 %v4378, %v4362
    %v4472 = vshrl.u32 %v4362, 16
    %v4473 = vshrl.u32 %v4378, 16
    %v4474 = vpack.i.b16 %v4473, %v4472
    %v4477 = vunpack.c.l.s4 1983009808
    %v4478 = vunpack.c.0.s8 %v4477
    %v4479 = vperm.slane %v4381, %v4478
    %v4482 = vunpack.c.l.s4 1983009808
    %v4483 = vunpack.c.0.s8 %v4482
    %v4484 = vperm.slane %v4387, %v4483
    %v4485 = vrot.slane %v4484, 4
    %v4486 = vsel %vm818, %v4485, %v4479
    %v4487 = vrot.slane %v4479, 4
    %v4488 = vsel %vm818, %v4484, %v4487
    %v4490 = vunpack.c.l.s4 1934713408
    %v4491 = vunpack.c.0.s8 %v4490
    %v4492 = vperm.slane %v4486, %v4491
    %v4494 = vunpack.c.l.s4 1934713408
    %v4495 = vunpack.c.0.s8 %v4494
    %v4496 = vperm.slane %v4488, %v4495
    %v4497 = vrot.slane %v4492, 4
    %v4498 = vsel %vm818, 0, %v4497
    %v4499 = vrot.slane %v4496, 4
    %v4500 = vsel %vm818, 0, %v4499
    %v4503 = vunpack.c.l.s4 1983009808
    %v4504 = vunpack.c.0.s8 %v4503
    %v4505 = vperm.slane %v4384, %v4504
    %v4508 = vunpack.c.l.s4 1983009808
    %v4509 = vunpack.c.0.s8 %v4508
    %v4510 = vperm.slane %v4390, %v4509
    %v4511 = vrot.slane %v4510, 4
    %v4512 = vsel %vm818, %v4511, %v4505
    %v4513 = vrot.slane %v4505, 4
    %v4514 = vsel %vm818, %v4510, %v4513
    %v4516 = vunpack.c.l.s4 1934713408
    %v4517 = vunpack.c.0.s8 %v4516
    %v4518 = vperm.slane %v4512, %v4517
    %v4520 = vunpack.c.l.s4 1934713408
    %v4521 = vunpack.c.0.s8 %v4520
    %v4522 = vperm.slane %v4514, %v4521
    %v4523 = vrot.slane %v4518, 4
    %v4524 = vsel %vm818, 0, %v4523
    %v4525 = vrot.slane %v4522, 4
    %v4526 = vsel %vm818, 0, %v4525
    %v4529 = vunpack.c.l.s4 1983009808
    %v4530 = vunpack.c.0.s8 %v4529
    %v4531 = vperm.slane %v4393, %v4530
    %v4534 = vunpack.c.l.s4 1983009808
    %v4535 = vunpack.c.0.s8 %v4534
    %v4536 = vperm.slane %v4399, %v4535
    %v4537 = vrot.slane %v4536, 4
    %v4538 = vsel %vm818, %v4537, %v4531
    %v4539 = vrot.slane %v4531, 4
    %v4540 = vsel %vm818, %v4536, %v4539
    %v4542 = vunpack.c.l.s4 1934713408
    %v4543 = vunpack.c.0.s8 %v4542
    %v4544 = vperm.slane %v4538, %v4543
    %v4546 = vunpack.c.l.s4 1934713408
    %v4547 = vunpack.c.0.s8 %v4546
    %v4548 = vperm.slane %v4540, %v4547
    %v4549 = vrot.slane %v4544, 4
    %v4550 = vsel %vm818, 0, %v4549
    %v4551 = vrot.slane %v4548, 4
    %v4552 = vsel %vm818, 0, %v4551
    %v4555 = vunpack.c.l.s4 1983009808
    %v4556 = vunpack.c.0.s8 %v4555
    %v4557 = vperm.slane %v4396, %v4556
    %v4560 = vunpack.c.l.s4 1983009808
    %v4561 = vunpack.c.0.s8 %v4560
    %v4562 = vperm.slane %v4402, %v4561
    %v4563 = vrot.slane %v4562, 4
    %v4564 = vsel %vm818, %v4563, %v4557
    %v4565 = vrot.slane %v4557, 4
    %v4566 = vsel %vm818, %v4562, %v4565
    %v4568 = vunpack.c.l.s4 1934713408
    %v4569 = vunpack.c.0.s8 %v4568
    %v4570 = vperm.slane %v4564, %v4569
    %v4572 = vunpack.c.l.s4 1934713408
    %v4573 = vunpack.c.0.s8 %v4572
    %v4574 = vperm.slane %v4566, %v4573
    %v4575 = vrot.slane %v4570, 4
    %v4576 = vsel %vm818, 0, %v4575
    %v4577 = vrot.slane %v4574, 4
    %v4578 = vsel %vm818, 0, %v4577
    %v4581 = vunpack.c.l.s4 1983009808
    %v4582 = vunpack.c.0.s8 %v4581
    %v4583 = vperm.slane %v4405, %v4582
    %v4586 = vunpack.c.l.s4 1983009808
    %v4587 = vunpack.c.0.s8 %v4586
    %v4588 = vperm.slane %v4411, %v4587
    %v4589 = vrot.slane %v4588, 4
    %v4590 = vsel %vm818, %v4589, %v4583
    %v4591 = vrot.slane %v4583, 4
    %v4592 = vsel %vm818, %v4588, %v4591
    %v4594 = vunpack.c.l.s4 1934713408
    %v4595 = vunpack.c.0.s8 %v4594
    %v4596 = vperm.slane %v4590, %v4595
    %v4598 = vunpack.c.l.s4 1934713408
    %v4599 = vunpack.c.0.s8 %v4598
    %v4600 = vperm.slane %v4592, %v4599
    %v4601 = vrot.slane %v4596, 4
    %v4602 = vsel %vm818, 0, %v4601
    %v4603 = vrot.slane %v4600, 4
    %v4604 = vsel %vm818, 0, %v4603
    %v4607 = vunpack.c.l.s4 1983009808
    %v4608 = vunpack.c.0.s8 %v4607
    %v4609 = vperm.slane %v4408, %v4608
    %v4612 = vunpack.c.l.s4 1983009808
    %v4613 = vunpack.c.0.s8 %v4612
    %v4614 = vperm.slane %v4414, %v4613
    %v4615 = vrot.slane %v4614, 4
    %v4616 = vsel %vm818, %v4615, %v4609
    %v4617 = vrot.slane %v4609, 4
    %v4618 = vsel %vm818, %v4614, %v4617
    %v4620 = vunpack.c.l.s4 1934713408
    %v4621 = vunpack.c.0.s8 %v4620
    %v4622 = vperm.slane %v4616, %v4621
    %v4624 = vunpack.c.l.s4 1934713408
    %v4625 = vunpack.c.0.s8 %v4624
    %v4626 = vperm.slane %v4618, %v4625
    %v4627 = vrot.slane %v4622, 4
    %v4628 = vsel %vm818, 0, %v4627
    %v4629 = vrot.slane %v4626, 4
    %v4630 = vsel %vm818, 0, %v4629
    %v4633 = vunpack.c.l.s4 1983009808
    %v4634 = vunpack.c.0.s8 %v4633
    %v4635 = vperm.slane %v4417, %v4634
    %v4638 = vunpack.c.l.s4 1983009808
    %v4639 = vunpack.c.0.s8 %v4638
    %v4640 = vperm.slane %v4423, %v4639
    %v4641 = vrot.slane %v4640, 4
    %v4642 = vsel %vm818, %v4641, %v4635
    %v4643 = vrot.slane %v4635, 4
    %v4644 = vsel %vm818, %v4640, %v4643
    %v4646 = vunpack.c.l.s4 1934713408
    %v4647 = vunpack.c.0.s8 %v4646
    %v4648 = vperm.slane %v4642, %v4647
    %v4650 = vunpack.c.l.s4 1934713408
    %v4651 = vunpack.c.0.s8 %v4650
    %v4652 = vperm.slane %v4644, %v4651
    %v4653 = vrot.slane %v4648, 4
    %v4654 = vsel %vm818, 0, %v4653
    %v4655 = vrot.slane %v4652, 4
    %v4656 = vsel %vm818, 0, %v4655
    %v4659 = vunpack.c.l.s4 1983009808
    %v4660 = vunpack.c.0.s8 %v4659
    %v4661 = vperm.slane %v4420, %v4660
    %v4664 = vunpack.c.l.s4 1983009808
    %v4665 = vunpack.c.0.s8 %v4664
    %v4666 = vperm.slane %v4426, %v4665
    %v4667 = vrot.slane %v4666, 4
    %v4668 = vsel %vm818, %v4667, %v4661
    %v4669 = vrot.slane %v4661, 4
    %v4670 = vsel %vm818, %v4666, %v4669
    %v4672 = vunpack.c.l.s4 1934713408
    %v4673 = vunpack.c.0.s8 %v4672
    %v4674 = vperm.slane %v4668, %v4673
    %v4676 = vunpack.c.l.s4 1934713408
    %v4677 = vunpack.c.0.s8 %v4676
    %v4678 = vperm.slane %v4670, %v4677
    %v4679 = vrot.slane %v4674, 4
    %v4680 = vsel %vm818, 0, %v4679
    %v4681 = vrot.slane %v4678, 4
    %v4682 = vsel %vm818, 0, %v4681
    %v4685 = vunpack.c.l.s4 1983009808
    %v4686 = vunpack.c.0.s8 %v4685
    %v4687 = vperm.slane %v4429, %v4686
    %v4690 = vunpack.c.l.s4 1983009808
    %v4691 = vunpack.c.0.s8 %v4690
    %v4692 = vperm.slane %v4435, %v4691
    %v4693 = vrot.slane %v4692, 4
    %v4694 = vsel %vm818, %v4693, %v4687
    %v4695 = vrot.slane %v4687, 4
    %v4696 = vsel %vm818, %v4692, %v4695
    %v4698 = vunpack.c.l.s4 1934713408
    %v4699 = vunpack.c.0.s8 %v4698
    %v4700 = vperm.slane %v4694, %v4699
    %v4702 = vunpack.c.l.s4 1934713408
    %v4703 = vunpack.c.0.s8 %v4702
    %v4704 = vperm.slane %v4696, %v4703
    %v4705 = vrot.slane %v4700, 4
    %v4706 = vsel %vm818, 0, %v4705
    %v4707 = vrot.slane %v4704, 4
    %v4708 = vsel %vm818, 0, %v4707
    %v4711 = vunpack.c.l.s4 1983009808
    %v4712 = vunpack.c.0.s8 %v4711
    %v4713 = vperm.slane %v4432, %v4712
    %v4716 = vunpack.c.l.s4 1983009808
    %v4717 = vunpack.c.0.s8 %v4716
    %v4718 = vperm.slane %v4438, %v4717
    %v4719 = vrot.slane %v4718, 4
    %v4720 = vsel %vm818, %v4719, %v4713
    %v4721 = vrot.slane %v4713, 4
    %v4722 = vsel %vm818, %v4718, %v4721
    %v4724 = vunpack.c.l.s4 1934713408
    %v4725 = vunpack.c.0.s8 %v4724
    %v4726 = vperm.slane %v4720, %v4725
    %v4728 = vunpack.c.l.s4 1934713408
    %v4729 = vunpack.c.0.s8 %v4728
    %v4730 = vperm.slane %v4722, %v4729
    %v4731 = vrot.slane %v4726, 4
    %v4732 = vsel %vm818, 0, %v4731
    %v4733 = vrot.slane %v4730, 4
    %v4734 = vsel %vm818, 0, %v4733
    %v4737 = vunpack.c.l.s4 1983009808
    %v4738 = vunpack.c.0.s8 %v4737
    %v4739 = vperm.slane %v4441, %v4738
    %v4742 = vunpack.c.l.s4 1983009808
    %v4743 = vunpack.c.0.s8 %v4742
    %v4744 = vperm.slane %v4447, %v4743
    %v4745 = vrot.slane %v4744, 4
    %v4746 = vsel %vm818, %v4745, %v4739
    %v4747 = vrot.slane %v4739, 4
    %v4748 = vsel %vm818, %v4744, %v4747
    %v4750 = vunpack.c.l.s4 1934713408
    %v4751 = vunpack.c.0.s8 %v4750
    %v4752 = vperm.slane %v4746, %v4751
    %v4754 = vunpack.c.l.s4 1934713408
    %v4755 = vunpack.c.0.s8 %v4754
    %v4756 = vperm.slane %v4748, %v4755
    %v4757 = vrot.slane %v4752, 4
    %v4758 = vsel %vm818, 0, %v4757
    %v4759 = vrot.slane %v4756, 4
    %v4760 = vsel %vm818, 0, %v4759
    %v4763 = vunpack.c.l.s4 1983009808
    %v4764 = vunpack.c.0.s8 %v4763
    %v4765 = vperm.slane %v4444, %v4764
    %v4768 = vunpack.c.l.s4 1983009808
    %v4769 = vunpack.c.0.s8 %v4768
    %v4770 = vperm.slane %v4450, %v4769
    %v4771 = vrot.slane %v4770, 4
    %v4772 = vsel %vm818, %v4771, %v4765
    %v4773 = vrot.slane %v4765, 4
    %v4774 = vsel %vm818, %v4770, %v4773
    %v4776 = vunpack.c.l.s4 1934713408
    %v4777 = vunpack.c.0.s8 %v4776
    %v4778 = vperm.slane %v4772, %v4777
    %v4780 = vunpack.c.l.s4 1934713408
    %v4781 = vunpack.c.0.s8 %v4780
    %v4782 = vperm.slane %v4774, %v4781
    %v4783 = vrot.slane %v4778, 4
    %v4784 = vsel %vm818, 0, %v4783
    %v4785 = vrot.slane %v4782, 4
    %v4786 = vsel %vm818, 0, %v4785
    %v4789 = vunpack.c.l.s4 1983009808
    %v4790 = vunpack.c.0.s8 %v4789
    %v4791 = vperm.slane %v4453, %v4790
    %v4794 = vunpack.c.l.s4 1983009808
    %v4795 = vunpack.c.0.s8 %v4794
    %v4796 = vperm.slane %v4459, %v4795
    %v4797 = vrot.slane %v4796, 4
    %v4798 = vsel %vm818, %v4797, %v4791
    %v4799 = vrot.slane %v4791, 4
    %v4800 = vsel %vm818, %v4796, %v4799
    %v4802 = vunpack.c.l.s4 1934713408
    %v4803 = vunpack.c.0.s8 %v4802
    %v4804 = vperm.slane %v4798, %v4803
    %v4806 = vunpack.c.l.s4 1934713408
    %v4807 = vunpack.c.0.s8 %v4806
    %v4808 = vperm.slane %v4800, %v4807
    %v4809 = vrot.slane %v4804, 4
    %v4810 = vsel %vm818, 0, %v4809
    %v4811 = vrot.slane %v4808, 4
    %v4812 = vsel %vm818, 0, %v4811
    %v4815 = vunpack.c.l.s4 1983009808
    %v4816 = vunpack.c.0.s8 %v4815
    %v4817 = vperm.slane %v4456, %v4816
    %v4820 = vunpack.c.l.s4 1983009808
    %v4821 = vunpack.c.0.s8 %v4820
    %v4822 = vperm.slane %v4462, %v4821
    %v4823 = vrot.slane %v4822, 4
    %v4824 = vsel %vm818, %v4823, %v4817
    %v4825 = vrot.slane %v4817, 4
    %v4826 = vsel %vm818, %v4822, %v4825
    %v4828 = vunpack.c.l.s4 1934713408
    %v4829 = vunpack.c.0.s8 %v4828
    %v4830 = vperm.slane %v4824, %v4829
    %v4832 = vunpack.c.l.s4 1934713408
    %v4833 = vunpack.c.0.s8 %v4832
    %v4834 = vperm.slane %v4826, %v4833
    %v4835 = vrot.slane %v4830, 4
    %v4836 = vsel %vm818, 0, %v4835
    %v4837 = vrot.slane %v4834, 4
    %v4838 = vsel %vm818, 0, %v4837
    %v4841 = vunpack.c.l.s4 1983009808
    %v4842 = vunpack.c.0.s8 %v4841
    %v4843 = vperm.slane %v4465, %v4842
    %v4846 = vunpack.c.l.s4 1983009808
    %v4847 = vunpack.c.0.s8 %v4846
    %v4848 = vperm.slane %v4471, %v4847
    %v4849 = vrot.slane %v4848, 4
    %v4850 = vsel %vm818, %v4849, %v4843
    %v4851 = vrot.slane %v4843, 4
    %v4852 = vsel %vm818, %v4848, %v4851
    %v4854 = vunpack.c.l.s4 1934713408
    %v4855 = vunpack.c.0.s8 %v4854
    %v4856 = vperm.slane %v4850, %v4855
    %v4858 = vunpack.c.l.s4 1934713408
    %v4859 = vunpack.c.0.s8 %v4858
    %v4860 = vperm.slane %v4852, %v4859
    %v4861 = vrot.slane %v4856, 4
    %v4862 = vsel %vm818, 0, %v4861
    %v4863 = vrot.slane %v4860, 4
    %v4864 = vsel %vm818, 0, %v4863
    %v4867 = vunpack.c.l.s4 1983009808
    %v4868 = vunpack.c.0.s8 %v4867
    %v4869 = vperm.slane %v4468, %v4868
    %v4872 = vunpack.c.l.s4 1983009808
    %v4873 = vunpack.c.0.s8 %v4872
    %v4874 = vperm.slane %v4474, %v4873
    %v4875 = vrot.slane %v4874, 4
    %v4876 = vsel %vm818, %v4875, %v4869
    %v4877 = vrot.slane %v4869, 4
    %v4878 = vsel %vm818, %v4874, %v4877
    %v4880 = vunpack.c.l.s4 1934713408
    %v4881 = vunpack.c.0.s8 %v4880
    %v4882 = vperm.slane %v4876, %v4881
    %v4884 = vunpack.c.l.s4 1934713408
    %v4885 = vunpack.c.0.s8 %v4884
    %v4886 = vperm.slane %v4878, %v4885
    %v4887 = vrot.slane %v4882, 4
    %v4888 = vsel %vm818, 0, %v4887
    %v4889 = vrot.slane %v4886, 4
    %v4890 = vsel %vm818, 0, %v4889
    %v4891 = vsel %vm818, %v4499, %v4492
    %v4893 = vunpack.c.l.s4 1983009808
    %v4894 = vunpack.c.0.s8 %v4893
    %v4895 = vperm.slane %v4891, %v4894
    %v4896 = vrot.slane %v4500, 4
    %v4897 = vsel %vm818, %v4896, %v4498
    %v4899 = vunpack.c.l.s4 1983009808
    %v4900 = vunpack.c.0.s8 %v4899
    %v4901 = vperm.slane %v4897, %v4900
    %v4902 = vrot.slane %v4901, 4
    %v4903 = vsel %vm818, %v4902, %v4895
    %v4905 = vunpack.c.l.s4 1934713408
    %v4906 = vunpack.c.0.s8 %v4905
    %v4907 = vperm.slane %v4903, %v4906
    %v4908 = vrot.slane %v4907, 4
    %v4909 = vsel %vm818, 0, %v4908
    %v4910 = vsel %vm818, %v4525, %v4518
    %v4912 = vunpack.c.l.s4 1983009808
    %v4913 = vunpack.c.0.s8 %v4912
    %v4914 = vperm.slane %v4910, %v4913
    %v4915 = vrot.slane %v4526, 4
    %v4916 = vsel %vm818, %v4915, %v4524
    %v4918 = vunpack.c.l.s4 1983009808
    %v4919 = vunpack.c.0.s8 %v4918
    %v4920 = vperm.slane %v4916, %v4919
    %v4921 = vrot.slane %v4920, 4
    %v4922 = vsel %vm818, %v4921, %v4914
    %v4924 = vunpack.c.l.s4 1934713408
    %v4925 = vunpack.c.0.s8 %v4924
    %v4926 = vperm.slane %v4922, %v4925
    %v4927 = vrot.slane %v4926, 4
    %v4928 = vsel %vm818, 0, %v4927
    %v4929 = vsel %vm818, %v4551, %v4544
    %v4931 = vunpack.c.l.s4 1983009808
    %v4932 = vunpack.c.0.s8 %v4931
    %v4933 = vperm.slane %v4929, %v4932
    %v4934 = vrot.slane %v4552, 4
    %v4935 = vsel %vm818, %v4934, %v4550
    %v4937 = vunpack.c.l.s4 1983009808
    %v4938 = vunpack.c.0.s8 %v4937
    %v4939 = vperm.slane %v4935, %v4938
    %v4940 = vrot.slane %v4939, 4
    %v4941 = vsel %vm818, %v4940, %v4933
    %v4943 = vunpack.c.l.s4 1934713408
    %v4944 = vunpack.c.0.s8 %v4943
    %v4945 = vperm.slane %v4941, %v4944
    %v4946 = vrot.slane %v4945, 4
    %v4947 = vsel %vm818, 0, %v4946
    %v4948 = vsel %vm818, %v4577, %v4570
    %v4950 = vunpack.c.l.s4 1983009808
    %v4951 = vunpack.c.0.s8 %v4950
    %v4952 = vperm.slane %v4948, %v4951
    %v4953 = vrot.slane %v4578, 4
    %v4954 = vsel %vm818, %v4953, %v4576
    %v4956 = vunpack.c.l.s4 1983009808
    %v4957 = vunpack.c.0.s8 %v4956
    %v4958 = vperm.slane %v4954, %v4957
    %v4959 = vrot.slane %v4958, 4
    %v4960 = vsel %vm818, %v4959, %v4952
    %v4962 = vunpack.c.l.s4 1934713408
    %v4963 = vunpack.c.0.s8 %v4962
    %v4964 = vperm.slane %v4960, %v4963
    %v4965 = vrot.slane %v4964, 4
    %v4966 = vsel %vm818, 0, %v4965
    %v4967 = vsel %vm818, %v4603, %v4596
    %v4969 = vunpack.c.l.s4 1983009808
    %v4970 = vunpack.c.0.s8 %v4969
    %v4971 = vperm.slane %v4967, %v4970
    %v4972 = vrot.slane %v4604, 4
    %v4973 = vsel %vm818, %v4972, %v4602
    %v4975 = vunpack.c.l.s4 1983009808
    %v4976 = vunpack.c.0.s8 %v4975
    %v4977 = vperm.slane %v4973, %v4976
    %v4978 = vrot.slane %v4977, 4
    %v4979 = vsel %vm818, %v4978, %v4971
    %v4981 = vunpack.c.l.s4 1934713408
    %v4982 = vunpack.c.0.s8 %v4981
    %v4983 = vperm.slane %v4979, %v4982
    %v4984 = vrot.slane %v4983, 4
    %v4985 = vsel %vm818, 0, %v4984
    %v4986 = vsel %vm818, %v4629, %v4622
    %v4988 = vunpack.c.l.s4 1983009808
    %v4989 = vunpack.c.0.s8 %v4988
    %v4990 = vperm.slane %v4986, %v4989
    %v4991 = vrot.slane %v4630, 4
    %v4992 = vsel %vm818, %v4991, %v4628
    %v4994 = vunpack.c.l.s4 1983009808
    %v4995 = vunpack.c.0.s8 %v4994
    %v4996 = vperm.slane %v4992, %v4995
    %v4997 = vrot.slane %v4996, 4
    %v4998 = vsel %vm818, %v4997, %v4990
    %v5000 = vunpack.c.l.s4 1934713408
    %v5001 = vunpack.c.0.s8 %v5000
    %v5002 = vperm.slane %v4998, %v5001
    %v5003 = vrot.slane %v5002, 4
    %v5004 = vsel %vm818, 0, %v5003
    %v5005 = vsel %vm818, %v4655, %v4648
    %v5007 = vunpack.c.l.s4 1983009808
    %v5008 = vunpack.c.0.s8 %v5007
    %v5009 = vperm.slane %v5005, %v5008
    %v5010 = vrot.slane %v4656, 4
    %v5011 = vsel %vm818, %v5010, %v4654
    %v5013 = vunpack.c.l.s4 1983009808
    %v5014 = vunpack.c.0.s8 %v5013
    %v5015 = vperm.slane %v5011, %v5014
    %v5016 = vrot.slane %v5015, 4
    %v5017 = vsel %vm818, %v5016, %v5009
    %v5019 = vunpack.c.l.s4 1934713408
    %v5020 = vunpack.c.0.s8 %v5019
    %v5021 = vperm.slane %v5017, %v5020
    %v5022 = vrot.slane %v5021, 4
    %v5023 = vsel %vm818, 0, %v5022
    %v5024 = vsel %vm818, %v4681, %v4674
    %v5026 = vunpack.c.l.s4 1983009808
    %v5027 = vunpack.c.0.s8 %v5026
    %v5028 = vperm.slane %v5024, %v5027
    %v5029 = vrot.slane %v4682, 4
    %v5030 = vsel %vm818, %v5029, %v4680
    %v5032 = vunpack.c.l.s4 1983009808
    %v5033 = vunpack.c.0.s8 %v5032
    %v5034 = vperm.slane %v5030, %v5033
    %v5035 = vrot.slane %v5034, 4
    %v5036 = vsel %vm818, %v5035, %v5028
    %v5038 = vunpack.c.l.s4 1934713408
    %v5039 = vunpack.c.0.s8 %v5038
    %v5040 = vperm.slane %v5036, %v5039
    %v5041 = vrot.slane %v5040, 4
    %v5042 = vsel %vm818, 0, %v5041
    %v5043 = vsel %vm818, %v4707, %v4700
    %v5045 = vunpack.c.l.s4 1983009808
    %v5046 = vunpack.c.0.s8 %v5045
    %v5047 = vperm.slane %v5043, %v5046
    %v5048 = vrot.slane %v4708, 4
    %v5049 = vsel %vm818, %v5048, %v4706
    %v5051 = vunpack.c.l.s4 1983009808
    %v5052 = vunpack.c.0.s8 %v5051
    %v5053 = vperm.slane %v5049, %v5052
    %v5054 = vrot.slane %v5053, 4
    %v5055 = vsel %vm818, %v5054, %v5047
    %v5057 = vunpack.c.l.s4 1934713408
    %v5058 = vunpack.c.0.s8 %v5057
    %v5059 = vperm.slane %v5055, %v5058
    %v5060 = vrot.slane %v5059, 4
    %v5061 = vsel %vm818, 0, %v5060
    %v5062 = vsel %vm818, %v4733, %v4726
    %v5064 = vunpack.c.l.s4 1983009808
    %v5065 = vunpack.c.0.s8 %v5064
    %v5066 = vperm.slane %v5062, %v5065
    %v5067 = vrot.slane %v4734, 4
    %v5068 = vsel %vm818, %v5067, %v4732
    %v5070 = vunpack.c.l.s4 1983009808
    %v5071 = vunpack.c.0.s8 %v5070
    %v5072 = vperm.slane %v5068, %v5071
    %v5073 = vrot.slane %v5072, 4
    %v5074 = vsel %vm818, %v5073, %v5066
    %v5076 = vunpack.c.l.s4 1934713408
    %v5077 = vunpack.c.0.s8 %v5076
    %v5078 = vperm.slane %v5074, %v5077
    %v5079 = vrot.slane %v5078, 4
    %v5080 = vsel %vm818, 0, %v5079
    %v5081 = vsel %vm818, %v4759, %v4752
    %v5083 = vunpack.c.l.s4 1983009808
    %v5084 = vunpack.c.0.s8 %v5083
    %v5085 = vperm.slane %v5081, %v5084
    %v5086 = vrot.slane %v4760, 4
    %v5087 = vsel %vm818, %v5086, %v4758
    %v5089 = vunpack.c.l.s4 1983009808
    %v5090 = vunpack.c.0.s8 %v5089
    %v5091 = vperm.slane %v5087, %v5090
    %v5092 = vrot.slane %v5091, 4
    %v5093 = vsel %vm818, %v5092, %v5085
    %v5095 = vunpack.c.l.s4 1934713408
    %v5096 = vunpack.c.0.s8 %v5095
    %v5097 = vperm.slane %v5093, %v5096
    %v5098 = vrot.slane %v5097, 4
    %v5099 = vsel %vm818, 0, %v5098
    %v5100 = vsel %vm818, %v4785, %v4778
    %v5102 = vunpack.c.l.s4 1983009808
    %v5103 = vunpack.c.0.s8 %v5102
    %v5104 = vperm.slane %v5100, %v5103
    %v5105 = vrot.slane %v4786, 4
    %v5106 = vsel %vm818, %v5105, %v4784
    %v5108 = vunpack.c.l.s4 1983009808
    %v5109 = vunpack.c.0.s8 %v5108
    %v5110 = vperm.slane %v5106, %v5109
    %v5111 = vrot.slane %v5110, 4
    %v5112 = vsel %vm818, %v5111, %v5104
    %v5114 = vunpack.c.l.s4 1934713408
    %v5115 = vunpack.c.0.s8 %v5114
    %v5116 = vperm.slane %v5112, %v5115
    %v5117 = vrot.slane %v5116, 4
    %v5118 = vsel %vm818, 0, %v5117
    %v5119 = vsel %vm818, %v4811, %v4804
    %v5121 = vunpack.c.l.s4 1983009808
    %v5122 = vunpack.c.0.s8 %v5121
    %v5123 = vperm.slane %v5119, %v5122
    %v5124 = vrot.slane %v4812, 4
    %v5125 = vsel %vm818, %v5124, %v4810
    %v5127 = vunpack.c.l.s4 1983009808
    %v5128 = vunpack.c.0.s8 %v5127
    %v5129 = vperm.slane %v5125, %v5128
    %v5130 = vrot.slane %v5129, 4
    %v5131 = vsel %vm818, %v5130, %v5123
    %v5133 = vunpack.c.l.s4 1934713408
    %v5134 = vunpack.c.0.s8 %v5133
    %v5135 = vperm.slane %v5131, %v5134
    %v5136 = vrot.slane %v5135, 4
    %v5137 = vsel %vm818, 0, %v5136
    %v5138 = vsel %vm818, %v4837, %v4830
    %v5140 = vunpack.c.l.s4 1983009808
    %v5141 = vunpack.c.0.s8 %v5140
    %v5142 = vperm.slane %v5138, %v5141
    %v5143 = vrot.slane %v4838, 4
    %v5144 = vsel %vm818, %v5143, %v4836
    %v5146 = vunpack.c.l.s4 1983009808
    %v5147 = vunpack.c.0.s8 %v5146
    %v5148 = vperm.slane %v5144, %v5147
    %v5149 = vrot.slane %v5148, 4
    %v5150 = vsel %vm818, %v5149, %v5142
    %v5152 = vunpack.c.l.s4 1934713408
    %v5153 = vunpack.c.0.s8 %v5152
    %v5154 = vperm.slane %v5150, %v5153
    %v5155 = vrot.slane %v5154, 4
    %v5156 = vsel %vm818, 0, %v5155
    %v5157 = vsel %vm818, %v4863, %v4856
    %v5159 = vunpack.c.l.s4 1983009808
    %v5160 = vunpack.c.0.s8 %v5159
    %v5161 = vperm.slane %v5157, %v5160
    %v5162 = vrot.slane %v4864, 4
    %v5163 = vsel %vm818, %v5162, %v4862
    %v5165 = vunpack.c.l.s4 1983009808
    %v5166 = vunpack.c.0.s8 %v5165
    %v5167 = vperm.slane %v5163, %v5166
    %v5168 = vrot.slane %v5167, 4
    %v5169 = vsel %vm818, %v5168, %v5161
    %v5171 = vunpack.c.l.s4 1934713408
    %v5172 = vunpack.c.0.s8 %v5171
    %v5173 = vperm.slane %v5169, %v5172
    %v5174 = vrot.slane %v5173, 4
    %v5175 = vsel %vm818, 0, %v5174
    %v5176 = vsel %vm818, %v4889, %v4882
    %v5178 = vunpack.c.l.s4 1983009808
    %v5179 = vunpack.c.0.s8 %v5178
    %v5180 = vperm.slane %v5176, %v5179
    %v5181 = vrot.slane %v4890, 4
    %v5182 = vsel %vm818, %v5181, %v4888
    %v5184 = vunpack.c.l.s4 1983009808
    %v5185 = vunpack.c.0.s8 %v5184
    %v5186 = vperm.slane %v5182, %v5185
    %v5187 = vrot.slane %v5186, 4
    %v5188 = vsel %vm818, %v5187, %v5180
    %v5190 = vunpack.c.l.s4 1934713408
    %v5191 = vunpack.c.0.s8 %v5190
    %v5192 = vperm.slane %v5188, %v5191
    %v5193 = vrot.slane %v5192, 4
    %v5194 = vsel %vm818, 0, %v5193
    %v5197 = vpack.i.b16 %v4926, %v4907
    %v5198 = vshrl.u32 %v4907, 16
    %v5199 = vshrl.u32 %v4926, 16
    %v5200 = vpack.i.b16 %v5199, %v5198
    %v5203 = vpack.i.b16 %v4928, %v4909
    %v5204 = vshrl.u32 %v4909, 16
    %v5205 = vshrl.u32 %v4928, 16
    %v5206 = vpack.i.b16 %v5205, %v5204
    %v5209 = vpack.i.b16 %v4964, %v4945
    %v5210 = vshrl.u32 %v4945, 16
    %v5211 = vshrl.u32 %v4964, 16
    %v5212 = vpack.i.b16 %v5211, %v5210
    %v5215 = vpack.i.b16 %v4966, %v4947
    %v5216 = vshrl.u32 %v4947, 16
    %v5217 = vshrl.u32 %v4966, 16
    %v5218 = vpack.i.b16 %v5217, %v5216
    %v5221 = vpack.i.b16 %v5002, %v4983
    %v5222 = vshrl.u32 %v4983, 16
    %v5223 = vshrl.u32 %v5002, 16
    %v5224 = vpack.i.b16 %v5223, %v5222
    %v5227 = vpack.i.b16 %v5004, %v4985
    %v5228 = vshrl.u32 %v4985, 16
    %v5229 = vshrl.u32 %v5004, 16
    %v5230 = vpack.i.b16 %v5229, %v5228
    %v5233 = vpack.i.b16 %v5040, %v5021
    %v5234 = vshrl.u32 %v5021, 16
    %v5235 = vshrl.u32 %v5040, 16
    %v5236 = vpack.i.b16 %v5235, %v5234
    %v5239 = vpack.i.b16 %v5042, %v5023
    %v5240 = vshrl.u32 %v5023, 16
    %v5241 = vshrl.u32 %v5042, 16
    %v5242 = vpack.i.b16 %v5241, %v5240
    %v5245 = vpack.i.b16 %v5078, %v5059
    %v5246 = vshrl.u32 %v5059, 16
    %v5247 = vshrl.u32 %v5078, 16
    %v5248 = vpack.i.b16 %v5247, %v5246
    %v5251 = vpack.i.b16 %v5080, %v5061
    %v5252 = vshrl.u32 %v5061, 16
    %v5253 = vshrl.u32 %v5080, 16
    %v5254 = vpack.i.b16 %v5253, %v5252
    %v5257 = vpack.i.b16 %v5116, %v5097
    %v5258 = vshrl.u32 %v5097, 16
    %v5259 = vshrl.u32 %v5116, 16
    %v5260 = vpack.i.b16 %v5259, %v5258
    %v5263 = vpack.i.b16 %v5118, %v5099
    %v5264 = vshrl.u32 %v5099, 16
    %v5265 = vshrl.u32 %v5118, 16
    %v5266 = vpack.i.b16 %v5265, %v5264
    %v5269 = vpack.i.b16 %v5154, %v5135
    %v5270 = vshrl.u32 %v5135, 16
    %v5271 = vshrl.u32 %v5154, 16
    %v5272 = vpack.i.b16 %v5271, %v5270
    %v5275 = vpack.i.b16 %v5156, %v5137
    %v5276 = vshrl.u32 %v5137, 16
    %v5277 = vshrl.u32 %v5156, 16
    %v5278 = vpack.i.b16 %v5277, %v5276
    %v5281 = vpack.i.b16 %v5192, %v5173
    %v5282 = vshrl.u32 %v5173, 16
    %v5283 = vshrl.u32 %v5192, 16
    %v5284 = vpack.i.b16 %v5283, %v5282
    %v5287 = vpack.i.b16 %v5194, %v5175
    %v5288 = vshrl.u32 %v5175, 16
    %v5289 = vshrl.u32 %v5194, 16
    %v5290 = vpack.i.b16 %v5289, %v5288
    %v5291 = vpack.c.bf16 %v3808, %v3808
    %v5292 = vpack.c.bf16 %v3810, %v3810
    %v5293 = vpack.c.bf16 %v3813, %v3813
    %v5294 = vpack.c.bf16 %v3815, %v3815
    %v5295 = vpack.c.bf16 %v3818, %v3818
    %v5296 = vpack.c.bf16 %v3820, %v3820
    %v5297 = vpack.c.bf16 %v3823, %v3823
    %v5298 = vpack.c.bf16 %v3825, %v3825
    %5307 = vrot.lane.b32.xlu0 %v5291, 96
    %v5308 = vpop.permute.xlu0 %5307
    %5309 = vrot.lane.b32.xlu0 %v5292, 96
    %v5310 = vpop.permute.xlu0 %5309
    %5311 = vrot.lane.b32.xlu0 %v5293, 96
    %v5312 = vpop.permute.xlu0 %5311
    %5313 = vrot.lane.b32.xlu0 %v5294, 96
    %v5314 = vpop.permute.xlu0 %5313
    %5315 = vrot.lane.b32.xlu0 %v5295, 96
    %v5316 = vpop.permute.xlu0 %5315
    %5317 = vrot.lane.b32.xlu0 %v5296, 96
    %v5318 = vpop.permute.xlu0 %5317
    %5319 = vrot.lane.b32.xlu0 %v5297, 96
    %v5320 = vpop.permute.xlu0 %5319
    %5321 = vrot.lane.b32.xlu0 %v5298, 96
    %v5322 = vpop.permute.xlu0 %5321
    %5323 = vrot.lane.b32.xlu0 %v5291, 64
    %v5324 = vpop.permute.xlu0 %5323
    %5325 = vrot.lane.b32.xlu0 %v5292, 64
    %v5326 = vpop.permute.xlu0 %5325
    %5327 = vrot.lane.b32.xlu0 %v5293, 64
    %v5328 = vpop.permute.xlu0 %5327
    %5329 = vrot.lane.b32.xlu0 %v5294, 64
    %v5330 = vpop.permute.xlu0 %5329
    %5331 = vrot.lane.b32.xlu0 %v5295, 64
    %v5332 = vpop.permute.xlu0 %5331
    %5333 = vrot.lane.b32.xlu0 %v5296, 64
    %v5334 = vpop.permute.xlu0 %5333
    %5335 = vrot.lane.b32.xlu0 %v5297, 64
    %v5336 = vpop.permute.xlu0 %5335
    %5337 = vrot.lane.b32.xlu0 %v5298, 64
    %v5338 = vpop.permute.xlu0 %5337
    %5339 = vrot.lane.b32.xlu0 %v5291, 32
    %v5340 = vpop.permute.xlu0 %5339
    %5341 = vrot.lane.b32.xlu0 %v5292, 32
    %v5342 = vpop.permute.xlu0 %5341
    %5343 = vrot.lane.b32.xlu0 %v5293, 32
    %v5344 = vpop.permute.xlu0 %5343
    %5345 = vrot.lane.b32.xlu0 %v5294, 32
    %v5346 = vpop.permute.xlu0 %5345
    %5347 = vrot.lane.b32.xlu0 %v5295, 32
    %v5348 = vpop.permute.xlu0 %5347
    %5349 = vrot.lane.b32.xlu0 %v5296, 32
    %v5350 = vpop.permute.xlu0 %5349
    %5351 = vrot.lane.b32.xlu0 %v5297, 32
    %v5352 = vpop.permute.xlu0 %5351
    %5353 = vrot.lane.b32.xlu0 %v5298, 32
    %v5354 = vpop.permute.xlu0 %5353
    %v5357 = vpack.i.b16 %v5308, %v5291
    %v5358 = vshrl.u32 %v5291, 16
    %v5359 = vshrl.u32 %v5308, 16
    %v5360 = vpack.i.b16 %v5359, %v5358
    %v5363 = vpack.i.b16 %v5340, %v5324
    %v5364 = vshrl.u32 %v5324, 16
    %v5365 = vshrl.u32 %v5340, 16
    %v5366 = vpack.i.b16 %v5365, %v5364
    %v5369 = vpack.i.b16 %v5310, %v5292
    %v5370 = vshrl.u32 %v5292, 16
    %v5371 = vshrl.u32 %v5310, 16
    %v5372 = vpack.i.b16 %v5371, %v5370
    %v5375 = vpack.i.b16 %v5342, %v5326
    %v5376 = vshrl.u32 %v5326, 16
    %v5377 = vshrl.u32 %v5342, 16
    %v5378 = vpack.i.b16 %v5377, %v5376
    %v5381 = vpack.i.b16 %v5312, %v5293
    %v5382 = vshrl.u32 %v5293, 16
    %v5383 = vshrl.u32 %v5312, 16
    %v5384 = vpack.i.b16 %v5383, %v5382
    %v5387 = vpack.i.b16 %v5344, %v5328
    %v5388 = vshrl.u32 %v5328, 16
    %v5389 = vshrl.u32 %v5344, 16
    %v5390 = vpack.i.b16 %v5389, %v5388
    %v5393 = vpack.i.b16 %v5314, %v5294
    %v5394 = vshrl.u32 %v5294, 16
    %v5395 = vshrl.u32 %v5314, 16
    %v5396 = vpack.i.b16 %v5395, %v5394
    %v5399 = vpack.i.b16 %v5346, %v5330
    %v5400 = vshrl.u32 %v5330, 16
    %v5401 = vshrl.u32 %v5346, 16
    %v5402 = vpack.i.b16 %v5401, %v5400
    %v5405 = vpack.i.b16 %v5316, %v5295
    %v5406 = vshrl.u32 %v5295, 16
    %v5407 = vshrl.u32 %v5316, 16
    %v5408 = vpack.i.b16 %v5407, %v5406
    %v5411 = vpack.i.b16 %v5348, %v5332
    %v5412 = vshrl.u32 %v5332, 16
    %v5413 = vshrl.u32 %v5348, 16
    %v5414 = vpack.i.b16 %v5413, %v5412
    %v5417 = vpack.i.b16 %v5318, %v5296
    %v5418 = vshrl.u32 %v5296, 16
    %v5419 = vshrl.u32 %v5318, 16
    %v5420 = vpack.i.b16 %v5419, %v5418
    %v5423 = vpack.i.b16 %v5350, %v5334
    %v5424 = vshrl.u32 %v5334, 16
    %v5425 = vshrl.u32 %v5350, 16
    %v5426 = vpack.i.b16 %v5425, %v5424
    %v5429 = vpack.i.b16 %v5320, %v5297
    %v5430 = vshrl.u32 %v5297, 16
    %v5431 = vshrl.u32 %v5320, 16
    %v5432 = vpack.i.b16 %v5431, %v5430
    %v5435 = vpack.i.b16 %v5352, %v5336
    %v5436 = vshrl.u32 %v5336, 16
    %v5437 = vshrl.u32 %v5352, 16
    %v5438 = vpack.i.b16 %v5437, %v5436
    %v5441 = vpack.i.b16 %v5322, %v5298
    %v5442 = vshrl.u32 %v5298, 16
    %v5443 = vshrl.u32 %v5322, 16
    %v5444 = vpack.i.b16 %v5443, %v5442
    %v5447 = vpack.i.b16 %v5354, %v5338
    %v5448 = vshrl.u32 %v5338, 16
    %v5449 = vshrl.u32 %v5354, 16
    %v5450 = vpack.i.b16 %v5449, %v5448
    %v5453 = vunpack.c.l.s4 1983009808
    %v5454 = vunpack.c.0.s8 %v5453
    %v5455 = vperm.slane %v5357, %v5454
    %v5458 = vunpack.c.l.s4 1983009808
    %v5459 = vunpack.c.0.s8 %v5458
    %v5460 = vperm.slane %v5363, %v5459
    %v5461 = vrot.slane %v5460, 4
    %v5462 = vsel %vm818, %v5461, %v5455
    %v5463 = vrot.slane %v5455, 4
    %v5464 = vsel %vm818, %v5460, %v5463
    %v5466 = vunpack.c.l.s4 1934713408
    %v5467 = vunpack.c.0.s8 %v5466
    %v5468 = vperm.slane %v5462, %v5467
    %v5470 = vunpack.c.l.s4 1934713408
    %v5471 = vunpack.c.0.s8 %v5470
    %v5472 = vperm.slane %v5464, %v5471
    %v5473 = vrot.slane %v5468, 4
    %v5474 = vsel %vm818, 0, %v5473
    %v5475 = vrot.slane %v5472, 4
    %v5476 = vsel %vm818, 0, %v5475
    %v5479 = vunpack.c.l.s4 1983009808
    %v5480 = vunpack.c.0.s8 %v5479
    %v5481 = vperm.slane %v5360, %v5480
    %v5484 = vunpack.c.l.s4 1983009808
    %v5485 = vunpack.c.0.s8 %v5484
    %v5486 = vperm.slane %v5366, %v5485
    %v5487 = vrot.slane %v5486, 4
    %v5488 = vsel %vm818, %v5487, %v5481
    %v5489 = vrot.slane %v5481, 4
    %v5490 = vsel %vm818, %v5486, %v5489
    %v5492 = vunpack.c.l.s4 1934713408
    %v5493 = vunpack.c.0.s8 %v5492
    %v5494 = vperm.slane %v5488, %v5493
    %v5496 = vunpack.c.l.s4 1934713408
    %v5497 = vunpack.c.0.s8 %v5496
    %v5498 = vperm.slane %v5490, %v5497
    %v5499 = vrot.slane %v5494, 4
    %v5500 = vsel %vm818, 0, %v5499
    %v5501 = vrot.slane %v5498, 4
    %v5502 = vsel %vm818, 0, %v5501
    %v5505 = vunpack.c.l.s4 1983009808
    %v5506 = vunpack.c.0.s8 %v5505
    %v5507 = vperm.slane %v5369, %v5506
    %v5510 = vunpack.c.l.s4 1983009808
    %v5511 = vunpack.c.0.s8 %v5510
    %v5512 = vperm.slane %v5375, %v5511
    %v5513 = vrot.slane %v5512, 4
    %v5514 = vsel %vm818, %v5513, %v5507
    %v5515 = vrot.slane %v5507, 4
    %v5516 = vsel %vm818, %v5512, %v5515
    %v5518 = vunpack.c.l.s4 1934713408
    %v5519 = vunpack.c.0.s8 %v5518
    %v5520 = vperm.slane %v5514, %v5519
    %v5522 = vunpack.c.l.s4 1934713408
    %v5523 = vunpack.c.0.s8 %v5522
    %v5524 = vperm.slane %v5516, %v5523
    %v5525 = vrot.slane %v5520, 4
    %v5526 = vsel %vm818, 0, %v5525
    %v5527 = vrot.slane %v5524, 4
    %v5528 = vsel %vm818, 0, %v5527
    %v5531 = vunpack.c.l.s4 1983009808
    %v5532 = vunpack.c.0.s8 %v5531
    %v5533 = vperm.slane %v5372, %v5532
    %v5536 = vunpack.c.l.s4 1983009808
    %v5537 = vunpack.c.0.s8 %v5536
    %v5538 = vperm.slane %v5378, %v5537
    %v5539 = vrot.slane %v5538, 4
    %v5540 = vsel %vm818, %v5539, %v5533
    %v5541 = vrot.slane %v5533, 4
    %v5542 = vsel %vm818, %v5538, %v5541
    %v5544 = vunpack.c.l.s4 1934713408
    %v5545 = vunpack.c.0.s8 %v5544
    %v5546 = vperm.slane %v5540, %v5545
    %v5548 = vunpack.c.l.s4 1934713408
    %v5549 = vunpack.c.0.s8 %v5548
    %v5550 = vperm.slane %v5542, %v5549
    %v5551 = vrot.slane %v5546, 4
    %v5552 = vsel %vm818, 0, %v5551
    %v5553 = vrot.slane %v5550, 4
    %v5554 = vsel %vm818, 0, %v5553
    %v5557 = vunpack.c.l.s4 1983009808
    %v5558 = vunpack.c.0.s8 %v5557
    %v5559 = vperm.slane %v5381, %v5558
    %v5562 = vunpack.c.l.s4 1983009808
    %v5563 = vunpack.c.0.s8 %v5562
    %v5564 = vperm.slane %v5387, %v5563
    %v5565 = vrot.slane %v5564, 4
    %v5566 = vsel %vm818, %v5565, %v5559
    %v5567 = vrot.slane %v5559, 4
    %v5568 = vsel %vm818, %v5564, %v5567
    %v5570 = vunpack.c.l.s4 1934713408
    %v5571 = vunpack.c.0.s8 %v5570
    %v5572 = vperm.slane %v5566, %v5571
    %v5574 = vunpack.c.l.s4 1934713408
    %v5575 = vunpack.c.0.s8 %v5574
    %v5576 = vperm.slane %v5568, %v5575
    %v5577 = vrot.slane %v5572, 4
    %v5578 = vsel %vm818, 0, %v5577
    %v5579 = vrot.slane %v5576, 4
    %v5580 = vsel %vm818, 0, %v5579
    %v5583 = vunpack.c.l.s4 1983009808
    %v5584 = vunpack.c.0.s8 %v5583
    %v5585 = vperm.slane %v5384, %v5584
    %v5588 = vunpack.c.l.s4 1983009808
    %v5589 = vunpack.c.0.s8 %v5588
    %v5590 = vperm.slane %v5390, %v5589
    %v5591 = vrot.slane %v5590, 4
    %v5592 = vsel %vm818, %v5591, %v5585
    %v5593 = vrot.slane %v5585, 4
    %v5594 = vsel %vm818, %v5590, %v5593
    %v5596 = vunpack.c.l.s4 1934713408
    %v5597 = vunpack.c.0.s8 %v5596
    %v5598 = vperm.slane %v5592, %v5597
    %v5600 = vunpack.c.l.s4 1934713408
    %v5601 = vunpack.c.0.s8 %v5600
    %v5602 = vperm.slane %v5594, %v5601
    %v5603 = vrot.slane %v5598, 4
    %v5604 = vsel %vm818, 0, %v5603
    %v5605 = vrot.slane %v5602, 4
    %v5606 = vsel %vm818, 0, %v5605
    %v5609 = vunpack.c.l.s4 1983009808
    %v5610 = vunpack.c.0.s8 %v5609
    %v5611 = vperm.slane %v5393, %v5610
    %v5614 = vunpack.c.l.s4 1983009808
    %v5615 = vunpack.c.0.s8 %v5614
    %v5616 = vperm.slane %v5399, %v5615
    %v5617 = vrot.slane %v5616, 4
    %v5618 = vsel %vm818, %v5617, %v5611
    %v5619 = vrot.slane %v5611, 4
    %v5620 = vsel %vm818, %v5616, %v5619
    %v5622 = vunpack.c.l.s4 1934713408
    %v5623 = vunpack.c.0.s8 %v5622
    %v5624 = vperm.slane %v5618, %v5623
    %v5626 = vunpack.c.l.s4 1934713408
    %v5627 = vunpack.c.0.s8 %v5626
    %v5628 = vperm.slane %v5620, %v5627
    %v5629 = vrot.slane %v5624, 4
    %v5630 = vsel %vm818, 0, %v5629
    %v5631 = vrot.slane %v5628, 4
    %v5632 = vsel %vm818, 0, %v5631
    %v5635 = vunpack.c.l.s4 1983009808
    %v5636 = vunpack.c.0.s8 %v5635
    %v5637 = vperm.slane %v5396, %v5636
    %v5640 = vunpack.c.l.s4 1983009808
    %v5641 = vunpack.c.0.s8 %v5640
    %v5642 = vperm.slane %v5402, %v5641
    %v5643 = vrot.slane %v5642, 4
    %v5644 = vsel %vm818, %v5643, %v5637
    %v5645 = vrot.slane %v5637, 4
    %v5646 = vsel %vm818, %v5642, %v5645
    %v5648 = vunpack.c.l.s4 1934713408
    %v5649 = vunpack.c.0.s8 %v5648
    %v5650 = vperm.slane %v5644, %v5649
    %v5652 = vunpack.c.l.s4 1934713408
    %v5653 = vunpack.c.0.s8 %v5652
    %v5654 = vperm.slane %v5646, %v5653
    %v5655 = vrot.slane %v5650, 4
    %v5656 = vsel %vm818, 0, %v5655
    %v5657 = vrot.slane %v5654, 4
    %v5658 = vsel %vm818, 0, %v5657
    %v5661 = vunpack.c.l.s4 1983009808
    %v5662 = vunpack.c.0.s8 %v5661
    %v5663 = vperm.slane %v5405, %v5662
    %v5666 = vunpack.c.l.s4 1983009808
    %v5667 = vunpack.c.0.s8 %v5666
    %v5668 = vperm.slane %v5411, %v5667
    %v5669 = vrot.slane %v5668, 4
    %v5670 = vsel %vm818, %v5669, %v5663
    %v5671 = vrot.slane %v5663, 4
    %v5672 = vsel %vm818, %v5668, %v5671
    %v5674 = vunpack.c.l.s4 1934713408
    %v5675 = vunpack.c.0.s8 %v5674
    %v5676 = vperm.slane %v5670, %v5675
    %v5678 = vunpack.c.l.s4 1934713408
    %v5679 = vunpack.c.0.s8 %v5678
    %v5680 = vperm.slane %v5672, %v5679
    %v5681 = vrot.slane %v5676, 4
    %v5682 = vsel %vm818, 0, %v5681
    %v5683 = vrot.slane %v5680, 4
    %v5684 = vsel %vm818, 0, %v5683
    %v5687 = vunpack.c.l.s4 1983009808
    %v5688 = vunpack.c.0.s8 %v5687
    %v5689 = vperm.slane %v5408, %v5688
    %v5692 = vunpack.c.l.s4 1983009808
    %v5693 = vunpack.c.0.s8 %v5692
    %v5694 = vperm.slane %v5414, %v5693
    %v5695 = vrot.slane %v5694, 4
    %v5696 = vsel %vm818, %v5695, %v5689
    %v5697 = vrot.slane %v5689, 4
    %v5698 = vsel %vm818, %v5694, %v5697
    %v5700 = vunpack.c.l.s4 1934713408
    %v5701 = vunpack.c.0.s8 %v5700
    %v5702 = vperm.slane %v5696, %v5701
    %v5704 = vunpack.c.l.s4 1934713408
    %v5705 = vunpack.c.0.s8 %v5704
    %v5706 = vperm.slane %v5698, %v5705
    %v5707 = vrot.slane %v5702, 4
    %v5708 = vsel %vm818, 0, %v5707
    %v5709 = vrot.slane %v5706, 4
    %v5710 = vsel %vm818, 0, %v5709
    %v5713 = vunpack.c.l.s4 1983009808
    %v5714 = vunpack.c.0.s8 %v5713
    %v5715 = vperm.slane %v5417, %v5714
    %v5718 = vunpack.c.l.s4 1983009808
    %v5719 = vunpack.c.0.s8 %v5718
    %v5720 = vperm.slane %v5423, %v5719
    %v5721 = vrot.slane %v5720, 4
    %v5722 = vsel %vm818, %v5721, %v5715
    %v5723 = vrot.slane %v5715, 4
    %v5724 = vsel %vm818, %v5720, %v5723
    %v5726 = vunpack.c.l.s4 1934713408
    %v5727 = vunpack.c.0.s8 %v5726
    %v5728 = vperm.slane %v5722, %v5727
    %v5730 = vunpack.c.l.s4 1934713408
    %v5731 = vunpack.c.0.s8 %v5730
    %v5732 = vperm.slane %v5724, %v5731
    %v5733 = vrot.slane %v5728, 4
    %v5734 = vsel %vm818, 0, %v5733
    %v5735 = vrot.slane %v5732, 4
    %v5736 = vsel %vm818, 0, %v5735
    %v5739 = vunpack.c.l.s4 1983009808
    %v5740 = vunpack.c.0.s8 %v5739
    %v5741 = vperm.slane %v5420, %v5740
    %v5744 = vunpack.c.l.s4 1983009808
    %v5745 = vunpack.c.0.s8 %v5744
    %v5746 = vperm.slane %v5426, %v5745
    %v5747 = vrot.slane %v5746, 4
    %v5748 = vsel %vm818, %v5747, %v5741
    %v5749 = vrot.slane %v5741, 4
    %v5750 = vsel %vm818, %v5746, %v5749
    %v5752 = vunpack.c.l.s4 1934713408
    %v5753 = vunpack.c.0.s8 %v5752
    %v5754 = vperm.slane %v5748, %v5753
    %v5756 = vunpack.c.l.s4 1934713408
    %v5757 = vunpack.c.0.s8 %v5756
    %v5758 = vperm.slane %v5750, %v5757
    %v5759 = vrot.slane %v5754, 4
    %v5760 = vsel %vm818, 0, %v5759
    %v5761 = vrot.slane %v5758, 4
    %v5762 = vsel %vm818, 0, %v5761
    %v5765 = vunpack.c.l.s4 1983009808
    %v5766 = vunpack.c.0.s8 %v5765
    %v5767 = vperm.slane %v5429, %v5766
    %v5770 = vunpack.c.l.s4 1983009808
    %v5771 = vunpack.c.0.s8 %v5770
    %v5772 = vperm.slane %v5435, %v5771
    %v5773 = vrot.slane %v5772, 4
    %v5774 = vsel %vm818, %v5773, %v5767
    %v5775 = vrot.slane %v5767, 4
    %v5776 = vsel %vm818, %v5772, %v5775
    %v5778 = vunpack.c.l.s4 1934713408
    %v5779 = vunpack.c.0.s8 %v5778
    %v5780 = vperm.slane %v5774, %v5779
    %v5782 = vunpack.c.l.s4 1934713408
    %v5783 = vunpack.c.0.s8 %v5782
    %v5784 = vperm.slane %v5776, %v5783
    %v5785 = vrot.slane %v5780, 4
    %v5786 = vsel %vm818, 0, %v5785
    %v5787 = vrot.slane %v5784, 4
    %v5788 = vsel %vm818, 0, %v5787
    %v5791 = vunpack.c.l.s4 1983009808
    %v5792 = vunpack.c.0.s8 %v5791
    %v5793 = vperm.slane %v5432, %v5792
    %v5796 = vunpack.c.l.s4 1983009808
    %v5797 = vunpack.c.0.s8 %v5796
    %v5798 = vperm.slane %v5438, %v5797
    %v5799 = vrot.slane %v5798, 4
    %v5800 = vsel %vm818, %v5799, %v5793
    %v5801 = vrot.slane %v5793, 4
    %v5802 = vsel %vm818, %v5798, %v5801
    %v5804 = vunpack.c.l.s4 1934713408
    %v5805 = vunpack.c.0.s8 %v5804
    %v5806 = vperm.slane %v5800, %v5805
    %v5808 = vunpack.c.l.s4 1934713408
    %v5809 = vunpack.c.0.s8 %v5808
    %v5810 = vperm.slane %v5802, %v5809
    %v5811 = vrot.slane %v5806, 4
    %v5812 = vsel %vm818, 0, %v5811
    %v5813 = vrot.slane %v5810, 4
    %v5814 = vsel %vm818, 0, %v5813
    %v5817 = vunpack.c.l.s4 1983009808
    %v5818 = vunpack.c.0.s8 %v5817
    %v5819 = vperm.slane %v5441, %v5818
    %v5822 = vunpack.c.l.s4 1983009808
    %v5823 = vunpack.c.0.s8 %v5822
    %v5824 = vperm.slane %v5447, %v5823
    %v5825 = vrot.slane %v5824, 4
    %v5826 = vsel %vm818, %v5825, %v5819
    %v5827 = vrot.slane %v5819, 4
    %v5828 = vsel %vm818, %v5824, %v5827
    %v5830 = vunpack.c.l.s4 1934713408
    %v5831 = vunpack.c.0.s8 %v5830
    %v5832 = vperm.slane %v5826, %v5831
    %v5834 = vunpack.c.l.s4 1934713408
    %v5835 = vunpack.c.0.s8 %v5834
    %v5836 = vperm.slane %v5828, %v5835
    %v5837 = vrot.slane %v5832, 4
    %v5838 = vsel %vm818, 0, %v5837
    %v5839 = vrot.slane %v5836, 4
    %v5840 = vsel %vm818, 0, %v5839
    %v5843 = vunpack.c.l.s4 1983009808
    %v5844 = vunpack.c.0.s8 %v5843
    %v5845 = vperm.slane %v5444, %v5844
    %v5848 = vunpack.c.l.s4 1983009808
    %v5849 = vunpack.c.0.s8 %v5848
    %v5850 = vperm.slane %v5450, %v5849
    %v5851 = vrot.slane %v5850, 4
    %v5852 = vsel %vm818, %v5851, %v5845
    %v5853 = vrot.slane %v5845, 4
    %v5854 = vsel %vm818, %v5850, %v5853
    %v5856 = vunpack.c.l.s4 1934713408
    %v5857 = vunpack.c.0.s8 %v5856
    %v5858 = vperm.slane %v5852, %v5857
    %v5860 = vunpack.c.l.s4 1934713408
    %v5861 = vunpack.c.0.s8 %v5860
    %v5862 = vperm.slane %v5854, %v5861
    %v5863 = vrot.slane %v5858, 4
    %v5864 = vsel %vm818, 0, %v5863
    %v5865 = vrot.slane %v5862, 4
    %v5866 = vsel %vm818, 0, %v5865
    %v5867 = vsel %vm818, %v5475, %v5468
    %v5869 = vunpack.c.l.s4 1983009808
    %v5870 = vunpack.c.0.s8 %v5869
    %v5871 = vperm.slane %v5867, %v5870
    %v5872 = vrot.slane %v5476, 4
    %v5873 = vsel %vm818, %v5872, %v5474
    %v5875 = vunpack.c.l.s4 1983009808
    %v5876 = vunpack.c.0.s8 %v5875
    %v5877 = vperm.slane %v5873, %v5876
    %v5878 = vrot.slane %v5877, 4
    %v5879 = vsel %vm818, %v5878, %v5871
    %v5881 = vunpack.c.l.s4 1934713408
    %v5882 = vunpack.c.0.s8 %v5881
    %v5883 = vperm.slane %v5879, %v5882
    %v5884 = vrot.slane %v5883, 4
    %v5885 = vsel %vm818, 0, %v5884
    %v5886 = vsel %vm818, %v5501, %v5494
    %v5888 = vunpack.c.l.s4 1983009808
    %v5889 = vunpack.c.0.s8 %v5888
    %v5890 = vperm.slane %v5886, %v5889
    %v5891 = vrot.slane %v5502, 4
    %v5892 = vsel %vm818, %v5891, %v5500
    %v5894 = vunpack.c.l.s4 1983009808
    %v5895 = vunpack.c.0.s8 %v5894
    %v5896 = vperm.slane %v5892, %v5895
    %v5897 = vrot.slane %v5896, 4
    %v5898 = vsel %vm818, %v5897, %v5890
    %v5900 = vunpack.c.l.s4 1934713408
    %v5901 = vunpack.c.0.s8 %v5900
    %v5902 = vperm.slane %v5898, %v5901
    %v5903 = vrot.slane %v5902, 4
    %v5904 = vsel %vm818, 0, %v5903
    %v5905 = vsel %vm818, %v5527, %v5520
    %v5907 = vunpack.c.l.s4 1983009808
    %v5908 = vunpack.c.0.s8 %v5907
    %v5909 = vperm.slane %v5905, %v5908
    %v5910 = vrot.slane %v5528, 4
    %v5911 = vsel %vm818, %v5910, %v5526
    %v5913 = vunpack.c.l.s4 1983009808
    %v5914 = vunpack.c.0.s8 %v5913
    %v5915 = vperm.slane %v5911, %v5914
    %v5916 = vrot.slane %v5915, 4
    %v5917 = vsel %vm818, %v5916, %v5909
    %v5919 = vunpack.c.l.s4 1934713408
    %v5920 = vunpack.c.0.s8 %v5919
    %v5921 = vperm.slane %v5917, %v5920
    %v5922 = vrot.slane %v5921, 4
    %v5923 = vsel %vm818, 0, %v5922
    %v5924 = vsel %vm818, %v5553, %v5546
    %v5926 = vunpack.c.l.s4 1983009808
    %v5927 = vunpack.c.0.s8 %v5926
    %v5928 = vperm.slane %v5924, %v5927
    %v5929 = vrot.slane %v5554, 4
    %v5930 = vsel %vm818, %v5929, %v5552
    %v5932 = vunpack.c.l.s4 1983009808
    %v5933 = vunpack.c.0.s8 %v5932
    %v5934 = vperm.slane %v5930, %v5933
    %v5935 = vrot.slane %v5934, 4
    %v5936 = vsel %vm818, %v5935, %v5928
    %v5938 = vunpack.c.l.s4 1934713408
    %v5939 = vunpack.c.0.s8 %v5938
    %v5940 = vperm.slane %v5936, %v5939
    %v5941 = vrot.slane %v5940, 4
    %v5942 = vsel %vm818, 0, %v5941
    %v5943 = vsel %vm818, %v5579, %v5572
    %v5945 = vunpack.c.l.s4 1983009808
    %v5946 = vunpack.c.0.s8 %v5945
    %v5947 = vperm.slane %v5943, %v5946
    %v5948 = vrot.slane %v5580, 4
    %v5949 = vsel %vm818, %v5948, %v5578
    %v5951 = vunpack.c.l.s4 1983009808
    %v5952 = vunpack.c.0.s8 %v5951
    %v5953 = vperm.slane %v5949, %v5952
    %v5954 = vrot.slane %v5953, 4
    %v5955 = vsel %vm818, %v5954, %v5947
    %v5957 = vunpack.c.l.s4 1934713408
    %v5958 = vunpack.c.0.s8 %v5957
    %v5959 = vperm.slane %v5955, %v5958
    %v5960 = vrot.slane %v5959, 4
    %v5961 = vsel %vm818, 0, %v5960
    %v5962 = vsel %vm818, %v5605, %v5598
    %v5964 = vunpack.c.l.s4 1983009808
    %v5965 = vunpack.c.0.s8 %v5964
    %v5966 = vperm.slane %v5962, %v5965
    %v5967 = vrot.slane %v5606, 4
    %v5968 = vsel %vm818, %v5967, %v5604
    %v5970 = vunpack.c.l.s4 1983009808
    %v5971 = vunpack.c.0.s8 %v5970
    %v5972 = vperm.slane %v5968, %v5971
    %v5973 = vrot.slane %v5972, 4
    %v5974 = vsel %vm818, %v5973, %v5966
    %v5976 = vunpack.c.l.s4 1934713408
    %v5977 = vunpack.c.0.s8 %v5976
    %v5978 = vperm.slane %v5974, %v5977
    %v5979 = vrot.slane %v5978, 4
    %v5980 = vsel %vm818, 0, %v5979
    %v5981 = vsel %vm818, %v5631, %v5624
    %v5983 = vunpack.c.l.s4 1983009808
    %v5984 = vunpack.c.0.s8 %v5983
    %v5985 = vperm.slane %v5981, %v5984
    %v5986 = vrot.slane %v5632, 4
    %v5987 = vsel %vm818, %v5986, %v5630
    %v5989 = vunpack.c.l.s4 1983009808
    %v5990 = vunpack.c.0.s8 %v5989
    %v5991 = vperm.slane %v5987, %v5990
    %v5992 = vrot.slane %v5991, 4
    %v5993 = vsel %vm818, %v5992, %v5985
    %v5995 = vunpack.c.l.s4 1934713408
    %v5996 = vunpack.c.0.s8 %v5995
    %v5997 = vperm.slane %v5993, %v5996
    %v5998 = vrot.slane %v5997, 4
    %v5999 = vsel %vm818, 0, %v5998
    %v6000 = vsel %vm818, %v5657, %v5650
    %v6002 = vunpack.c.l.s4 1983009808
    %v6003 = vunpack.c.0.s8 %v6002
    %v6004 = vperm.slane %v6000, %v6003
    %v6005 = vrot.slane %v5658, 4
    %v6006 = vsel %vm818, %v6005, %v5656
    %v6008 = vunpack.c.l.s4 1983009808
    %v6009 = vunpack.c.0.s8 %v6008
    %v6010 = vperm.slane %v6006, %v6009
    %v6011 = vrot.slane %v6010, 4
    %v6012 = vsel %vm818, %v6011, %v6004
    %v6014 = vunpack.c.l.s4 1934713408
    %v6015 = vunpack.c.0.s8 %v6014
    %v6016 = vperm.slane %v6012, %v6015
    %v6017 = vrot.slane %v6016, 4
    %v6018 = vsel %vm818, 0, %v6017
    %v6019 = vsel %vm818, %v5683, %v5676
    %v6021 = vunpack.c.l.s4 1983009808
    %v6022 = vunpack.c.0.s8 %v6021
    %v6023 = vperm.slane %v6019, %v6022
    %v6024 = vrot.slane %v5684, 4
    %v6025 = vsel %vm818, %v6024, %v5682
    %v6027 = vunpack.c.l.s4 1983009808
    %v6028 = vunpack.c.0.s8 %v6027
    %v6029 = vperm.slane %v6025, %v6028
    %v6030 = vrot.slane %v6029, 4
    %v6031 = vsel %vm818, %v6030, %v6023
    %v6033 = vunpack.c.l.s4 1934713408
    %v6034 = vunpack.c.0.s8 %v6033
    %v6035 = vperm.slane %v6031, %v6034
    %v6036 = vrot.slane %v6035, 4
    %v6037 = vsel %vm818, 0, %v6036
    %v6038 = vsel %vm818, %v5709, %v5702
    %v6040 = vunpack.c.l.s4 1983009808
    %v6041 = vunpack.c.0.s8 %v6040
    %v6042 = vperm.slane %v6038, %v6041
    %v6043 = vrot.slane %v5710, 4
    %v6044 = vsel %vm818, %v6043, %v5708
    %v6046 = vunpack.c.l.s4 1983009808
    %v6047 = vunpack.c.0.s8 %v6046
    %v6048 = vperm.slane %v6044, %v6047
    %v6049 = vrot.slane %v6048, 4
    %v6050 = vsel %vm818, %v6049, %v6042
    %v6052 = vunpack.c.l.s4 1934713408
    %v6053 = vunpack.c.0.s8 %v6052
    %v6054 = vperm.slane %v6050, %v6053
    %v6055 = vrot.slane %v6054, 4
    %v6056 = vsel %vm818, 0, %v6055
    %v6057 = vsel %vm818, %v5735, %v5728
    %v6059 = vunpack.c.l.s4 1983009808
    %v6060 = vunpack.c.0.s8 %v6059
    %v6061 = vperm.slane %v6057, %v6060
    %v6062 = vrot.slane %v5736, 4
    %v6063 = vsel %vm818, %v6062, %v5734
    %v6065 = vunpack.c.l.s4 1983009808
    %v6066 = vunpack.c.0.s8 %v6065
    %v6067 = vperm.slane %v6063, %v6066
    %v6068 = vrot.slane %v6067, 4
    %v6069 = vsel %vm818, %v6068, %v6061
    %v6071 = vunpack.c.l.s4 1934713408
    %v6072 = vunpack.c.0.s8 %v6071
    %v6073 = vperm.slane %v6069, %v6072
    %v6074 = vrot.slane %v6073, 4
    %v6075 = vsel %vm818, 0, %v6074
    %v6076 = vsel %vm818, %v5761, %v5754
    %v6078 = vunpack.c.l.s4 1983009808
    %v6079 = vunpack.c.0.s8 %v6078
    %v6080 = vperm.slane %v6076, %v6079
    %v6081 = vrot.slane %v5762, 4
    %v6082 = vsel %vm818, %v6081, %v5760
    %v6084 = vunpack.c.l.s4 1983009808
    %v6085 = vunpack.c.0.s8 %v6084
    %v6086 = vperm.slane %v6082, %v6085
    %v6087 = vrot.slane %v6086, 4
    %v6088 = vsel %vm818, %v6087, %v6080
    %v6090 = vunpack.c.l.s4 1934713408
    %v6091 = vunpack.c.0.s8 %v6090
    %v6092 = vperm.slane %v6088, %v6091
    %v6093 = vrot.slane %v6092, 4
    %v6094 = vsel %vm818, 0, %v6093
    %v6095 = vsel %vm818, %v5787, %v5780
    %v6097 = vunpack.c.l.s4 1983009808
    %v6098 = vunpack.c.0.s8 %v6097
    %v6099 = vperm.slane %v6095, %v6098
    %v6100 = vrot.slane %v5788, 4
    %v6101 = vsel %vm818, %v6100, %v5786
    %v6103 = vunpack.c.l.s4 1983009808
    %v6104 = vunpack.c.0.s8 %v6103
    %v6105 = vperm.slane %v6101, %v6104
    %v6106 = vrot.slane %v6105, 4
    %v6107 = vsel %vm818, %v6106, %v6099
    %v6109 = vunpack.c.l.s4 1934713408
    %v6110 = vunpack.c.0.s8 %v6109
    %v6111 = vperm.slane %v6107, %v6110
    %v6112 = vrot.slane %v6111, 4
    %v6113 = vsel %vm818, 0, %v6112
    %v6114 = vsel %vm818, %v5813, %v5806
    %v6116 = vunpack.c.l.s4 1983009808
    %v6117 = vunpack.c.0.s8 %v6116
    %v6118 = vperm.slane %v6114, %v6117
    %v6119 = vrot.slane %v5814, 4
    %v6120 = vsel %vm818, %v6119, %v5812
    %v6122 = vunpack.c.l.s4 1983009808
    %v6123 = vunpack.c.0.s8 %v6122
    %v6124 = vperm.slane %v6120, %v6123
    %v6125 = vrot.slane %v6124, 4
    %v6126 = vsel %vm818, %v6125, %v6118
    %v6128 = vunpack.c.l.s4 1934713408
    %v6129 = vunpack.c.0.s8 %v6128
    %v6130 = vperm.slane %v6126, %v6129
    %v6131 = vrot.slane %v6130, 4
    %v6132 = vsel %vm818, 0, %v6131
    %v6133 = vsel %vm818, %v5839, %v5832
    %v6135 = vunpack.c.l.s4 1983009808
    %v6136 = vunpack.c.0.s8 %v6135
    %v6137 = vperm.slane %v6133, %v6136
    %v6138 = vrot.slane %v5840, 4
    %v6139 = vsel %vm818, %v6138, %v5838
    %v6141 = vunpack.c.l.s4 1983009808
    %v6142 = vunpack.c.0.s8 %v6141
    %v6143 = vperm.slane %v6139, %v6142
    %v6144 = vrot.slane %v6143, 4
    %v6145 = vsel %vm818, %v6144, %v6137
    %v6147 = vunpack.c.l.s4 1934713408
    %v6148 = vunpack.c.0.s8 %v6147
    %v6149 = vperm.slane %v6145, %v6148
    %v6150 = vrot.slane %v6149, 4
    %v6151 = vsel %vm818, 0, %v6150
    %v6152 = vsel %vm818, %v5865, %v5858
    %v6154 = vunpack.c.l.s4 1983009808
    %v6155 = vunpack.c.0.s8 %v6154
    %v6156 = vperm.slane %v6152, %v6155
    %v6157 = vrot.slane %v5866, 4
    %v6158 = vsel %vm818, %v6157, %v5864
    %v6160 = vunpack.c.l.s4 1983009808
    %v6161 = vunpack.c.0.s8 %v6160
    %v6162 = vperm.slane %v6158, %v6161
    %v6163 = vrot.slane %v6162, 4
    %v6164 = vsel %vm818, %v6163, %v6156
    %v6166 = vunpack.c.l.s4 1934713408
    %v6167 = vunpack.c.0.s8 %v6166
    %v6168 = vperm.slane %v6164, %v6167
    %v6169 = vrot.slane %v6168, 4
    %v6170 = vsel %vm818, 0, %v6169
    %v6173 = vpack.i.b16 %v5902, %v5883
    %v6174 = vshrl.u32 %v5883, 16
    %v6175 = vshrl.u32 %v5902, 16
    %v6176 = vpack.i.b16 %v6175, %v6174
    %v6179 = vpack.i.b16 %v5904, %v5885
    %v6180 = vshrl.u32 %v5885, 16
    %v6181 = vshrl.u32 %v5904, 16
    %v6182 = vpack.i.b16 %v6181, %v6180
    %v6185 = vpack.i.b16 %v5940, %v5921
    %v6186 = vshrl.u32 %v5921, 16
    %v6187 = vshrl.u32 %v5940, 16
    %v6188 = vpack.i.b16 %v6187, %v6186
    %v6191 = vpack.i.b16 %v5942, %v5923
    %v6192 = vshrl.u32 %v5923, 16
    %v6193 = vshrl.u32 %v5942, 16
    %v6194 = vpack.i.b16 %v6193, %v6192
    %v6197 = vpack.i.b16 %v5978, %v5959
    %v6198 = vshrl.u32 %v5959, 16
    %v6199 = vshrl.u32 %v5978, 16
    %v6200 = vpack.i.b16 %v6199, %v6198
    %v6203 = vpack.i.b16 %v5980, %v5961
    %v6204 = vshrl.u32 %v5961, 16
    %v6205 = vshrl.u32 %v5980, 16
    %v6206 = vpack.i.b16 %v6205, %v6204
    %v6209 = vpack.i.b16 %v6016, %v5997
    %v6210 = vshrl.u32 %v5997, 16
    %v6211 = vshrl.u32 %v6016, 16
    %v6212 = vpack.i.b16 %v6211, %v6210
    %v6215 = vpack.i.b16 %v6018, %v5999
    %v6216 = vshrl.u32 %v5999, 16
    %v6217 = vshrl.u32 %v6018, 16
    %v6218 = vpack.i.b16 %v6217, %v6216
    %v6221 = vpack.i.b16 %v6054, %v6035
    %v6222 = vshrl.u32 %v6035, 16
    %v6223 = vshrl.u32 %v6054, 16
    %v6224 = vpack.i.b16 %v6223, %v6222
    %v6227 = vpack.i.b16 %v6056, %v6037
    %v6228 = vshrl.u32 %v6037, 16
    %v6229 = vshrl.u32 %v6056, 16
    %v6230 = vpack.i.b16 %v6229, %v6228
    %v6233 = vpack.i.b16 %v6092, %v6073
    %v6234 = vshrl.u32 %v6073, 16
    %v6235 = vshrl.u32 %v6092, 16
    %v6236 = vpack.i.b16 %v6235, %v6234
    %v6239 = vpack.i.b16 %v6094, %v6075
    %v6240 = vshrl.u32 %v6075, 16
    %v6241 = vshrl.u32 %v6094, 16
    %v6242 = vpack.i.b16 %v6241, %v6240
    %v6245 = vpack.i.b16 %v6130, %v6111
    %v6246 = vshrl.u32 %v6111, 16
    %v6247 = vshrl.u32 %v6130, 16
    %v6248 = vpack.i.b16 %v6247, %v6246
    %v6251 = vpack.i.b16 %v6132, %v6113
    %v6252 = vshrl.u32 %v6113, 16
    %v6253 = vshrl.u32 %v6132, 16
    %v6254 = vpack.i.b16 %v6253, %v6252
    %v6257 = vpack.i.b16 %v6168, %v6149
    %v6258 = vshrl.u32 %v6149, 16
    %v6259 = vshrl.u32 %v6168, 16
    %v6260 = vpack.i.b16 %v6259, %v6258
    %v6263 = vpack.i.b16 %v6170, %v6151
    %v6264 = vshrl.u32 %v6151, 16
    %v6265 = vshrl.u32 %v6170, 16
    %v6266 = vpack.i.b16 %v6265, %v6264
    %v6267 = vunpack.c.l.b16 %v4269
    %v6268 = vunpack.c.l.b16 %v4281
    %v6269 = vpack.c.b16 %v6268, %v6267
    %v6270 = vunpack.c.l.b16 %v5197
    %v6271 = vunpack.c.l.b16 %v5209
    %v6272 = vunpack.c.l.b16 %v5221
    %v6273 = vunpack.c.l.b16 %v5233
    %v6274 = vpack.c.b16 %v6271, %v6270
    %v6275 = vpack.c.b16 %v6273, %v6272
    %v6277 = vsel %vm2198, %v6269, 0
    %v6280 = vsel %vm2198, %v6274, 0
    %v6283 = vsel %vm2198, %v6275, 0
    %6285 = vmatpush.bf16.xpose.msra.mxu0 0
    %6286 = vmatpush.bf16.xpose.msra.mxu0 0
    %6287 = vmatpush.bf16.xpose.msra.mxu0 0
    %6288 = vmatpush.bf16.xpose.msra.mxu0 0
    %6289 = vmatpush.bf16.xpose.msra.mxu0 0
    %6290 = vmatpush.bf16.xpose.msra.mxu0 0
    %6291 = vmatpush.bf16.xpose.msra.mxu0 %v6283
    %6292 = vmatpush.bf16.xpose.msra.mxu0 %v6280
    %6293 = vmatmul.bf16.gmra.mxu0 %v6277
    %v6294 = vpop.f32.mrf.mxu0
    %v6295 = vadd.f32 %v328, %v6294
    %v6296 = vpop.f32.mrf.mxu0
    %v6297 = vadd.f32 %v329, %v6296
    %6298 = vdwg.mxu0
    %v6299 = vunpack.c.l.b16 %v4272
    %v6300 = vunpack.c.l.b16 %v4284
    %v6301 = vpack.c.b16 %v6300, %v6299
    %v6302 = vunpack.c.l.b16 %v5200
    %v6303 = vunpack.c.l.b16 %v5212
    %v6304 = vunpack.c.l.b16 %v5224
    %v6305 = vunpack.c.l.b16 %v5236
    %v6306 = vpack.c.b16 %v6303, %v6302
    %v6307 = vpack.c.b16 %v6305, %v6304
    %v6309 = vsel %vm2198, %v6301, 0
    %v6312 = vsel %vm2198, %v6306, 0
    %v6315 = vsel %vm2198, %v6307, 0
    %6317 = vmatpush.bf16.xpose.msra.mxu0 0
    %6318 = vmatpush.bf16.xpose.msra.mxu0 0
    %6319 = vmatpush.bf16.xpose.msra.mxu0 0
    %6320 = vmatpush.bf16.xpose.msra.mxu0 0
    %6321 = vmatpush.bf16.xpose.msra.mxu0 0
    %6322 = vmatpush.bf16.xpose.msra.mxu0 0
    %6323 = vmatpush.bf16.xpose.msra.mxu0 %v6315
    %6324 = vmatpush.bf16.xpose.msra.mxu0 %v6312
    %6325 = vmatmul.bf16.gmra.mxu0 %v6309
    %v6326 = vpop.f32.mrf.mxu0
    %v6327 = vadd.f32 %v328, %v6326
    %v6328 = vpop.f32.mrf.mxu0
    %v6329 = vadd.f32 %v329, %v6328
    %6330 = vdwg.mxu0
    %v6331 = vunpack.c.l.b16 %v4275
    %v6332 = vunpack.c.l.b16 %v4287
    %v6333 = vpack.c.b16 %v6332, %v6331
    %v6334 = vunpack.c.l.b16 %v5203
    %v6335 = vunpack.c.l.b16 %v5215
    %v6336 = vunpack.c.l.b16 %v5227
    %v6337 = vunpack.c.l.b16 %v5239
    %v6338 = vpack.c.b16 %v6335, %v6334
    %v6339 = vpack.c.b16 %v6337, %v6336
    %v6341 = vsel %vm2198, %v6333, 0
    %v6344 = vsel %vm2198, %v6338, 0
    %v6347 = vsel %vm2198, %v6339, 0
    %6349 = vmatpush.bf16.xpose.msra.mxu0 0
    %6350 = vmatpush.bf16.xpose.msra.mxu0 0
    %6351 = vmatpush.bf16.xpose.msra.mxu0 0
    %6352 = vmatpush.bf16.xpose.msra.mxu0 0
    %6353 = vmatpush.bf16.xpose.msra.mxu0 0
    %6354 = vmatpush.bf16.xpose.msra.mxu0 0
    %6355 = vmatpush.bf16.xpose.msra.mxu0 %v6347
    %6356 = vmatpush.bf16.xpose.msra.mxu0 %v6344
    %6357 = vmatmul.bf16.gmra.mxu0 %v6341
    %v6358 = vpop.f32.mrf.mxu0
    %v6359 = vadd.f32 %v328, %v6358
    %v6360 = vpop.f32.mrf.mxu0
    %v6361 = vadd.f32 %v329, %v6360
    %6362 = vdwg.mxu0
    %v6363 = vunpack.c.l.b16 %v4278
    %v6364 = vunpack.c.l.b16 %v4290
    %v6365 = vpack.c.b16 %v6364, %v6363
    %v6366 = vunpack.c.l.b16 %v5206
    %v6367 = vunpack.c.l.b16 %v5218
    %v6368 = vunpack.c.l.b16 %v5230
    %v6369 = vunpack.c.l.b16 %v5242
    %v6370 = vpack.c.b16 %v6367, %v6366
    %v6371 = vpack.c.b16 %v6369, %v6368
    %v6373 = vsel %vm2198, %v6365, 0
    %v6376 = vsel %vm2198, %v6370, 0
    %v6379 = vsel %vm2198, %v6371, 0
    %6381 = vmatpush.bf16.xpose.msra.mxu0 0
    %6382 = vmatpush.bf16.xpose.msra.mxu0 0
    %6383 = vmatpush.bf16.xpose.msra.mxu0 0
    %6384 = vmatpush.bf16.xpose.msra.mxu0 0
    %6385 = vmatpush.bf16.xpose.msra.mxu0 0
    %6386 = vmatpush.bf16.xpose.msra.mxu0 0
    %6387 = vmatpush.bf16.xpose.msra.mxu0 %v6379
    %6388 = vmatpush.bf16.xpose.msra.mxu0 %v6376
    %6389 = vmatmul.bf16.gmra.mxu0 %v6373
    %v6390 = vpop.f32.mrf.mxu0
    %v6391 = vadd.f32 %v328, %v6390
    %v6392 = vpop.f32.mrf.mxu0
    %v6393 = vadd.f32 %v329, %v6392
    %6394 = vdwg.mxu0
    %v6395 = vunpack.c.l.b16 %v4293
    %v6396 = vunpack.c.l.b16 %v4305
    %v6397 = vpack.c.b16 %v6396, %v6395
    %v6398 = vunpack.c.l.b16 %v5245
    %v6399 = vunpack.c.l.b16 %v5257
    %v6400 = vunpack.c.l.b16 %v5269
    %v6401 = vunpack.c.l.b16 %v5281
    %v6402 = vpack.c.b16 %v6399, %v6398
    %v6403 = vpack.c.b16 %v6401, %v6400
    %v6405 = vsel %vm2198, %v6397, 0
    %v6408 = vsel %vm2198, %v6402, 0
    %v6411 = vsel %vm2198, %v6403, 0
    %6413 = vmatpush.bf16.xpose.msra.mxu0 0
    %6414 = vmatpush.bf16.xpose.msra.mxu0 0
    %6415 = vmatpush.bf16.xpose.msra.mxu0 0
    %6416 = vmatpush.bf16.xpose.msra.mxu0 0
    %6417 = vmatpush.bf16.xpose.msra.mxu0 0
    %6418 = vmatpush.bf16.xpose.msra.mxu0 0
    %6419 = vmatpush.bf16.xpose.msra.mxu0 %v6411
    %6420 = vmatpush.bf16.xpose.msra.mxu0 %v6408
    %6421 = vmatmul.bf16.gmra.mxu0 %v6405
    %v6422 = vpop.f32.mrf.mxu0
    %v6423 = vadd.f32 %v328, %v6422
    %v6424 = vpop.f32.mrf.mxu0
    %v6425 = vadd.f32 %v329, %v6424
    %6426 = vdwg.mxu0
    %v6427 = vunpack.c.l.b16 %v4296
    %v6428 = vunpack.c.l.b16 %v4308
    %v6429 = vpack.c.b16 %v6428, %v6427
    %v6430 = vunpack.c.l.b16 %v5248
    %v6431 = vunpack.c.l.b16 %v5260
    %v6432 = vunpack.c.l.b16 %v5272
    %v6433 = vunpack.c.l.b16 %v5284
    %v6434 = vpack.c.b16 %v6431, %v6430
    %v6435 = vpack.c.b16 %v6433, %v6432
    %v6437 = vsel %vm2198, %v6429, 0
    %v6440 = vsel %vm2198, %v6434, 0
    %v6443 = vsel %vm2198, %v6435, 0
    %6445 = vmatpush.bf16.xpose.msra.mxu0 0
    %6446 = vmatpush.bf16.xpose.msra.mxu0 0
    %6447 = vmatpush.bf16.xpose.msra.mxu0 0
    %6448 = vmatpush.bf16.xpose.msra.mxu0 0
    %6449 = vmatpush.bf16.xpose.msra.mxu0 0
    %6450 = vmatpush.bf16.xpose.msra.mxu0 0
    %6451 = vmatpush.bf16.xpose.msra.mxu0 %v6443
    %6452 = vmatpush.bf16.xpose.msra.mxu0 %v6440
    %6453 = vmatmul.bf16.gmra.mxu0 %v6437
    %v6454 = vpop.f32.mrf.mxu0
    %v6455 = vadd.f32 %v328, %v6454
    %v6456 = vpop.f32.mrf.mxu0
    %v6457 = vadd.f32 %v329, %v6456
    %6458 = vdwg.mxu0
    %v6459 = vunpack.c.l.b16 %v4299
    %v6460 = vunpack.c.l.b16 %v4311
    %v6461 = vpack.c.b16 %v6460, %v6459
    %v6462 = vunpack.c.l.b16 %v5251
    %v6463 = vunpack.c.l.b16 %v5263
    %v6464 = vunpack.c.l.b16 %v5275
    %v6465 = vunpack.c.l.b16 %v5287
    %v6466 = vpack.c.b16 %v6463, %v6462
    %v6467 = vpack.c.b16 %v6465, %v6464
    %v6469 = vsel %vm2198, %v6461, 0
    %v6472 = vsel %vm2198, %v6466, 0
    %v6475 = vsel %vm2198, %v6467, 0
    %6477 = vmatpush.bf16.xpose.msra.mxu0 0
    %6478 = vmatpush.bf16.xpose.msra.mxu0 0
    %6479 = vmatpush.bf16.xpose.msra.mxu0 0
    %6480 = vmatpush.bf16.xpose.msra.mxu0 0
    %6481 = vmatpush.bf16.xpose.msra.mxu0 0
    %6482 = vmatpush.bf16.xpose.msra.mxu0 0
    %6483 = vmatpush.bf16.xpose.msra.mxu0 %v6475
    %6484 = vmatpush.bf16.xpose.msra.mxu0 %v6472
    %6485 = vmatmul.bf16.gmra.mxu0 %v6469
    %v6486 = vpop.f32.mrf.mxu0
    %v6487 = vadd.f32 %v328, %v6486
    %v6488 = vpop.f32.mrf.mxu0
    %v6489 = vadd.f32 %v329, %v6488
    %6490 = vdwg.mxu0
    %v6491 = vunpack.c.l.b16 %v4302
    %v6492 = vunpack.c.l.b16 %v4314
    %v6493 = vpack.c.b16 %v6492, %v6491
    %v6494 = vunpack.c.l.b16 %v5254
    %v6495 = vunpack.c.l.b16 %v5266
    %v6496 = vunpack.c.l.b16 %v5278
    %v6497 = vunpack.c.l.b16 %v5290
    %v6498 = vpack.c.b16 %v6495, %v6494
    %v6499 = vpack.c.b16 %v6497, %v6496
    %v6501 = vsel %vm2198, %v6493, 0
    %v6504 = vsel %vm2198, %v6498, 0
    %v6507 = vsel %vm2198, %v6499, 0
    %6509 = vmatpush.bf16.xpose.msra.mxu0 0
    %6510 = vmatpush.bf16.xpose.msra.mxu0 0
    %6511 = vmatpush.bf16.xpose.msra.mxu0 0
    %6512 = vmatpush.bf16.xpose.msra.mxu0 0
    %6513 = vmatpush.bf16.xpose.msra.mxu0 0
    %6514 = vmatpush.bf16.xpose.msra.mxu0 0
    %6515 = vmatpush.bf16.xpose.msra.mxu0 %v6507
    %6516 = vmatpush.bf16.xpose.msra.mxu0 %v6504
    %6517 = vmatmul.bf16.gmra.mxu0 %v6501
    %v6518 = vpop.f32.mrf.mxu0
    %v6519 = vadd.f32 %v328, %v6518
    %v6520 = vpop.f32.mrf.mxu0
    %v6521 = vadd.f32 %v329, %v6520
    %6522 = vdwg.mxu0
    %v6523 = vsel %vm2198, %v6295, -inf
    %6524 = vmax.xlane.f32.xlu0 %v6523
    %v6525 = vpop.xlane.xlu0 %6524
    %v6526 = vsel %vm2198, %v6297, -inf
    %6527 = vmax.xlane.f32.xlu0 %v6526
    %v6528 = vpop.xlane.xlu0 %6527
    %v6529 = vsel %vm2198, %v6327, -inf
    %6530 = vmax.xlane.f32.xlu0 %v6529
    %v6531 = vpop.xlane.xlu0 %6530
    %v6532 = vsel %vm2198, %v6329, -inf
    %6533 = vmax.xlane.f32.xlu0 %v6532
    %v6534 = vpop.xlane.xlu0 %6533
    %v6535 = vsel %vm2198, %v6359, -inf
    %6536 = vmax.xlane.f32.xlu0 %v6535
    %v6537 = vpop.xlane.xlu0 %6536
    %v6538 = vsel %vm2198, %v6361, -inf
    %6539 = vmax.xlane.f32.xlu0 %v6538
    %v6540 = vpop.xlane.xlu0 %6539
    %v6541 = vsel %vm2198, %v6391, -inf
    %6542 = vmax.xlane.f32.xlu0 %v6541
    %v6543 = vpop.xlane.xlu0 %6542
    %v6544 = vsel %vm2198, %v6393, -inf
    %6545 = vmax.xlane.f32.xlu0 %v6544
    %v6546 = vpop.xlane.xlu0 %6545
    %v6547 = vsel %vm2198, %v6423, -inf
    %6548 = vmax.xlane.f32.xlu0 %v6547
    %v6549 = vpop.xlane.xlu0 %6548
    %v6550 = vsel %vm2198, %v6425, -inf
    %6551 = vmax.xlane.f32.xlu0 %v6550
    %v6552 = vpop.xlane.xlu0 %6551
    %v6553 = vsel %vm2198, %v6455, -inf
    %6554 = vmax.xlane.f32.xlu0 %v6553
    %v6555 = vpop.xlane.xlu0 %6554
    %v6556 = vsel %vm2198, %v6457, -inf
    %6557 = vmax.xlane.f32.xlu0 %v6556
    %v6558 = vpop.xlane.xlu0 %6557
    %v6559 = vsel %vm2198, %v6487, -inf
    %6560 = vmax.xlane.f32.xlu0 %v6559
    %v6561 = vpop.xlane.xlu0 %6560
    %v6562 = vsel %vm2198, %v6489, -inf
    %6563 = vmax.xlane.f32.xlu0 %v6562
    %v6564 = vpop.xlane.xlu0 %6563
    %v6565 = vsel %vm2198, %v6519, -inf
    %6566 = vmax.xlane.f32.xlu0 %v6565
    %v6567 = vpop.xlane.xlu0 %6566
    %v6568 = vsel %vm2198, %v6521, -inf
    %6569 = vmax.xlane.f32.xlu0 %v6568
    %v6570 = vpop.xlane.xlu0 %6569
    %v6571 = vsub.f32 %v6295, %v6525
    %v6572 = vsub.f32 %v6297, %v6528
    %v6573 = vsub.f32 %v6327, %v6531
    %v6574 = vsub.f32 %v6329, %v6534
    %v6575 = vsub.f32 %v6359, %v6537
    %v6576 = vsub.f32 %v6361, %v6540
    %v6577 = vsub.f32 %v6391, %v6543
    %v6578 = vsub.f32 %v6393, %v6546
    %v6579 = vsub.f32 %v6423, %v6549
    %v6580 = vsub.f32 %v6425, %v6552
    %v6581 = vsub.f32 %v6455, %v6555
    %v6582 = vsub.f32 %v6457, %v6558
    %v6583 = vsub.f32 %v6487, %v6561
    %v6584 = vsub.f32 %v6489, %v6564
    %v6585 = vsub.f32 %v6519, %v6567
    %v6586 = vsub.f32 %v6521, %v6570
    %v6587 = vmul.f32 %v6571, 1.442695
    %v6588 = vpow.pop %v6587
    %v6589 = vmul.f32 %v6572, 1.442695
    %v6590 = vpow.pop %v6589
    %v6591 = vmul.f32 %v6573, 1.442695
    %v6592 = vpow.pop %v6591
    %v6593 = vmul.f32 %v6574, 1.442695
    %v6594 = vpow.pop %v6593
    %v6595 = vmul.f32 %v6575, 1.442695
    %v6596 = vpow.pop %v6595
    %v6597 = vmul.f32 %v6576, 1.442695
    %v6598 = vpow.pop %v6597
    %v6599 = vmul.f32 %v6577, 1.442695
    %v6600 = vpow.pop %v6599
    %v6601 = vmul.f32 %v6578, 1.442695
    %v6602 = vpow.pop %v6601
    %v6603 = vmul.f32 %v6579, 1.442695
    %v6604 = vpow.pop %v6603
    %v6605 = vmul.f32 %v6580, 1.442695
    %v6606 = vpow.pop %v6605
    %v6607 = vmul.f32 %v6581, 1.442695
    %v6608 = vpow.pop %v6607
    %v6609 = vmul.f32 %v6582, 1.442695
    %v6610 = vpow.pop %v6609
    %v6611 = vmul.f32 %v6583, 1.442695
    %v6612 = vpow.pop %v6611
    %v6613 = vmul.f32 %v6584, 1.442695
    %v6614 = vpow.pop %v6613
    %v6615 = vmul.f32 %v6585, 1.442695
    %v6616 = vpow.pop %v6615
    %v6617 = vmul.f32 %v6586, 1.442695
    %v6618 = vpow.pop %v6617
    %v6619 = vsel %vm2198, %v6588, 0.0
    %6620 = vadd.xlane.f32.xlu0 %v6619
    %v6621 = vpop.xlane.xlu0 %6620
    %v6622 = vsel %vm2198, %v6590, 0.0
    %6623 = vadd.xlane.f32.xlu0 %v6622
    %v6624 = vpop.xlane.xlu0 %6623
    %v6625 = vsel %vm2198, %v6592, 0.0
    %6626 = vadd.xlane.f32.xlu0 %v6625
    %v6627 = vpop.xlane.xlu0 %6626
    %v6628 = vsel %vm2198, %v6594, 0.0
    %6629 = vadd.xlane.f32.xlu0 %v6628
    %v6630 = vpop.xlane.xlu0 %6629
    %v6631 = vsel %vm2198, %v6596, 0.0
    %6632 = vadd.xlane.f32.xlu0 %v6631
    %v6633 = vpop.xlane.xlu0 %6632
    %v6634 = vsel %vm2198, %v6598, 0.0
    %6635 = vadd.xlane.f32.xlu0 %v6634
    %v6636 = vpop.xlane.xlu0 %6635
    %v6637 = vsel %vm2198, %v6600, 0.0
    %6638 = vadd.xlane.f32.xlu0 %v6637
    %v6639 = vpop.xlane.xlu0 %6638
    %v6640 = vsel %vm2198, %v6602, 0.0
    %6641 = vadd.xlane.f32.xlu0 %v6640
    %v6642 = vpop.xlane.xlu0 %6641
    %v6643 = vsel %vm2198, %v6604, 0.0
    %6644 = vadd.xlane.f32.xlu0 %v6643
    %v6645 = vpop.xlane.xlu0 %6644
    %v6646 = vsel %vm2198, %v6606, 0.0
    %6647 = vadd.xlane.f32.xlu0 %v6646
    %v6648 = vpop.xlane.xlu0 %6647
    %v6649 = vsel %vm2198, %v6608, 0.0
    %6650 = vadd.xlane.f32.xlu0 %v6649
    %v6651 = vpop.xlane.xlu0 %6650
    %v6652 = vsel %vm2198, %v6610, 0.0
    %6653 = vadd.xlane.f32.xlu0 %v6652
    %v6654 = vpop.xlane.xlu0 %6653
    %v6655 = vsel %vm2198, %v6612, 0.0
    %6656 = vadd.xlane.f32.xlu0 %v6655
    %v6657 = vpop.xlane.xlu0 %6656
    %v6658 = vsel %vm2198, %v6614, 0.0
    %6659 = vadd.xlane.f32.xlu0 %v6658
    %v6660 = vpop.xlane.xlu0 %6659
    %v6661 = vsel %vm2198, %v6616, 0.0
    %6662 = vadd.xlane.f32.xlu0 %v6661
    %v6663 = vpop.xlane.xlu0 %6662
    %v6664 = vsel %vm2198, %v6618, 0.0
    %6665 = vadd.xlane.f32.xlu0 %v6664
    %v6666 = vpop.xlane.xlu0 %6665
    %v6667 = vrcp.pop %v6621
    %v6668 = vrcp.pop %v6624
    %v6669 = vrcp.pop %v6627
    %v6670 = vrcp.pop %v6630
    %v6671 = vrcp.pop %v6633
    %v6672 = vrcp.pop %v6636
    %v6673 = vrcp.pop %v6639
    %v6674 = vrcp.pop %v6642
    %v6675 = vrcp.pop %v6645
    %v6676 = vrcp.pop %v6648
    %v6677 = vrcp.pop %v6651
    %v6678 = vrcp.pop %v6654
    %v6679 = vrcp.pop %v6657
    %v6680 = vrcp.pop %v6660
    %v6681 = vrcp.pop %v6663
    %v6682 = vrcp.pop %v6666
    %v6683 = vmul.f32 %v6588, %v6667
    %v6684 = vmul.f32 %v6590, %v6668
    %v6685 = vmul.f32 %v6592, %v6669
    %v6686 = vmul.f32 %v6594, %v6670
    %v6687 = vmul.f32 %v6596, %v6671
    %v6688 = vmul.f32 %v6598, %v6672
    %v6689 = vmul.f32 %v6600, %v6673
    %v6690 = vmul.f32 %v6602, %v6674
    %v6691 = vmul.f32 %v6604, %v6675
    %v6692 = vmul.f32 %v6606, %v6676
    %v6693 = vmul.f32 %v6608, %v6677
    %v6694 = vmul.f32 %v6610, %v6678
    %v6695 = vmul.f32 %v6612, %v6679
    %v6696 = vmul.f32 %v6614, %v6680
    %v6697 = vmul.f32 %v6616, %v6681
    %v6698 = vmul.f32 %v6618, %v6682
    %v6699 = vpack.c.bf16 %v6683, %v6683
    %v6700 = vpack.c.bf16 %v6684, %v6684
    %v6701 = vpack.c.bf16 %v6685, %v6685
    %v6702 = vpack.c.bf16 %v6686, %v6686
    %v6703 = vpack.c.bf16 %v6687, %v6687
    %v6704 = vpack.c.bf16 %v6688, %v6688
    %v6705 = vpack.c.bf16 %v6689, %v6689
    %v6706 = vpack.c.bf16 %v6690, %v6690
    %v6707 = vpack.c.bf16 %v6691, %v6691
    %v6708 = vpack.c.bf16 %v6692, %v6692
    %v6709 = vpack.c.bf16 %v6693, %v6693
    %v6710 = vpack.c.bf16 %v6694, %v6694
    %v6711 = vpack.c.bf16 %v6695, %v6695
    %v6712 = vpack.c.bf16 %v6696, %v6696
    %v6713 = vpack.c.bf16 %v6697, %v6697
    %v6714 = vpack.c.bf16 %v6698, %v6698
    %v6717 = vunpack.c.l.b16 %v6699
    %v6718 = vunpack.c.l.b16 %v6700
    %v6719 = vpack.c.b16 %v6718, %v6717
    %v6720 = vunpack.c.l.b16 %v6173
    %v6721 = vunpack.c.l.b16 %v6185
    %v6722 = vunpack.c.l.b16 %v6197
    %v6723 = vunpack.c.l.b16 %v6209
    %v6724 = vpack.c.b16 %v6721, %v6720
    %v6725 = vpack.c.b16 %v6723, %v6722
    %v6729 = vsel %vm2198, %v6719, 0
    %6731 = vmatpush.bf16.msra.mxu0 0
    %6732 = vmatpush.bf16.msra.mxu0 0
    %6733 = vmatpush.bf16.msra.mxu0 0
    %6734 = vmatpush.bf16.msra.mxu0 0
    %6735 = vmatpush.bf16.msra.mxu0 0
    %6736 = vmatpush.bf16.msra.mxu0 0
    %6737 = vmatpush.bf16.msra.mxu0 %v6725
    %6738 = vmatpush.bf16.msra.mxu0 %v6724
    %6739 = vmatmul.bf16.gmra.mxu0 %v6729
    %v6740 = vpop.f32.mrf.mxu0
    %v6741 = vadd.f32 0.0, %v6740
    %v6742 = vpop.f32.mrf.mxu0
    %v6743 = vadd.f32 0.0, %v6742
    %6744 = vdwg.mxu0
    %v6747 = vunpack.c.l.b16 %v6701
    %v6748 = vunpack.c.l.b16 %v6702
    %v6749 = vpack.c.b16 %v6748, %v6747
    %v6750 = vunpack.c.l.b16 %v6176
    %v6751 = vunpack.c.l.b16 %v6188
    %v6752 = vunpack.c.l.b16 %v6200
    %v6753 = vunpack.c.l.b16 %v6212
    %v6754 = vpack.c.b16 %v6751, %v6750
    %v6755 = vpack.c.b16 %v6753, %v6752
    %v6759 = vsel %vm2198, %v6749, 0
    %6761 = vmatpush.bf16.msra.mxu0 0
    %6762 = vmatpush.bf16.msra.mxu0 0
    %6763 = vmatpush.bf16.msra.mxu0 0
    %6764 = vmatpush.bf16.msra.mxu0 0
    %6765 = vmatpush.bf16.msra.mxu0 0
    %6766 = vmatpush.bf16.msra.mxu0 0
    %6767 = vmatpush.bf16.msra.mxu0 %v6755
    %6768 = vmatpush.bf16.msra.mxu0 %v6754
    %6769 = vmatmul.bf16.gmra.mxu0 %v6759
    %v6770 = vpop.f32.mrf.mxu0
    %v6771 = vadd.f32 0.0, %v6770
    %v6772 = vpop.f32.mrf.mxu0
    %v6773 = vadd.f32 0.0, %v6772
    %6774 = vdwg.mxu0
    %v6777 = vunpack.c.l.b16 %v6703
    %v6778 = vunpack.c.l.b16 %v6704
    %v6779 = vpack.c.b16 %v6778, %v6777
    %v6780 = vunpack.c.l.b16 %v6179
    %v6781 = vunpack.c.l.b16 %v6191
    %v6782 = vunpack.c.l.b16 %v6203
    %v6783 = vunpack.c.l.b16 %v6215
    %v6784 = vpack.c.b16 %v6781, %v6780
    %v6785 = vpack.c.b16 %v6783, %v6782
    %v6789 = vsel %vm2198, %v6779, 0
    %6791 = vmatpush.bf16.msra.mxu0 0
    %6792 = vmatpush.bf16.msra.mxu0 0
    %6793 = vmatpush.bf16.msra.mxu0 0
    %6794 = vmatpush.bf16.msra.mxu0 0
    %6795 = vmatpush.bf16.msra.mxu0 0
    %6796 = vmatpush.bf16.msra.mxu0 0
    %6797 = vmatpush.bf16.msra.mxu0 %v6785
    %6798 = vmatpush.bf16.msra.mxu0 %v6784
    %6799 = vmatmul.bf16.gmra.mxu0 %v6789
    %v6800 = vpop.f32.mrf.mxu0
    %v6801 = vadd.f32 0.0, %v6800
    %v6802 = vpop.f32.mrf.mxu0
    %v6803 = vadd.f32 0.0, %v6802
    %6804 = vdwg.mxu0
    %v6807 = vunpack.c.l.b16 %v6705
    %v6808 = vunpack.c.l.b16 %v6706
    %v6809 = vpack.c.b16 %v6808, %v6807
    %v6810 = vunpack.c.l.b16 %v6182
    %v6811 = vunpack.c.l.b16 %v6194
    %v6812 = vunpack.c.l.b16 %v6206
    %v6813 = vunpack.c.l.b16 %v6218
    %v6814 = vpack.c.b16 %v6811, %v6810
    %v6815 = vpack.c.b16 %v6813, %v6812
    %v6819 = vsel %vm2198, %v6809, 0
    %6821 = vmatpush.bf16.msra.mxu0 0
    %6822 = vmatpush.bf16.msra.mxu0 0
    %6823 = vmatpush.bf16.msra.mxu0 0
    %6824 = vmatpush.bf16.msra.mxu0 0
    %6825 = vmatpush.bf16.msra.mxu0 0
    %6826 = vmatpush.bf16.msra.mxu0 0
    %6827 = vmatpush.bf16.msra.mxu0 %v6815
    %6828 = vmatpush.bf16.msra.mxu0 %v6814
    %6829 = vmatmul.bf16.gmra.mxu0 %v6819
    %v6830 = vpop.f32.mrf.mxu0
    %v6831 = vadd.f32 0.0, %v6830
    %v6832 = vpop.f32.mrf.mxu0
    %v6833 = vadd.f32 0.0, %v6832
    %6834 = vdwg.mxu0
    %v6837 = vunpack.c.l.b16 %v6707
    %v6838 = vunpack.c.l.b16 %v6708
    %v6839 = vpack.c.b16 %v6838, %v6837
    %v6840 = vunpack.c.l.b16 %v6221
    %v6841 = vunpack.c.l.b16 %v6233
    %v6842 = vunpack.c.l.b16 %v6245
    %v6843 = vunpack.c.l.b16 %v6257
    %v6844 = vpack.c.b16 %v6841, %v6840
    %v6845 = vpack.c.b16 %v6843, %v6842
    %v6849 = vsel %vm2198, %v6839, 0
    %6851 = vmatpush.bf16.msra.mxu0 0
    %6852 = vmatpush.bf16.msra.mxu0 0
    %6853 = vmatpush.bf16.msra.mxu0 0
    %6854 = vmatpush.bf16.msra.mxu0 0
    %6855 = vmatpush.bf16.msra.mxu0 0
    %6856 = vmatpush.bf16.msra.mxu0 0
    %6857 = vmatpush.bf16.msra.mxu0 %v6845
    %6858 = vmatpush.bf16.msra.mxu0 %v6844
    %6859 = vmatmul.bf16.gmra.mxu0 %v6849
    %v6860 = vpop.f32.mrf.mxu0
    %v6861 = vadd.f32 0.0, %v6860
    %v6862 = vpop.f32.mrf.mxu0
    %v6863 = vadd.f32 0.0, %v6862
    %6864 = vdwg.mxu0
    %v6867 = vunpack.c.l.b16 %v6709
    %v6868 = vunpack.c.l.b16 %v6710
    %v6869 = vpack.c.b16 %v6868, %v6867
    %v6870 = vunpack.c.l.b16 %v6224
    %v6871 = vunpack.c.l.b16 %v6236
    %v6872 = vunpack.c.l.b16 %v6248
    %v6873 = vunpack.c.l.b16 %v6260
    %v6874 = vpack.c.b16 %v6871, %v6870
    %v6875 = vpack.c.b16 %v6873, %v6872
    %v6879 = vsel %vm2198, %v6869, 0
    %6881 = vmatpush.bf16.msra.mxu0 0
    %6882 = vmatpush.bf16.msra.mxu0 0
    %6883 = vmatpush.bf16.msra.mxu0 0
    %6884 = vmatpush.bf16.msra.mxu0 0
    %6885 = vmatpush.bf16.msra.mxu0 0
    %6886 = vmatpush.bf16.msra.mxu0 0
    %6887 = vmatpush.bf16.msra.mxu0 %v6875
    %6888 = vmatpush.bf16.msra.mxu0 %v6874
    %6889 = vmatmul.bf16.gmra.mxu0 %v6879
    %v6890 = vpop.f32.mrf.mxu0
    %v6891 = vadd.f32 0.0, %v6890
    %v6892 = vpop.f32.mrf.mxu0
    %v6893 = vadd.f32 0.0, %v6892
    %6894 = vdwg.mxu0
    %v6897 = vunpack.c.l.b16 %v6711
    %v6898 = vunpack.c.l.b16 %v6712
    %v6899 = vpack.c.b16 %v6898, %v6897
    %v6900 = vunpack.c.l.b16 %v6227
    %v6901 = vunpack.c.l.b16 %v6239
    %v6902 = vunpack.c.l.b16 %v6251
    %v6903 = vunpack.c.l.b16 %v6263
    %v6904 = vpack.c.b16 %v6901, %v6900
    %v6905 = vpack.c.b16 %v6903, %v6902
    %v6909 = vsel %vm2198, %v6899, 0
    %6911 = vmatpush.bf16.msra.mxu0 0
    %6912 = vmatpush.bf16.msra.mxu0 0
    %6913 = vmatpush.bf16.msra.mxu0 0
    %6914 = vmatpush.bf16.msra.mxu0 0
    %6915 = vmatpush.bf16.msra.mxu0 0
    %6916 = vmatpush.bf16.msra.mxu0 0
    %6917 = vmatpush.bf16.msra.mxu0 %v6905
    %6918 = vmatpush.bf16.msra.mxu0 %v6904
    %6919 = vmatmul.bf16.gmra.mxu0 %v6909
    %v6920 = vpop.f32.mrf.mxu0
    %v6921 = vadd.f32 0.0, %v6920
    %v6922 = vpop.f32.mrf.mxu0
    %v6923 = vadd.f32 0.0, %v6922
    %6924 = vdwg.mxu0
    %v6927 = vunpack.c.l.b16 %v6713
    %v6928 = vunpack.c.l.b16 %v6714
    %v6929 = vpack.c.b16 %v6928, %v6927
    %v6930 = vunpack.c.l.b16 %v6230
    %v6931 = vunpack.c.l.b16 %v6242
    %v6932 = vunpack.c.l.b16 %v6254
    %v6933 = vunpack.c.l.b16 %v6266
    %v6934 = vpack.c.b16 %v6931, %v6930
    %v6935 = vpack.c.b16 %v6933, %v6932
    %v6939 = vsel %vm2198, %v6929, 0
    %6941 = vmatpush.bf16.msra.mxu0 0
    %6942 = vmatpush.bf16.msra.mxu0 0
    %6943 = vmatpush.bf16.msra.mxu0 0
    %6944 = vmatpush.bf16.msra.mxu0 0
    %6945 = vmatpush.bf16.msra.mxu0 0
    %6946 = vmatpush.bf16.msra.mxu0 0
    %6947 = vmatpush.bf16.msra.mxu0 %v6935
    %6948 = vmatpush.bf16.msra.mxu0 %v6934
    %6949 = vmatmul.bf16.gmra.mxu0 %v6939
    %v6950 = vpop.f32.mrf.mxu0
    %v6951 = vadd.f32 0.0, %v6950
    %v6952 = vpop.f32.mrf.mxu0
    %v6953 = vadd.f32 0.0, %v6952
    %6954 = vdwg.mxu0
    %v6955 = vrot.slane %v6801, 4
    %v6956 = vsel %vm2803, %v6955, %v6741
    %v6957 = vrot.slane %v6741, 4
    %v6958 = vsel %vm2803, %v6801, %v6957
    %v6960 = vunpack.c.l.s4 1983009808
    %v6961 = vunpack.c.0.s8 %v6960
    %v6962 = vperm.slane %v6956, %v6961
    %v6964 = vunpack.c.l.s4 1983009808
    %v6965 = vunpack.c.0.s8 %v6964
    %v6966 = vperm.slane %v6958, %v6965
    %v6967 = vrot.slane %v6831, 4
    %v6968 = vsel %vm2803, %v6967, %v6771
    %v6969 = vrot.slane %v6771, 4
    %v6970 = vsel %vm2803, %v6831, %v6969
    %v6972 = vunpack.c.l.s4 1983009808
    %v6973 = vunpack.c.0.s8 %v6972
    %v6974 = vperm.slane %v6968, %v6973
    %v6976 = vunpack.c.l.s4 1983009808
    %v6977 = vunpack.c.0.s8 %v6976
    %v6978 = vperm.slane %v6970, %v6977
    %v6979 = vrot.slane %v6974, 4
    %v6980 = vsel %vm2803, %v6979, %v6962
    %v6981 = vrot.slane %v6962, 4
    %v6982 = vsel %vm2803, %v6974, %v6981
    %v6984 = vunpack.c.l.s4 1934713408
    %v6985 = vunpack.c.0.s8 %v6984
    %v6986 = vperm.slane %v6980, %v6985
    %v6988 = vunpack.c.l.s4 1934713408
    %v6989 = vunpack.c.0.s8 %v6988
    %v6990 = vperm.slane %v6982, %v6989
    %v6991 = vrot.slane %v6978, 4
    %v6992 = vsel %vm2803, %v6991, %v6966
    %v6993 = vrot.slane %v6966, 4
    %v6994 = vsel %vm2803, %v6978, %v6993
    %v6996 = vunpack.c.l.s4 1934713408
    %v6997 = vunpack.c.0.s8 %v6996
    %v6998 = vperm.slane %v6992, %v6997
    %v7000 = vunpack.c.l.s4 1934713408
    %v7001 = vunpack.c.0.s8 %v7000
    %v7002 = vperm.slane %v6994, %v7001
    %v7003 = vrot.slane %v6986, 4
    %v7004 = vsel %vm2803, 0.0, %v7003
    %v7005 = vrot.slane %v6990, 4
    %v7006 = vsel %vm2803, 0.0, %v7005
    %v7007 = vrot.slane %v6998, 4
    %v7008 = vsel %vm2803, 0.0, %v7007
    %v7009 = vrot.slane %v7002, 4
    %v7010 = vsel %vm2803, 0.0, %v7009
    %v7011 = vrot.slane %v6803, 4
    %v7012 = vsel %vm2803, %v7011, %v6743
    %v7013 = vrot.slane %v6743, 4
    %v7014 = vsel %vm2803, %v6803, %v7013
    %v7016 = vunpack.c.l.s4 1983009808
    %v7017 = vunpack.c.0.s8 %v7016
    %v7018 = vperm.slane %v7012, %v7017
    %v7020 = vunpack.c.l.s4 1983009808
    %v7021 = vunpack.c.0.s8 %v7020
    %v7022 = vperm.slane %v7014, %v7021
    %v7023 = vrot.slane %v6833, 4
    %v7024 = vsel %vm2803, %v7023, %v6773
    %v7025 = vrot.slane %v6773, 4
    %v7026 = vsel %vm2803, %v6833, %v7025
    %v7028 = vunpack.c.l.s4 1983009808
    %v7029 = vunpack.c.0.s8 %v7028
    %v7030 = vperm.slane %v7024, %v7029
    %v7032 = vunpack.c.l.s4 1983009808
    %v7033 = vunpack.c.0.s8 %v7032
    %v7034 = vperm.slane %v7026, %v7033
    %v7035 = vrot.slane %v7030, 4
    %v7036 = vsel %vm2803, %v7035, %v7018
    %v7037 = vrot.slane %v7018, 4
    %v7038 = vsel %vm2803, %v7030, %v7037
    %v7040 = vunpack.c.l.s4 1934713408
    %v7041 = vunpack.c.0.s8 %v7040
    %v7042 = vperm.slane %v7036, %v7041
    %v7044 = vunpack.c.l.s4 1934713408
    %v7045 = vunpack.c.0.s8 %v7044
    %v7046 = vperm.slane %v7038, %v7045
    %v7047 = vrot.slane %v7034, 4
    %v7048 = vsel %vm2803, %v7047, %v7022
    %v7049 = vrot.slane %v7022, 4
    %v7050 = vsel %vm2803, %v7034, %v7049
    %v7052 = vunpack.c.l.s4 1934713408
    %v7053 = vunpack.c.0.s8 %v7052
    %v7054 = vperm.slane %v7048, %v7053
    %v7056 = vunpack.c.l.s4 1934713408
    %v7057 = vunpack.c.0.s8 %v7056
    %v7058 = vperm.slane %v7050, %v7057
    %v7059 = vrot.slane %v7042, 4
    %v7060 = vsel %vm2803, 0.0, %v7059
    %v7061 = vrot.slane %v7046, 4
    %v7062 = vsel %vm2803, 0.0, %v7061
    %v7063 = vrot.slane %v7054, 4
    %v7064 = vsel %vm2803, 0.0, %v7063
    %v7065 = vrot.slane %v7058, 4
    %v7066 = vsel %vm2803, 0.0, %v7065
    %v7067 = vrot.slane %v6921, 4
    %v7068 = vsel %vm2803, %v7067, %v6861
    %v7069 = vrot.slane %v6861, 4
    %v7070 = vsel %vm2803, %v6921, %v7069
    %v7072 = vunpack.c.l.s4 1983009808
    %v7073 = vunpack.c.0.s8 %v7072
    %v7074 = vperm.slane %v7068, %v7073
    %v7076 = vunpack.c.l.s4 1983009808
    %v7077 = vunpack.c.0.s8 %v7076
    %v7078 = vperm.slane %v7070, %v7077
    %v7079 = vrot.slane %v6951, 4
    %v7080 = vsel %vm2803, %v7079, %v6891
    %v7081 = vrot.slane %v6891, 4
    %v7082 = vsel %vm2803, %v6951, %v7081
    %v7084 = vunpack.c.l.s4 1983009808
    %v7085 = vunpack.c.0.s8 %v7084
    %v7086 = vperm.slane %v7080, %v7085
    %v7088 = vunpack.c.l.s4 1983009808
    %v7089 = vunpack.c.0.s8 %v7088
    %v7090 = vperm.slane %v7082, %v7089
    %v7091 = vrot.slane %v7086, 4
    %v7092 = vsel %vm2803, %v7091, %v7074
    %v7093 = vrot.slane %v7074, 4
    %v7094 = vsel %vm2803, %v7086, %v7093
    %v7096 = vunpack.c.l.s4 1934713408
    %v7097 = vunpack.c.0.s8 %v7096
    %v7098 = vperm.slane %v7092, %v7097
    %v7100 = vunpack.c.l.s4 1934713408
    %v7101 = vunpack.c.0.s8 %v7100
    %v7102 = vperm.slane %v7094, %v7101
    %v7103 = vrot.slane %v7090, 4
    %v7104 = vsel %vm2803, %v7103, %v7078
    %v7105 = vrot.slane %v7078, 4
    %v7106 = vsel %vm2803, %v7090, %v7105
    %v7108 = vunpack.c.l.s4 1934713408
    %v7109 = vunpack.c.0.s8 %v7108
    %v7110 = vperm.slane %v7104, %v7109
    %v7112 = vunpack.c.l.s4 1934713408
    %v7113 = vunpack.c.0.s8 %v7112
    %v7114 = vperm.slane %v7106, %v7113
    %v7115 = vrot.slane %v7098, 4
    %v7116 = vsel %vm2803, 0.0, %v7115
    %v7117 = vrot.slane %v7102, 4
    %v7118 = vsel %vm2803, 0.0, %v7117
    %v7119 = vrot.slane %v7110, 4
    %v7120 = vsel %vm2803, 0.0, %v7119
    %v7121 = vrot.slane %v7114, 4
    %v7122 = vsel %vm2803, 0.0, %v7121
    %v7123 = vrot.slane %v6923, 4
    %v7124 = vsel %vm2803, %v7123, %v6863
    %v7125 = vrot.slane %v6863, 4
    %v7126 = vsel %vm2803, %v6923, %v7125
    %v7128 = vunpack.c.l.s4 1983009808
    %v7129 = vunpack.c.0.s8 %v7128
    %v7130 = vperm.slane %v7124, %v7129
    %v7132 = vunpack.c.l.s4 1983009808
    %v7133 = vunpack.c.0.s8 %v7132
    %v7134 = vperm.slane %v7126, %v7133
    %v7135 = vrot.slane %v6953, 4
    %v7136 = vsel %vm2803, %v7135, %v6893
    %v7137 = vrot.slane %v6893, 4
    %v7138 = vsel %vm2803, %v6953, %v7137
    %v7140 = vunpack.c.l.s4 1983009808
    %v7141 = vunpack.c.0.s8 %v7140
    %v7142 = vperm.slane %v7136, %v7141
    %v7144 = vunpack.c.l.s4 1983009808
    %v7145 = vunpack.c.0.s8 %v7144
    %v7146 = vperm.slane %v7138, %v7145
    %v7147 = vrot.slane %v7142, 4
    %v7148 = vsel %vm2803, %v7147, %v7130
    %v7149 = vrot.slane %v7130, 4
    %v7150 = vsel %vm2803, %v7142, %v7149
    %v7152 = vunpack.c.l.s4 1934713408
    %v7153 = vunpack.c.0.s8 %v7152
    %v7154 = vperm.slane %v7148, %v7153
    %v7156 = vunpack.c.l.s4 1934713408
    %v7157 = vunpack.c.0.s8 %v7156
    %v7158 = vperm.slane %v7150, %v7157
    %v7159 = vrot.slane %v7146, 4
    %v7160 = vsel %vm2803, %v7159, %v7134
    %v7161 = vrot.slane %v7134, 4
    %v7162 = vsel %vm2803, %v7146, %v7161
    %v7164 = vunpack.c.l.s4 1934713408
    %v7165 = vunpack.c.0.s8 %v7164
    %v7166 = vperm.slane %v7160, %v7165
    %v7168 = vunpack.c.l.s4 1934713408
    %v7169 = vunpack.c.0.s8 %v7168
    %v7170 = vperm.slane %v7162, %v7169
    %v7171 = vrot.slane %v7154, 4
    %v7172 = vsel %vm2803, 0.0, %v7171
    %v7173 = vrot.slane %v7158, 4
    %v7174 = vsel %vm2803, 0.0, %v7173
    %v7175 = vrot.slane %v7166, 4
    %v7176 = vsel %vm2803, 0.0, %v7175
    %v7177 = vrot.slane %v7170, 4
    %v7178 = vsel %vm2803, 0.0, %v7177
    %v7179 = vsel %vm2803, %v7005, %v6986
    %v7181 = vunpack.c.l.s4 1983009808
    %v7182 = vunpack.c.0.s8 %v7181
    %v7183 = vperm.slane %v7179, %v7182
    %v7184 = vrot.slane %v7006, 4
    %v7185 = vsel %vm2803, %v7184, %v7004
    %v7187 = vunpack.c.l.s4 1983009808
    %v7188 = vunpack.c.0.s8 %v7187
    %v7189 = vperm.slane %v7185, %v7188
    %v7190 = vsel %vm2803, %v7009, %v6998
    %v7192 = vunpack.c.l.s4 1983009808
    %v7193 = vunpack.c.0.s8 %v7192
    %v7194 = vperm.slane %v7190, %v7193
    %v7195 = vrot.slane %v7010, 4
    %v7196 = vsel %vm2803, %v7195, %v7008
    %v7198 = vunpack.c.l.s4 1983009808
    %v7199 = vunpack.c.0.s8 %v7198
    %v7200 = vperm.slane %v7196, %v7199
    %v7201 = vrot.slane %v7189, 4
    %v7202 = vsel %vm2803, %v7201, %v7183
    %v7203 = vrot.slane %v7183, 4
    %v7204 = vsel %vm2803, %v7189, %v7203
    %v7206 = vunpack.c.l.s4 1934713408
    %v7207 = vunpack.c.0.s8 %v7206
    %v7208 = vperm.slane %v7202, %v7207
    %v7210 = vunpack.c.l.s4 1934713408
    %v7211 = vunpack.c.0.s8 %v7210
    %v7212 = vperm.slane %v7204, %v7211
    %v7213 = vrot.slane %v7200, 4
    %v7214 = vsel %vm2803, %v7213, %v7194
    %v7215 = vrot.slane %v7194, 4
    %v7216 = vsel %vm2803, %v7200, %v7215
    %v7218 = vunpack.c.l.s4 1934713408
    %v7219 = vunpack.c.0.s8 %v7218
    %v7220 = vperm.slane %v7214, %v7219
    %v7222 = vunpack.c.l.s4 1934713408
    %v7223 = vunpack.c.0.s8 %v7222
    %v7224 = vperm.slane %v7216, %v7223
    %v7225 = vrot.slane %v7220, 4
    %v7226 = vsel %vm2803, %v7225, %v7208
    %v7227 = vrot.slane %v7208, 4
    %v7228 = vsel %vm2803, %v7220, %v7227
    %v7229 = vrot.slane %v7224, 4
    %v7230 = vsel %vm2803, %v7229, %v7212
    %v7231 = vrot.slane %v7212, 4
    %v7232 = vsel %vm2803, %v7224, %v7231
    %v7233 = vsel %vm2803, %v7061, %v7042
    %v7235 = vunpack.c.l.s4 1983009808
    %v7236 = vunpack.c.0.s8 %v7235
    %v7237 = vperm.slane %v7233, %v7236
    %v7238 = vrot.slane %v7062, 4
    %v7239 = vsel %vm2803, %v7238, %v7060
    %v7241 = vunpack.c.l.s4 1983009808
    %v7242 = vunpack.c.0.s8 %v7241
    %v7243 = vperm.slane %v7239, %v7242
    %v7244 = vsel %vm2803, %v7065, %v7054
    %v7246 = vunpack.c.l.s4 1983009808
    %v7247 = vunpack.c.0.s8 %v7246
    %v7248 = vperm.slane %v7244, %v7247
    %v7249 = vrot.slane %v7066, 4
    %v7250 = vsel %vm2803, %v7249, %v7064
    %v7252 = vunpack.c.l.s4 1983009808
    %v7253 = vunpack.c.0.s8 %v7252
    %v7254 = vperm.slane %v7250, %v7253
    %v7255 = vrot.slane %v7243, 4
    %v7256 = vsel %vm2803, %v7255, %v7237
    %v7257 = vrot.slane %v7237, 4
    %v7258 = vsel %vm2803, %v7243, %v7257
    %v7260 = vunpack.c.l.s4 1934713408
    %v7261 = vunpack.c.0.s8 %v7260
    %v7262 = vperm.slane %v7256, %v7261
    %v7264 = vunpack.c.l.s4 1934713408
    %v7265 = vunpack.c.0.s8 %v7264
    %v7266 = vperm.slane %v7258, %v7265
    %v7267 = vrot.slane %v7254, 4
    %v7268 = vsel %vm2803, %v7267, %v7248
    %v7269 = vrot.slane %v7248, 4
    %v7270 = vsel %vm2803, %v7254, %v7269
    %v7272 = vunpack.c.l.s4 1934713408
    %v7273 = vunpack.c.0.s8 %v7272
    %v7274 = vperm.slane %v7268, %v7273
    %v7276 = vunpack.c.l.s4 1934713408
    %v7277 = vunpack.c.0.s8 %v7276
    %v7278 = vperm.slane %v7270, %v7277
    %v7279 = vrot.slane %v7274, 4
    %v7280 = vsel %vm2803, %v7279, %v7262
    %v7281 = vrot.slane %v7262, 4
    %v7282 = vsel %vm2803, %v7274, %v7281
    %v7283 = vrot.slane %v7278, 4
    %v7284 = vsel %vm2803, %v7283, %v7266
    %v7285 = vrot.slane %v7266, 4
    %v7286 = vsel %vm2803, %v7278, %v7285
    %v7287 = vsel %vm2803, %v7117, %v7098
    %v7289 = vunpack.c.l.s4 1983009808
    %v7290 = vunpack.c.0.s8 %v7289
    %v7291 = vperm.slane %v7287, %v7290
    %v7292 = vrot.slane %v7118, 4
    %v7293 = vsel %vm2803, %v7292, %v7116
    %v7295 = vunpack.c.l.s4 1983009808
    %v7296 = vunpack.c.0.s8 %v7295
    %v7297 = vperm.slane %v7293, %v7296
    %v7298 = vsel %vm2803, %v7121, %v7110
    %v7300 = vunpack.c.l.s4 1983009808
    %v7301 = vunpack.c.0.s8 %v7300
    %v7302 = vperm.slane %v7298, %v7301
    %v7303 = vrot.slane %v7122, 4
    %v7304 = vsel %vm2803, %v7303, %v7120
    %v7306 = vunpack.c.l.s4 1983009808
    %v7307 = vunpack.c.0.s8 %v7306
    %v7308 = vperm.slane %v7304, %v7307
    %v7309 = vrot.slane %v7297, 4
    %v7310 = vsel %vm2803, %v7309, %v7291
    %v7311 = vrot.slane %v7291, 4
    %v7312 = vsel %vm2803, %v7297, %v7311
    %v7314 = vunpack.c.l.s4 1934713408
    %v7315 = vunpack.c.0.s8 %v7314
    %v7316 = vperm.slane %v7310, %v7315
    %v7318 = vunpack.c.l.s4 1934713408
    %v7319 = vunpack.c.0.s8 %v7318
    %v7320 = vperm.slane %v7312, %v7319
    %v7321 = vrot.slane %v7308, 4
    %v7322 = vsel %vm2803, %v7321, %v7302
    %v7323 = vrot.slane %v7302, 4
    %v7324 = vsel %vm2803, %v7308, %v7323
    %v7326 = vunpack.c.l.s4 1934713408
    %v7327 = vunpack.c.0.s8 %v7326
    %v7328 = vperm.slane %v7322, %v7327
    %v7330 = vunpack.c.l.s4 1934713408
    %v7331 = vunpack.c.0.s8 %v7330
    %v7332 = vperm.slane %v7324, %v7331
    %v7333 = vrot.slane %v7328, 4
    %v7334 = vsel %vm2803, %v7333, %v7316
    %v7335 = vrot.slane %v7316, 4
    %v7336 = vsel %vm2803, %v7328, %v7335
    %v7337 = vrot.slane %v7332, 4
    %v7338 = vsel %vm2803, %v7337, %v7320
    %v7339 = vrot.slane %v7320, 4
    %v7340 = vsel %vm2803, %v7332, %v7339
    %v7341 = vsel %vm2803, %v7173, %v7154
    %v7343 = vunpack.c.l.s4 1983009808
    %v7344 = vunpack.c.0.s8 %v7343
    %v7345 = vperm.slane %v7341, %v7344
    %v7346 = vrot.slane %v7174, 4
    %v7347 = vsel %vm2803, %v7346, %v7172
    %v7349 = vunpack.c.l.s4 1983009808
    %v7350 = vunpack.c.0.s8 %v7349
    %v7351 = vperm.slane %v7347, %v7350
    %v7352 = vsel %vm2803, %v7177, %v7166
    %v7354 = vunpack.c.l.s4 1983009808
    %v7355 = vunpack.c.0.s8 %v7354
    %v7356 = vperm.slane %v7352, %v7355
    %v7357 = vrot.slane %v7178, 4
    %v7358 = vsel %vm2803, %v7357, %v7176
    %v7360 = vunpack.c.l.s4 1983009808
    %v7361 = vunpack.c.0.s8 %v7360
    %v7362 = vperm.slane %v7358, %v7361
    %v7363 = vrot.slane %v7351, 4
    %v7364 = vsel %vm2803, %v7363, %v7345
    %v7365 = vrot.slane %v7345, 4
    %v7366 = vsel %vm2803, %v7351, %v7365
    %v7368 = vunpack.c.l.s4 1934713408
    %v7369 = vunpack.c.0.s8 %v7368
    %v7370 = vperm.slane %v7364, %v7369
    %v7372 = vunpack.c.l.s4 1934713408
    %v7373 = vunpack.c.0.s8 %v7372
    %v7374 = vperm.slane %v7366, %v7373
    %v7375 = vrot.slane %v7362, 4
    %v7376 = vsel %vm2803, %v7375, %v7356
    %v7377 = vrot.slane %v7356, 4
    %v7378 = vsel %vm2803, %v7362, %v7377
    %v7380 = vunpack.c.l.s4 1934713408
    %v7381 = vunpack.c.0.s8 %v7380
    %v7382 = vperm.slane %v7376, %v7381
    %v7384 = vunpack.c.l.s4 1934713408
    %v7385 = vunpack.c.0.s8 %v7384
    %v7386 = vperm.slane %v7378, %v7385
    %v7387 = vrot.slane %v7382, 4
    %v7388 = vsel %vm2803, %v7387, %v7370
    %v7389 = vrot.slane %v7370, 4
    %v7390 = vsel %vm2803, %v7382, %v7389
    %v7391 = vrot.slane %v7386, 4
    %v7392 = vsel %vm2803, %v7391, %v7374
    %v7393 = vrot.slane %v7374, 4
    %v7394 = vsel %vm2803, %v7386, %v7393
    %7399 = vrot.lane.b32.xlu0 %v7228, 32
    %v7400 = vpop.permute.xlu0 %7399
    %7401 = vrot.lane.b32.xlu0 %v7282, 32
    %v7402 = vpop.permute.xlu0 %7401
    %7403 = vrot.lane.b32.xlu0 %v7336, 32
    %v7404 = vpop.permute.xlu0 %7403
    %7405 = vrot.lane.b32.xlu0 %v7390, 32
    %v7406 = vpop.permute.xlu0 %7405
    %7415 = vrot.lane.b32.xlu0 %v7230, 64
    %v7416 = vpop.permute.xlu0 %7415
    %7417 = vrot.lane.b32.xlu0 %v7284, 64
    %v7418 = vpop.permute.xlu0 %7417
    %7419 = vrot.lane.b32.xlu0 %v7338, 64
    %v7420 = vpop.permute.xlu0 %7419
    %7421 = vrot.lane.b32.xlu0 %v7392, 64
    %v7422 = vpop.permute.xlu0 %7421
    %7431 = vrot.lane.b32.xlu0 %v7232, 96
    %v7432 = vpop.permute.xlu0 %7431
    %7433 = vrot.lane.b32.xlu0 %v7286, 96
    %v7434 = vpop.permute.xlu0 %7433
    %7435 = vrot.lane.b32.xlu0 %v7340, 96
    %v7436 = vpop.permute.xlu0 %7435
    %7437 = vrot.lane.b32.xlu0 %v7394, 96
    %v7438 = vpop.permute.xlu0 %7437
    %v7443 = vsel %vm2198, %v7226, %v7400
    %v7444 = vsel %vm2198, %v7280, %v7402
    %v7445 = vsel %vm2198, %v7334, %v7404
    %v7446 = vsel %vm2198, %v7388, %v7406
    %v7447 = vsel %vm3295, %v7443, %v7416
    %v7448 = vsel %vm3295, %v7444, %v7418
    %v7449 = vsel %vm3295, %v7445, %v7420
    %v7450 = vsel %vm3295, %v7446, %v7422
    %v7451 = vsel %vm3300, %v7447, %v7432
    %v7452 = vsel %vm3300, %v7448, %v7434
    %v7453 = vsel %vm3300, %v7449, %v7436
    %v7454 = vsel %vm3300, %v7450, %v7438
    %v7455 = vpack.c.bf16 %v7452, %v7451
    %v7456 = vpack.c.bf16 %v7454, %v7453
    %v7457 = vld [vmem:[#allocation22] sm:$0xf]
    %v7458 = vld [vmem:[#allocation22 + $0x4] sm:$0xf]
    %v7459 = vld [vmem:[#allocation22 + $0x8] sm:$0xf]
    %v7460 = vld [vmem:[#allocation22 + $0xc] sm:$0xf]
    %v7461 = vld [vmem:[#allocation22 + $0x10] sm:$0xf]
    %v7462 = vld [vmem:[#allocation22 + $0x14] sm:$0xf]
    %v7463 = vld [vmem:[#allocation22 + $0x18] sm:$0xf]
    %v7464 = vld [vmem:[#allocation22 + $0x1c] sm:$0xf]
    %v7465 = vld [vmem:[#allocation22 + $0x20] sm:$0xf]
    %v7466 = vld [vmem:[#allocation22 + $0x24] sm:$0xf]
    %v7467 = vld [vmem:[#allocation22 + $0x28] sm:$0xf]
    %v7468 = vld [vmem:[#allocation22 + $0x2c] sm:$0xf]
    %v7469 = vld [vmem:[#allocation22 + $0x30] sm:$0xf]
    %v7470 = vld [vmem:[#allocation22 + $0x34] sm:$0xf]
    %v7471 = vld [vmem:[#allocation22 + $0x38] sm:$0xf]
    %v7472 = vld [vmem:[#allocation22 + $0x3c] sm:$0xf]
    %v7473 = vld [vmem:[#allocation23] sm:$0x1]
    %v7475 = vperm.slane %v7473, 0
    %v7493 = vunpack.c.l.b16 %v7457
    %v7494 = vunpack.c.l.b16 %v7458
    %v7495 = vunpack.c.l.b16 %v7459
    %v7496 = vunpack.c.l.b16 %v7460
    %v7497 = vunpack.c.l.b16 %v7461
    %v7498 = vunpack.c.l.b16 %v7462
    %v7499 = vunpack.c.l.b16 %v7463
    %v7500 = vunpack.c.l.b16 %v7464
    %v7501 = vunpack.c.l.b16 %v7465
    %v7502 = vunpack.c.l.b16 %v7466
    %v7503 = vunpack.c.l.b16 %v7467
    %v7504 = vunpack.c.l.b16 %v7468
    %v7505 = vunpack.c.l.b16 %v7469
    %v7506 = vunpack.c.l.b16 %v7470
    %v7507 = vunpack.c.l.b16 %v7471
    %v7508 = vunpack.c.l.b16 %v7472
    %v7509 = vpack.c.b16 %v7494, %v7493
    %v7510 = vpack.c.b16 %v7496, %v7495
    %v7511 = vpack.c.b16 %v7498, %v7497
    %v7512 = vpack.c.b16 %v7500, %v7499
    %v7513 = vpack.c.b16 %v7502, %v7501
    %v7514 = vpack.c.b16 %v7504, %v7503
    %v7515 = vpack.c.b16 %v7506, %v7505
    %v7516 = vpack.c.b16 %v7508, %v7507
    %7525 = vmatpush.bf16.msra.mxu0 %v7516
    %7526 = vmatpush.bf16.msra.mxu0 %v7515
    %7527 = vmatpush.bf16.msra.mxu0 %v7514
    %7528 = vmatpush.bf16.msra.mxu0 %v7513
    %7529 = vmatpush.bf16.msra.mxu0 %v7512
    %7530 = vmatpush.bf16.msra.mxu0 %v7511
    %7531 = vmatpush.bf16.msra.mxu0 %v7510
    %7532 = vmatpush.bf16.msra.mxu0 %v7509
    %7533 = vmatmul.bf16.gmra.mxu0 %v7455
    %v7534 = vpop.f32.mrf.mxu0
    %v7535 = vadd.f32 %v7475, %v7534
    %v7536 = vpop.f32.mrf.mxu0
    %v7537 = vadd.f32 %v7475, %v7536
    %7538 = vmatmul.bf16.gmra.mxu0 %v7456
    %v7539 = vpop.f32.mrf.mxu0
    %v7540 = vadd.f32 %v7475, %v7539
    %v7541 = vpop.f32.mrf.mxu0
    %v7542 = vadd.f32 %v7475, %v7541
    %7543 = vdwg.mxu0
    %v7544 = vadd.f32 %v3394, %v7535
    %v7545 = vadd.f32 %v3395, %v7537
    %v7546 = vadd.f32 %v3396, %v7540
    %v7547 = vadd.f32 %v3397, %v7542
    %v7548 = vld [vmem:[%s18 + $0x2] sm:$0x1]
    %v7549 = vld [vmem:[%s19 + $0x2] sm:$0x1]
    %7550 = vadd.xlane.f32.xlu0 %v7544
    %v7551 = vpop.xlane.xlu0 %7550
    %7552 = vadd.xlane.f32.xlu0 %v7545
    %v7553 = vpop.xlane.xlu0 %7552
    %7554 = vadd.xlane.f32.xlu0 %v7546
    %v7555 = vpop.xlane.xlu0 %7554
    %7556 = vadd.xlane.f32.xlu0 %v7547
    %v7557 = vpop.xlane.xlu0 %7556
    %v7558 = vmul.f32 %v7551, %v346
    %v7559 = vmul.f32 %v7553, %v346
    %v7560 = vmul.f32 %v7555, %v346
    %v7561 = vmul.f32 %v7557, %v346
    %v7562 = vsub.f32 %v7544, %v7558
    %v7563 = vsub.f32 %v7545, %v7559
    %v7564 = vsub.f32 %v7546, %v7560
    %v7565 = vsub.f32 %v7547, %v7561
    %v7566 = vmul.f32 %v7562, %v7562
    %v7567 = vmul.f32 %v7563, %v7563
    %v7568 = vmul.f32 %v7564, %v7564
    %v7569 = vmul.f32 %v7565, %v7565
    %7570 = vadd.xlane.f32.xlu0 %v7566
    %v7571 = vpop.xlane.xlu0 %7570
    %7572 = vadd.xlane.f32.xlu0 %v7567
    %v7573 = vpop.xlane.xlu0 %7572
    %7574 = vadd.xlane.f32.xlu0 %v7568
    %v7575 = vpop.xlane.xlu0 %7574
    %7576 = vadd.xlane.f32.xlu0 %v7569
    %v7577 = vpop.xlane.xlu0 %7576
    %v7578 = vmul.f32 %v7571, %v373
    %v7579 = vmul.f32 %v7573, %v373
    %v7580 = vmul.f32 %v7575, %v373
    %v7581 = vmul.f32 %v7577, %v373
    %v7582 = vrsqrt.pop %v7578
    %v7583 = vmul.f32 %v7582, %v7578
    %v7584 = vmul.f32 %v7583, %v7582
    %v7585 = vmul.f32 0.5, %v7584
    %v7586 = vsub.f32 1.5, %v7585
    %v7587 = vmul.f32 %v7582, %v7586
    %v7588 = vmul.f32 %v7578, %v7587
    %vm7589 = vcmp.eq.f32.partialorder %v7578, inf
    %v7590 = vsel %vm7589, %v7578, %v7588
    %vm7591 = vcmp.eq.f32.partialorder %v7578, 0.0
    %v7592 = vand.u32 %v7578, 2147483648
    %v7593 = vsel %vm7591, %v7592, %v7590
    %v7594 = vrsqrt.pop %v7579
    %v7595 = vmul.f32 %v7594, %v7579
    %v7596 = vmul.f32 %v7595, %v7594
    %v7597 = vmul.f32 0.5, %v7596
    %v7598 = vsub.f32 1.5, %v7597
    %v7599 = vmul.f32 %v7594, %v7598
    %v7600 = vmul.f32 %v7579, %v7599
    %vm7601 = vcmp.eq.f32.partialorder %v7579, inf
    %v7602 = vsel %vm7601, %v7579, %v7600
    %vm7603 = vcmp.eq.f32.partialorder %v7579, 0.0
    %v7604 = vand.u32 %v7579, 2147483648
    %v7605 = vsel %vm7603, %v7604, %v7602
    %v7606 = vrsqrt.pop %v7580
    %v7607 = vmul.f32 %v7606, %v7580
    %v7608 = vmul.f32 %v7607, %v7606
    %v7609 = vmul.f32 0.5, %v7608
    %v7610 = vsub.f32 1.5, %v7609
    %v7611 = vmul.f32 %v7606, %v7610
    %v7612 = vmul.f32 %v7580, %v7611
    %vm7613 = vcmp.eq.f32.partialorder %v7580, inf
    %v7614 = vsel %vm7613, %v7580, %v7612
    %vm7615 = vcmp.eq.f32.partialorder %v7580, 0.0
    %v7616 = vand.u32 %v7580, 2147483648
    %v7617 = vsel %vm7615, %v7616, %v7614
    %v7618 = vrsqrt.pop %v7581
    %v7619 = vmul.f32 %v7618, %v7581
    %v7620 = vmul.f32 %v7619, %v7618
    %v7621 = vmul.f32 0.5, %v7620
    %v7622 = vsub.f32 1.5, %v7621
    %v7623 = vmul.f32 %v7618, %v7622
    %v7624 = vmul.f32 %v7581, %v7623
    %vm7625 = vcmp.eq.f32.partialorder %v7581, inf
    %v7626 = vsel %vm7625, %v7581, %v7624
    %vm7627 = vcmp.eq.f32.partialorder %v7581, 0.0
    %v7628 = vand.u32 %v7581, 2147483648
    %v7629 = vsel %vm7627, %v7628, %v7626
    %v7630 = vperm.slane %v7548, 0
    %v7631 = vmul.f32 %v7630, %v7562
    %v7632 = vmul.f32 %v7630, %v7563
    %v7633 = vmul.f32 %v7630, %v7564
    %v7634 = vmul.f32 %v7630, %v7565
    %v7635 = vadd.f32 %v7593, 1e-06
    %v7636 = vadd.f32 %v7605, 1e-06
    %v7637 = vadd.f32 %v7617, 1e-06
    %v7638 = vadd.f32 %v7629, 1e-06
    %v7639 = vrcp.pop %v7635
    %v7640 = vmul.f32 %v7635, %v7639
    %v7641 = vsub.f32 1.0, %v7640
    %v7642 = vmul.f32 %v7639, %v7641
    %v7643 = vadd.f32 %v7639, %v7642
    %vm7644 = vweird.f32 %v7635
    %vm7645 = vweird.f32 %v7639
    %vm7646 = vmor %vm7644, %vm7645
    %v7647 = vsel %vm7646, %v7639, %v7643
    %v7648 = vand.u32 2147483647, %v7635
    %vm7649 = vcmp.eq.f32.partialorder %v7648, 8.507059e+37
    %v7650 = vand.u32 %v7635, 2147483648
    %v7651 = vor.u32 1.1754944e-38, %v7650
    %v7652 = vsel %vm7649, %v7651, %v7647
    %v7653 = vmul.f32 %v7631, %v7652
    %v7654 = vrcp.pop %v7636
    %v7655 = vmul.f32 %v7636, %v7654
    %v7656 = vsub.f32 1.0, %v7655
    %v7657 = vmul.f32 %v7654, %v7656
    %v7658 = vadd.f32 %v7654, %v7657
    %vm7659 = vweird.f32 %v7636
    %vm7660 = vweird.f32 %v7654
    %vm7661 = vmor %vm7659, %vm7660
    %v7662 = vsel %vm7661, %v7654, %v7658
    %v7663 = vand.u32 2147483647, %v7636
    %vm7664 = vcmp.eq.f32.partialorder %v7663, 8.507059e+37
    %v7665 = vand.u32 %v7636, 2147483648
    %v7666 = vor.u32 1.1754944e-38, %v7665
    %v7667 = vsel %vm7664, %v7666, %v7662
    %v7668 = vmul.f32 %v7632, %v7667
    %v7669 = vrcp.pop %v7637
    %v7670 = vmul.f32 %v7637, %v7669
    %v7671 = vsub.f32 1.0, %v7670
    %v7672 = vmul.f32 %v7669, %v7671
    %v7673 = vadd.f32 %v7669, %v7672
    %vm7674 = vweird.f32 %v7637
    %vm7675 = vweird.f32 %v7669
    %vm7676 = vmor %vm7674, %vm7675
    %v7677 = vsel %vm7676, %v7669, %v7673
    %v7678 = vand.u32 2147483647, %v7637
    %vm7679 = vcmp.eq.f32.partialorder %v7678, 8.507059e+37
    %v7680 = vand.u32 %v7637, 2147483648
    %v7681 = vor.u32 1.1754944e-38, %v7680
    %v7682 = vsel %vm7679, %v7681, %v7677
    %v7683 = vmul.f32 %v7633, %v7682
    %v7684 = vrcp.pop %v7638
    %v7685 = vmul.f32 %v7638, %v7684
    %v7686 = vsub.f32 1.0, %v7685
    %v7687 = vmul.f32 %v7684, %v7686
    %v7688 = vadd.f32 %v7684, %v7687
    %vm7689 = vweird.f32 %v7638
    %vm7690 = vweird.f32 %v7684
    %vm7691 = vmor %vm7689, %vm7690
    %v7692 = vsel %vm7691, %v7684, %v7688
    %v7693 = vand.u32 2147483647, %v7638
    %vm7694 = vcmp.eq.f32.partialorder %v7693, 8.507059e+37
    %v7695 = vand.u32 %v7638, 2147483648
    %v7696 = vor.u32 1.1754944e-38, %v7695
    %v7697 = vsel %vm7694, %v7696, %v7692
    %v7698 = vmul.f32 %v7634, %v7697
    %v7699 = vperm.slane %v7549, 0
    %v7700 = vadd.f32 %v7653, %v7699
    %v7701 = vadd.f32 %v7668, %v7699
    %v7702 = vadd.f32 %v7683, %v7699
    %v7703 = vadd.f32 %v7698, %v7699
    %v7704 = vpack.c.bf16 %v7701, %v7700
    %v7705 = vpack.c.bf16 %v7703, %v7702
    %v7706 = vld [vmem:[#allocation25] sm:$0xff]
    %v7707 = vld [vmem:[#allocation25 + $0x8] sm:$0xff]
    %v7708 = vld [vmem:[#allocation25 + $0x10] sm:$0xff]
    %v7709 = vld [vmem:[#allocation25 + $0x18] sm:$0xff]
    %v7710 = vld [vmem:[#allocation25 + $0x20] sm:$0xff]
    %v7711 = vld [vmem:[#allocation25 + $0x28] sm:$0xff]
    %v7712 = vld [vmem:[#allocation25 + $0x30] sm:$0xff]
    %v7713 = vld [vmem:[#allocation25 + $0x38] sm:$0xff]
    %v7714 = vld [vmem:[#allocation25 + $0x40] sm:$0xff]
    %v7715 = vld [vmem:[#allocation25 + $0x48] sm:$0xff]
    %v7716 = vld [vmem:[#allocation25 + $0x50] sm:$0xff]
    %v7717 = vld [vmem:[#allocation25 + $0x58] sm:$0xff]
    %v7718 = vld [vmem:[#allocation25 + $0x60] sm:$0xff]
    %v7719 = vld [vmem:[#allocation25 + $0x68] sm:$0xff]
    %v7720 = vld [vmem:[#allocation25 + $0x70] sm:$0xff]
    %v7721 = vld [vmem:[#allocation25 + $0x78] sm:$0xff]
    %v7722 = vld [vmem:[#allocation25 + $0x80] sm:$0xff]
    %v7723 = vld [vmem:[#allocation25 + $0x88] sm:$0xff]
    %v7724 = vld [vmem:[#allocation25 + $0x90] sm:$0xff]
    %v7725 = vld [vmem:[#allocation25 + $0x98] sm:$0xff]
    %v7726 = vld [vmem:[#allocation25 + $0xa0] sm:$0xff]
    %v7727 = vld [vmem:[#allocation25 + $0xa8] sm:$0xff]
    %v7728 = vld [vmem:[#allocation25 + $0xb0] sm:$0xff]
    %v7729 = vld [vmem:[#allocation25 + $0xb8] sm:$0xff]
    %v7730 = vld [vmem:[#allocation25 + $0xc0] sm:$0xff]
    %v7731 = vld [vmem:[#allocation25 + $0xc8] sm:$0xff]
    %v7732 = vld [vmem:[#allocation25 + $0xd0] sm:$0xff]
    %v7733 = vld [vmem:[#allocation25 + $0xd8] sm:$0xff]
    %v7734 = vld [vmem:[#allocation25 + $0xe0] sm:$0xff]
    %v7735 = vld [vmem:[#allocation25 + $0xe8] sm:$0xff]
    %v7736 = vld [vmem:[#allocation25 + $0xf0] sm:$0xff]
    %v7737 = vld [vmem:[#allocation25 + $0xf8] sm:$0xff]
    %v7738 = vld [vmem:[%s15] sm:$0xf]
    %v7740 = vperm.slane %v7738, 0
    %v7741 = vperm.slane %v7738, 1
    %v7742 = vperm.slane %v7738, 2
    %v7743 = vperm.slane %v7738, 3
    %v7780 = vunpack.c.l.b16 %v7706
    %v7781 = vunpack.c.h.b16 %v7706
    %v7782 = vunpack.c.l.b16 %v7707
    %v7783 = vunpack.c.h.b16 %v7707
    %v7784 = vunpack.c.l.b16 %v7708
    %v7785 = vunpack.c.h.b16 %v7708
    %v7786 = vunpack.c.l.b16 %v7709
    %v7787 = vunpack.c.h.b16 %v7709
    %v7788 = vunpack.c.l.b16 %v7710
    %v7789 = vunpack.c.h.b16 %v7710
    %v7790 = vunpack.c.l.b16 %v7711
    %v7791 = vunpack.c.h.b16 %v7711
    %v7792 = vunpack.c.l.b16 %v7712
    %v7793 = vunpack.c.h.b16 %v7712
    %v7794 = vunpack.c.l.b16 %v7713
    %v7795 = vunpack.c.h.b16 %v7713
    %v7796 = vunpack.c.l.b16 %v7714
    %v7797 = vunpack.c.h.b16 %v7714
    %v7798 = vunpack.c.l.b16 %v7715
    %v7799 = vunpack.c.h.b16 %v7715
    %v7800 = vunpack.c.l.b16 %v7716
    %v7801 = vunpack.c.h.b16 %v7716
    %v7802 = vunpack.c.l.b16 %v7717
    %v7803 = vunpack.c.h.b16 %v7717
    %v7804 = vunpack.c.l.b16 %v7718
    %v7805 = vunpack.c.h.b16 %v7718
    %v7806 = vunpack.c.l.b16 %v7719
    %v7807 = vunpack.c.h.b16 %v7719
    %v7808 = vunpack.c.l.b16 %v7720
    %v7809 = vunpack.c.h.b16 %v7720
    %v7810 = vunpack.c.l.b16 %v7721
    %v7811 = vunpack.c.h.b16 %v7721
    %v7812 = vunpack.c.l.b16 %v7722
    %v7813 = vunpack.c.h.b16 %v7722
    %v7814 = vunpack.c.l.b16 %v7723
    %v7815 = vunpack.c.h.b16 %v7723
    %v7816 = vunpack.c.l.b16 %v7724
    %v7817 = vunpack.c.h.b16 %v7724
    %v7818 = vunpack.c.l.b16 %v7725
    %v7819 = vunpack.c.h.b16 %v7725
    %v7820 = vunpack.c.l.b16 %v7726
    %v7821 = vunpack.c.h.b16 %v7726
    %v7822 = vunpack.c.l.b16 %v7727
    %v7823 = vunpack.c.h.b16 %v7727
    %v7824 = vunpack.c.l.b16 %v7728
    %v7825 = vunpack.c.h.b16 %v7728
    %v7826 = vunpack.c.l.b16 %v7729
    %v7827 = vunpack.c.h.b16 %v7729
    %v7828 = vunpack.c.l.b16 %v7730
    %v7829 = vunpack.c.h.b16 %v7730
    %v7830 = vunpack.c.l.b16 %v7731
    %v7831 = vunpack.c.h.b16 %v7731
    %v7832 = vunpack.c.l.b16 %v7732
    %v7833 = vunpack.c.h.b16 %v7732
    %v7834 = vunpack.c.l.b16 %v7733
    %v7835 = vunpack.c.h.b16 %v7733
    %v7836 = vunpack.c.l.b16 %v7734
    %v7837 = vunpack.c.h.b16 %v7734
    %v7838 = vunpack.c.l.b16 %v7735
    %v7839 = vunpack.c.h.b16 %v7735
    %v7840 = vunpack.c.l.b16 %v7736
    %v7841 = vunpack.c.h.b16 %v7736
    %v7842 = vunpack.c.l.b16 %v7737
    %v7843 = vunpack.c.h.b16 %v7737
    %v7844 = vpack.c.b16 %v7784, %v7780
    %v7845 = vpack.c.b16 %v7785, %v7781
    %v7846 = vpack.c.b16 %v7786, %v7782
    %v7847 = vpack.c.b16 %v7787, %v7783
    %v7848 = vpack.c.b16 %v7792, %v7788
    %v7849 = vpack.c.b16 %v7793, %v7789
    %v7850 = vpack.c.b16 %v7794, %v7790
    %v7851 = vpack.c.b16 %v7795, %v7791
    %v7852 = vpack.c.b16 %v7800, %v7796
    %v7853 = vpack.c.b16 %v7801, %v7797
    %v7854 = vpack.c.b16 %v7802, %v7798
    %v7855 = vpack.c.b16 %v7803, %v7799
    %v7856 = vpack.c.b16 %v7808, %v7804
    %v7857 = vpack.c.b16 %v7809, %v7805
    %v7858 = vpack.c.b16 %v7810, %v7806
    %v7859 = vpack.c.b16 %v7811, %v7807
    %v7860 = vpack.c.b16 %v7816, %v7812
    %v7861 = vpack.c.b16 %v7817, %v7813
    %v7862 = vpack.c.b16 %v7818, %v7814
    %v7863 = vpack.c.b16 %v7819, %v7815
    %v7864 = vpack.c.b16 %v7824, %v7820
    %v7865 = vpack.c.b16 %v7825, %v7821
    %v7866 = vpack.c.b16 %v7826, %v7822
    %v7867 = vpack.c.b16 %v7827, %v7823
    %v7868 = vpack.c.b16 %v7832, %v7828
    %v7869 = vpack.c.b16 %v7833, %v7829
    %v7870 = vpack.c.b16 %v7834, %v7830
    %v7871 = vpack.c.b16 %v7835, %v7831
    %v7872 = vpack.c.b16 %v7840, %v7836
    %v7873 = vpack.c.b16 %v7841, %v7837
    %v7874 = vpack.c.b16 %v7842, %v7838
    %v7875 = vpack.c.b16 %v7843, %v7839
    %7908 = vmatpush.bf16.msra.mxu0 %v7872
    %7909 = vmatpush.bf16.msra.mxu0 %v7868
    %7910 = vmatpush.bf16.msra.mxu0 %v7864
    %7911 = vmatpush.bf16.msra.mxu0 %v7860
    %7912 = vmatpush.bf16.msra.mxu0 %v7856
    %7913 = vmatpush.bf16.msra.mxu0 %v7852
    %7914 = vmatpush.bf16.msra.mxu0 %v7848
    %7915 = vmatpush.bf16.msra.mxu0 %v7844
    %7916 = vmatmul.bf16.gmra.mxu0 %v7704
    %v7917 = vpop.f32.mrf.mxu0
    %v7918 = vadd.f32 %v7740, %v7917
    %v7919 = vpop.f32.mrf.mxu0
    %v7920 = vadd.f32 %v7740, %v7919
    %7921 = vmatmul.bf16.gmra.mxu0 %v7705
    %v7922 = vpop.f32.mrf.mxu0
    %v7923 = vadd.f32 %v7740, %v7922
    %v7924 = vpop.f32.mrf.mxu0
    %v7925 = vadd.f32 %v7740, %v7924
    %7926 = vdwg.mxu0
    %7927 = vmatpush.bf16.msra.mxu0 %v7873
    %7928 = vmatpush.bf16.msra.mxu0 %v7869
    %7929 = vmatpush.bf16.msra.mxu0 %v7865
    %7930 = vmatpush.bf16.msra.mxu0 %v7861
    %7931 = vmatpush.bf16.msra.mxu0 %v7857
    %7932 = vmatpush.bf16.msra.mxu0 %v7853
    %7933 = vmatpush.bf16.msra.mxu0 %v7849
    %7934 = vmatpush.bf16.msra.mxu0 %v7845
    %7935 = vmatmul.bf16.gmra.mxu0 %v7704
    %v7936 = vpop.f32.mrf.mxu0
    %v7937 = vadd.f32 %v7741, %v7936
    %v7938 = vpop.f32.mrf.mxu0
    %v7939 = vadd.f32 %v7741, %v7938
    %7940 = vmatmul.bf16.gmra.mxu0 %v7705
    %v7941 = vpop.f32.mrf.mxu0
    %v7942 = vadd.f32 %v7741, %v7941
    %v7943 = vpop.f32.mrf.mxu0
    %v7944 = vadd.f32 %v7741, %v7943
    %7945 = vdwg.mxu0
    %7946 = vmatpush.bf16.msra.mxu0 %v7874
    %7947 = vmatpush.bf16.msra.mxu0 %v7870
    %7948 = vmatpush.bf16.msra.mxu0 %v7866
    %7949 = vmatpush.bf16.msra.mxu0 %v7862
    %7950 = vmatpush.bf16.msra.mxu0 %v7858
    %7951 = vmatpush.bf16.msra.mxu0 %v7854
    %7952 = vmatpush.bf16.msra.mxu0 %v7850
    %7953 = vmatpush.bf16.msra.mxu0 %v7846
    %7954 = vmatmul.bf16.gmra.mxu0 %v7704
    %v7955 = vpop.f32.mrf.mxu0
    %v7956 = vadd.f32 %v7742, %v7955
    %v7957 = vpop.f32.mrf.mxu0
    %v7958 = vadd.f32 %v7742, %v7957
    %7959 = vmatmul.bf16.gmra.mxu0 %v7705
    %v7960 = vpop.f32.mrf.mxu0
    %v7961 = vadd.f32 %v7742, %v7960
    %v7962 = vpop.f32.mrf.mxu0
    %v7963 = vadd.f32 %v7742, %v7962
    %7964 = vdwg.mxu0
    %7965 = vmatpush.bf16.msra.mxu0 %v7875
    %7966 = vmatpush.bf16.msra.mxu0 %v7871
    %7967 = vmatpush.bf16.msra.mxu0 %v7867
    %7968 = vmatpush.bf16.msra.mxu0 %v7863
    %7969 = vmatpush.bf16.msra.mxu0 %v7859
    %7970 = vmatpush.bf16.msra.mxu0 %v7855
    %7971 = vmatpush.bf16.msra.mxu0 %v7851
    %7972 = vmatpush.bf16.msra.mxu0 %v7847
    %7973 = vmatmul.bf16.gmra.mxu0 %v7704
    %v7974 = vpop.f32.mrf.mxu0
    %v7975 = vadd.f32 %v7743, %v7974
    %v7976 = vpop.f32.mrf.mxu0
    %v7977 = vadd.f32 %v7743, %v7976
    %7978 = vmatmul.bf16.gmra.mxu0 %v7705
    %v7979 = vpop.f32.mrf.mxu0
    %v7980 = vadd.f32 %v7743, %v7979
    %v7981 = vpop.f32.mrf.mxu0
    %v7982 = vadd.f32 %v7743, %v7981
    %7983 = vdwg.mxu0
    %v7984 = vmax.f32 %v7918, 0.0
    %v7985 = vmax.f32 %v7937, 0.0
    %v7986 = vmax.f32 %v7956, 0.0
    %v7987 = vmax.f32 %v7975, 0.0
    %v7988 = vmax.f32 %v7920, 0.0
    %v7989 = vmax.f32 %v7939, 0.0
    %v7990 = vmax.f32 %v7958, 0.0
    %v7991 = vmax.f32 %v7977, 0.0
    %v7992 = vmax.f32 %v7923, 0.0
    %v7993 = vmax.f32 %v7942, 0.0
    %v7994 = vmax.f32 %v7961, 0.0
    %v7995 = vmax.f32 %v7980, 0.0
    %v7996 = vmax.f32 %v7925, 0.0
    %v7997 = vmax.f32 %v7944, 0.0
    %v7998 = vmax.f32 %v7963, 0.0
    %v7999 = vmax.f32 %v7982, 0.0
    %v8000 = vpack.c.bf16 %v7988, %v7984
    %v8001 = vpack.c.bf16 %v7989, %v7985
    %v8002 = vpack.c.bf16 %v7990, %v7986
    %v8003 = vpack.c.bf16 %v7991, %v7987
    %v8004 = vpack.c.bf16 %v7996, %v7992
    %v8005 = vpack.c.bf16 %v7997, %v7993
    %v8006 = vpack.c.bf16 %v7998, %v7994
    %v8007 = vpack.c.bf16 %v7999, %v7995
    %v8008 = vld [vmem:[#allocation26] sm:$0xf]
    %v8009 = vld [vmem:[#allocation26 + $0x4] sm:$0xf]
    %v8010 = vld [vmem:[#allocation26 + $0x8] sm:$0xf]
    %v8011 = vld [vmem:[#allocation26 + $0xc] sm:$0xf]
    %v8012 = vld [vmem:[#allocation26 + $0x10] sm:$0xf]
    %v8013 = vld [vmem:[#allocation26 + $0x14] sm:$0xf]
    %v8014 = vld [vmem:[#allocation26 + $0x18] sm:$0xf]
    %v8015 = vld [vmem:[#allocation26 + $0x1c] sm:$0xf]
    %v8016 = vld [vmem:[#allocation26 + $0x20] sm:$0xf]
    %v8017 = vld [vmem:[#allocation26 + $0x24] sm:$0xf]
    %v8018 = vld [vmem:[#allocation26 + $0x28] sm:$0xf]
    %v8019 = vld [vmem:[#allocation26 + $0x2c] sm:$0xf]
    %v8020 = vld [vmem:[#allocation26 + $0x30] sm:$0xf]
    %v8021 = vld [vmem:[#allocation26 + $0x34] sm:$0xf]
    %v8022 = vld [vmem:[#allocation26 + $0x38] sm:$0xf]
    %v8023 = vld [vmem:[#allocation26 + $0x3c] sm:$0xf]
    %v8024 = vld [vmem:[#allocation26 + $0x40] sm:$0xf]
    %v8025 = vld [vmem:[#allocation26 + $0x44] sm:$0xf]
    %v8026 = vld [vmem:[#allocation26 + $0x48] sm:$0xf]
    %v8027 = vld [vmem:[#allocation26 + $0x4c] sm:$0xf]
    %v8028 = vld [vmem:[#allocation26 + $0x50] sm:$0xf]
    %v8029 = vld [vmem:[#allocation26 + $0x54] sm:$0xf]
    %v8030 = vld [vmem:[#allocation26 + $0x58] sm:$0xf]
    %v8031 = vld [vmem:[#allocation26 + $0x5c] sm:$0xf]
    %v8032 = vld [vmem:[#allocation26 + $0x60] sm:$0xf]
    %v8033 = vld [vmem:[#allocation26 + $0x64] sm:$0xf]
    %v8034 = vld [vmem:[#allocation26 + $0x68] sm:$0xf]
    %v8035 = vld [vmem:[#allocation26 + $0x6c] sm:$0xf]
    %v8036 = vld [vmem:[#allocation26 + $0x70] sm:$0xf]
    %v8037 = vld [vmem:[#allocation26 + $0x74] sm:$0xf]
    %v8038 = vld [vmem:[#allocation26 + $0x78] sm:$0xf]
    %v8039 = vld [vmem:[#allocation26 + $0x7c] sm:$0xf]
    %v8040 = vld [vmem:[#allocation26 + $0x80] sm:$0xf]
    %v8041 = vld [vmem:[#allocation26 + $0x84] sm:$0xf]
    %v8042 = vld [vmem:[#allocation26 + $0x88] sm:$0xf]
    %v8043 = vld [vmem:[#allocation26 + $0x8c] sm:$0xf]
    %v8044 = vld [vmem:[#allocation26 + $0x90] sm:$0xf]
    %v8045 = vld [vmem:[#allocation26 + $0x94] sm:$0xf]
    %v8046 = vld [vmem:[#allocation26 + $0x98] sm:$0xf]
    %v8047 = vld [vmem:[#allocation26 + $0x9c] sm:$0xf]
    %v8048 = vld [vmem:[#allocation26 + $0xa0] sm:$0xf]
    %v8049 = vld [vmem:[#allocation26 + $0xa4] sm:$0xf]
    %v8050 = vld [vmem:[#allocation26 + $0xa8] sm:$0xf]
    %v8051 = vld [vmem:[#allocation26 + $0xac] sm:$0xf]
    %v8052 = vld [vmem:[#allocation26 + $0xb0] sm:$0xf]
    %v8053 = vld [vmem:[#allocation26 + $0xb4] sm:$0xf]
    %v8054 = vld [vmem:[#allocation26 + $0xb8] sm:$0xf]
    %v8055 = vld [vmem:[#allocation26 + $0xbc] sm:$0xf]
    %v8056 = vld [vmem:[#allocation26 + $0xc0] sm:$0xf]
    %v8057 = vld [vmem:[#allocation26 + $0xc4] sm:$0xf]
    %v8058 = vld [vmem:[#allocation26 + $0xc8] sm:$0xf]
    %v8059 = vld [vmem:[#allocation26 + $0xcc] sm:$0xf]
    %v8060 = vld [vmem:[#allocation26 + $0xd0] sm:$0xf]
    %v8061 = vld [vmem:[#allocation26 + $0xd4] sm:$0xf]
    %v8062 = vld [vmem:[#allocation26 + $0xd8] sm:$0xf]
    %v8063 = vld [vmem:[#allocation26 + $0xdc] sm:$0xf]
    %v8064 = vld [vmem:[#allocation26 + $0xe0] sm:$0xf]
    %v8065 = vld [vmem:[#allocation26 + $0xe4] sm:$0xf]
    %v8066 = vld [vmem:[#allocation26 + $0xe8] sm:$0xf]
    %v8067 = vld [vmem:[#allocation26 + $0xec] sm:$0xf]
    %v8068 = vld [vmem:[#allocation26 + $0xf0] sm:$0xf]
    %v8069 = vld [vmem:[#allocation26 + $0xf4] sm:$0xf]
    %v8070 = vld [vmem:[#allocation26 + $0xf8] sm:$0xf]
    %v8071 = vld [vmem:[#allocation26 + $0xfc] sm:$0xf]
    %v8136 = vunpack.c.l.b16 %v8008
    %v8137 = vunpack.c.l.b16 %v8009
    %v8138 = vunpack.c.l.b16 %v8010
    %v8139 = vunpack.c.l.b16 %v8011
    %v8140 = vunpack.c.l.b16 %v8012
    %v8141 = vunpack.c.l.b16 %v8013
    %v8142 = vunpack.c.l.b16 %v8014
    %v8143 = vunpack.c.l.b16 %v8015
    %v8144 = vunpack.c.l.b16 %v8016
    %v8145 = vunpack.c.l.b16 %v8017
    %v8146 = vunpack.c.l.b16 %v8018
    %v8147 = vunpack.c.l.b16 %v8019
    %v8148 = vunpack.c.l.b16 %v8020
    %v8149 = vunpack.c.l.b16 %v8021
    %v8150 = vunpack.c.l.b16 %v8022
    %v8151 = vunpack.c.l.b16 %v8023
    %v8152 = vunpack.c.l.b16 %v8024
    %v8153 = vunpack.c.l.b16 %v8025
    %v8154 = vunpack.c.l.b16 %v8026
    %v8155 = vunpack.c.l.b16 %v8027
    %v8156 = vunpack.c.l.b16 %v8028
    %v8157 = vunpack.c.l.b16 %v8029
    %v8158 = vunpack.c.l.b16 %v8030
    %v8159 = vunpack.c.l.b16 %v8031
    %v8160 = vunpack.c.l.b16 %v8032
    %v8161 = vunpack.c.l.b16 %v8033
    %v8162 = vunpack.c.l.b16 %v8034
    %v8163 = vunpack.c.l.b16 %v8035
    %v8164 = vunpack.c.l.b16 %v8036
    %v8165 = vunpack.c.l.b16 %v8037
    %v8166 = vunpack.c.l.b16 %v8038
    %v8167 = vunpack.c.l.b16 %v8039
    %v8168 = vunpack.c.l.b16 %v8040
    %v8169 = vunpack.c.l.b16 %v8041
    %v8170 = vunpack.c.l.b16 %v8042
    %v8171 = vunpack.c.l.b16 %v8043
    %v8172 = vunpack.c.l.b16 %v8044
    %v8173 = vunpack.c.l.b16 %v8045
    %v8174 = vunpack.c.l.b16 %v8046
    %v8175 = vunpack.c.l.b16 %v8047
    %v8176 = vunpack.c.l.b16 %v8048
    %v8177 = vunpack.c.l.b16 %v8049
    %v8178 = vunpack.c.l.b16 %v8050
    %v8179 = vunpack.c.l.b16 %v8051
    %v8180 = vunpack.c.l.b16 %v8052
    %v8181 = vunpack.c.l.b16 %v8053
    %v8182 = vunpack.c.l.b16 %v8054
    %v8183 = vunpack.c.l.b16 %v8055
    %v8184 = vunpack.c.l.b16 %v8056
    %v8185 = vunpack.c.l.b16 %v8057
    %v8186 = vunpack.c.l.b16 %v8058
    %v8187 = vunpack.c.l.b16 %v8059
    %v8188 = vunpack.c.l.b16 %v8060
    %v8189 = vunpack.c.l.b16 %v8061
    %v8190 = vunpack.c.l.b16 %v8062
    %v8191 = vunpack.c.l.b16 %v8063
    %v8192 = vunpack.c.l.b16 %v8064
    %v8193 = vunpack.c.l.b16 %v8065
    %v8194 = vunpack.c.l.b16 %v8066
    %v8195 = vunpack.c.l.b16 %v8067
    %v8196 = vunpack.c.l.b16 %v8068
    %v8197 = vunpack.c.l.b16 %v8069
    %v8198 = vunpack.c.l.b16 %v8070
    %v8199 = vunpack.c.l.b16 %v8071
    %v8200 = vpack.c.b16 %v8137, %v8136
    %v8201 = vpack.c.b16 %v8139, %v8138
    %v8202 = vpack.c.b16 %v8141, %v8140
    %v8203 = vpack.c.b16 %v8143, %v8142
    %v8204 = vpack.c.b16 %v8145, %v8144
    %v8205 = vpack.c.b16 %v8147, %v8146
    %v8206 = vpack.c.b16 %v8149, %v8148
    %v8207 = vpack.c.b16 %v8151, %v8150
    %v8208 = vpack.c.b16 %v8153, %v8152
    %v8209 = vpack.c.b16 %v8155, %v8154
    %v8210 = vpack.c.b16 %v8157, %v8156
    %v8211 = vpack.c.b16 %v8159, %v8158
    %v8212 = vpack.c.b16 %v8161, %v8160
    %v8213 = vpack.c.b16 %v8163, %v8162
    %v8214 = vpack.c.b16 %v8165, %v8164
    %v8215 = vpack.c.b16 %v8167, %v8166
    %v8216 = vpack.c.b16 %v8169, %v8168
    %v8217 = vpack.c.b16 %v8171, %v8170
    %v8218 = vpack.c.b16 %v8173, %v8172
    %v8219 = vpack.c.b16 %v8175, %v8174
    %v8220 = vpack.c.b16 %v8177, %v8176
    %v8221 = vpack.c.b16 %v8179, %v8178
    %v8222 = vpack.c.b16 %v8181, %v8180
    %v8223 = vpack.c.b16 %v8183, %v8182
    %v8224 = vpack.c.b16 %v8185, %v8184
    %v8225 = vpack.c.b16 %v8187, %v8186
    %v8226 = vpack.c.b16 %v8189, %v8188
    %v8227 = vpack.c.b16 %v8191, %v8190
    %v8228 = vpack.c.b16 %v8193, %v8192
    %v8229 = vpack.c.b16 %v8195, %v8194
    %v8230 = vpack.c.b16 %v8197, %v8196
    %v8231 = vpack.c.b16 %v8199, %v8198
    %8264 = vmatpush.bf16.msra.mxu0 %v8207
    %8265 = vmatpush.bf16.msra.mxu0 %v8206
    %8266 = vmatpush.bf16.msra.mxu0 %v8205
    %8267 = vmatpush.bf16.msra.mxu0 %v8204
    %8268 = vmatpush.bf16.msra.mxu0 %v8203
    %8269 = vmatpush.bf16.msra.mxu0 %v8202
    %8270 = vmatpush.bf16.msra.mxu0 %v8201
    %8271 = vmatpush.bf16.msra.mxu0 %v8200
    %8272 = vmatmul.bf16.gmra.mxu0 %v8000
    %v8273 = vpop.f32.mrf.mxu0
    %v8274 = vadd.f32 0.0, %v8273
    %v8275 = vpop.f32.mrf.mxu0
    %v8276 = vadd.f32 0.0, %v8275
    %8277 = vmatmul.bf16.gmra.mxu0 %v8004
    %v8278 = vpop.f32.mrf.mxu0
    %v8279 = vadd.f32 0.0, %v8278
    %v8280 = vpop.f32.mrf.mxu0
    %v8281 = vadd.f32 0.0, %v8280
    %8282 = vdwg.mxu0
    %8283 = vmatpush.bf16.msra.mxu0 %v8215
    %8284 = vmatpush.bf16.msra.mxu0 %v8214
    %8285 = vmatpush.bf16.msra.mxu0 %v8213
    %8286 = vmatpush.bf16.msra.mxu0 %v8212
    %8287 = vmatpush.bf16.msra.mxu0 %v8211
    %8288 = vmatpush.bf16.msra.mxu0 %v8210
    %8289 = vmatpush.bf16.msra.mxu0 %v8209
    %8290 = vmatpush.bf16.msra.mxu0 %v8208
    %8291 = vmatmul.bf16.gmra.mxu0 %v8001
    %v8292 = vpop.f32.mrf.mxu0
    %v8293 = vadd.f32 %v8274, %v8292
    %v8294 = vpop.f32.mrf.mxu0
    %v8295 = vadd.f32 %v8276, %v8294
    %8296 = vmatmul.bf16.gmra.mxu0 %v8005
    %v8297 = vpop.f32.mrf.mxu0
    %v8298 = vadd.f32 %v8279, %v8297
    %v8299 = vpop.f32.mrf.mxu0
    %v8300 = vadd.f32 %v8281, %v8299
    %8301 = vdwg.mxu0
    %8302 = vmatpush.bf16.msra.mxu0 %v8223
    %8303 = vmatpush.bf16.msra.mxu0 %v8222
    %8304 = vmatpush.bf16.msra.mxu0 %v8221
    %8305 = vmatpush.bf16.msra.mxu0 %v8220
    %8306 = vmatpush.bf16.msra.mxu0 %v8219
    %8307 = vmatpush.bf16.msra.mxu0 %v8218
    %8308 = vmatpush.bf16.msra.mxu0 %v8217
    %8309 = vmatpush.bf16.msra.mxu0 %v8216
    %8310 = vmatmul.bf16.gmra.mxu0 %v8002
    %v8311 = vpop.f32.mrf.mxu0
    %v8312 = vadd.f32 %v8293, %v8311
    %v8313 = vpop.f32.mrf.mxu0
    %v8314 = vadd.f32 %v8295, %v8313
    %8315 = vmatmul.bf16.gmra.mxu0 %v8006
    %v8316 = vpop.f32.mrf.mxu0
    %v8317 = vadd.f32 %v8298, %v8316
    %v8318 = vpop.f32.mrf.mxu0
    %v8319 = vadd.f32 %v8300, %v8318
    %8320 = vdwg.mxu0
    %8321 = vmatpush.bf16.msra.mxu0 %v8231
    %8322 = vmatpush.bf16.msra.mxu0 %v8230
    %8323 = vmatpush.bf16.msra.mxu0 %v8229
    %8324 = vmatpush.bf16.msra.mxu0 %v8228
    %8325 = vmatpush.bf16.msra.mxu0 %v8227
    %8326 = vmatpush.bf16.msra.mxu0 %v8226
    %8327 = vmatpush.bf16.msra.mxu0 %v8225
    %8328 = vmatpush.bf16.msra.mxu0 %v8224
    %8329 = vmatmul.bf16.gmra.mxu0 %v8003
    %v8330 = vpop.f32.mrf.mxu0
    %v8331 = vadd.f32 %v8312, %v8330
    %v8332 = vpop.f32.mrf.mxu0
    %v8333 = vadd.f32 %v8314, %v8332
    %8334 = vmatmul.bf16.gmra.mxu0 %v8007
    %v8335 = vpop.f32.mrf.mxu0
    %v8336 = vadd.f32 %v8317, %v8335
    %v8337 = vpop.f32.mrf.mxu0
    %v8338 = vadd.f32 %v8319, %v8337
    %8339 = vdwg.mxu0
    %v8340 = vadd.f32 %v7544, %v8331
    %v8341 = vadd.f32 %v7545, %v8333
    %v8342 = vadd.f32 %v7546, %v8336
    %v8343 = vadd.f32 %v7547, %v8338
    %v8344 = vld [vmem:[%s17] sm:$0x1]
    %v8346 = vperm.slane %v8344, 0
    %v8348 = vadd.f32 %v8340, %v8346
    %v8349 = vadd.f32 %v8341, %v8346
    %v8350 = vadd.f32 %v8342, %v8346
    %v8351 = vadd.f32 %v8343, %v8346
    %8352 = vst [vmem:[#allocation28] sm:$0xff] %v8348
    %8353 = vst [vmem:[#allocation28 + $0x8] sm:$0xff] %v8349
    %8354 = vst [vmem:[#allocation28 + $0x10] sm:$0xff] %v8350
    %8355 = vst [vmem:[#allocation28 + $0x18] sm:$0xff] %v8351
    // Predicated region
    $region146: #{tpu_custom_call.1} parent=1 // pred_check
      _
    $region147: #{tpu_custom_call.1} parent=1 // pred_check_branch
      %8357 = sbr.rel (0) target = $region149
    $region148: #{tpu_custom_call.1} parent=1 // pred_region
      %8359 = vsyncadd [#allocation4], 0
      %s8360 = sshll.u32 [#allocation28], 4
      %s8361 = int_to_ptr.vmem [resolvable:$true] %s8360
      %s8362 = sshll.u32 %s20, 4
      %s8363 = int_to_ptr.hbm [resolvable:$true] %s8362
      %8368 = dma.vmem_to_hbm [thread:$0]  %s8361, 512, %s8363, [#allocation4], 128, 128, 8
    $region149: #{tpu_custom_call.1} parent=1 // pred_fallthru
      _
    // Predicated region
    $region150: #{tpu_custom_call.1} parent=1 // pred_check
      _
    $region151: #{tpu_custom_call.1} parent=1 // pred_check_branch
      %8370 = sbr.rel (0) target = $region153
    $region152: #{tpu_custom_call.1} parent=1 // pred_region
      %8372 = dma.done [#allocation4], 512
    $region153: #{tpu_custom_call.1} parent=1 // pred_fallthru
      _
    %8373 = vsyncpa [#allocation3], 1
    %8374 = vsyncpa [#allocation6], 1
    %8375 = vsyncpa [#allocation9], 1
    %8376 = vsyncpa [#allocation12], 1
    %8377 = vsyncpa [#allocation15], 1
    %8378 = vsyncpa [#allocation18], 1
    %8379 = vsyncpa [#allocation21], 1
    %8380 = vsyncpa [#allocation24], 1
    %8381 = vsyncpa [#allocation27], 1
    %8382 = vsyncpa [#allocation4], 1

</llo_original>
